<compile_context>
chip_gen: v5e
topology: v5e:2x2
jax: 0.10.0
libtpu: 0.0.40
codegen_flags: <defaults>
</compile_context>

<pallas_src>
import numpy as np
import jax
import jax.numpy as jnp
from jax.experimental import pallas as pl
from jax.experimental.pallas import tpu as pltpu


# ----------------------------- Pallas kernel --------------------------------
def embedding_final_kernel(x_ref,     # (BT, C*H*W)       f32  raw flattened NCHW tile
                           wbig_ref,  # (C*H*W, H*W*HID)  bf16 fully-banded 3x3 conv weight
                           bbig_ref,  # (1, H*W*HID)      f32  conv bias tiled per position
                           wfe_ref,   # (H*W*HID, EPAD)   bf16 fused pool+fc+proj weight
                           bfe_ref,   # (1, EPAD)         f32  fused bias (lane-padded)
                           out_ref):  # (BT, EPAD)        f32
    # Whole 3x3 / pad-1 conv for the batch tile in a single bf16 MXU matmul;
    # taps and zero padding live in the banded weight.
    x_bf = x_ref[...].astype(jnp.bfloat16)                       # cheap VPU cast in VMEM
    conv = jnp.dot(x_bf, wbig_ref[...],
                   preferred_element_type=jnp.float32)           # (BT, H*W*HID), f32 acc
    conv = jnp.maximum(conv + bbig_ref[...], 0.0)                # bias + ReLU in f32

    # mean-pool over positions + Linear(HID,CNN_OUT) + Linear(CNN_OUT,EMBED),
    # all folded into one bf16 weight; output dim padded to 128 lanes so the
    # store below is an unmasked, lane-dense vst.
    emb = jnp.dot(conv.astype(jnp.bfloat16), wfe_ref[...],
                  preferred_element_type=jnp.float32)
    out_ref[...] = emb + bfe_ref[...]


# --------------------- one-time weight preprocessing --------------------------
def prepare_params(params, C, H, W):
    """One-time (outside the hot path) weight transformation for the kernel."""
    wconv, bconv, wfc, bfc, wproj, bproj = params
    wconv = np.asarray(wconv, np.float32)          # (3*3*C, HID), rows = (kh, kw, c)
    bconv = np.asarray(bconv, np.float32).reshape(-1)
    wfc = np.asarray(wfc, np.float32)
    bfc = np.asarray(bfc, np.float32).reshape(-1)
    wproj = np.asarray(wproj, np.float32)
    bproj = np.asarray(bproj, np.float32).reshape(-1)

    HID = wconv.shape[1]
    EMBED = wproj.shape[1]
    EPAD = ((EMBED + 127) // 128) * 128            # lane-dense output width
    wc = wconv.reshape(3, 3, C, HID)               # (kh, kw, c, o)

    # Fully banded conv weight consuming raw flattened NCHW input:
    #   wbig[c*H*W + hi*W + wi, (ho*W + wo)*HID + o] = wc[hi-ho+1, wi-wo+1, c, o]
    # Out-of-range taps are simply omitted -> implicit zero padding.
    wbig = np.zeros((C, H, W, H * W * HID), np.float32)
    for kh in range(3):
        for kw in range(3):
            for ho in range(H):
                hi = ho + kh - 1
                if not (0 <= hi < H):
                    continue
                for wo in range(W):
                    wi = wo + kw - 1
                    if not (0 <= wi < W):
                        continue
                    col = (ho * W + wo) * HID
                    wbig[:, hi, wi, col:col + HID] = wc[kh, kw]
    wbig = wbig.reshape(C * H * W, H * W * HID)

    bbig = np.tile(bconv.reshape(1, HID), (1, H * W))            # (1, H*W*HID)

    # Fuse mean-pool scale and the two Linears (no nonlinearity in between).
    wfused = (wfc @ wproj) / float(H * W)                        # (HID, EMBED)
    wfe = np.zeros((H * W * HID, EPAD), np.float32)
    wfe[:, :EMBED] = np.tile(wfused, (H * W, 1))
    bfe = np.zeros((1, EPAD), np.float32)
    bfe[0, :EMBED] = bfc @ wproj + bproj

    prepared = (jnp.asarray(wbig, jnp.bfloat16),
                jnp.asarray(bbig, jnp.float32),
                jnp.asarray(wfe, jnp.bfloat16),
                jnp.asarray(bfe, jnp.float32))
    return prepared, EMBED


# ------------------------------ wrapper --------------------------------------
def embedding_final_layer(x_nchw, prepared, embed_size, *, b_tile=512):
    """x_nchw: [B, C, H, W] float32.  Returns [B, 1, embed_size]."""
    wbig, bbig, wfe, bfe = prepared
    B, C, H, W = x_nchw.shape
    CHW = C * H * W
    PHID = wbig.shape[1]
    EPAD = wfe.shape[1]

    # Metadata-only collapse of the contiguous NCHW image: the kernel streams
    # the raw f32 bytes once; the bf16 cast happens on the tile in VMEM.
    x_flat = x_nchw.reshape(B, CHW)

    if B <= b_tile:
        bt, nb, Bp = B, 1, B
    else:
        bt = b_tile                                # multiple of 8
        nb = (B + bt - 1) // bt
        Bp = nb * bt
        if Bp != B:
            x_flat = jnp.pad(x_flat, ((0, Bp - B), (0, 0)))

    out = pl.pallas_call(
        embedding_final_kernel,
        out_shape=jax.ShapeDtypeStruct((Bp, EPAD), jnp.float32),
        grid_spec=pltpu.PrefetchScalarGridSpec(
            num_scalar_prefetch=0,
            grid=(nb,),
            in_specs=[
                pl.BlockSpec((bt, CHW),    lambda b: (b, 0)),
                pl.BlockSpec((CHW, PHID),  lambda b: (0, 0)),
                pl.BlockSpec((1, PHID),    lambda b: (0, 0)),
                pl.BlockSpec((PHID, EPAD), lambda b: (0, 0)),
                pl.BlockSpec((1, EPAD),    lambda b: (0, 0)),
            ],
            out_specs=pl.BlockSpec((bt, EPAD), lambda b: (b, 0)),
        ),
        compiler_params=pltpu.CompilerParams(
            dimension_semantics=("parallel",),
            vmem_limit_bytes=48 * 1024 * 1024),
    )(x_flat, wbig, bbig, wfe, bfe)

    # Drop batch padding, drop lane padding, unsqueeze dim 1.
    return out[:B, None, :embed_size]


# --------------------------- numpy float64 reference ---------------------------
def reference(x_nchw, params):
    """High-precision reference matching the PyTorch module semantics."""
    wconv, bconv, wfc, bfc, wproj, bproj = [np.asarray(p, np.float64) for p in params]
    x = np.asarray(x_nchw, np.float64)
    B, C, H, W = x.shape
    HID = wconv.shape[1]
    wc = wconv.reshape(3, 3, C, HID)
    xp = np.pad(x, ((0, 0), (0, 0), (1, 1), (1, 1)))
    conv = np.zeros((B, H, W, HID), np.float64)
    for kh in range(3):
        for kw in range(3):
            patch = xp[:, :, kh:kh + H, kw:kw + W]               # (B, C, H, W)
            conv += np.einsum('bchw,co->bhwo', patch, wc[kh, kw])
    conv = np.maximum(conv + bconv.reshape(1, 1, 1, HID), 0.0)
    pooled = conv.reshape(B, H * W, HID).mean(axis=1)
    feat = pooled @ wfc + bfc.reshape(1, -1)
    emb = feat @ wproj + bproj.reshape(1, -1)
    return emb[:, None, :]


if __name__ == "__main__":
    # Small shapes consistent with the module.
    B, C, H, W = 2, 4, 16, 16
    HID, CNN_OUT, EMBED = 8, 24, 32

    key = jax.random.PRNGKey(0)
    k = jax.random.split(key, 8)

    x = jax.random.normal(k[0], (B, C, H, W), dtype=jnp.float32)

    # Deterministic synthetic parameters (matmul-form conv weight [3*3*C, HID],
    # i.e. torch weight [HID, C, 3, 3] transposed to (kh, kw, c, o)).
    wconv = jax.random.normal(k[1], (3 * 3 * C, HID), dtype=jnp.float32) * 0.1
    bconv = jax.random.normal(k[2], (1, HID), dtype=jnp.float32) * 0.1
    wfc   = jax.random.normal(k[3], (HID, CNN_OUT), dtype=jnp.float32) * 0.1
    bfc   = jax.random.normal(k[4], (1, CNN_OUT), dtype=jnp.float32) * 0.1
    wproj = jax.random.normal(k[5], (CNN_OUT, EMBED), dtype=jnp.float32) * 0.1
    bproj = jax.random.normal(k[6], (1, EMBED), dtype=jnp.float32) * 0.1
    params = (wconv, bconv, wfc, bfc, wproj, bproj)

    prepared, embed_size = prepare_params(params, C, H, W)
    assert embed_size == EMBED

    out = jax.block_until_ready(embedding_final_layer(x, prepared, embed_size))
    assert out.shape == (B, 1, EMBED), out.shape

    # Check against the float64 module semantics; only intentional differences
    # are bf16 MXU operands (input / conv activations / weights), f32 accum.
    ref = reference(np.asarray(x), params)
    max_err = float(np.max(np.abs(np.asarray(out, np.float64) - ref)))
    assert np.allclose(np.asarray(out, np.float64), ref, atol=5e-3, rtol=5e-3), max_err

    print("KERNEL_OK")
</pallas_src>

<mosaic_0001>
module attributes {stable_mosaic.version = 11 : i64} {
  func.func @embedding_final_kernel(%arg0: i32, %arg1: memref<2x1024xf32, #tpu.memory_space<vmem>>, %arg2: memref<1024x2048xbf16, #tpu.memory_space<vmem>>, %arg3: memref<1x2048xf32, #tpu.memory_space<vmem>>, %arg4: memref<2048x128xbf16, #tpu.memory_space<vmem>>, %arg5: memref<1x128xf32, #tpu.memory_space<vmem>>, %arg6: memref<2x128xf32, #tpu.memory_space<vmem>>) attributes {dimension_semantics = [#tpu.dimension_semantics<parallel>], iteration_bounds = array<i64: 1>, scalar_prefetch = 0 : i64, scratch_operands = 0 : i64, tpu.core_type = #tpu.core_type<tc>, window_params = [{transform_indices = @transform_0, window_bounds = array<i64: 2, 1024>}, {pipeline_mode = #tpu.pipeline_mode<synchronous>, transform_indices = @transform_1, window_bounds = array<i64: 1024, 2048>}, {pipeline_mode = #tpu.pipeline_mode<synchronous>, transform_indices = @transform_2, window_bounds = array<i64: 1, 2048>}, {pipeline_mode = #tpu.pipeline_mode<synchronous>, transform_indices = @transform_3, window_bounds = array<i64: 2048, 128>}, {pipeline_mode = #tpu.pipeline_mode<synchronous>, transform_indices = @transform_4, window_bounds = array<i64: 1, 128>}, {transform_indices = @transform_5, window_bounds = array<i64: 2, 128>}]} {
    %c0 = arith.constant 0 : index
    %c0_0 = arith.constant 0 : index
    %0 = vector.load %arg1[%c0, %c0_0] : memref<2x1024xf32, #tpu.memory_space<vmem>>, vector<2x1024xf32>
    %1 = arith.truncf %0 : vector<2x1024xf32> to vector<2x1024xbf16>
    %c0_1 = arith.constant 0 : index
    %c0_2 = arith.constant 0 : index
    %2 = vector.load %arg2[%c0_1, %c0_2] : memref<1024x2048xbf16, #tpu.memory_space<vmem>>, vector<1024x2048xbf16>
    %cst = arith.constant dense<0.000000e+00> : vector<2x2048xf32>
    %3 = tpu.matmul %1, %2, %cst {dimension_numbers = #tpu.dot_dimension_numbers<[1], [0], [0], [1], [0, 0, 1, 1], [], []>} : vector<2x1024xbf16>, vector<1024x2048xbf16>, vector<2x2048xf32> -> vector<2x2048xf32>
    %c0_3 = arith.constant 0 : index
    %c0_4 = arith.constant 0 : index
    %4 = vector.load %arg3[%c0_3, %c0_4] : memref<1x2048xf32, #tpu.memory_space<vmem>>, vector<1x2048xf32>
    %5 = vector.broadcast %4 : vector<1x2048xf32> to vector<2x2048xf32>
    %6 = arith.addf %3, %5 : vector<2x2048xf32>
    %cst_5 = arith.constant 0.000000e+00 : f32
    %7 = vector.broadcast %cst_5 : f32 to vector<2x2048xf32>
    %8 = arith.maximumf %6, %7 : vector<2x2048xf32>
    %9 = arith.truncf %8 : vector<2x2048xf32> to vector<2x2048xbf16>
    %c0_6 = arith.constant 0 : index
    %c0_7 = arith.constant 0 : index
    %10 = vector.load %arg4[%c0_6, %c0_7] : memref<2048x128xbf16, #tpu.memory_space<vmem>>, vector<2048x128xbf16>
    %cst_8 = arith.constant dense<0.000000e+00> : vector<2x128xf32>
    %11 = tpu.matmul %9, %10, %cst_8 {dimension_numbers = #tpu.dot_dimension_numbers<[1], [0], [0], [1], [0, 0, 1, 1], [], []>} : vector<2x2048xbf16>, vector<2048x128xbf16>, vector<2x128xf32> -> vector<2x128xf32>
    %c0_9 = arith.constant 0 : index
    %c0_10 = arith.constant 0 : index
    %12 = vector.load %arg5[%c0_9, %c0_10] : memref<1x128xf32, #tpu.memory_space<vmem>>, vector<1x128xf32>
    %13 = vector.broadcast %12 : vector<1x128xf32> to vector<2x128xf32>
    %14 = arith.addf %11, %13 : vector<2x128xf32>
    %c0_11 = arith.constant 0 : index
    %c0_12 = arith.constant 0 : index
    %15 = vector.load %arg6[%c0_11, %c0_12] : memref<2x128xf32, #tpu.memory_space<vmem>>, vector<2x128xf32>
    tpu.vector_store %arg6[%c0_11, %c0_12], %14 {strides = array<i32>} : memref<2x128xf32, #tpu.memory_space<vmem>>, vector<2x128xf32>,
    return
  }
  func.func @transform_0(%arg0: i32) -> (i32, i32) {
    %c0_i32 = arith.constant 0 : i32
    %c0_i32_0 = arith.constant 0 : i32
    return %arg0, %c0_i32 : i32, i32
  }
  func.func @transform_1(%arg0: i32) -> (i32, i32) {
    %c0_i32 = arith.constant 0 : i32
    %c0_i32_0 = arith.constant 0 : i32
    %c0_i32_1 = arith.constant 0 : i32
    return %c0_i32, %c0_i32_0 : i32, i32
  }
  func.func @transform_2(%arg0: i32) -> (i32, i32) {
    %c0_i32 = arith.constant 0 : i32
    %c0_i32_0 = arith.constant 0 : i32
    %c0_i32_1 = arith.constant 0 : i32
    return %c0_i32, %c0_i32_0 : i32, i32
  }
  func.func @transform_3(%arg0: i32) -> (i32, i32) {
    %c0_i32 = arith.constant 0 : i32
    %c0_i32_0 = arith.constant 0 : i32
    %c0_i32_1 = arith.constant 0 : i32
    return %c0_i32, %c0_i32_0 : i32, i32
  }
  func.func @transform_4(%arg0: i32) -> (i32, i32) {
    %c0_i32 = arith.constant 0 : i32
    %c0_i32_0 = arith.constant 0 : i32
    %c0_i32_1 = arith.constant 0 : i32
    return %c0_i32, %c0_i32_0 : i32, i32
  }
  func.func @transform_5(%arg0: i32) -> (i32, i32) {
    %c0_i32 = arith.constant 0 : i32
    %c0_i32_0 = arith.constant 0 : i32
    return %arg0, %c0_i32 : i32, i32
  }
}

</mosaic_0001>

<llo_original>
// kernel: tpu_custom_call.1
$region0: #{tpu_custom_call.1}
  #allocation0 [shape = 'u32[]', space=smem, size = 0x4, offset = 0x4, fixed_abs, tag = 'smem constant byte address 0x4 - core index']
  #allocation1 [shape = 'u32[72,128]{1,0:T(1,128)}', space=vmem, size = 0x9000, scoped, tag = 'internal scratch']
  %s0 = inlined_call_operand.hbm [shape: f32[2,1024], index: 0, kind: input, shape index: {}]
  %s1 = inlined_call_operand.hbm [shape: bf16[1024,2048], index: 1, kind: input, shape index: {}]
  %s2 = inlined_call_operand.hbm [shape: f32[1,2048], index: 2, kind: input, shape index: {}]
  %s3 = inlined_call_operand.hbm [shape: bf16[2048,128], index: 3, kind: input, shape index: {}]
  %s4 = inlined_call_operand.hbm [shape: f32[1,128], index: 4, kind: input, shape index: {}]
  %s5 = inlined_call_operand.hbm [shape: f32[2,128], index: 5, kind: output, shape index: {}]
  %s6 = sld [smem:[#allocation0]]
  $region50: #{tpu_custom_call.1} parent=0
    _
  %s8 = ssub.s32 1, %s6
  %s9 = scalar_select 0, %s8, %s6
  $region1: #{tpu_custom_call.1} parent=0
    #allocation2 [shape = 'u8[8192]{0}', space=vmem, size = 0x2000, scoped, tag = 'input window, operand 0, single buffered']
    #allocation3 [shape = 's32[1]{0}', space=sflag, size = 0x4, scoped, tag = 'scoped memory for tpu_custom_call.1']
    #allocation4 [shape = 's32[1]{0}', space=sflag, size = 0x4, scoped, tag = 'scoped memory for tpu_custom_call.1']
    #allocation5 [shape = 'u8[4194304]{0}', space=vmem, size = 0x400000, scoped, tag = 'input window, operand 1, single buffered']
    #allocation6 [shape = 's32[1]{0}', space=sflag, size = 0x4, scoped, tag = 'scoped memory for tpu_custom_call.1']
    #allocation7 [shape = 'u8[8192]{0}', space=vmem, size = 0x2000, scoped, tag = 'input window, operand 2, single buffered']
    #allocation8 [shape = 'u8[524288]{0}', space=vmem, size = 0x80000, scoped, tag = 'input window, operand 3, single buffered']
    #allocation9 [shape = 's32[1]{0}', space=sflag, size = 0x4, scoped, tag = 'scoped memory for tpu_custom_call.1']
    #allocation10 [shape = 'u8[512]{0}', space=vmem, size = 0x400, scoped, tag = 'input window, operand 4, single buffered']
    #allocation11 [shape = 'u8[1024]{0}', space=vmem, size = 0x400, scoped, tag = 'output window, operand 0, single buffered']
    %10 = vsyncpa [#allocation3], 0
    %11 = vsyncpa [#allocation6], 0
    %12 = vsyncpa [#allocation9], 0
    %13 = vsyncpa [#allocation4], 0
    // Predicated region
    $region2: #{tpu_custom_call.1} parent=1 // pred_check
      _
    $region3: #{tpu_custom_call.1} parent=1 // pred_check_branch
      %15 = sbr.rel (0) target = $region5
    $region4: #{tpu_custom_call.1} parent=1 // pred_region
      %17 = vsyncadd [#allocation3], 0
      %s19 = sshll.u32 %s0, 4
      %s20 = int_to_ptr.hbm [resolvable:$true] %s19
      %s21 = sshll.u32 [#allocation2], 4
      %s22 = int_to_ptr.vmem [resolvable:$true] %s21
      %24 = dma.hbm_to_vmem [thread:$0]  %s20, 256, %s22, [#allocation3]
    $region5: #{tpu_custom_call.1} parent=1 // pred_fallthru
      _
    // Predicated region
    $region6: #{tpu_custom_call.1} parent=1 // pred_check
      _
    $region7: #{tpu_custom_call.1} parent=1 // pred_check_branch
      %26 = sbr.rel (0) target = $region9
    $region8: #{tpu_custom_call.1} parent=1 // pred_region
      %28 = vsyncadd [#allocation6], 0
      %s29 = sshll.u32 %s1, 4
      %s30 = int_to_ptr.hbm [resolvable:$true] %s29
      %s31 = sshll.u32 [#allocation5], 4
      %s32 = int_to_ptr.vmem [resolvable:$true] %s31
      %37 = dma.hbm_to_vmem [thread:$0]  %s30, 131072, %s32, [#allocation6], 1024, 1024, 64
    $region9: #{tpu_custom_call.1} parent=1 // pred_fallthru
      _
    // Predicated region
    $region10: #{tpu_custom_call.1} parent=1 // pred_check
      _
    $region11: #{tpu_custom_call.1} parent=1 // pred_check_branch
      %39 = sbr.rel (0) target = $region13
    $region12: #{tpu_custom_call.1} parent=1 // pred_region
      %41 = vsyncadd [#allocation6], 0
      %s43 = sshll.u32 %s2, 4
      %s44 = int_to_ptr.hbm [resolvable:$true] %s43
      %s45 = sshll.u32 [#allocation7], 4
      %s46 = int_to_ptr.vmem [resolvable:$true] %s45
      %48 = dma.hbm_to_vmem [thread:$0]  %s44, 256, %s46, [#allocation6]
    $region13: #{tpu_custom_call.1} parent=1 // pred_fallthru
      _
    // Predicated region
    $region14: #{tpu_custom_call.1} parent=1 // pred_check
      _
    $region15: #{tpu_custom_call.1} parent=1 // pred_check_branch
      %50 = sbr.rel (0) target = $region17
    $region16: #{tpu_custom_call.1} parent=1 // pred_region
      %52 = vsyncadd [#allocation9], 0
      %s53 = sshll.u32 %s3, 4
      %s54 = int_to_ptr.hbm [resolvable:$true] %s53
      %s55 = sshll.u32 [#allocation8], 4
      %s56 = int_to_ptr.vmem [resolvable:$true] %s55
      %61 = dma.hbm_to_vmem [thread:$0]  %s54, 16384, %s56, [#allocation9], 64, 64, 4
    $region17: #{tpu_custom_call.1} parent=1 // pred_fallthru
      _
    // Predicated region
    $region18: #{tpu_custom_call.1} parent=1 // pred_check
      _
    $region19: #{tpu_custom_call.1} parent=1 // pred_check_branch
      %63 = sbr.rel (0) target = $region21
    $region20: #{tpu_custom_call.1} parent=1 // pred_region
      %65 = vsyncadd [#allocation9], 0
      %s67 = sshll.u32 %s4, 4
      %s68 = int_to_ptr.hbm [resolvable:$true] %s67
      %s69 = sshll.u32 [#allocation10], 4
      %s70 = int_to_ptr.vmem [resolvable:$true] %s69
      %72 = dma.hbm_to_vmem [thread:$0]  %s68, 16, %s70, [#allocation9]
    $region21: #{tpu_custom_call.1} parent=1 // pred_fallthru
      _
    // Predicated region
    $region22: #{tpu_custom_call.1} parent=1 // pred_check
      _
    $region23: #{tpu_custom_call.1} parent=1 // pred_check_branch
      %74 = sbr.rel (0) target = $region25
    $region24: #{tpu_custom_call.1} parent=1 // pred_region
      %76 = dma.done [#allocation3], 256
    $region25: #{tpu_custom_call.1} parent=1 // pred_fallthru
      _
    // Predicated region
    $region26: #{tpu_custom_call.1} parent=1 // pred_check
      _
    $region27: #{tpu_custom_call.1} parent=1 // pred_check_branch
      %78 = sbr.rel (0) target = $region29
    $region28: #{tpu_custom_call.1} parent=1 // pred_region
      %80 = dma.done [#allocation6], 131072
    $region29: #{tpu_custom_call.1} parent=1 // pred_fallthru
      _
    // Predicated region
    $region30: #{tpu_custom_call.1} parent=1 // pred_check
      _
    $region31: #{tpu_custom_call.1} parent=1 // pred_check_branch
      %82 = sbr.rel (0) target = $region33
    $region32: #{tpu_custom_call.1} parent=1 // pred_region
      %84 = dma.done [#allocation6], 256
    $region33: #{tpu_custom_call.1} parent=1 // pred_fallthru
      _
    // Predicated region
    $region34: #{tpu_custom_call.1} parent=1 // pred_check
      _
    $region35: #{tpu_custom_call.1} parent=1 // pred_check_branch
      %86 = sbr.rel (0) target = $region37
    $region36: #{tpu_custom_call.1} parent=1 // pred_region
      %88 = dma.done [#allocation9], 16384
    $region37: #{tpu_custom_call.1} parent=1 // pred_fallthru
      _
    // Predicated region
    $region38: #{tpu_custom_call.1} parent=1 // pred_check
      _
    $region39: #{tpu_custom_call.1} parent=1 // pred_check_branch
      %90 = sbr.rel (0) target = $region41
    $region40: #{tpu_custom_call.1} parent=1 // pred_region
      %92 = dma.done [#allocation9], 16
    $region41: #{tpu_custom_call.1} parent=1 // pred_fallthru
      _
    %v93 = vld [vmem:[#allocation2] sm:$0xff]
    %v94 = vld [vmem:[#allocation2 + $0x8] sm:$0xff]
    %97 = vst [vmem:[#allocation1] ss:$4 sm:$0xff] %v93
    %s98 = scalar_lea.vmem [#allocation1], 32
    %99 = vst [vmem:[%s98] ss:$4 sm:$0xff] %v94
    %v100 = vld.sshfl [vmem:[#allocation1] sm:$0xff pattern:$0x73625140]
    %v101 = vld.sshfl [vmem:[#allocation1 + $0x8] sm:$0xff pattern:$0x73625140]
    %v102 = vld.sshfl [vmem:[#allocation1 + $0x10] sm:$0xff pattern:$0x73625140]
    %v103 = vld.sshfl [vmem:[#allocation1 + $0x18] sm:$0xff pattern:$0x73625140]
    %v104 = vld.sshfl [vmem:[#allocation1 + $0x20] sm:$0xff pattern:$0x73625140]
    %v105 = vld.sshfl [vmem:[#allocation1 + $0x28] sm:$0xff pattern:$0x73625140]
    %v106 = vld.sshfl [vmem:[#allocation1 + $0x30] sm:$0xff pattern:$0x73625140]
    %v107 = vld.sshfl [vmem:[#allocation1 + $0x38] sm:$0xff pattern:$0x73625140]
    %v116 = vpack.c.bf16 %v100, %v100
    %v117 = vpack.c.bf16 %v101, %v101
    %v118 = vpack.c.bf16 %v102, %v102
    %v119 = vpack.c.bf16 %v103, %v103
    %v120 = vpack.c.bf16 %v104, %v104
    %v121 = vpack.c.bf16 %v105, %v105
    %v122 = vpack.c.bf16 %v106, %v106
    %v123 = vpack.c.bf16 %v107, %v107
    %v124 = vld [vmem:[#allocation5] sm:$0xff]
    %v125 = vld [vmem:[#allocation5 + $0x8] sm:$0xff]
    %v126 = vld [vmem:[#allocation5 + $0x10] sm:$0xff]
    %v127 = vld [vmem:[#allocation5 + $0x18] sm:$0xff]
    %v128 = vld [vmem:[#allocation5 + $0x20] sm:$0xff]
    %v129 = vld [vmem:[#allocation5 + $0x28] sm:$0xff]
    %v130 = vld [vmem:[#allocation5 + $0x30] sm:$0xff]
    %v131 = vld [vmem:[#allocation5 + $0x38] sm:$0xff]
    %v132 = vld [vmem:[#allocation5 + $0x40] sm:$0xff]
    %v133 = vld [vmem:[#allocation5 + $0x48] sm:$0xff]
    %v134 = vld [vmem:[#allocation5 + $0x50] sm:$0xff]
    %v135 = vld [vmem:[#allocation5 + $0x58] sm:$0xff]
    %v136 = vld [vmem:[#allocation5 + $0x60] sm:$0xff]
    %v137 = vld [vmem:[#allocation5 + $0x68] sm:$0xff]
    %v138 = vld [vmem:[#allocation5 + $0x70] sm:$0xff]
    %v139 = vld [vmem:[#allocation5 + $0x78] sm:$0xff]
    %v140 = vld [vmem:[#allocation5 + $0x80] sm:$0xff]
    %v141 = vld [vmem:[#allocation5 + $0x88] sm:$0xff]
    %v142 = vld [vmem:[#allocation5 + $0x90] sm:$0xff]
    %v143 = vld [vmem:[#allocation5 + $0x98] sm:$0xff]
    %v144 = vld [vmem:[#allocation5 + $0xa0] sm:$0xff]
    %v145 = vld [vmem:[#allocation5 + $0xa8] sm:$0xff]
    %v146 = vld [vmem:[#allocation5 + $0xb0] sm:$0xff]
    %v147 = vld [vmem:[#allocation5 + $0xb8] sm:$0xff]
    %v148 = vld [vmem:[#allocation5 + $0xc0] sm:$0xff]
    %v149 = vld [vmem:[#allocation5 + $0xc8] sm:$0xff]
    %v150 = vld [vmem:[#allocation5 + $0xd0] sm:$0xff]
    %v151 = vld [vmem:[#allocation5 + $0xd8] sm:$0xff]
    %v152 = vld [vmem:[#allocation5 + $0xe0] sm:$0xff]
    %v153 = vld [vmem:[#allocation5 + $0xe8] sm:$0xff]
    %v154 = vld [vmem:[#allocation5 + $0xf0] sm:$0xff]
    %v155 = vld [vmem:[#allocation5 + $0xf8] sm:$0xff]
    %v156 = vld [vmem:[#allocation5 + $0x100] sm:$0xff]
    %v157 = vld [vmem:[#allocation5 + $0x108] sm:$0xff]
    %v158 = vld [vmem:[#allocation5 + $0x110] sm:$0xff]
    %v159 = vld [vmem:[#allocation5 + $0x118] sm:$0xff]
    %v160 = vld [vmem:[#allocation5 + $0x120] sm:$0xff]
    %v161 = vld [vmem:[#allocation5 + $0x128] sm:$0xff]
    %v162 = vld [vmem:[#allocation5 + $0x130] sm:$0xff]
    %v163 = vld [vmem:[#allocation5 + $0x138] sm:$0xff]
    %v164 = vld [vmem:[#allocation5 + $0x140] sm:$0xff]
    %v165 = vld [vmem:[#allocation5 + $0x148] sm:$0xff]
    %v166 = vld [vmem:[#allocation5 + $0x150] sm:$0xff]
    %v167 = vld [vmem:[#allocation5 + $0x158] sm:$0xff]
    %v168 = vld [vmem:[#allocation5 + $0x160] sm:$0xff]
    %v169 = vld [vmem:[#allocation5 + $0x168] sm:$0xff]
    %v170 = vld [vmem:[#allocation5 + $0x170] sm:$0xff]
    %v171 = vld [vmem:[#allocation5 + $0x178] sm:$0xff]
    %v172 = vld [vmem:[#allocation5 + $0x180] sm:$0xff]
    %v173 = vld [vmem:[#allocation5 + $0x188] sm:$0xff]
    %v174 = vld [vmem:[#allocation5 + $0x190] sm:$0xff]
    %v175 = vld [vmem:[#allocation5 + $0x198] sm:$0xff]
    %v176 = vld [vmem:[#allocation5 + $0x1a0] sm:$0xff]
    %v177 = vld [vmem:[#allocation5 + $0x1a8] sm:$0xff]
    %v178 = vld [vmem:[#allocation5 + $0x1b0] sm:$0xff]
    %v179 = vld [vmem:[#allocation5 + $0x1b8] sm:$0xff]
    %v180 = vld [vmem:[#allocation5 + $0x1c0] sm:$0xff]
    %v181 = vld [vmem:[#allocation5 + $0x1c8] sm:$0xff]
    %v182 = vld [vmem:[#allocation5 + $0x1d0] sm:$0xff]
    %v183 = vld [vmem:[#allocation5 + $0x1d8] sm:$0xff]
    %v184 = vld [vmem:[#allocation5 + $0x1e0] sm:$0xff]
    %v185 = vld [vmem:[#allocation5 + $0x1e8] sm:$0xff]
    %v186 = vld [vmem:[#allocation5 + $0x1f0] sm:$0xff]
    %v187 = vld [vmem:[#allocation5 + $0x1f8] sm:$0xff]
    %v188 = vld [vmem:[#allocation5 + $0x200] sm:$0xff]
    %v189 = vld [vmem:[#allocation5 + $0x208] sm:$0xff]
    %v190 = vld [vmem:[#allocation5 + $0x210] sm:$0xff]
    %v191 = vld [vmem:[#allocation5 + $0x218] sm:$0xff]
    %v192 = vld [vmem:[#allocation5 + $0x220] sm:$0xff]
    %v193 = vld [vmem:[#allocation5 + $0x228] sm:$0xff]
    %v194 = vld [vmem:[#allocation5 + $0x230] sm:$0xff]
    %v195 = vld [vmem:[#allocation5 + $0x238] sm:$0xff]
    %v196 = vld [vmem:[#allocation5 + $0x240] sm:$0xff]
    %v197 = vld [vmem:[#allocation5 + $0x248] sm:$0xff]
    %v198 = vld [vmem:[#allocation5 + $0x250] sm:$0xff]
    %v199 = vld [vmem:[#allocation5 + $0x258] sm:$0xff]
    %v200 = vld [vmem:[#allocation5 + $0x260] sm:$0xff]
    %v201 = vld [vmem:[#allocation5 + $0x268] sm:$0xff]
    %v202 = vld [vmem:[#allocation5 + $0x270] sm:$0xff]
    %v203 = vld [vmem:[#allocation5 + $0x278] sm:$0xff]
    %v204 = vld [vmem:[#allocation5 + $0x280] sm:$0xff]
    %v205 = vld [vmem:[#allocation5 + $0x288] sm:$0xff]
    %v206 = vld [vmem:[#allocation5 + $0x290] sm:$0xff]
    %v207 = vld [vmem:[#allocation5 + $0x298] sm:$0xff]
    %v208 = vld [vmem:[#allocation5 + $0x2a0] sm:$0xff]
    %v209 = vld [vmem:[#allocation5 + $0x2a8] sm:$0xff]
    %v210 = vld [vmem:[#allocation5 + $0x2b0] sm:$0xff]
    %v211 = vld [vmem:[#allocation5 + $0x2b8] sm:$0xff]
    %v212 = vld [vmem:[#allocation5 + $0x2c0] sm:$0xff]
    %v213 = vld [vmem:[#allocation5 + $0x2c8] sm:$0xff]
    %v214 = vld [vmem:[#allocation5 + $0x2d0] sm:$0xff]
    %v215 = vld [vmem:[#allocation5 + $0x2d8] sm:$0xff]
    %v216 = vld [vmem:[#allocation5 + $0x2e0] sm:$0xff]
    %v217 = vld [vmem:[#allocation5 + $0x2e8] sm:$0xff]
    %v218 = vld [vmem:[#allocation5 + $0x2f0] sm:$0xff]
    %v219 = vld [vmem:[#allocation5 + $0x2f8] sm:$0xff]
    %v220 = vld [vmem:[#allocation5 + $0x300] sm:$0xff]
    %v221 = vld [vmem:[#allocation5 + $0x308] sm:$0xff]
    %v222 = vld [vmem:[#allocation5 + $0x310] sm:$0xff]
    %v223 = vld [vmem:[#allocation5 + $0x318] sm:$0xff]
    %v224 = vld [vmem:[#allocation5 + $0x320] sm:$0xff]
    %v225 = vld [vmem:[#allocation5 + $0x328] sm:$0xff]
    %v226 = vld [vmem:[#allocation5 + $0x330] sm:$0xff]
    %v227 = vld [vmem:[#allocation5 + $0x338] sm:$0xff]
    %v228 = vld [vmem:[#allocation5 + $0x340] sm:$0xff]
    %v229 = vld [vmem:[#allocation5 + $0x348] sm:$0xff]
    %v230 = vld [vmem:[#allocation5 + $0x350] sm:$0xff]
    %v231 = vld [vmem:[#allocation5 + $0x358] sm:$0xff]
    %v232 = vld [vmem:[#allocation5 + $0x360] sm:$0xff]
    %v233 = vld [vmem:[#allocation5 + $0x368] sm:$0xff]
    %v234 = vld [vmem:[#allocation5 + $0x370] sm:$0xff]
    %v235 = vld [vmem:[#allocation5 + $0x378] sm:$0xff]
    %v236 = vld [vmem:[#allocation5 + $0x380] sm:$0xff]
    %v237 = vld [vmem:[#allocation5 + $0x388] sm:$0xff]
    %v238 = vld [vmem:[#allocation5 + $0x390] sm:$0xff]
    %v239 = vld [vmem:[#allocation5 + $0x398] sm:$0xff]
    %v240 = vld [vmem:[#allocation5 + $0x3a0] sm:$0xff]
    %v241 = vld [vmem:[#allocation5 + $0x3a8] sm:$0xff]
    %v242 = vld [vmem:[#allocation5 + $0x3b0] sm:$0xff]
    %v243 = vld [vmem:[#allocation5 + $0x3b8] sm:$0xff]
    %v244 = vld [vmem:[#allocation5 + $0x3c0] sm:$0xff]
    %v245 = vld [vmem:[#allocation5 + $0x3c8] sm:$0xff]
    %v246 = vld [vmem:[#allocation5 + $0x3d0] sm:$0xff]
    %v247 = vld [vmem:[#allocation5 + $0x3d8] sm:$0xff]
    %v248 = vld [vmem:[#allocation5 + $0x3e0] sm:$0xff]
    %v249 = vld [vmem:[#allocation5 + $0x3e8] sm:$0xff]
    %v250 = vld [vmem:[#allocation5 + $0x3f0] sm:$0xff]
    %v251 = vld [vmem:[#allocation5 + $0x3f8] sm:$0xff]
    %v252 = vld [vmem:[#allocation5 + $0x400] sm:$0xff]
    %v253 = vld [vmem:[#allocation5 + $0x408] sm:$0xff]
    %v254 = vld [vmem:[#allocation5 + $0x410] sm:$0xff]
    %v255 = vld [vmem:[#allocation5 + $0x418] sm:$0xff]
    %v256 = vld [vmem:[#allocation5 + $0x420] sm:$0xff]
    %v257 = vld [vmem:[#allocation5 + $0x428] sm:$0xff]
    %v258 = vld [vmem:[#allocation5 + $0x430] sm:$0xff]
    %v259 = vld [vmem:[#allocation5 + $0x438] sm:$0xff]
    %v260 = vld [vmem:[#allocation5 + $0x440] sm:$0xff]
    %v261 = vld [vmem:[#allocation5 + $0x448] sm:$0xff]
    %v262 = vld [vmem:[#allocation5 + $0x450] sm:$0xff]
    %v263 = vld [vmem:[#allocation5 + $0x458] sm:$0xff]
    %v264 = vld [vmem:[#allocation5 + $0x460] sm:$0xff]
    %v265 = vld [vmem:[#allocation5 + $0x468] sm:$0xff]
    %v266 = vld [vmem:[#allocation5 + $0x470] sm:$0xff]
    %v267 = vld [vmem:[#allocation5 + $0x478] sm:$0xff]
    %v268 = vld [vmem:[#allocation5 + $0x480] sm:$0xff]
    %v269 = vld [vmem:[#allocation5 + $0x488] sm:$0xff]
    %v270 = vld [vmem:[#allocation5 + $0x490] sm:$0xff]
    %v271 = vld [vmem:[#allocation5 + $0x498] sm:$0xff]
    %v272 = vld [vmem:[#allocation5 + $0x4a0] sm:$0xff]
    %v273 = vld [vmem:[#allocation5 + $0x4a8] sm:$0xff]
    %v274 = vld [vmem:[#allocation5 + $0x4b0] sm:$0xff]
    %v275 = vld [vmem:[#allocation5 + $0x4b8] sm:$0xff]
    %v276 = vld [vmem:[#allocation5 + $0x4c0] sm:$0xff]
    %v277 = vld [vmem:[#allocation5 + $0x4c8] sm:$0xff]
    %v278 = vld [vmem:[#allocation5 + $0x4d0] sm:$0xff]
    %v279 = vld [vmem:[#allocation5 + $0x4d8] sm:$0xff]
    %v280 = vld [vmem:[#allocation5 + $0x4e0] sm:$0xff]
    %v281 = vld [vmem:[#allocation5 + $0x4e8] sm:$0xff]
    %v282 = vld [vmem:[#allocation5 + $0x4f0] sm:$0xff]
    %v283 = vld [vmem:[#allocation5 + $0x4f8] sm:$0xff]
    %v284 = vld [vmem:[#allocation5 + $0x500] sm:$0xff]
    %v285 = vld [vmem:[#allocation5 + $0x508] sm:$0xff]
    %v286 = vld [vmem:[#allocation5 + $0x510] sm:$0xff]
    %v287 = vld [vmem:[#allocation5 + $0x518] sm:$0xff]
    %v288 = vld [vmem:[#allocation5 + $0x520] sm:$0xff]
    %v289 = vld [vmem:[#allocation5 + $0x528] sm:$0xff]
    %v290 = vld [vmem:[#allocation5 + $0x530] sm:$0xff]
    %v291 = vld [vmem:[#allocation5 + $0x538] sm:$0xff]
    %v292 = vld [vmem:[#allocation5 + $0x540] sm:$0xff]
    %v293 = vld [vmem:[#allocation5 + $0x548] sm:$0xff]
    %v294 = vld [vmem:[#allocation5 + $0x550] sm:$0xff]
    %v295 = vld [vmem:[#allocation5 + $0x558] sm:$0xff]
    %v296 = vld [vmem:[#allocation5 + $0x560] sm:$0xff]
    %v297 = vld [vmem:[#allocation5 + $0x568] sm:$0xff]
    %v298 = vld [vmem:[#allocation5 + $0x570] sm:$0xff]
    %v299 = vld [vmem:[#allocation5 + $0x578] sm:$0xff]
    %v300 = vld [vmem:[#allocation5 + $0x580] sm:$0xff]
    %v301 = vld [vmem:[#allocation5 + $0x588] sm:$0xff]
    %v302 = vld [vmem:[#allocation5 + $0x590] sm:$0xff]
    %v303 = vld [vmem:[#allocation5 + $0x598] sm:$0xff]
    %v304 = vld [vmem:[#allocation5 + $0x5a0] sm:$0xff]
    %v305 = vld [vmem:[#allocation5 + $0x5a8] sm:$0xff]
    %v306 = vld [vmem:[#allocation5 + $0x5b0] sm:$0xff]
    %v307 = vld [vmem:[#allocation5 + $0x5b8] sm:$0xff]
    %v308 = vld [vmem:[#allocation5 + $0x5c0] sm:$0xff]
    %v309 = vld [vmem:[#allocation5 + $0x5c8] sm:$0xff]
    %v310 = vld [vmem:[#allocation5 + $0x5d0] sm:$0xff]
    %v311 = vld [vmem:[#allocation5 + $0x5d8] sm:$0xff]
    %v312 = vld [vmem:[#allocation5 + $0x5e0] sm:$0xff]
    %v313 = vld [vmem:[#allocation5 + $0x5e8] sm:$0xff]
    %v314 = vld [vmem:[#allocation5 + $0x5f0] sm:$0xff]
    %v315 = vld [vmem:[#allocation5 + $0x5f8] sm:$0xff]
    %v316 = vld [vmem:[#allocation5 + $0x600] sm:$0xff]
    %v317 = vld [vmem:[#allocation5 + $0x608] sm:$0xff]
    %v318 = vld [vmem:[#allocation5 + $0x610] sm:$0xff]
    %v319 = vld [vmem:[#allocation5 + $0x618] sm:$0xff]
    %v320 = vld [vmem:[#allocation5 + $0x620] sm:$0xff]
    %v321 = vld [vmem:[#allocation5 + $0x628] sm:$0xff]
    %v322 = vld [vmem:[#allocation5 + $0x630] sm:$0xff]
    %v323 = vld [vmem:[#allocation5 + $0x638] sm:$0xff]
    %v324 = vld [vmem:[#allocation5 + $0x640] sm:$0xff]
    %v325 = vld [vmem:[#allocation5 + $0x648] sm:$0xff]
    %v326 = vld [vmem:[#allocation5 + $0x650] sm:$0xff]
    %v327 = vld [vmem:[#allocation5 + $0x658] sm:$0xff]
    %v328 = vld [vmem:[#allocation5 + $0x660] sm:$0xff]
    %v329 = vld [vmem:[#allocation5 + $0x668] sm:$0xff]
    %v330 = vld [vmem:[#allocation5 + $0x670] sm:$0xff]
    %v331 = vld [vmem:[#allocation5 + $0x678] sm:$0xff]
    %v332 = vld [vmem:[#allocation5 + $0x680] sm:$0xff]
    %v333 = vld [vmem:[#allocation5 + $0x688] sm:$0xff]
    %v334 = vld [vmem:[#allocation5 + $0x690] sm:$0xff]
    %v335 = vld [vmem:[#allocation5 + $0x698] sm:$0xff]
    %v336 = vld [vmem:[#allocation5 + $0x6a0] sm:$0xff]
    %v337 = vld [vmem:[#allocation5 + $0x6a8] sm:$0xff]
    %v338 = vld [vmem:[#allocation5 + $0x6b0] sm:$0xff]
    %v339 = vld [vmem:[#allocation5 + $0x6b8] sm:$0xff]
    %v340 = vld [vmem:[#allocation5 + $0x6c0] sm:$0xff]
    %v341 = vld [vmem:[#allocation5 + $0x6c8] sm:$0xff]
    %v342 = vld [vmem:[#allocation5 + $0x6d0] sm:$0xff]
    %v343 = vld [vmem:[#allocation5 + $0x6d8] sm:$0xff]
    %v344 = vld [vmem:[#allocation5 + $0x6e0] sm:$0xff]
    %v345 = vld [vmem:[#allocation5 + $0x6e8] sm:$0xff]
    %v346 = vld [vmem:[#allocation5 + $0x6f0] sm:$0xff]
    %v347 = vld [vmem:[#allocation5 + $0x6f8] sm:$0xff]
    %v348 = vld [vmem:[#allocation5 + $0x700] sm:$0xff]
    %v349 = vld [vmem:[#allocation5 + $0x708] sm:$0xff]
    %v350 = vld [vmem:[#allocation5 + $0x710] sm:$0xff]
    %v351 = vld [vmem:[#allocation5 + $0x718] sm:$0xff]
    %v352 = vld [vmem:[#allocation5 + $0x720] sm:$0xff]
    %v353 = vld [vmem:[#allocation5 + $0x728] sm:$0xff]
    %v354 = vld [vmem:[#allocation5 + $0x730] sm:$0xff]
    %v355 = vld [vmem:[#allocation5 + $0x738] sm:$0xff]
    %v356 = vld [vmem:[#allocation5 + $0x740] sm:$0xff]
    %v357 = vld [vmem:[#allocation5 + $0x748] sm:$0xff]
    %v358 = vld [vmem:[#allocation5 + $0x750] sm:$0xff]
    %v359 = vld [vmem:[#allocation5 + $0x758] sm:$0xff]
    %v360 = vld [vmem:[#allocation5 + $0x760] sm:$0xff]
    %v361 = vld [vmem:[#allocation5 + $0x768] sm:$0xff]
    %v362 = vld [vmem:[#allocation5 + $0x770] sm:$0xff]
    %v363 = vld [vmem:[#allocation5 + $0x778] sm:$0xff]
    %v364 = vld [vmem:[#allocation5 + $0x780] sm:$0xff]
    %v365 = vld [vmem:[#allocation5 + $0x788] sm:$0xff]
    %v366 = vld [vmem:[#allocation5 + $0x790] sm:$0xff]
    %v367 = vld [vmem:[#allocation5 + $0x798] sm:$0xff]
    %v368 = vld [vmem:[#allocation5 + $0x7a0] sm:$0xff]
    %v369 = vld [vmem:[#allocation5 + $0x7a8] sm:$0xff]
    %v370 = vld [vmem:[#allocation5 + $0x7b0] sm:$0xff]
    %v371 = vld [vmem:[#allocation5 + $0x7b8] sm:$0xff]
    %v372 = vld [vmem:[#allocation5 + $0x7c0] sm:$0xff]
    %v373 = vld [vmem:[#allocation5 + $0x7c8] sm:$0xff]
    %v374 = vld [vmem:[#allocation5 + $0x7d0] sm:$0xff]
    %v375 = vld [vmem:[#allocation5 + $0x7d8] sm:$0xff]
    %v376 = vld [vmem:[#allocation5 + $0x7e0] sm:$0xff]
    %v377 = vld [vmem:[#allocation5 + $0x7e8] sm:$0xff]
    %v378 = vld [vmem:[#allocation5 + $0x7f0] sm:$0xff]
    %v379 = vld [vmem:[#allocation5 + $0x7f8] sm:$0xff]
    %v380 = vld [vmem:[#allocation5 + $0x800] sm:$0xff]
    %v381 = vld [vmem:[#allocation5 + $0x808] sm:$0xff]
    %v382 = vld [vmem:[#allocation5 + $0x810] sm:$0xff]
    %v383 = vld [vmem:[#allocation5 + $0x818] sm:$0xff]
    %v384 = vld [vmem:[#allocation5 + $0x820] sm:$0xff]
    %v385 = vld [vmem:[#allocation5 + $0x828] sm:$0xff]
    %v386 = vld [vmem:[#allocation5 + $0x830] sm:$0xff]
    %v387 = vld [vmem:[#allocation5 + $0x838] sm:$0xff]
    %v388 = vld [vmem:[#allocation5 + $0x840] sm:$0xff]
    %v389 = vld [vmem:[#allocation5 + $0x848] sm:$0xff]
    %v390 = vld [vmem:[#allocation5 + $0x850] sm:$0xff]
    %v391 = vld [vmem:[#allocation5 + $0x858] sm:$0xff]
    %v392 = vld [vmem:[#allocation5 + $0x860] sm:$0xff]
    %v393 = vld [vmem:[#allocation5 + $0x868] sm:$0xff]
    %v394 = vld [vmem:[#allocation5 + $0x870] sm:$0xff]
    %v395 = vld [vmem:[#allocation5 + $0x878] sm:$0xff]
    %v396 = vld [vmem:[#allocation5 + $0x880] sm:$0xff]
    %v397 = vld [vmem:[#allocation5 + $0x888] sm:$0xff]
    %v398 = vld [vmem:[#allocation5 + $0x890] sm:$0xff]
    %v399 = vld [vmem:[#allocation5 + $0x898] sm:$0xff]
    %v400 = vld [vmem:[#allocation5 + $0x8a0] sm:$0xff]
    %v401 = vld [vmem:[#allocation5 + $0x8a8] sm:$0xff]
    %v402 = vld [vmem:[#allocation5 + $0x8b0] sm:$0xff]
    %v403 = vld [vmem:[#allocation5 + $0x8b8] sm:$0xff]
    %v404 = vld [vmem:[#allocation5 + $0x8c0] sm:$0xff]
    %v405 = vld [vmem:[#allocation5 + $0x8c8] sm:$0xff]
    %v406 = vld [vmem:[#allocation5 + $0x8d0] sm:$0xff]
    %v407 = vld [vmem:[#allocation5 + $0x8d8] sm:$0xff]
    %v408 = vld [vmem:[#allocation5 + $0x8e0] sm:$0xff]
    %v409 = vld [vmem:[#allocation5 + $0x8e8] sm:$0xff]
    %v410 = vld [vmem:[#allocation5 + $0x8f0] sm:$0xff]
    %v411 = vld [vmem:[#allocation5 + $0x8f8] sm:$0xff]
    %v412 = vld [vmem:[#allocation5 + $0x900] sm:$0xff]
    %v413 = vld [vmem:[#allocation5 + $0x908] sm:$0xff]
    %v414 = vld [vmem:[#allocation5 + $0x910] sm:$0xff]
    %v415 = vld [vmem:[#allocation5 + $0x918] sm:$0xff]
    %v416 = vld [vmem:[#allocation5 + $0x920] sm:$0xff]
    %v417 = vld [vmem:[#allocation5 + $0x928] sm:$0xff]
    %v418 = vld [vmem:[#allocation5 + $0x930] sm:$0xff]
    %v419 = vld [vmem:[#allocation5 + $0x938] sm:$0xff]
    %v420 = vld [vmem:[#allocation5 + $0x940] sm:$0xff]
    %v421 = vld [vmem:[#allocation5 + $0x948] sm:$0xff]
    %v422 = vld [vmem:[#allocation5 + $0x950] sm:$0xff]
    %v423 = vld [vmem:[#allocation5 + $0x958] sm:$0xff]
    %v424 = vld [vmem:[#allocation5 + $0x960] sm:$0xff]
    %v425 = vld [vmem:[#allocation5 + $0x968] sm:$0xff]
    %v426 = vld [vmem:[#allocation5 + $0x970] sm:$0xff]
    %v427 = vld [vmem:[#allocation5 + $0x978] sm:$0xff]
    %v428 = vld [vmem:[#allocation5 + $0x980] sm:$0xff]
    %v429 = vld [vmem:[#allocation5 + $0x988] sm:$0xff]
    %v430 = vld [vmem:[#allocation5 + $0x990] sm:$0xff]
    %v431 = vld [vmem:[#allocation5 + $0x998] sm:$0xff]
    %v432 = vld [vmem:[#allocation5 + $0x9a0] sm:$0xff]
    %v433 = vld [vmem:[#allocation5 + $0x9a8] sm:$0xff]
    %v434 = vld [vmem:[#allocation5 + $0x9b0] sm:$0xff]
    %v435 = vld [vmem:[#allocation5 + $0x9b8] sm:$0xff]
    %v436 = vld [vmem:[#allocation5 + $0x9c0] sm:$0xff]
    %v437 = vld [vmem:[#allocation5 + $0x9c8] sm:$0xff]
    %v438 = vld [vmem:[#allocation5 + $0x9d0] sm:$0xff]
    %v439 = vld [vmem:[#allocation5 + $0x9d8] sm:$0xff]
    %v440 = vld [vmem:[#allocation5 + $0x9e0] sm:$0xff]
    %v441 = vld [vmem:[#allocation5 + $0x9e8] sm:$0xff]
    %v442 = vld [vmem:[#allocation5 + $0x9f0] sm:$0xff]
    %v443 = vld [vmem:[#allocation5 + $0x9f8] sm:$0xff]
    %v444 = vld [vmem:[#allocation5 + $0xa00] sm:$0xff]
    %v445 = vld [vmem:[#allocation5 + $0xa08] sm:$0xff]
    %v446 = vld [vmem:[#allocation5 + $0xa10] sm:$0xff]
    %v447 = vld [vmem:[#allocation5 + $0xa18] sm:$0xff]
    %v448 = vld [vmem:[#allocation5 + $0xa20] sm:$0xff]
    %v449 = vld [vmem:[#allocation5 + $0xa28] sm:$0xff]
    %v450 = vld [vmem:[#allocation5 + $0xa30] sm:$0xff]
    %v451 = vld [vmem:[#allocation5 + $0xa38] sm:$0xff]
    %v452 = vld [vmem:[#allocation5 + $0xa40] sm:$0xff]
    %v453 = vld [vmem:[#allocation5 + $0xa48] sm:$0xff]
    %v454 = vld [vmem:[#allocation5 + $0xa50] sm:$0xff]
    %v455 = vld [vmem:[#allocation5 + $0xa58] sm:$0xff]
    %v456 = vld [vmem:[#allocation5 + $0xa60] sm:$0xff]
    %v457 = vld [vmem:[#allocation5 + $0xa68] sm:$0xff]
    %v458 = vld [vmem:[#allocation5 + $0xa70] sm:$0xff]
    %v459 = vld [vmem:[#allocation5 + $0xa78] sm:$0xff]
    %v460 = vld [vmem:[#allocation5 + $0xa80] sm:$0xff]
    %v461 = vld [vmem:[#allocation5 + $0xa88] sm:$0xff]
    %v462 = vld [vmem:[#allocation5 + $0xa90] sm:$0xff]
    %v463 = vld [vmem:[#allocation5 + $0xa98] sm:$0xff]
    %v464 = vld [vmem:[#allocation5 + $0xaa0] sm:$0xff]
    %v465 = vld [vmem:[#allocation5 + $0xaa8] sm:$0xff]
    %v466 = vld [vmem:[#allocation5 + $0xab0] sm:$0xff]
    %v467 = vld [vmem:[#allocation5 + $0xab8] sm:$0xff]
    %v468 = vld [vmem:[#allocation5 + $0xac0] sm:$0xff]
    %v469 = vld [vmem:[#allocation5 + $0xac8] sm:$0xff]
    %v470 = vld [vmem:[#allocation5 + $0xad0] sm:$0xff]
    %v471 = vld [vmem:[#allocation5 + $0xad8] sm:$0xff]
    %v472 = vld [vmem:[#allocation5 + $0xae0] sm:$0xff]
    %v473 = vld [vmem:[#allocation5 + $0xae8] sm:$0xff]
    %v474 = vld [vmem:[#allocation5 + $0xaf0] sm:$0xff]
    %v475 = vld [vmem:[#allocation5 + $0xaf8] sm:$0xff]
    %v476 = vld [vmem:[#allocation5 + $0xb00] sm:$0xff]
    %v477 = vld [vmem:[#allocation5 + $0xb08] sm:$0xff]
    %v478 = vld [vmem:[#allocation5 + $0xb10] sm:$0xff]
    %v479 = vld [vmem:[#allocation5 + $0xb18] sm:$0xff]
    %v480 = vld [vmem:[#allocation5 + $0xb20] sm:$0xff]
    %v481 = vld [vmem:[#allocation5 + $0xb28] sm:$0xff]
    %v482 = vld [vmem:[#allocation5 + $0xb30] sm:$0xff]
    %v483 = vld [vmem:[#allocation5 + $0xb38] sm:$0xff]
    %v484 = vld [vmem:[#allocation5 + $0xb40] sm:$0xff]
    %v485 = vld [vmem:[#allocation5 + $0xb48] sm:$0xff]
    %v486 = vld [vmem:[#allocation5 + $0xb50] sm:$0xff]
    %v487 = vld [vmem:[#allocation5 + $0xb58] sm:$0xff]
    %v488 = vld [vmem:[#allocation5 + $0xb60] sm:$0xff]
    %v489 = vld [vmem:[#allocation5 + $0xb68] sm:$0xff]
    %v490 = vld [vmem:[#allocation5 + $0xb70] sm:$0xff]
    %v491 = vld [vmem:[#allocation5 + $0xb78] sm:$0xff]
    %v492 = vld [vmem:[#allocation5 + $0xb80] sm:$0xff]
    %v493 = vld [vmem:[#allocation5 + $0xb88] sm:$0xff]
    %v494 = vld [vmem:[#allocation5 + $0xb90] sm:$0xff]
    %v495 = vld [vmem:[#allocation5 + $0xb98] sm:$0xff]
    %v496 = vld [vmem:[#allocation5 + $0xba0] sm:$0xff]
    %v497 = vld [vmem:[#allocation5 + $0xba8] sm:$0xff]
    %v498 = vld [vmem:[#allocation5 + $0xbb0] sm:$0xff]
    %v499 = vld [vmem:[#allocation5 + $0xbb8] sm:$0xff]
    %v500 = vld [vmem:[#allocation5 + $0xbc0] sm:$0xff]
    %v501 = vld [vmem:[#allocation5 + $0xbc8] sm:$0xff]
    %v502 = vld [vmem:[#allocation5 + $0xbd0] sm:$0xff]
    %v503 = vld [vmem:[#allocation5 + $0xbd8] sm:$0xff]
    %v504 = vld [vmem:[#allocation5 + $0xbe0] sm:$0xff]
    %v505 = vld [vmem:[#allocation5 + $0xbe8] sm:$0xff]
    %v506 = vld [vmem:[#allocation5 + $0xbf0] sm:$0xff]
    %v507 = vld [vmem:[#allocation5 + $0xbf8] sm:$0xff]
    %v508 = vld [vmem:[#allocation5 + $0xc00] sm:$0xff]
    %v509 = vld [vmem:[#allocation5 + $0xc08] sm:$0xff]
    %v510 = vld [vmem:[#allocation5 + $0xc10] sm:$0xff]
    %v511 = vld [vmem:[#allocation5 + $0xc18] sm:$0xff]
    %v512 = vld [vmem:[#allocation5 + $0xc20] sm:$0xff]
    %v513 = vld [vmem:[#allocation5 + $0xc28] sm:$0xff]
    %v514 = vld [vmem:[#allocation5 + $0xc30] sm:$0xff]
    %v515 = vld [vmem:[#allocation5 + $0xc38] sm:$0xff]
    %v516 = vld [vmem:[#allocation5 + $0xc40] sm:$0xff]
    %v517 = vld [vmem:[#allocation5 + $0xc48] sm:$0xff]
    %v518 = vld [vmem:[#allocation5 + $0xc50] sm:$0xff]
    %v519 = vld [vmem:[#allocation5 + $0xc58] sm:$0xff]
    %v520 = vld [vmem:[#allocation5 + $0xc60] sm:$0xff]
    %v521 = vld [vmem:[#allocation5 + $0xc68] sm:$0xff]
    %v522 = vld [vmem:[#allocation5 + $0xc70] sm:$0xff]
    %v523 = vld [vmem:[#allocation5 + $0xc78] sm:$0xff]
    %v524 = vld [vmem:[#allocation5 + $0xc80] sm:$0xff]
    %v525 = vld [vmem:[#allocation5 + $0xc88] sm:$0xff]
    %v526 = vld [vmem:[#allocation5 + $0xc90] sm:$0xff]
    %v527 = vld [vmem:[#allocation5 + $0xc98] sm:$0xff]
    %v528 = vld [vmem:[#allocation5 + $0xca0] sm:$0xff]
    %v529 = vld [vmem:[#allocation5 + $0xca8] sm:$0xff]
    %v530 = vld [vmem:[#allocation5 + $0xcb0] sm:$0xff]
    %v531 = vld [vmem:[#allocation5 + $0xcb8] sm:$0xff]
    %v532 = vld [vmem:[#allocation5 + $0xcc0] sm:$0xff]
    %v533 = vld [vmem:[#allocation5 + $0xcc8] sm:$0xff]
    %v534 = vld [vmem:[#allocation5 + $0xcd0] sm:$0xff]
    %v535 = vld [vmem:[#allocation5 + $0xcd8] sm:$0xff]
    %v536 = vld [vmem:[#allocation5 + $0xce0] sm:$0xff]
    %v537 = vld [vmem:[#allocation5 + $0xce8] sm:$0xff]
    %v538 = vld [vmem:[#allocation5 + $0xcf0] sm:$0xff]
    %v539 = vld [vmem:[#allocation5 + $0xcf8] sm:$0xff]
    %v540 = vld [vmem:[#allocation5 + $0xd00] sm:$0xff]
    %v541 = vld [vmem:[#allocation5 + $0xd08] sm:$0xff]
    %v542 = vld [vmem:[#allocation5 + $0xd10] sm:$0xff]
    %v543 = vld [vmem:[#allocation5 + $0xd18] sm:$0xff]
    %v544 = vld [vmem:[#allocation5 + $0xd20] sm:$0xff]
    %v545 = vld [vmem:[#allocation5 + $0xd28] sm:$0xff]
    %v546 = vld [vmem:[#allocation5 + $0xd30] sm:$0xff]
    %v547 = vld [vmem:[#allocation5 + $0xd38] sm:$0xff]
    %v548 = vld [vmem:[#allocation5 + $0xd40] sm:$0xff]
    %v549 = vld [vmem:[#allocation5 + $0xd48] sm:$0xff]
    %v550 = vld [vmem:[#allocation5 + $0xd50] sm:$0xff]
    %v551 = vld [vmem:[#allocation5 + $0xd58] sm:$0xff]
    %v552 = vld [vmem:[#allocation5 + $0xd60] sm:$0xff]
    %v553 = vld [vmem:[#allocation5 + $0xd68] sm:$0xff]
    %v554 = vld [vmem:[#allocation5 + $0xd70] sm:$0xff]
    %v555 = vld [vmem:[#allocation5 + $0xd78] sm:$0xff]
    %v556 = vld [vmem:[#allocation5 + $0xd80] sm:$0xff]
    %v557 = vld [vmem:[#allocation5 + $0xd88] sm:$0xff]
    %v558 = vld [vmem:[#allocation5 + $0xd90] sm:$0xff]
    %v559 = vld [vmem:[#allocation5 + $0xd98] sm:$0xff]
    %v560 = vld [vmem:[#allocation5 + $0xda0] sm:$0xff]
    %v561 = vld [vmem:[#allocation5 + $0xda8] sm:$0xff]
    %v562 = vld [vmem:[#allocation5 + $0xdb0] sm:$0xff]
    %v563 = vld [vmem:[#allocation5 + $0xdb8] sm:$0xff]
    %v564 = vld [vmem:[#allocation5 + $0xdc0] sm:$0xff]
    %v565 = vld [vmem:[#allocation5 + $0xdc8] sm:$0xff]
    %v566 = vld [vmem:[#allocation5 + $0xdd0] sm:$0xff]
    %v567 = vld [vmem:[#allocation5 + $0xdd8] sm:$0xff]
    %v568 = vld [vmem:[#allocation5 + $0xde0] sm:$0xff]
    %v569 = vld [vmem:[#allocation5 + $0xde8] sm:$0xff]
    %v570 = vld [vmem:[#allocation5 + $0xdf0] sm:$0xff]
    %v571 = vld [vmem:[#allocation5 + $0xdf8] sm:$0xff]
    %v572 = vld [vmem:[#allocation5 + $0xe00] sm:$0xff]
    %v573 = vld [vmem:[#allocation5 + $0xe08] sm:$0xff]
    %v574 = vld [vmem:[#allocation5 + $0xe10] sm:$0xff]
    %v575 = vld [vmem:[#allocation5 + $0xe18] sm:$0xff]
    %v576 = vld [vmem:[#allocation5 + $0xe20] sm:$0xff]
    %v577 = vld [vmem:[#allocation5 + $0xe28] sm:$0xff]
    %v578 = vld [vmem:[#allocation5 + $0xe30] sm:$0xff]
    %v579 = vld [vmem:[#allocation5 + $0xe38] sm:$0xff]
    %v580 = vld [vmem:[#allocation5 + $0xe40] sm:$0xff]
    %v581 = vld [vmem:[#allocation5 + $0xe48] sm:$0xff]
    %v582 = vld [vmem:[#allocation5 + $0xe50] sm:$0xff]
    %v583 = vld [vmem:[#allocation5 + $0xe58] sm:$0xff]
    %v584 = vld [vmem:[#allocation5 + $0xe60] sm:$0xff]
    %v585 = vld [vmem:[#allocation5 + $0xe68] sm:$0xff]
    %v586 = vld [vmem:[#allocation5 + $0xe70] sm:$0xff]
    %v587 = vld [vmem:[#allocation5 + $0xe78] sm:$0xff]
    %v588 = vld [vmem:[#allocation5 + $0xe80] sm:$0xff]
    %v589 = vld [vmem:[#allocation5 + $0xe88] sm:$0xff]
    %v590 = vld [vmem:[#allocation5 + $0xe90] sm:$0xff]
    %v591 = vld [vmem:[#allocation5 + $0xe98] sm:$0xff]
    %v592 = vld [vmem:[#allocation5 + $0xea0] sm:$0xff]
    %v593 = vld [vmem:[#allocation5 + $0xea8] sm:$0xff]
    %v594 = vld [vmem:[#allocation5 + $0xeb0] sm:$0xff]
    %v595 = vld [vmem:[#allocation5 + $0xeb8] sm:$0xff]
    %v596 = vld [vmem:[#allocation5 + $0xec0] sm:$0xff]
    %v597 = vld [vmem:[#allocation5 + $0xec8] sm:$0xff]
    %v598 = vld [vmem:[#allocation5 + $0xed0] sm:$0xff]
    %v599 = vld [vmem:[#allocation5 + $0xed8] sm:$0xff]
    %v600 = vld [vmem:[#allocation5 + $0xee0] sm:$0xff]
    %v601 = vld [vmem:[#allocation5 + $0xee8] sm:$0xff]
    %v602 = vld [vmem:[#allocation5 + $0xef0] sm:$0xff]
    %v603 = vld [vmem:[#allocation5 + $0xef8] sm:$0xff]
    %v604 = vld [vmem:[#allocation5 + $0xf00] sm:$0xff]
    %v605 = vld [vmem:[#allocation5 + $0xf08] sm:$0xff]
    %v606 = vld [vmem:[#allocation5 + $0xf10] sm:$0xff]
    %v607 = vld [vmem:[#allocation5 + $0xf18] sm:$0xff]
    %v608 = vld [vmem:[#allocation5 + $0xf20] sm:$0xff]
    %v609 = vld [vmem:[#allocation5 + $0xf28] sm:$0xff]
    %v610 = vld [vmem:[#allocation5 + $0xf30] sm:$0xff]
    %v611 = vld [vmem:[#allocation5 + $0xf38] sm:$0xff]
    %v612 = vld [vmem:[#allocation5 + $0xf40] sm:$0xff]
    %v613 = vld [vmem:[#allocation5 + $0xf48] sm:$0xff]
    %v614 = vld [vmem:[#allocation5 + $0xf50] sm:$0xff]
    %v615 = vld [vmem:[#allocation5 + $0xf58] sm:$0xff]
    %v616 = vld [vmem:[#allocation5 + $0xf60] sm:$0xff]
    %v617 = vld [vmem:[#allocation5 + $0xf68] sm:$0xff]
    %v618 = vld [vmem:[#allocation5 + $0xf70] sm:$0xff]
    %v619 = vld [vmem:[#allocation5 + $0xf78] sm:$0xff]
    %v620 = vld [vmem:[#allocation5 + $0xf80] sm:$0xff]
    %v621 = vld [vmem:[#allocation5 + $0xf88] sm:$0xff]
    %v622 = vld [vmem:[#allocation5 + $0xf90] sm:$0xff]
    %v623 = vld [vmem:[#allocation5 + $0xf98] sm:$0xff]
    %v624 = vld [vmem:[#allocation5 + $0xfa0] sm:$0xff]
    %v625 = vld [vmem:[#allocation5 + $0xfa8] sm:$0xff]
    %v626 = vld [vmem:[#allocation5 + $0xfb0] sm:$0xff]
    %v627 = vld [vmem:[#allocation5 + $0xfb8] sm:$0xff]
    %v628 = vld [vmem:[#allocation5 + $0xfc0] sm:$0xff]
    %v629 = vld [vmem:[#allocation5 + $0xfc8] sm:$0xff]
    %v630 = vld [vmem:[#allocation5 + $0xfd0] sm:$0xff]
    %v631 = vld [vmem:[#allocation5 + $0xfd8] sm:$0xff]
    %v632 = vld [vmem:[#allocation5 + $0xfe0] sm:$0xff]
    %v633 = vld [vmem:[#allocation5 + $0xfe8] sm:$0xff]
    %v634 = vld [vmem:[#allocation5 + $0xff0] sm:$0xff]
    %v635 = vld [vmem:[#allocation5 + $0xff8] sm:$0xff]
    %v636 = vld [vmem:[#allocation5 + $0x1000] sm:$0xff]
    %v637 = vld [vmem:[#allocation5 + $0x1008] sm:$0xff]
    %v638 = vld [vmem:[#allocation5 + $0x1010] sm:$0xff]
    %v639 = vld [vmem:[#allocation5 + $0x1018] sm:$0xff]
    %v640 = vld [vmem:[#allocation5 + $0x1020] sm:$0xff]
    %v641 = vld [vmem:[#allocation5 + $0x1028] sm:$0xff]
    %v642 = vld [vmem:[#allocation5 + $0x1030] sm:$0xff]
    %v643 = vld [vmem:[#allocation5 + $0x1038] sm:$0xff]
    %v644 = vld [vmem:[#allocation5 + $0x1040] sm:$0xff]
    %v645 = vld [vmem:[#allocation5 + $0x1048] sm:$0xff]
    %v646 = vld [vmem:[#allocation5 + $0x1050] sm:$0xff]
    %v647 = vld [vmem:[#allocation5 + $0x1058] sm:$0xff]
    %v648 = vld [vmem:[#allocation5 + $0x1060] sm:$0xff]
    %v649 = vld [vmem:[#allocation5 + $0x1068] sm:$0xff]
    %v650 = vld [vmem:[#allocation5 + $0x1070] sm:$0xff]
    %v651 = vld [vmem:[#allocation5 + $0x1078] sm:$0xff]
    %v652 = vld [vmem:[#allocation5 + $0x1080] sm:$0xff]
    %v653 = vld [vmem:[#allocation5 + $0x1088] sm:$0xff]
    %v654 = vld [vmem:[#allocation5 + $0x1090] sm:$0xff]
    %v655 = vld [vmem:[#allocation5 + $0x1098] sm:$0xff]
    %v656 = vld [vmem:[#allocation5 + $0x10a0] sm:$0xff]
    %v657 = vld [vmem:[#allocation5 + $0x10a8] sm:$0xff]
    %v658 = vld [vmem:[#allocation5 + $0x10b0] sm:$0xff]
    %v659 = vld [vmem:[#allocation5 + $0x10b8] sm:$0xff]
    %v660 = vld [vmem:[#allocation5 + $0x10c0] sm:$0xff]
    %v661 = vld [vmem:[#allocation5 + $0x10c8] sm:$0xff]
    %v662 = vld [vmem:[#allocation5 + $0x10d0] sm:$0xff]
    %v663 = vld [vmem:[#allocation5 + $0x10d8] sm:$0xff]
    %v664 = vld [vmem:[#allocation5 + $0x10e0] sm:$0xff]
    %v665 = vld [vmem:[#allocation5 + $0x10e8] sm:$0xff]
    %v666 = vld [vmem:[#allocation5 + $0x10f0] sm:$0xff]
    %v667 = vld [vmem:[#allocation5 + $0x10f8] sm:$0xff]
    %v668 = vld [vmem:[#allocation5 + $0x1100] sm:$0xff]
    %v669 = vld [vmem:[#allocation5 + $0x1108] sm:$0xff]
    %v670 = vld [vmem:[#allocation5 + $0x1110] sm:$0xff]
    %v671 = vld [vmem:[#allocation5 + $0x1118] sm:$0xff]
    %v672 = vld [vmem:[#allocation5 + $0x1120] sm:$0xff]
    %v673 = vld [vmem:[#allocation5 + $0x1128] sm:$0xff]
    %v674 = vld [vmem:[#allocation5 + $0x1130] sm:$0xff]
    %v675 = vld [vmem:[#allocation5 + $0x1138] sm:$0xff]
    %v676 = vld [vmem:[#allocation5 + $0x1140] sm:$0xff]
    %v677 = vld [vmem:[#allocation5 + $0x1148] sm:$0xff]
    %v678 = vld [vmem:[#allocation5 + $0x1150] sm:$0xff]
    %v679 = vld [vmem:[#allocation5 + $0x1158] sm:$0xff]
    %v680 = vld [vmem:[#allocation5 + $0x1160] sm:$0xff]
    %v681 = vld [vmem:[#allocation5 + $0x1168] sm:$0xff]
    %v682 = vld [vmem:[#allocation5 + $0x1170] sm:$0xff]
    %v683 = vld [vmem:[#allocation5 + $0x1178] sm:$0xff]
    %v684 = vld [vmem:[#allocation5 + $0x1180] sm:$0xff]
    %v685 = vld [vmem:[#allocation5 + $0x1188] sm:$0xff]
    %v686 = vld [vmem:[#allocation5 + $0x1190] sm:$0xff]
    %v687 = vld [vmem:[#allocation5 + $0x1198] sm:$0xff]
    %v688 = vld [vmem:[#allocation5 + $0x11a0] sm:$0xff]
    %v689 = vld [vmem:[#allocation5 + $0x11a8] sm:$0xff]
    %v690 = vld [vmem:[#allocation5 + $0x11b0] sm:$0xff]
    %v691 = vld [vmem:[#allocation5 + $0x11b8] sm:$0xff]
    %v692 = vld [vmem:[#allocation5 + $0x11c0] sm:$0xff]
    %v693 = vld [vmem:[#allocation5 + $0x11c8] sm:$0xff]
    %v694 = vld [vmem:[#allocation5 + $0x11d0] sm:$0xff]
    %v695 = vld [vmem:[#allocation5 + $0x11d8] sm:$0xff]
    %v696 = vld [vmem:[#allocation5 + $0x11e0] sm:$0xff]
    %v697 = vld [vmem:[#allocation5 + $0x11e8] sm:$0xff]
    %v698 = vld [vmem:[#allocation5 + $0x11f0] sm:$0xff]
    %v699 = vld [vmem:[#allocation5 + $0x11f8] sm:$0xff]
    %v700 = vld [vmem:[#allocation5 + $0x1200] sm:$0xff]
    %v701 = vld [vmem:[#allocation5 + $0x1208] sm:$0xff]
    %v702 = vld [vmem:[#allocation5 + $0x1210] sm:$0xff]
    %v703 = vld [vmem:[#allocation5 + $0x1218] sm:$0xff]
    %v704 = vld [vmem:[#allocation5 + $0x1220] sm:$0xff]
    %v705 = vld [vmem:[#allocation5 + $0x1228] sm:$0xff]
    %v706 = vld [vmem:[#allocation5 + $0x1230] sm:$0xff]
    %v707 = vld [vmem:[#allocation5 + $0x1238] sm:$0xff]
    %v708 = vld [vmem:[#allocation5 + $0x1240] sm:$0xff]
    %v709 = vld [vmem:[#allocation5 + $0x1248] sm:$0xff]
    %v710 = vld [vmem:[#allocation5 + $0x1250] sm:$0xff]
    %v711 = vld [vmem:[#allocation5 + $0x1258] sm:$0xff]
    %v712 = vld [vmem:[#allocation5 + $0x1260] sm:$0xff]
    %v713 = vld [vmem:[#allocation5 + $0x1268] sm:$0xff]
    %v714 = vld [vmem:[#allocation5 + $0x1270] sm:$0xff]
    %v715 = vld [vmem:[#allocation5 + $0x1278] sm:$0xff]
    %v716 = vld [vmem:[#allocation5 + $0x1280] sm:$0xff]
    %v717 = vld [vmem:[#allocation5 + $0x1288] sm:$0xff]
    %v718 = vld [vmem:[#allocation5 + $0x1290] sm:$0xff]
    %v719 = vld [vmem:[#allocation5 + $0x1298] sm:$0xff]
    %v720 = vld [vmem:[#allocation5 + $0x12a0] sm:$0xff]
    %v721 = vld [vmem:[#allocation5 + $0x12a8] sm:$0xff]
    %v722 = vld [vmem:[#allocation5 + $0x12b0] sm:$0xff]
    %v723 = vld [vmem:[#allocation5 + $0x12b8] sm:$0xff]
    %v724 = vld [vmem:[#allocation5 + $0x12c0] sm:$0xff]
    %v725 = vld [vmem:[#allocation5 + $0x12c8] sm:$0xff]
    %v726 = vld [vmem:[#allocation5 + $0x12d0] sm:$0xff]
    %v727 = vld [vmem:[#allocation5 + $0x12d8] sm:$0xff]
    %v728 = vld [vmem:[#allocation5 + $0x12e0] sm:$0xff]
    %v729 = vld [vmem:[#allocation5 + $0x12e8] sm:$0xff]
    %v730 = vld [vmem:[#allocation5 + $0x12f0] sm:$0xff]
    %v731 = vld [vmem:[#allocation5 + $0x12f8] sm:$0xff]
    %v732 = vld [vmem:[#allocation5 + $0x1300] sm:$0xff]
    %v733 = vld [vmem:[#allocation5 + $0x1308] sm:$0xff]
    %v734 = vld [vmem:[#allocation5 + $0x1310] sm:$0xff]
    %v735 = vld [vmem:[#allocation5 + $0x1318] sm:$0xff]
    %v736 = vld [vmem:[#allocation5 + $0x1320] sm:$0xff]
    %v737 = vld [vmem:[#allocation5 + $0x1328] sm:$0xff]
    %v738 = vld [vmem:[#allocation5 + $0x1330] sm:$0xff]
    %v739 = vld [vmem:[#allocation5 + $0x1338] sm:$0xff]
    %v740 = vld [vmem:[#allocation5 + $0x1340] sm:$0xff]
    %v741 = vld [vmem:[#allocation5 + $0x1348] sm:$0xff]
    %v742 = vld [vmem:[#allocation5 + $0x1350] sm:$0xff]
    %v743 = vld [vmem:[#allocation5 + $0x1358] sm:$0xff]
    %v744 = vld [vmem:[#allocation5 + $0x1360] sm:$0xff]
    %v745 = vld [vmem:[#allocation5 + $0x1368] sm:$0xff]
    %v746 = vld [vmem:[#allocation5 + $0x1370] sm:$0xff]
    %v747 = vld [vmem:[#allocation5 + $0x1378] sm:$0xff]
    %v748 = vld [vmem:[#allocation5 + $0x1380] sm:$0xff]
    %v749 = vld [vmem:[#allocation5 + $0x1388] sm:$0xff]
    %v750 = vld [vmem:[#allocation5 + $0x1390] sm:$0xff]
    %v751 = vld [vmem:[#allocation5 + $0x1398] sm:$0xff]
    %v752 = vld [vmem:[#allocation5 + $0x13a0] sm:$0xff]
    %v753 = vld [vmem:[#allocation5 + $0x13a8] sm:$0xff]
    %v754 = vld [vmem:[#allocation5 + $0x13b0] sm:$0xff]
    %v755 = vld [vmem:[#allocation5 + $0x13b8] sm:$0xff]
    %v756 = vld [vmem:[#allocation5 + $0x13c0] sm:$0xff]
    %v757 = vld [vmem:[#allocation5 + $0x13c8] sm:$0xff]
    %v758 = vld [vmem:[#allocation5 + $0x13d0] sm:$0xff]
    %v759 = vld [vmem:[#allocation5 + $0x13d8] sm:$0xff]
    %v760 = vld [vmem:[#allocation5 + $0x13e0] sm:$0xff]
    %v761 = vld [vmem:[#allocation5 + $0x13e8] sm:$0xff]
    %v762 = vld [vmem:[#allocation5 + $0x13f0] sm:$0xff]
    %v763 = vld [vmem:[#allocation5 + $0x13f8] sm:$0xff]
    %v764 = vld [vmem:[#allocation5 + $0x1400] sm:$0xff]
    %v765 = vld [vmem:[#allocation5 + $0x1408] sm:$0xff]
    %v766 = vld [vmem:[#allocation5 + $0x1410] sm:$0xff]
    %v767 = vld [vmem:[#allocation5 + $0x1418] sm:$0xff]
    %v768 = vld [vmem:[#allocation5 + $0x1420] sm:$0xff]
    %v769 = vld [vmem:[#allocation5 + $0x1428] sm:$0xff]
    %v770 = vld [vmem:[#allocation5 + $0x1430] sm:$0xff]
    %v771 = vld [vmem:[#allocation5 + $0x1438] sm:$0xff]
    %v772 = vld [vmem:[#allocation5 + $0x1440] sm:$0xff]
    %v773 = vld [vmem:[#allocation5 + $0x1448] sm:$0xff]
    %v774 = vld [vmem:[#allocation5 + $0x1450] sm:$0xff]
    %v775 = vld [vmem:[#allocation5 + $0x1458] sm:$0xff]
    %v776 = vld [vmem:[#allocation5 + $0x1460] sm:$0xff]
    %v777 = vld [vmem:[#allocation5 + $0x1468] sm:$0xff]
    %v778 = vld [vmem:[#allocation5 + $0x1470] sm:$0xff]
    %v779 = vld [vmem:[#allocation5 + $0x1478] sm:$0xff]
    %v780 = vld [vmem:[#allocation5 + $0x1480] sm:$0xff]
    %v781 = vld [vmem:[#allocation5 + $0x1488] sm:$0xff]
    %v782 = vld [vmem:[#allocation5 + $0x1490] sm:$0xff]
    %v783 = vld [vmem:[#allocation5 + $0x1498] sm:$0xff]
    %v784 = vld [vmem:[#allocation5 + $0x14a0] sm:$0xff]
    %v785 = vld [vmem:[#allocation5 + $0x14a8] sm:$0xff]
    %v786 = vld [vmem:[#allocation5 + $0x14b0] sm:$0xff]
    %v787 = vld [vmem:[#allocation5 + $0x14b8] sm:$0xff]
    %v788 = vld [vmem:[#allocation5 + $0x14c0] sm:$0xff]
    %v789 = vld [vmem:[#allocation5 + $0x14c8] sm:$0xff]
    %v790 = vld [vmem:[#allocation5 + $0x14d0] sm:$0xff]
    %v791 = vld [vmem:[#allocation5 + $0x14d8] sm:$0xff]
    %v792 = vld [vmem:[#allocation5 + $0x14e0] sm:$0xff]
    %v793 = vld [vmem:[#allocation5 + $0x14e8] sm:$0xff]
    %v794 = vld [vmem:[#allocation5 + $0x14f0] sm:$0xff]
    %v795 = vld [vmem:[#allocation5 + $0x14f8] sm:$0xff]
    %v796 = vld [vmem:[#allocation5 + $0x1500] sm:$0xff]
    %v797 = vld [vmem:[#allocation5 + $0x1508] sm:$0xff]
    %v798 = vld [vmem:[#allocation5 + $0x1510] sm:$0xff]
    %v799 = vld [vmem:[#allocation5 + $0x1518] sm:$0xff]
    %v800 = vld [vmem:[#allocation5 + $0x1520] sm:$0xff]
    %v801 = vld [vmem:[#allocation5 + $0x1528] sm:$0xff]
    %v802 = vld [vmem:[#allocation5 + $0x1530] sm:$0xff]
    %v803 = vld [vmem:[#allocation5 + $0x1538] sm:$0xff]
    %v804 = vld [vmem:[#allocation5 + $0x1540] sm:$0xff]
    %v805 = vld [vmem:[#allocation5 + $0x1548] sm:$0xff]
    %v806 = vld [vmem:[#allocation5 + $0x1550] sm:$0xff]
    %v807 = vld [vmem:[#allocation5 + $0x1558] sm:$0xff]
    %v808 = vld [vmem:[#allocation5 + $0x1560] sm:$0xff]
    %v809 = vld [vmem:[#allocation5 + $0x1568] sm:$0xff]
    %v810 = vld [vmem:[#allocation5 + $0x1570] sm:$0xff]
    %v811 = vld [vmem:[#allocation5 + $0x1578] sm:$0xff]
    %v812 = vld [vmem:[#allocation5 + $0x1580] sm:$0xff]
    %v813 = vld [vmem:[#allocation5 + $0x1588] sm:$0xff]
    %v814 = vld [vmem:[#allocation5 + $0x1590] sm:$0xff]
    %v815 = vld [vmem:[#allocation5 + $0x1598] sm:$0xff]
    %v816 = vld [vmem:[#allocation5 + $0x15a0] sm:$0xff]
    %v817 = vld [vmem:[#allocation5 + $0x15a8] sm:$0xff]
    %v818 = vld [vmem:[#allocation5 + $0x15b0] sm:$0xff]
    %v819 = vld [vmem:[#allocation5 + $0x15b8] sm:$0xff]
    %v820 = vld [vmem:[#allocation5 + $0x15c0] sm:$0xff]
    %v821 = vld [vmem:[#allocation5 + $0x15c8] sm:$0xff]
    %v822 = vld [vmem:[#allocation5 + $0x15d0] sm:$0xff]
    %v823 = vld [vmem:[#allocation5 + $0x15d8] sm:$0xff]
    %v824 = vld [vmem:[#allocation5 + $0x15e0] sm:$0xff]
    %v825 = vld [vmem:[#allocation5 + $0x15e8] sm:$0xff]
    %v826 = vld [vmem:[#allocation5 + $0x15f0] sm:$0xff]
    %v827 = vld [vmem:[#allocation5 + $0x15f8] sm:$0xff]
    %v828 = vld [vmem:[#allocation5 + $0x1600] sm:$0xff]
    %v829 = vld [vmem:[#allocation5 + $0x1608] sm:$0xff]
    %v830 = vld [vmem:[#allocation5 + $0x1610] sm:$0xff]
    %v831 = vld [vmem:[#allocation5 + $0x1618] sm:$0xff]
    %v832 = vld [vmem:[#allocation5 + $0x1620] sm:$0xff]
    %v833 = vld [vmem:[#allocation5 + $0x1628] sm:$0xff]
    %v834 = vld [vmem:[#allocation5 + $0x1630] sm:$0xff]
    %v835 = vld [vmem:[#allocation5 + $0x1638] sm:$0xff]
    %v836 = vld [vmem:[#allocation5 + $0x1640] sm:$0xff]
    %v837 = vld [vmem:[#allocation5 + $0x1648] sm:$0xff]
    %v838 = vld [vmem:[#allocation5 + $0x1650] sm:$0xff]
    %v839 = vld [vmem:[#allocation5 + $0x1658] sm:$0xff]
    %v840 = vld [vmem:[#allocation5 + $0x1660] sm:$0xff]
    %v841 = vld [vmem:[#allocation5 + $0x1668] sm:$0xff]
    %v842 = vld [vmem:[#allocation5 + $0x1670] sm:$0xff]
    %v843 = vld [vmem:[#allocation5 + $0x1678] sm:$0xff]
    %v844 = vld [vmem:[#allocation5 + $0x1680] sm:$0xff]
    %v845 = vld [vmem:[#allocation5 + $0x1688] sm:$0xff]
    %v846 = vld [vmem:[#allocation5 + $0x1690] sm:$0xff]
    %v847 = vld [vmem:[#allocation5 + $0x1698] sm:$0xff]
    %v848 = vld [vmem:[#allocation5 + $0x16a0] sm:$0xff]
    %v849 = vld [vmem:[#allocation5 + $0x16a8] sm:$0xff]
    %v850 = vld [vmem:[#allocation5 + $0x16b0] sm:$0xff]
    %v851 = vld [vmem:[#allocation5 + $0x16b8] sm:$0xff]
    %v852 = vld [vmem:[#allocation5 + $0x16c0] sm:$0xff]
    %v853 = vld [vmem:[#allocation5 + $0x16c8] sm:$0xff]
    %v854 = vld [vmem:[#allocation5 + $0x16d0] sm:$0xff]
    %v855 = vld [vmem:[#allocation5 + $0x16d8] sm:$0xff]
    %v856 = vld [vmem:[#allocation5 + $0x16e0] sm:$0xff]
    %v857 = vld [vmem:[#allocation5 + $0x16e8] sm:$0xff]
    %v858 = vld [vmem:[#allocation5 + $0x16f0] sm:$0xff]
    %v859 = vld [vmem:[#allocation5 + $0x16f8] sm:$0xff]
    %v860 = vld [vmem:[#allocation5 + $0x1700] sm:$0xff]
    %v861 = vld [vmem:[#allocation5 + $0x1708] sm:$0xff]
    %v862 = vld [vmem:[#allocation5 + $0x1710] sm:$0xff]
    %v863 = vld [vmem:[#allocation5 + $0x1718] sm:$0xff]
    %v864 = vld [vmem:[#allocation5 + $0x1720] sm:$0xff]
    %v865 = vld [vmem:[#allocation5 + $0x1728] sm:$0xff]
    %v866 = vld [vmem:[#allocation5 + $0x1730] sm:$0xff]
    %v867 = vld [vmem:[#allocation5 + $0x1738] sm:$0xff]
    %v868 = vld [vmem:[#allocation5 + $0x1740] sm:$0xff]
    %v869 = vld [vmem:[#allocation5 + $0x1748] sm:$0xff]
    %v870 = vld [vmem:[#allocation5 + $0x1750] sm:$0xff]
    %v871 = vld [vmem:[#allocation5 + $0x1758] sm:$0xff]
    %v872 = vld [vmem:[#allocation5 + $0x1760] sm:$0xff]
    %v873 = vld [vmem:[#allocation5 + $0x1768] sm:$0xff]
    %v874 = vld [vmem:[#allocation5 + $0x1770] sm:$0xff]
    %v875 = vld [vmem:[#allocation5 + $0x1778] sm:$0xff]
    %v876 = vld [vmem:[#allocation5 + $0x1780] sm:$0xff]
    %v877 = vld [vmem:[#allocation5 + $0x1788] sm:$0xff]
    %v878 = vld [vmem:[#allocation5 + $0x1790] sm:$0xff]
    %v879 = vld [vmem:[#allocation5 + $0x1798] sm:$0xff]
    %v880 = vld [vmem:[#allocation5 + $0x17a0] sm:$0xff]
    %v881 = vld [vmem:[#allocation5 + $0x17a8] sm:$0xff]
    %v882 = vld [vmem:[#allocation5 + $0x17b0] sm:$0xff]
    %v883 = vld [vmem:[#allocation5 + $0x17b8] sm:$0xff]
    %v884 = vld [vmem:[#allocation5 + $0x17c0] sm:$0xff]
    %v885 = vld [vmem:[#allocation5 + $0x17c8] sm:$0xff]
    %v886 = vld [vmem:[#allocation5 + $0x17d0] sm:$0xff]
    %v887 = vld [vmem:[#allocation5 + $0x17d8] sm:$0xff]
    %v888 = vld [vmem:[#allocation5 + $0x17e0] sm:$0xff]
    %v889 = vld [vmem:[#allocation5 + $0x17e8] sm:$0xff]
    %v890 = vld [vmem:[#allocation5 + $0x17f0] sm:$0xff]
    %v891 = vld [vmem:[#allocation5 + $0x17f8] sm:$0xff]
    %v892 = vld [vmem:[#allocation5 + $0x1800] sm:$0xff]
    %v893 = vld [vmem:[#allocation5 + $0x1808] sm:$0xff]
    %v894 = vld [vmem:[#allocation5 + $0x1810] sm:$0xff]
    %v895 = vld [vmem:[#allocation5 + $0x1818] sm:$0xff]
    %v896 = vld [vmem:[#allocation5 + $0x1820] sm:$0xff]
    %v897 = vld [vmem:[#allocation5 + $0x1828] sm:$0xff]
    %v898 = vld [vmem:[#allocation5 + $0x1830] sm:$0xff]
    %v899 = vld [vmem:[#allocation5 + $0x1838] sm:$0xff]
    %v900 = vld [vmem:[#allocation5 + $0x1840] sm:$0xff]
    %v901 = vld [vmem:[#allocation5 + $0x1848] sm:$0xff]
    %v902 = vld [vmem:[#allocation5 + $0x1850] sm:$0xff]
    %v903 = vld [vmem:[#allocation5 + $0x1858] sm:$0xff]
    %v904 = vld [vmem:[#allocation5 + $0x1860] sm:$0xff]
    %v905 = vld [vmem:[#allocation5 + $0x1868] sm:$0xff]
    %v906 = vld [vmem:[#allocation5 + $0x1870] sm:$0xff]
    %v907 = vld [vmem:[#allocation5 + $0x1878] sm:$0xff]
    %v908 = vld [vmem:[#allocation5 + $0x1880] sm:$0xff]
    %v909 = vld [vmem:[#allocation5 + $0x1888] sm:$0xff]
    %v910 = vld [vmem:[#allocation5 + $0x1890] sm:$0xff]
    %v911 = vld [vmem:[#allocation5 + $0x1898] sm:$0xff]
    %v912 = vld [vmem:[#allocation5 + $0x18a0] sm:$0xff]
    %v913 = vld [vmem:[#allocation5 + $0x18a8] sm:$0xff]
    %v914 = vld [vmem:[#allocation5 + $0x18b0] sm:$0xff]
    %v915 = vld [vmem:[#allocation5 + $0x18b8] sm:$0xff]
    %v916 = vld [vmem:[#allocation5 + $0x18c0] sm:$0xff]
    %v917 = vld [vmem:[#allocation5 + $0x18c8] sm:$0xff]
    %v918 = vld [vmem:[#allocation5 + $0x18d0] sm:$0xff]
    %v919 = vld [vmem:[#allocation5 + $0x18d8] sm:$0xff]
    %v920 = vld [vmem:[#allocation5 + $0x18e0] sm:$0xff]
    %v921 = vld [vmem:[#allocation5 + $0x18e8] sm:$0xff]
    %v922 = vld [vmem:[#allocation5 + $0x18f0] sm:$0xff]
    %v923 = vld [vmem:[#allocation5 + $0x18f8] sm:$0xff]
    %v924 = vld [vmem:[#allocation5 + $0x1900] sm:$0xff]
    %v925 = vld [vmem:[#allocation5 + $0x1908] sm:$0xff]
    %v926 = vld [vmem:[#allocation5 + $0x1910] sm:$0xff]
    %v927 = vld [vmem:[#allocation5 + $0x1918] sm:$0xff]
    %v928 = vld [vmem:[#allocation5 + $0x1920] sm:$0xff]
    %v929 = vld [vmem:[#allocation5 + $0x1928] sm:$0xff]
    %v930 = vld [vmem:[#allocation5 + $0x1930] sm:$0xff]
    %v931 = vld [vmem:[#allocation5 + $0x1938] sm:$0xff]
    %v932 = vld [vmem:[#allocation5 + $0x1940] sm:$0xff]
    %v933 = vld [vmem:[#allocation5 + $0x1948] sm:$0xff]
    %v934 = vld [vmem:[#allocation5 + $0x1950] sm:$0xff]
    %v935 = vld [vmem:[#allocation5 + $0x1958] sm:$0xff]
    %v936 = vld [vmem:[#allocation5 + $0x1960] sm:$0xff]
    %v937 = vld [vmem:[#allocation5 + $0x1968] sm:$0xff]
    %v938 = vld [vmem:[#allocation5 + $0x1970] sm:$0xff]
    %v939 = vld [vmem:[#allocation5 + $0x1978] sm:$0xff]
    %v940 = vld [vmem:[#allocation5 + $0x1980] sm:$0xff]
    %v941 = vld [vmem:[#allocation5 + $0x1988] sm:$0xff]
    %v942 = vld [vmem:[#allocation5 + $0x1990] sm:$0xff]
    %v943 = vld [vmem:[#allocation5 + $0x1998] sm:$0xff]
    %v944 = vld [vmem:[#allocation5 + $0x19a0] sm:$0xff]
    %v945 = vld [vmem:[#allocation5 + $0x19a8] sm:$0xff]
    %v946 = vld [vmem:[#allocation5 + $0x19b0] sm:$0xff]
    %v947 = vld [vmem:[#allocation5 + $0x19b8] sm:$0xff]
    %v948 = vld [vmem:[#allocation5 + $0x19c0] sm:$0xff]
    %v949 = vld [vmem:[#allocation5 + $0x19c8] sm:$0xff]
    %v950 = vld [vmem:[#allocation5 + $0x19d0] sm:$0xff]
    %v951 = vld [vmem:[#allocation5 + $0x19d8] sm:$0xff]
    %v952 = vld [vmem:[#allocation5 + $0x19e0] sm:$0xff]
    %v953 = vld [vmem:[#allocation5 + $0x19e8] sm:$0xff]
    %v954 = vld [vmem:[#allocation5 + $0x19f0] sm:$0xff]
    %v955 = vld [vmem:[#allocation5 + $0x19f8] sm:$0xff]
    %v956 = vld [vmem:[#allocation5 + $0x1a00] sm:$0xff]
    %v957 = vld [vmem:[#allocation5 + $0x1a08] sm:$0xff]
    %v958 = vld [vmem:[#allocation5 + $0x1a10] sm:$0xff]
    %v959 = vld [vmem:[#allocation5 + $0x1a18] sm:$0xff]
    %v960 = vld [vmem:[#allocation5 + $0x1a20] sm:$0xff]
    %v961 = vld [vmem:[#allocation5 + $0x1a28] sm:$0xff]
    %v962 = vld [vmem:[#allocation5 + $0x1a30] sm:$0xff]
    %v963 = vld [vmem:[#allocation5 + $0x1a38] sm:$0xff]
    %v964 = vld [vmem:[#allocation5 + $0x1a40] sm:$0xff]
    %v965 = vld [vmem:[#allocation5 + $0x1a48] sm:$0xff]
    %v966 = vld [vmem:[#allocation5 + $0x1a50] sm:$0xff]
    %v967 = vld [vmem:[#allocation5 + $0x1a58] sm:$0xff]
    %v968 = vld [vmem:[#allocation5 + $0x1a60] sm:$0xff]
    %v969 = vld [vmem:[#allocation5 + $0x1a68] sm:$0xff]
    %v970 = vld [vmem:[#allocation5 + $0x1a70] sm:$0xff]
    %v971 = vld [vmem:[#allocation5 + $0x1a78] sm:$0xff]
    %v972 = vld [vmem:[#allocation5 + $0x1a80] sm:$0xff]
    %v973 = vld [vmem:[#allocation5 + $0x1a88] sm:$0xff]
    %v974 = vld [vmem:[#allocation5 + $0x1a90] sm:$0xff]
    %v975 = vld [vmem:[#allocation5 + $0x1a98] sm:$0xff]
    %v976 = vld [vmem:[#allocation5 + $0x1aa0] sm:$0xff]
    %v977 = vld [vmem:[#allocation5 + $0x1aa8] sm:$0xff]
    %v978 = vld [vmem:[#allocation5 + $0x1ab0] sm:$0xff]
    %v979 = vld [vmem:[#allocation5 + $0x1ab8] sm:$0xff]
    %v980 = vld [vmem:[#allocation5 + $0x1ac0] sm:$0xff]
    %v981 = vld [vmem:[#allocation5 + $0x1ac8] sm:$0xff]
    %v982 = vld [vmem:[#allocation5 + $0x1ad0] sm:$0xff]
    %v983 = vld [vmem:[#allocation5 + $0x1ad8] sm:$0xff]
    %v984 = vld [vmem:[#allocation5 + $0x1ae0] sm:$0xff]
    %v985 = vld [vmem:[#allocation5 + $0x1ae8] sm:$0xff]
    %v986 = vld [vmem:[#allocation5 + $0x1af0] sm:$0xff]
    %v987 = vld [vmem:[#allocation5 + $0x1af8] sm:$0xff]
    %v988 = vld [vmem:[#allocation5 + $0x1b00] sm:$0xff]
    %v989 = vld [vmem:[#allocation5 + $0x1b08] sm:$0xff]
    %v990 = vld [vmem:[#allocation5 + $0x1b10] sm:$0xff]
    %v991 = vld [vmem:[#allocation5 + $0x1b18] sm:$0xff]
    %v992 = vld [vmem:[#allocation5 + $0x1b20] sm:$0xff]
    %v993 = vld [vmem:[#allocation5 + $0x1b28] sm:$0xff]
    %v994 = vld [vmem:[#allocation5 + $0x1b30] sm:$0xff]
    %v995 = vld [vmem:[#allocation5 + $0x1b38] sm:$0xff]
    %v996 = vld [vmem:[#allocation5 + $0x1b40] sm:$0xff]
    %v997 = vld [vmem:[#allocation5 + $0x1b48] sm:$0xff]
    %v998 = vld [vmem:[#allocation5 + $0x1b50] sm:$0xff]
    %v999 = vld [vmem:[#allocation5 + $0x1b58] sm:$0xff]
    %v1000 = vld [vmem:[#allocation5 + $0x1b60] sm:$0xff]
    %v1001 = vld [vmem:[#allocation5 + $0x1b68] sm:$0xff]
    %v1002 = vld [vmem:[#allocation5 + $0x1b70] sm:$0xff]
    %v1003 = vld [vmem:[#allocation5 + $0x1b78] sm:$0xff]
    %v1004 = vld [vmem:[#allocation5 + $0x1b80] sm:$0xff]
    %v1005 = vld [vmem:[#allocation5 + $0x1b88] sm:$0xff]
    %v1006 = vld [vmem:[#allocation5 + $0x1b90] sm:$0xff]
    %v1007 = vld [vmem:[#allocation5 + $0x1b98] sm:$0xff]
    %v1008 = vld [vmem:[#allocation5 + $0x1ba0] sm:$0xff]
    %v1009 = vld [vmem:[#allocation5 + $0x1ba8] sm:$0xff]
    %v1010 = vld [vmem:[#allocation5 + $0x1bb0] sm:$0xff]
    %v1011 = vld [vmem:[#allocation5 + $0x1bb8] sm:$0xff]
    %v1012 = vld [vmem:[#allocation5 + $0x1bc0] sm:$0xff]
    %v1013 = vld [vmem:[#allocation5 + $0x1bc8] sm:$0xff]
    %v1014 = vld [vmem:[#allocation5 + $0x1bd0] sm:$0xff]
    %v1015 = vld [vmem:[#allocation5 + $0x1bd8] sm:$0xff]
    %v1016 = vld [vmem:[#allocation5 + $0x1be0] sm:$0xff]
    %v1017 = vld [vmem:[#allocation5 + $0x1be8] sm:$0xff]
    %v1018 = vld [vmem:[#allocation5 + $0x1bf0] sm:$0xff]
    %v1019 = vld [vmem:[#allocation5 + $0x1bf8] sm:$0xff]
    %v1020 = vld [vmem:[#allocation5 + $0x1c00] sm:$0xff]
    %v1021 = vld [vmem:[#allocation5 + $0x1c08] sm:$0xff]
    %v1022 = vld [vmem:[#allocation5 + $0x1c10] sm:$0xff]
    %v1023 = vld [vmem:[#allocation5 + $0x1c18] sm:$0xff]
    %v1024 = vld [vmem:[#allocation5 + $0x1c20] sm:$0xff]
    %v1025 = vld [vmem:[#allocation5 + $0x1c28] sm:$0xff]
    %v1026 = vld [vmem:[#allocation5 + $0x1c30] sm:$0xff]
    %v1027 = vld [vmem:[#allocation5 + $0x1c38] sm:$0xff]
    %v1028 = vld [vmem:[#allocation5 + $0x1c40] sm:$0xff]
    %v1029 = vld [vmem:[#allocation5 + $0x1c48] sm:$0xff]
    %v1030 = vld [vmem:[#allocation5 + $0x1c50] sm:$0xff]
    %v1031 = vld [vmem:[#allocation5 + $0x1c58] sm:$0xff]
    %v1032 = vld [vmem:[#allocation5 + $0x1c60] sm:$0xff]
    %v1033 = vld [vmem:[#allocation5 + $0x1c68] sm:$0xff]
    %v1034 = vld [vmem:[#allocation5 + $0x1c70] sm:$0xff]
    %v1035 = vld [vmem:[#allocation5 + $0x1c78] sm:$0xff]
    %v1036 = vld [vmem:[#allocation5 + $0x1c80] sm:$0xff]
    %v1037 = vld [vmem:[#allocation5 + $0x1c88] sm:$0xff]
    %v1038 = vld [vmem:[#allocation5 + $0x1c90] sm:$0xff]
    %v1039 = vld [vmem:[#allocation5 + $0x1c98] sm:$0xff]
    %v1040 = vld [vmem:[#allocation5 + $0x1ca0] sm:$0xff]
    %v1041 = vld [vmem:[#allocation5 + $0x1ca8] sm:$0xff]
    %v1042 = vld [vmem:[#allocation5 + $0x1cb0] sm:$0xff]
    %v1043 = vld [vmem:[#allocation5 + $0x1cb8] sm:$0xff]
    %v1044 = vld [vmem:[#allocation5 + $0x1cc0] sm:$0xff]
    %v1045 = vld [vmem:[#allocation5 + $0x1cc8] sm:$0xff]
    %v1046 = vld [vmem:[#allocation5 + $0x1cd0] sm:$0xff]
    %v1047 = vld [vmem:[#allocation5 + $0x1cd8] sm:$0xff]
    %v1048 = vld [vmem:[#allocation5 + $0x1ce0] sm:$0xff]
    %v1049 = vld [vmem:[#allocation5 + $0x1ce8] sm:$0xff]
    %v1050 = vld [vmem:[#allocation5 + $0x1cf0] sm:$0xff]
    %v1051 = vld [vmem:[#allocation5 + $0x1cf8] sm:$0xff]
    %v1052 = vld [vmem:[#allocation5 + $0x1d00] sm:$0xff]
    %v1053 = vld [vmem:[#allocation5 + $0x1d08] sm:$0xff]
    %v1054 = vld [vmem:[#allocation5 + $0x1d10] sm:$0xff]
    %v1055 = vld [vmem:[#allocation5 + $0x1d18] sm:$0xff]
    %v1056 = vld [vmem:[#allocation5 + $0x1d20] sm:$0xff]
    %v1057 = vld [vmem:[#allocation5 + $0x1d28] sm:$0xff]
    %v1058 = vld [vmem:[#allocation5 + $0x1d30] sm:$0xff]
    %v1059 = vld [vmem:[#allocation5 + $0x1d38] sm:$0xff]
    %v1060 = vld [vmem:[#allocation5 + $0x1d40] sm:$0xff]
    %v1061 = vld [vmem:[#allocation5 + $0x1d48] sm:$0xff]
    %v1062 = vld [vmem:[#allocation5 + $0x1d50] sm:$0xff]
    %v1063 = vld [vmem:[#allocation5 + $0x1d58] sm:$0xff]
    %v1064 = vld [vmem:[#allocation5 + $0x1d60] sm:$0xff]
    %v1065 = vld [vmem:[#allocation5 + $0x1d68] sm:$0xff]
    %v1066 = vld [vmem:[#allocation5 + $0x1d70] sm:$0xff]
    %v1067 = vld [vmem:[#allocation5 + $0x1d78] sm:$0xff]
    %v1068 = vld [vmem:[#allocation5 + $0x1d80] sm:$0xff]
    %v1069 = vld [vmem:[#allocation5 + $0x1d88] sm:$0xff]
    %v1070 = vld [vmem:[#allocation5 + $0x1d90] sm:$0xff]
    %v1071 = vld [vmem:[#allocation5 + $0x1d98] sm:$0xff]
    %v1072 = vld [vmem:[#allocation5 + $0x1da0] sm:$0xff]
    %v1073 = vld [vmem:[#allocation5 + $0x1da8] sm:$0xff]
    %v1074 = vld [vmem:[#allocation5 + $0x1db0] sm:$0xff]
    %v1075 = vld [vmem:[#allocation5 + $0x1db8] sm:$0xff]
    %v1076 = vld [vmem:[#allocation5 + $0x1dc0] sm:$0xff]
    %v1077 = vld [vmem:[#allocation5 + $0x1dc8] sm:$0xff]
    %v1078 = vld [vmem:[#allocation5 + $0x1dd0] sm:$0xff]
    %v1079 = vld [vmem:[#allocation5 + $0x1dd8] sm:$0xff]
    %v1080 = vld [vmem:[#allocation5 + $0x1de0] sm:$0xff]
    %v1081 = vld [vmem:[#allocation5 + $0x1de8] sm:$0xff]
    %v1082 = vld [vmem:[#allocation5 + $0x1df0] sm:$0xff]
    %v1083 = vld [vmem:[#allocation5 + $0x1df8] sm:$0xff]
    %v1084 = vld [vmem:[#allocation5 + $0x1e00] sm:$0xff]
    %v1085 = vld [vmem:[#allocation5 + $0x1e08] sm:$0xff]
    %v1086 = vld [vmem:[#allocation5 + $0x1e10] sm:$0xff]
    %v1087 = vld [vmem:[#allocation5 + $0x1e18] sm:$0xff]
    %v1088 = vld [vmem:[#allocation5 + $0x1e20] sm:$0xff]
    %v1089 = vld [vmem:[#allocation5 + $0x1e28] sm:$0xff]
    %v1090 = vld [vmem:[#allocation5 + $0x1e30] sm:$0xff]
    %v1091 = vld [vmem:[#allocation5 + $0x1e38] sm:$0xff]
    %v1092 = vld [vmem:[#allocation5 + $0x1e40] sm:$0xff]
    %v1093 = vld [vmem:[#allocation5 + $0x1e48] sm:$0xff]
    %v1094 = vld [vmem:[#allocation5 + $0x1e50] sm:$0xff]
    %v1095 = vld [vmem:[#allocation5 + $0x1e58] sm:$0xff]
    %v1096 = vld [vmem:[#allocation5 + $0x1e60] sm:$0xff]
    %v1097 = vld [vmem:[#allocation5 + $0x1e68] sm:$0xff]
    %v1098 = vld [vmem:[#allocation5 + $0x1e70] sm:$0xff]
    %v1099 = vld [vmem:[#allocation5 + $0x1e78] sm:$0xff]
    %v1100 = vld [vmem:[#allocation5 + $0x1e80] sm:$0xff]
    %v1101 = vld [vmem:[#allocation5 + $0x1e88] sm:$0xff]
    %v1102 = vld [vmem:[#allocation5 + $0x1e90] sm:$0xff]
    %v1103 = vld [vmem:[#allocation5 + $0x1e98] sm:$0xff]
    %v1104 = vld [vmem:[#allocation5 + $0x1ea0] sm:$0xff]
    %v1105 = vld [vmem:[#allocation5 + $0x1ea8] sm:$0xff]
    %v1106 = vld [vmem:[#allocation5 + $0x1eb0] sm:$0xff]
    %v1107 = vld [vmem:[#allocation5 + $0x1eb8] sm:$0xff]
    %v1108 = vld [vmem:[#allocation5 + $0x1ec0] sm:$0xff]
    %v1109 = vld [vmem:[#allocation5 + $0x1ec8] sm:$0xff]
    %v1110 = vld [vmem:[#allocation5 + $0x1ed0] sm:$0xff]
    %v1111 = vld [vmem:[#allocation5 + $0x1ed8] sm:$0xff]
    %v1112 = vld [vmem:[#allocation5 + $0x1ee0] sm:$0xff]
    %v1113 = vld [vmem:[#allocation5 + $0x1ee8] sm:$0xff]
    %v1114 = vld [vmem:[#allocation5 + $0x1ef0] sm:$0xff]
    %v1115 = vld [vmem:[#allocation5 + $0x1ef8] sm:$0xff]
    %v1116 = vld [vmem:[#allocation5 + $0x1f00] sm:$0xff]
    %v1117 = vld [vmem:[#allocation5 + $0x1f08] sm:$0xff]
    %v1118 = vld [vmem:[#allocation5 + $0x1f10] sm:$0xff]
    %v1119 = vld [vmem:[#allocation5 + $0x1f18] sm:$0xff]
    %v1120 = vld [vmem:[#allocation5 + $0x1f20] sm:$0xff]
    %v1121 = vld [vmem:[#allocation5 + $0x1f28] sm:$0xff]
    %v1122 = vld [vmem:[#allocation5 + $0x1f30] sm:$0xff]
    %v1123 = vld [vmem:[#allocation5 + $0x1f38] sm:$0xff]
    %v1124 = vld [vmem:[#allocation5 + $0x1f40] sm:$0xff]
    %v1125 = vld [vmem:[#allocation5 + $0x1f48] sm:$0xff]
    %v1126 = vld [vmem:[#allocation5 + $0x1f50] sm:$0xff]
    %v1127 = vld [vmem:[#allocation5 + $0x1f58] sm:$0xff]
    %v1128 = vld [vmem:[#allocation5 + $0x1f60] sm:$0xff]
    %v1129 = vld [vmem:[#allocation5 + $0x1f68] sm:$0xff]
    %v1130 = vld [vmem:[#allocation5 + $0x1f70] sm:$0xff]
    %v1131 = vld [vmem:[#allocation5 + $0x1f78] sm:$0xff]
    %v1132 = vld [vmem:[#allocation5 + $0x1f80] sm:$0xff]
    %v1133 = vld [vmem:[#allocation5 + $0x1f88] sm:$0xff]
    %v1134 = vld [vmem:[#allocation5 + $0x1f90] sm:$0xff]
    %v1135 = vld [vmem:[#allocation5 + $0x1f98] sm:$0xff]
    %v1136 = vld [vmem:[#allocation5 + $0x1fa0] sm:$0xff]
    %v1137 = vld [vmem:[#allocation5 + $0x1fa8] sm:$0xff]
    %v1138 = vld [vmem:[#allocation5 + $0x1fb0] sm:$0xff]
    %v1139 = vld [vmem:[#allocation5 + $0x1fb8] sm:$0xff]
    %v1140 = vld [vmem:[#allocation5 + $0x1fc0] sm:$0xff]
    %v1141 = vld [vmem:[#allocation5 + $0x1fc8] sm:$0xff]
    %v1142 = vld [vmem:[#allocation5 + $0x1fd0] sm:$0xff]
    %v1143 = vld [vmem:[#allocation5 + $0x1fd8] sm:$0xff]
    %v1144 = vld [vmem:[#allocation5 + $0x1fe0] sm:$0xff]
    %v1145 = vld [vmem:[#allocation5 + $0x1fe8] sm:$0xff]
    %v1146 = vld [vmem:[#allocation5 + $0x1ff0] sm:$0xff]
    %v1147 = vld [vmem:[#allocation5 + $0x1ff8] sm:$0xff]
    %v1148 = vld [vmem:[#allocation7] sm:$0xff]
    %v1149 = vld [vmem:[#allocation7 + $0x8] sm:$0xff]
    %v1152 = vperm.slane %v1148, 0
    %v1153 = vperm.slane %v1148, 1
    %v1154 = vperm.slane %v1148, 2
    %v1155 = vperm.slane %v1148, 3
    %v1156 = vperm.slane %v1148, 4
    %v1157 = vperm.slane %v1148, 5
    %v1158 = vperm.slane %v1148, 6
    %v1159 = vperm.slane %v1148, 7
    %v1160 = vperm.slane %v1149, 0
    %v1161 = vperm.slane %v1149, 1
    %v1162 = vperm.slane %v1149, 2
    %v1163 = vperm.slane %v1149, 3
    %v1164 = vperm.slane %v1149, 4
    %v1165 = vperm.slane %v1149, 5
    %v1166 = vperm.slane %v1149, 6
    %v1167 = vperm.slane %v1149, 7
    %v2208 = vunpack.c.l.b16 %v124
    %v2209 = vunpack.c.h.b16 %v124
    %v2210 = vunpack.c.l.b16 %v125
    %v2211 = vunpack.c.h.b16 %v125
    %v2212 = vunpack.c.l.b16 %v126
    %v2213 = vunpack.c.h.b16 %v126
    %v2214 = vunpack.c.l.b16 %v127
    %v2215 = vunpack.c.h.b16 %v127
    %v2216 = vunpack.c.l.b16 %v128
    %v2217 = vunpack.c.h.b16 %v128
    %v2218 = vunpack.c.l.b16 %v129
    %v2219 = vunpack.c.h.b16 %v129
    %v2220 = vunpack.c.l.b16 %v130
    %v2221 = vunpack.c.h.b16 %v130
    %v2222 = vunpack.c.l.b16 %v131
    %v2223 = vunpack.c.h.b16 %v131
    %v2224 = vunpack.c.l.b16 %v132
    %v2225 = vunpack.c.h.b16 %v132
    %v2226 = vunpack.c.l.b16 %v133
    %v2227 = vunpack.c.h.b16 %v133
    %v2228 = vunpack.c.l.b16 %v134
    %v2229 = vunpack.c.h.b16 %v134
    %v2230 = vunpack.c.l.b16 %v135
    %v2231 = vunpack.c.h.b16 %v135
    %v2232 = vunpack.c.l.b16 %v136
    %v2233 = vunpack.c.h.b16 %v136
    %v2234 = vunpack.c.l.b16 %v137
    %v2235 = vunpack.c.h.b16 %v137
    %v2236 = vunpack.c.l.b16 %v138
    %v2237 = vunpack.c.h.b16 %v138
    %v2238 = vunpack.c.l.b16 %v139
    %v2239 = vunpack.c.h.b16 %v139
    %v2240 = vunpack.c.l.b16 %v140
    %v2241 = vunpack.c.h.b16 %v140
    %v2242 = vunpack.c.l.b16 %v141
    %v2243 = vunpack.c.h.b16 %v141
    %v2244 = vunpack.c.l.b16 %v142
    %v2245 = vunpack.c.h.b16 %v142
    %v2246 = vunpack.c.l.b16 %v143
    %v2247 = vunpack.c.h.b16 %v143
    %v2248 = vunpack.c.l.b16 %v144
    %v2249 = vunpack.c.h.b16 %v144
    %v2250 = vunpack.c.l.b16 %v145
    %v2251 = vunpack.c.h.b16 %v145
    %v2252 = vunpack.c.l.b16 %v146
    %v2253 = vunpack.c.h.b16 %v146
    %v2254 = vunpack.c.l.b16 %v147
    %v2255 = vunpack.c.h.b16 %v147
    %v2256 = vunpack.c.l.b16 %v148
    %v2257 = vunpack.c.h.b16 %v148
    %v2258 = vunpack.c.l.b16 %v149
    %v2259 = vunpack.c.h.b16 %v149
    %v2260 = vunpack.c.l.b16 %v150
    %v2261 = vunpack.c.h.b16 %v150
    %v2262 = vunpack.c.l.b16 %v151
    %v2263 = vunpack.c.h.b16 %v151
    %v2264 = vunpack.c.l.b16 %v152
    %v2265 = vunpack.c.h.b16 %v152
    %v2266 = vunpack.c.l.b16 %v153
    %v2267 = vunpack.c.h.b16 %v153
    %v2268 = vunpack.c.l.b16 %v154
    %v2269 = vunpack.c.h.b16 %v154
    %v2270 = vunpack.c.l.b16 %v155
    %v2271 = vunpack.c.h.b16 %v155
    %v2272 = vunpack.c.l.b16 %v156
    %v2273 = vunpack.c.h.b16 %v156
    %v2274 = vunpack.c.l.b16 %v157
    %v2275 = vunpack.c.h.b16 %v157
    %v2276 = vunpack.c.l.b16 %v158
    %v2277 = vunpack.c.h.b16 %v158
    %v2278 = vunpack.c.l.b16 %v159
    %v2279 = vunpack.c.h.b16 %v159
    %v2280 = vunpack.c.l.b16 %v160
    %v2281 = vunpack.c.h.b16 %v160
    %v2282 = vunpack.c.l.b16 %v161
    %v2283 = vunpack.c.h.b16 %v161
    %v2284 = vunpack.c.l.b16 %v162
    %v2285 = vunpack.c.h.b16 %v162
    %v2286 = vunpack.c.l.b16 %v163
    %v2287 = vunpack.c.h.b16 %v163
    %v2288 = vunpack.c.l.b16 %v164
    %v2289 = vunpack.c.h.b16 %v164
    %v2290 = vunpack.c.l.b16 %v165
    %v2291 = vunpack.c.h.b16 %v165
    %v2292 = vunpack.c.l.b16 %v166
    %v2293 = vunpack.c.h.b16 %v166
    %v2294 = vunpack.c.l.b16 %v167
    %v2295 = vunpack.c.h.b16 %v167
    %v2296 = vunpack.c.l.b16 %v168
    %v2297 = vunpack.c.h.b16 %v168
    %v2298 = vunpack.c.l.b16 %v169
    %v2299 = vunpack.c.h.b16 %v169
    %v2300 = vunpack.c.l.b16 %v170
    %v2301 = vunpack.c.h.b16 %v170
    %v2302 = vunpack.c.l.b16 %v171
    %v2303 = vunpack.c.h.b16 %v171
    %v2304 = vunpack.c.l.b16 %v172
    %v2305 = vunpack.c.h.b16 %v172
    %v2306 = vunpack.c.l.b16 %v173
    %v2307 = vunpack.c.h.b16 %v173
    %v2308 = vunpack.c.l.b16 %v174
    %v2309 = vunpack.c.h.b16 %v174
    %v2310 = vunpack.c.l.b16 %v175
    %v2311 = vunpack.c.h.b16 %v175
    %v2312 = vunpack.c.l.b16 %v176
    %v2313 = vunpack.c.h.b16 %v176
    %v2314 = vunpack.c.l.b16 %v177
    %v2315 = vunpack.c.h.b16 %v177
    %v2316 = vunpack.c.l.b16 %v178
    %v2317 = vunpack.c.h.b16 %v178
    %v2318 = vunpack.c.l.b16 %v179
    %v2319 = vunpack.c.h.b16 %v179
    %v2320 = vunpack.c.l.b16 %v180
    %v2321 = vunpack.c.h.b16 %v180
    %v2322 = vunpack.c.l.b16 %v181
    %v2323 = vunpack.c.h.b16 %v181
    %v2324 = vunpack.c.l.b16 %v182
    %v2325 = vunpack.c.h.b16 %v182
    %v2326 = vunpack.c.l.b16 %v183
    %v2327 = vunpack.c.h.b16 %v183
    %v2328 = vunpack.c.l.b16 %v184
    %v2329 = vunpack.c.h.b16 %v184
    %v2330 = vunpack.c.l.b16 %v185
    %v2331 = vunpack.c.h.b16 %v185
    %v2332 = vunpack.c.l.b16 %v186
    %v2333 = vunpack.c.h.b16 %v186
    %v2334 = vunpack.c.l.b16 %v187
    %v2335 = vunpack.c.h.b16 %v187
    %v2336 = vunpack.c.l.b16 %v188
    %v2337 = vunpack.c.h.b16 %v188
    %v2338 = vunpack.c.l.b16 %v189
    %v2339 = vunpack.c.h.b16 %v189
    %v2340 = vunpack.c.l.b16 %v190
    %v2341 = vunpack.c.h.b16 %v190
    %v2342 = vunpack.c.l.b16 %v191
    %v2343 = vunpack.c.h.b16 %v191
    %v2344 = vunpack.c.l.b16 %v192
    %v2345 = vunpack.c.h.b16 %v192
    %v2346 = vunpack.c.l.b16 %v193
    %v2347 = vunpack.c.h.b16 %v193
    %v2348 = vunpack.c.l.b16 %v194
    %v2349 = vunpack.c.h.b16 %v194
    %v2350 = vunpack.c.l.b16 %v195
    %v2351 = vunpack.c.h.b16 %v195
    %v2352 = vunpack.c.l.b16 %v196
    %v2353 = vunpack.c.h.b16 %v196
    %v2354 = vunpack.c.l.b16 %v197
    %v2355 = vunpack.c.h.b16 %v197
    %v2356 = vunpack.c.l.b16 %v198
    %v2357 = vunpack.c.h.b16 %v198
    %v2358 = vunpack.c.l.b16 %v199
    %v2359 = vunpack.c.h.b16 %v199
    %v2360 = vunpack.c.l.b16 %v200
    %v2361 = vunpack.c.h.b16 %v200
    %v2362 = vunpack.c.l.b16 %v201
    %v2363 = vunpack.c.h.b16 %v201
    %v2364 = vunpack.c.l.b16 %v202
    %v2365 = vunpack.c.h.b16 %v202
    %v2366 = vunpack.c.l.b16 %v203
    %v2367 = vunpack.c.h.b16 %v203
    %v2368 = vunpack.c.l.b16 %v204
    %v2369 = vunpack.c.h.b16 %v204
    %v2370 = vunpack.c.l.b16 %v205
    %v2371 = vunpack.c.h.b16 %v205
    %v2372 = vunpack.c.l.b16 %v206
    %v2373 = vunpack.c.h.b16 %v206
    %v2374 = vunpack.c.l.b16 %v207
    %v2375 = vunpack.c.h.b16 %v207
    %v2376 = vunpack.c.l.b16 %v208
    %v2377 = vunpack.c.h.b16 %v208
    %v2378 = vunpack.c.l.b16 %v209
    %v2379 = vunpack.c.h.b16 %v209
    %v2380 = vunpack.c.l.b16 %v210
    %v2381 = vunpack.c.h.b16 %v210
    %v2382 = vunpack.c.l.b16 %v211
    %v2383 = vunpack.c.h.b16 %v211
    %v2384 = vunpack.c.l.b16 %v212
    %v2385 = vunpack.c.h.b16 %v212
    %v2386 = vunpack.c.l.b16 %v213
    %v2387 = vunpack.c.h.b16 %v213
    %v2388 = vunpack.c.l.b16 %v214
    %v2389 = vunpack.c.h.b16 %v214
    %v2390 = vunpack.c.l.b16 %v215
    %v2391 = vunpack.c.h.b16 %v215
    %v2392 = vunpack.c.l.b16 %v216
    %v2393 = vunpack.c.h.b16 %v216
    %v2394 = vunpack.c.l.b16 %v217
    %v2395 = vunpack.c.h.b16 %v217
    %v2396 = vunpack.c.l.b16 %v218
    %v2397 = vunpack.c.h.b16 %v218
    %v2398 = vunpack.c.l.b16 %v219
    %v2399 = vunpack.c.h.b16 %v219
    %v2400 = vunpack.c.l.b16 %v220
    %v2401 = vunpack.c.h.b16 %v220
    %v2402 = vunpack.c.l.b16 %v221
    %v2403 = vunpack.c.h.b16 %v221
    %v2404 = vunpack.c.l.b16 %v222
    %v2405 = vunpack.c.h.b16 %v222
    %v2406 = vunpack.c.l.b16 %v223
    %v2407 = vunpack.c.h.b16 %v223
    %v2408 = vunpack.c.l.b16 %v224
    %v2409 = vunpack.c.h.b16 %v224
    %v2410 = vunpack.c.l.b16 %v225
    %v2411 = vunpack.c.h.b16 %v225
    %v2412 = vunpack.c.l.b16 %v226
    %v2413 = vunpack.c.h.b16 %v226
    %v2414 = vunpack.c.l.b16 %v227
    %v2415 = vunpack.c.h.b16 %v227
    %v2416 = vunpack.c.l.b16 %v228
    %v2417 = vunpack.c.h.b16 %v228
    %v2418 = vunpack.c.l.b16 %v229
    %v2419 = vunpack.c.h.b16 %v229
    %v2420 = vunpack.c.l.b16 %v230
    %v2421 = vunpack.c.h.b16 %v230
    %v2422 = vunpack.c.l.b16 %v231
    %v2423 = vunpack.c.h.b16 %v231
    %v2424 = vunpack.c.l.b16 %v232
    %v2425 = vunpack.c.h.b16 %v232
    %v2426 = vunpack.c.l.b16 %v233
    %v2427 = vunpack.c.h.b16 %v233
    %v2428 = vunpack.c.l.b16 %v234
    %v2429 = vunpack.c.h.b16 %v234
    %v2430 = vunpack.c.l.b16 %v235
    %v2431 = vunpack.c.h.b16 %v235
    %v2432 = vunpack.c.l.b16 %v236
    %v2433 = vunpack.c.h.b16 %v236
    %v2434 = vunpack.c.l.b16 %v237
    %v2435 = vunpack.c.h.b16 %v237
    %v2436 = vunpack.c.l.b16 %v238
    %v2437 = vunpack.c.h.b16 %v238
    %v2438 = vunpack.c.l.b16 %v239
    %v2439 = vunpack.c.h.b16 %v239
    %v2440 = vunpack.c.l.b16 %v240
    %v2441 = vunpack.c.h.b16 %v240
    %v2442 = vunpack.c.l.b16 %v241
    %v2443 = vunpack.c.h.b16 %v241
    %v2444 = vunpack.c.l.b16 %v242
    %v2445 = vunpack.c.h.b16 %v242
    %v2446 = vunpack.c.l.b16 %v243
    %v2447 = vunpack.c.h.b16 %v243
    %v2448 = vunpack.c.l.b16 %v244
    %v2449 = vunpack.c.h.b16 %v244
    %v2450 = vunpack.c.l.b16 %v245
    %v2451 = vunpack.c.h.b16 %v245
    %v2452 = vunpack.c.l.b16 %v246
    %v2453 = vunpack.c.h.b16 %v246
    %v2454 = vunpack.c.l.b16 %v247
    %v2455 = vunpack.c.h.b16 %v247
    %v2456 = vunpack.c.l.b16 %v248
    %v2457 = vunpack.c.h.b16 %v248
    %v2458 = vunpack.c.l.b16 %v249
    %v2459 = vunpack.c.h.b16 %v249
    %v2460 = vunpack.c.l.b16 %v250
    %v2461 = vunpack.c.h.b16 %v250
    %v2462 = vunpack.c.l.b16 %v251
    %v2463 = vunpack.c.h.b16 %v251
    %v2464 = vunpack.c.l.b16 %v252
    %v2465 = vunpack.c.h.b16 %v252
    %v2466 = vunpack.c.l.b16 %v253
    %v2467 = vunpack.c.h.b16 %v253
    %v2468 = vunpack.c.l.b16 %v254
    %v2469 = vunpack.c.h.b16 %v254
    %v2470 = vunpack.c.l.b16 %v255
    %v2471 = vunpack.c.h.b16 %v255
    %v2472 = vunpack.c.l.b16 %v256
    %v2473 = vunpack.c.h.b16 %v256
    %v2474 = vunpack.c.l.b16 %v257
    %v2475 = vunpack.c.h.b16 %v257
    %v2476 = vunpack.c.l.b16 %v258
    %v2477 = vunpack.c.h.b16 %v258
    %v2478 = vunpack.c.l.b16 %v259
    %v2479 = vunpack.c.h.b16 %v259
    %v2480 = vunpack.c.l.b16 %v260
    %v2481 = vunpack.c.h.b16 %v260
    %v2482 = vunpack.c.l.b16 %v261
    %v2483 = vunpack.c.h.b16 %v261
    %v2484 = vunpack.c.l.b16 %v262
    %v2485 = vunpack.c.h.b16 %v262
    %v2486 = vunpack.c.l.b16 %v263
    %v2487 = vunpack.c.h.b16 %v263
    %v2488 = vunpack.c.l.b16 %v264
    %v2489 = vunpack.c.h.b16 %v264
    %v2490 = vunpack.c.l.b16 %v265
    %v2491 = vunpack.c.h.b16 %v265
    %v2492 = vunpack.c.l.b16 %v266
    %v2493 = vunpack.c.h.b16 %v266
    %v2494 = vunpack.c.l.b16 %v267
    %v2495 = vunpack.c.h.b16 %v267
    %v2496 = vunpack.c.l.b16 %v268
    %v2497 = vunpack.c.h.b16 %v268
    %v2498 = vunpack.c.l.b16 %v269
    %v2499 = vunpack.c.h.b16 %v269
    %v2500 = vunpack.c.l.b16 %v270
    %v2501 = vunpack.c.h.b16 %v270
    %v2502 = vunpack.c.l.b16 %v271
    %v2503 = vunpack.c.h.b16 %v271
    %v2504 = vunpack.c.l.b16 %v272
    %v2505 = vunpack.c.h.b16 %v272
    %v2506 = vunpack.c.l.b16 %v273
    %v2507 = vunpack.c.h.b16 %v273
    %v2508 = vunpack.c.l.b16 %v274
    %v2509 = vunpack.c.h.b16 %v274
    %v2510 = vunpack.c.l.b16 %v275
    %v2511 = vunpack.c.h.b16 %v275
    %v2512 = vunpack.c.l.b16 %v276
    %v2513 = vunpack.c.h.b16 %v276
    %v2514 = vunpack.c.l.b16 %v277
    %v2515 = vunpack.c.h.b16 %v277
    %v2516 = vunpack.c.l.b16 %v278
    %v2517 = vunpack.c.h.b16 %v278
    %v2518 = vunpack.c.l.b16 %v279
    %v2519 = vunpack.c.h.b16 %v279
    %v2520 = vunpack.c.l.b16 %v280
    %v2521 = vunpack.c.h.b16 %v280
    %v2522 = vunpack.c.l.b16 %v281
    %v2523 = vunpack.c.h.b16 %v281
    %v2524 = vunpack.c.l.b16 %v282
    %v2525 = vunpack.c.h.b16 %v282
    %v2526 = vunpack.c.l.b16 %v283
    %v2527 = vunpack.c.h.b16 %v283
    %v2528 = vunpack.c.l.b16 %v284
    %v2529 = vunpack.c.h.b16 %v284
    %v2530 = vunpack.c.l.b16 %v285
    %v2531 = vunpack.c.h.b16 %v285
    %v2532 = vunpack.c.l.b16 %v286
    %v2533 = vunpack.c.h.b16 %v286
    %v2534 = vunpack.c.l.b16 %v287
    %v2535 = vunpack.c.h.b16 %v287
    %v2536 = vunpack.c.l.b16 %v288
    %v2537 = vunpack.c.h.b16 %v288
    %v2538 = vunpack.c.l.b16 %v289
    %v2539 = vunpack.c.h.b16 %v289
    %v2540 = vunpack.c.l.b16 %v290
    %v2541 = vunpack.c.h.b16 %v290
    %v2542 = vunpack.c.l.b16 %v291
    %v2543 = vunpack.c.h.b16 %v291
    %v2544 = vunpack.c.l.b16 %v292
    %v2545 = vunpack.c.h.b16 %v292
    %v2546 = vunpack.c.l.b16 %v293
    %v2547 = vunpack.c.h.b16 %v293
    %v2548 = vunpack.c.l.b16 %v294
    %v2549 = vunpack.c.h.b16 %v294
    %v2550 = vunpack.c.l.b16 %v295
    %v2551 = vunpack.c.h.b16 %v295
    %v2552 = vunpack.c.l.b16 %v296
    %v2553 = vunpack.c.h.b16 %v296
    %v2554 = vunpack.c.l.b16 %v297
    %v2555 = vunpack.c.h.b16 %v297
    %v2556 = vunpack.c.l.b16 %v298
    %v2557 = vunpack.c.h.b16 %v298
    %v2558 = vunpack.c.l.b16 %v299
    %v2559 = vunpack.c.h.b16 %v299
    %v2560 = vunpack.c.l.b16 %v300
    %v2561 = vunpack.c.h.b16 %v300
    %v2562 = vunpack.c.l.b16 %v301
    %v2563 = vunpack.c.h.b16 %v301
    %v2564 = vunpack.c.l.b16 %v302
    %v2565 = vunpack.c.h.b16 %v302
    %v2566 = vunpack.c.l.b16 %v303
    %v2567 = vunpack.c.h.b16 %v303
    %v2568 = vunpack.c.l.b16 %v304
    %v2569 = vunpack.c.h.b16 %v304
    %v2570 = vunpack.c.l.b16 %v305
    %v2571 = vunpack.c.h.b16 %v305
    %v2572 = vunpack.c.l.b16 %v306
    %v2573 = vunpack.c.h.b16 %v306
    %v2574 = vunpack.c.l.b16 %v307
    %v2575 = vunpack.c.h.b16 %v307
    %v2576 = vunpack.c.l.b16 %v308
    %v2577 = vunpack.c.h.b16 %v308
    %v2578 = vunpack.c.l.b16 %v309
    %v2579 = vunpack.c.h.b16 %v309
    %v2580 = vunpack.c.l.b16 %v310
    %v2581 = vunpack.c.h.b16 %v310
    %v2582 = vunpack.c.l.b16 %v311
    %v2583 = vunpack.c.h.b16 %v311
    %v2584 = vunpack.c.l.b16 %v312
    %v2585 = vunpack.c.h.b16 %v312
    %v2586 = vunpack.c.l.b16 %v313
    %v2587 = vunpack.c.h.b16 %v313
    %v2588 = vunpack.c.l.b16 %v314
    %v2589 = vunpack.c.h.b16 %v314
    %v2590 = vunpack.c.l.b16 %v315
    %v2591 = vunpack.c.h.b16 %v315
    %v2592 = vunpack.c.l.b16 %v316
    %v2593 = vunpack.c.h.b16 %v316
    %v2594 = vunpack.c.l.b16 %v317
    %v2595 = vunpack.c.h.b16 %v317
    %v2596 = vunpack.c.l.b16 %v318
    %v2597 = vunpack.c.h.b16 %v318
    %v2598 = vunpack.c.l.b16 %v319
    %v2599 = vunpack.c.h.b16 %v319
    %v2600 = vunpack.c.l.b16 %v320
    %v2601 = vunpack.c.h.b16 %v320
    %v2602 = vunpack.c.l.b16 %v321
    %v2603 = vunpack.c.h.b16 %v321
    %v2604 = vunpack.c.l.b16 %v322
    %v2605 = vunpack.c.h.b16 %v322
    %v2606 = vunpack.c.l.b16 %v323
    %v2607 = vunpack.c.h.b16 %v323
    %v2608 = vunpack.c.l.b16 %v324
    %v2609 = vunpack.c.h.b16 %v324
    %v2610 = vunpack.c.l.b16 %v325
    %v2611 = vunpack.c.h.b16 %v325
    %v2612 = vunpack.c.l.b16 %v326
    %v2613 = vunpack.c.h.b16 %v326
    %v2614 = vunpack.c.l.b16 %v327
    %v2615 = vunpack.c.h.b16 %v327
    %v2616 = vunpack.c.l.b16 %v328
    %v2617 = vunpack.c.h.b16 %v328
    %v2618 = vunpack.c.l.b16 %v329
    %v2619 = vunpack.c.h.b16 %v329
    %v2620 = vunpack.c.l.b16 %v330
    %v2621 = vunpack.c.h.b16 %v330
    %v2622 = vunpack.c.l.b16 %v331
    %v2623 = vunpack.c.h.b16 %v331
    %v2624 = vunpack.c.l.b16 %v332
    %v2625 = vunpack.c.h.b16 %v332
    %v2626 = vunpack.c.l.b16 %v333
    %v2627 = vunpack.c.h.b16 %v333
    %v2628 = vunpack.c.l.b16 %v334
    %v2629 = vunpack.c.h.b16 %v334
    %v2630 = vunpack.c.l.b16 %v335
    %v2631 = vunpack.c.h.b16 %v335
    %v2632 = vunpack.c.l.b16 %v336
    %v2633 = vunpack.c.h.b16 %v336
    %v2634 = vunpack.c.l.b16 %v337
    %v2635 = vunpack.c.h.b16 %v337
    %v2636 = vunpack.c.l.b16 %v338
    %v2637 = vunpack.c.h.b16 %v338
    %v2638 = vunpack.c.l.b16 %v339
    %v2639 = vunpack.c.h.b16 %v339
    %v2640 = vunpack.c.l.b16 %v340
    %v2641 = vunpack.c.h.b16 %v340
    %v2642 = vunpack.c.l.b16 %v341
    %v2643 = vunpack.c.h.b16 %v341
    %v2644 = vunpack.c.l.b16 %v342
    %v2645 = vunpack.c.h.b16 %v342
    %v2646 = vunpack.c.l.b16 %v343
    %v2647 = vunpack.c.h.b16 %v343
    %v2648 = vunpack.c.l.b16 %v344
    %v2649 = vunpack.c.h.b16 %v344
    %v2650 = vunpack.c.l.b16 %v345
    %v2651 = vunpack.c.h.b16 %v345
    %v2652 = vunpack.c.l.b16 %v346
    %v2653 = vunpack.c.h.b16 %v346
    %v2654 = vunpack.c.l.b16 %v347
    %v2655 = vunpack.c.h.b16 %v347
    %v2656 = vunpack.c.l.b16 %v348
    %v2657 = vunpack.c.h.b16 %v348
    %v2658 = vunpack.c.l.b16 %v349
    %v2659 = vunpack.c.h.b16 %v349
    %v2660 = vunpack.c.l.b16 %v350
    %v2661 = vunpack.c.h.b16 %v350
    %v2662 = vunpack.c.l.b16 %v351
    %v2663 = vunpack.c.h.b16 %v351
    %v2664 = vunpack.c.l.b16 %v352
    %v2665 = vunpack.c.h.b16 %v352
    %v2666 = vunpack.c.l.b16 %v353
    %v2667 = vunpack.c.h.b16 %v353
    %v2668 = vunpack.c.l.b16 %v354
    %v2669 = vunpack.c.h.b16 %v354
    %v2670 = vunpack.c.l.b16 %v355
    %v2671 = vunpack.c.h.b16 %v355
    %v2672 = vunpack.c.l.b16 %v356
    %v2673 = vunpack.c.h.b16 %v356
    %v2674 = vunpack.c.l.b16 %v357
    %v2675 = vunpack.c.h.b16 %v357
    %v2676 = vunpack.c.l.b16 %v358
    %v2677 = vunpack.c.h.b16 %v358
    %v2678 = vunpack.c.l.b16 %v359
    %v2679 = vunpack.c.h.b16 %v359
    %v2680 = vunpack.c.l.b16 %v360
    %v2681 = vunpack.c.h.b16 %v360
    %v2682 = vunpack.c.l.b16 %v361
    %v2683 = vunpack.c.h.b16 %v361
    %v2684 = vunpack.c.l.b16 %v362
    %v2685 = vunpack.c.h.b16 %v362
    %v2686 = vunpack.c.l.b16 %v363
    %v2687 = vunpack.c.h.b16 %v363
    %v2688 = vunpack.c.l.b16 %v364
    %v2689 = vunpack.c.h.b16 %v364
    %v2690 = vunpack.c.l.b16 %v365
    %v2691 = vunpack.c.h.b16 %v365
    %v2692 = vunpack.c.l.b16 %v366
    %v2693 = vunpack.c.h.b16 %v366
    %v2694 = vunpack.c.l.b16 %v367
    %v2695 = vunpack.c.h.b16 %v367
    %v2696 = vunpack.c.l.b16 %v368
    %v2697 = vunpack.c.h.b16 %v368
    %v2698 = vunpack.c.l.b16 %v369
    %v2699 = vunpack.c.h.b16 %v369
    %v2700 = vunpack.c.l.b16 %v370
    %v2701 = vunpack.c.h.b16 %v370
    %v2702 = vunpack.c.l.b16 %v371
    %v2703 = vunpack.c.h.b16 %v371
    %v2704 = vunpack.c.l.b16 %v372
    %v2705 = vunpack.c.h.b16 %v372
    %v2706 = vunpack.c.l.b16 %v373
    %v2707 = vunpack.c.h.b16 %v373
    %v2708 = vunpack.c.l.b16 %v374
    %v2709 = vunpack.c.h.b16 %v374
    %v2710 = vunpack.c.l.b16 %v375
    %v2711 = vunpack.c.h.b16 %v375
    %v2712 = vunpack.c.l.b16 %v376
    %v2713 = vunpack.c.h.b16 %v376
    %v2714 = vunpack.c.l.b16 %v377
    %v2715 = vunpack.c.h.b16 %v377
    %v2716 = vunpack.c.l.b16 %v378
    %v2717 = vunpack.c.h.b16 %v378
    %v2718 = vunpack.c.l.b16 %v379
    %v2719 = vunpack.c.h.b16 %v379
    %v2720 = vunpack.c.l.b16 %v380
    %v2721 = vunpack.c.h.b16 %v380
    %v2722 = vunpack.c.l.b16 %v381
    %v2723 = vunpack.c.h.b16 %v381
    %v2724 = vunpack.c.l.b16 %v382
    %v2725 = vunpack.c.h.b16 %v382
    %v2726 = vunpack.c.l.b16 %v383
    %v2727 = vunpack.c.h.b16 %v383
    %v2728 = vunpack.c.l.b16 %v384
    %v2729 = vunpack.c.h.b16 %v384
    %v2730 = vunpack.c.l.b16 %v385
    %v2731 = vunpack.c.h.b16 %v385
    %v2732 = vunpack.c.l.b16 %v386
    %v2733 = vunpack.c.h.b16 %v386
    %v2734 = vunpack.c.l.b16 %v387
    %v2735 = vunpack.c.h.b16 %v387
    %v2736 = vunpack.c.l.b16 %v388
    %v2737 = vunpack.c.h.b16 %v388
    %v2738 = vunpack.c.l.b16 %v389
    %v2739 = vunpack.c.h.b16 %v389
    %v2740 = vunpack.c.l.b16 %v390
    %v2741 = vunpack.c.h.b16 %v390
    %v2742 = vunpack.c.l.b16 %v391
    %v2743 = vunpack.c.h.b16 %v391
    %v2744 = vunpack.c.l.b16 %v392
    %v2745 = vunpack.c.h.b16 %v392
    %v2746 = vunpack.c.l.b16 %v393
    %v2747 = vunpack.c.h.b16 %v393
    %v2748 = vunpack.c.l.b16 %v394
    %v2749 = vunpack.c.h.b16 %v394
    %v2750 = vunpack.c.l.b16 %v395
    %v2751 = vunpack.c.h.b16 %v395
    %v2752 = vunpack.c.l.b16 %v396
    %v2753 = vunpack.c.h.b16 %v396
    %v2754 = vunpack.c.l.b16 %v397
    %v2755 = vunpack.c.h.b16 %v397
    %v2756 = vunpack.c.l.b16 %v398
    %v2757 = vunpack.c.h.b16 %v398
    %v2758 = vunpack.c.l.b16 %v399
    %v2759 = vunpack.c.h.b16 %v399
    %v2760 = vunpack.c.l.b16 %v400
    %v2761 = vunpack.c.h.b16 %v400
    %v2762 = vunpack.c.l.b16 %v401
    %v2763 = vunpack.c.h.b16 %v401
    %v2764 = vunpack.c.l.b16 %v402
    %v2765 = vunpack.c.h.b16 %v402
    %v2766 = vunpack.c.l.b16 %v403
    %v2767 = vunpack.c.h.b16 %v403
    %v2768 = vunpack.c.l.b16 %v404
    %v2769 = vunpack.c.h.b16 %v404
    %v2770 = vunpack.c.l.b16 %v405
    %v2771 = vunpack.c.h.b16 %v405
    %v2772 = vunpack.c.l.b16 %v406
    %v2773 = vunpack.c.h.b16 %v406
    %v2774 = vunpack.c.l.b16 %v407
    %v2775 = vunpack.c.h.b16 %v407
    %v2776 = vunpack.c.l.b16 %v408
    %v2777 = vunpack.c.h.b16 %v408
    %v2778 = vunpack.c.l.b16 %v409
    %v2779 = vunpack.c.h.b16 %v409
    %v2780 = vunpack.c.l.b16 %v410
    %v2781 = vunpack.c.h.b16 %v410
    %v2782 = vunpack.c.l.b16 %v411
    %v2783 = vunpack.c.h.b16 %v411
    %v2784 = vunpack.c.l.b16 %v412
    %v2785 = vunpack.c.h.b16 %v412
    %v2786 = vunpack.c.l.b16 %v413
    %v2787 = vunpack.c.h.b16 %v413
    %v2788 = vunpack.c.l.b16 %v414
    %v2789 = vunpack.c.h.b16 %v414
    %v2790 = vunpack.c.l.b16 %v415
    %v2791 = vunpack.c.h.b16 %v415
    %v2792 = vunpack.c.l.b16 %v416
    %v2793 = vunpack.c.h.b16 %v416
    %v2794 = vunpack.c.l.b16 %v417
    %v2795 = vunpack.c.h.b16 %v417
    %v2796 = vunpack.c.l.b16 %v418
    %v2797 = vunpack.c.h.b16 %v418
    %v2798 = vunpack.c.l.b16 %v419
    %v2799 = vunpack.c.h.b16 %v419
    %v2800 = vunpack.c.l.b16 %v420
    %v2801 = vunpack.c.h.b16 %v420
    %v2802 = vunpack.c.l.b16 %v421
    %v2803 = vunpack.c.h.b16 %v421
    %v2804 = vunpack.c.l.b16 %v422
    %v2805 = vunpack.c.h.b16 %v422
    %v2806 = vunpack.c.l.b16 %v423
    %v2807 = vunpack.c.h.b16 %v423
    %v2808 = vunpack.c.l.b16 %v424
    %v2809 = vunpack.c.h.b16 %v424
    %v2810 = vunpack.c.l.b16 %v425
    %v2811 = vunpack.c.h.b16 %v425
    %v2812 = vunpack.c.l.b16 %v426
    %v2813 = vunpack.c.h.b16 %v426
    %v2814 = vunpack.c.l.b16 %v427
    %v2815 = vunpack.c.h.b16 %v427
    %v2816 = vunpack.c.l.b16 %v428
    %v2817 = vunpack.c.h.b16 %v428
    %v2818 = vunpack.c.l.b16 %v429
    %v2819 = vunpack.c.h.b16 %v429
    %v2820 = vunpack.c.l.b16 %v430
    %v2821 = vunpack.c.h.b16 %v430
    %v2822 = vunpack.c.l.b16 %v431
    %v2823 = vunpack.c.h.b16 %v431
    %v2824 = vunpack.c.l.b16 %v432
    %v2825 = vunpack.c.h.b16 %v432
    %v2826 = vunpack.c.l.b16 %v433
    %v2827 = vunpack.c.h.b16 %v433
    %v2828 = vunpack.c.l.b16 %v434
    %v2829 = vunpack.c.h.b16 %v434
    %v2830 = vunpack.c.l.b16 %v435
    %v2831 = vunpack.c.h.b16 %v435
    %v2832 = vunpack.c.l.b16 %v436
    %v2833 = vunpack.c.h.b16 %v436
    %v2834 = vunpack.c.l.b16 %v437
    %v2835 = vunpack.c.h.b16 %v437
    %v2836 = vunpack.c.l.b16 %v438
    %v2837 = vunpack.c.h.b16 %v438
    %v2838 = vunpack.c.l.b16 %v439
    %v2839 = vunpack.c.h.b16 %v439
    %v2840 = vunpack.c.l.b16 %v440
    %v2841 = vunpack.c.h.b16 %v440
    %v2842 = vunpack.c.l.b16 %v441
    %v2843 = vunpack.c.h.b16 %v441
    %v2844 = vunpack.c.l.b16 %v442
    %v2845 = vunpack.c.h.b16 %v442
    %v2846 = vunpack.c.l.b16 %v443
    %v2847 = vunpack.c.h.b16 %v443
    %v2848 = vunpack.c.l.b16 %v444
    %v2849 = vunpack.c.h.b16 %v444
    %v2850 = vunpack.c.l.b16 %v445
    %v2851 = vunpack.c.h.b16 %v445
    %v2852 = vunpack.c.l.b16 %v446
    %v2853 = vunpack.c.h.b16 %v446
    %v2854 = vunpack.c.l.b16 %v447
    %v2855 = vunpack.c.h.b16 %v447
    %v2856 = vunpack.c.l.b16 %v448
    %v2857 = vunpack.c.h.b16 %v448
    %v2858 = vunpack.c.l.b16 %v449
    %v2859 = vunpack.c.h.b16 %v449
    %v2860 = vunpack.c.l.b16 %v450
    %v2861 = vunpack.c.h.b16 %v450
    %v2862 = vunpack.c.l.b16 %v451
    %v2863 = vunpack.c.h.b16 %v451
    %v2864 = vunpack.c.l.b16 %v452
    %v2865 = vunpack.c.h.b16 %v452
    %v2866 = vunpack.c.l.b16 %v453
    %v2867 = vunpack.c.h.b16 %v453
    %v2868 = vunpack.c.l.b16 %v454
    %v2869 = vunpack.c.h.b16 %v454
    %v2870 = vunpack.c.l.b16 %v455
    %v2871 = vunpack.c.h.b16 %v455
    %v2872 = vunpack.c.l.b16 %v456
    %v2873 = vunpack.c.h.b16 %v456
    %v2874 = vunpack.c.l.b16 %v457
    %v2875 = vunpack.c.h.b16 %v457
    %v2876 = vunpack.c.l.b16 %v458
    %v2877 = vunpack.c.h.b16 %v458
    %v2878 = vunpack.c.l.b16 %v459
    %v2879 = vunpack.c.h.b16 %v459
    %v2880 = vunpack.c.l.b16 %v460
    %v2881 = vunpack.c.h.b16 %v460
    %v2882 = vunpack.c.l.b16 %v461
    %v2883 = vunpack.c.h.b16 %v461
    %v2884 = vunpack.c.l.b16 %v462
    %v2885 = vunpack.c.h.b16 %v462
    %v2886 = vunpack.c.l.b16 %v463
    %v2887 = vunpack.c.h.b16 %v463
    %v2888 = vunpack.c.l.b16 %v464
    %v2889 = vunpack.c.h.b16 %v464
    %v2890 = vunpack.c.l.b16 %v465
    %v2891 = vunpack.c.h.b16 %v465
    %v2892 = vunpack.c.l.b16 %v466
    %v2893 = vunpack.c.h.b16 %v466
    %v2894 = vunpack.c.l.b16 %v467
    %v2895 = vunpack.c.h.b16 %v467
    %v2896 = vunpack.c.l.b16 %v468
    %v2897 = vunpack.c.h.b16 %v468
    %v2898 = vunpack.c.l.b16 %v469
    %v2899 = vunpack.c.h.b16 %v469
    %v2900 = vunpack.c.l.b16 %v470
    %v2901 = vunpack.c.h.b16 %v470
    %v2902 = vunpack.c.l.b16 %v471
    %v2903 = vunpack.c.h.b16 %v471
    %v2904 = vunpack.c.l.b16 %v472
    %v2905 = vunpack.c.h.b16 %v472
    %v2906 = vunpack.c.l.b16 %v473
    %v2907 = vunpack.c.h.b16 %v473
    %v2908 = vunpack.c.l.b16 %v474
    %v2909 = vunpack.c.h.b16 %v474
    %v2910 = vunpack.c.l.b16 %v475
    %v2911 = vunpack.c.h.b16 %v475
    %v2912 = vunpack.c.l.b16 %v476
    %v2913 = vunpack.c.h.b16 %v476
    %v2914 = vunpack.c.l.b16 %v477
    %v2915 = vunpack.c.h.b16 %v477
    %v2916 = vunpack.c.l.b16 %v478
    %v2917 = vunpack.c.h.b16 %v478
    %v2918 = vunpack.c.l.b16 %v479
    %v2919 = vunpack.c.h.b16 %v479
    %v2920 = vunpack.c.l.b16 %v480
    %v2921 = vunpack.c.h.b16 %v480
    %v2922 = vunpack.c.l.b16 %v481
    %v2923 = vunpack.c.h.b16 %v481
    %v2924 = vunpack.c.l.b16 %v482
    %v2925 = vunpack.c.h.b16 %v482
    %v2926 = vunpack.c.l.b16 %v483
    %v2927 = vunpack.c.h.b16 %v483
    %v2928 = vunpack.c.l.b16 %v484
    %v2929 = vunpack.c.h.b16 %v484
    %v2930 = vunpack.c.l.b16 %v485
    %v2931 = vunpack.c.h.b16 %v485
    %v2932 = vunpack.c.l.b16 %v486
    %v2933 = vunpack.c.h.b16 %v486
    %v2934 = vunpack.c.l.b16 %v487
    %v2935 = vunpack.c.h.b16 %v487
    %v2936 = vunpack.c.l.b16 %v488
    %v2937 = vunpack.c.h.b16 %v488
    %v2938 = vunpack.c.l.b16 %v489
    %v2939 = vunpack.c.h.b16 %v489
    %v2940 = vunpack.c.l.b16 %v490
    %v2941 = vunpack.c.h.b16 %v490
    %v2942 = vunpack.c.l.b16 %v491
    %v2943 = vunpack.c.h.b16 %v491
    %v2944 = vunpack.c.l.b16 %v492
    %v2945 = vunpack.c.h.b16 %v492
    %v2946 = vunpack.c.l.b16 %v493
    %v2947 = vunpack.c.h.b16 %v493
    %v2948 = vunpack.c.l.b16 %v494
    %v2949 = vunpack.c.h.b16 %v494
    %v2950 = vunpack.c.l.b16 %v495
    %v2951 = vunpack.c.h.b16 %v495
    %v2952 = vunpack.c.l.b16 %v496
    %v2953 = vunpack.c.h.b16 %v496
    %v2954 = vunpack.c.l.b16 %v497
    %v2955 = vunpack.c.h.b16 %v497
    %v2956 = vunpack.c.l.b16 %v498
    %v2957 = vunpack.c.h.b16 %v498
    %v2958 = vunpack.c.l.b16 %v499
    %v2959 = vunpack.c.h.b16 %v499
    %v2960 = vunpack.c.l.b16 %v500
    %v2961 = vunpack.c.h.b16 %v500
    %v2962 = vunpack.c.l.b16 %v501
    %v2963 = vunpack.c.h.b16 %v501
    %v2964 = vunpack.c.l.b16 %v502
    %v2965 = vunpack.c.h.b16 %v502
    %v2966 = vunpack.c.l.b16 %v503
    %v2967 = vunpack.c.h.b16 %v503
    %v2968 = vunpack.c.l.b16 %v504
    %v2969 = vunpack.c.h.b16 %v504
    %v2970 = vunpack.c.l.b16 %v505
    %v2971 = vunpack.c.h.b16 %v505
    %v2972 = vunpack.c.l.b16 %v506
    %v2973 = vunpack.c.h.b16 %v506
    %v2974 = vunpack.c.l.b16 %v507
    %v2975 = vunpack.c.h.b16 %v507
    %v2976 = vunpack.c.l.b16 %v508
    %v2977 = vunpack.c.h.b16 %v508
    %v2978 = vunpack.c.l.b16 %v509
    %v2979 = vunpack.c.h.b16 %v509
    %v2980 = vunpack.c.l.b16 %v510
    %v2981 = vunpack.c.h.b16 %v510
    %v2982 = vunpack.c.l.b16 %v511
    %v2983 = vunpack.c.h.b16 %v511
    %v2984 = vunpack.c.l.b16 %v512
    %v2985 = vunpack.c.h.b16 %v512
    %v2986 = vunpack.c.l.b16 %v513
    %v2987 = vunpack.c.h.b16 %v513
    %v2988 = vunpack.c.l.b16 %v514
    %v2989 = vunpack.c.h.b16 %v514
    %v2990 = vunpack.c.l.b16 %v515
    %v2991 = vunpack.c.h.b16 %v515
    %v2992 = vunpack.c.l.b16 %v516
    %v2993 = vunpack.c.h.b16 %v516
    %v2994 = vunpack.c.l.b16 %v517
    %v2995 = vunpack.c.h.b16 %v517
    %v2996 = vunpack.c.l.b16 %v518
    %v2997 = vunpack.c.h.b16 %v518
    %v2998 = vunpack.c.l.b16 %v519
    %v2999 = vunpack.c.h.b16 %v519
    %v3000 = vunpack.c.l.b16 %v520
    %v3001 = vunpack.c.h.b16 %v520
    %v3002 = vunpack.c.l.b16 %v521
    %v3003 = vunpack.c.h.b16 %v521
    %v3004 = vunpack.c.l.b16 %v522
    %v3005 = vunpack.c.h.b16 %v522
    %v3006 = vunpack.c.l.b16 %v523
    %v3007 = vunpack.c.h.b16 %v523
    %v3008 = vunpack.c.l.b16 %v524
    %v3009 = vunpack.c.h.b16 %v524
    %v3010 = vunpack.c.l.b16 %v525
    %v3011 = vunpack.c.h.b16 %v525
    %v3012 = vunpack.c.l.b16 %v526
    %v3013 = vunpack.c.h.b16 %v526
    %v3014 = vunpack.c.l.b16 %v527
    %v3015 = vunpack.c.h.b16 %v527
    %v3016 = vunpack.c.l.b16 %v528
    %v3017 = vunpack.c.h.b16 %v528
    %v3018 = vunpack.c.l.b16 %v529
    %v3019 = vunpack.c.h.b16 %v529
    %v3020 = vunpack.c.l.b16 %v530
    %v3021 = vunpack.c.h.b16 %v530
    %v3022 = vunpack.c.l.b16 %v531
    %v3023 = vunpack.c.h.b16 %v531
    %v3024 = vunpack.c.l.b16 %v532
    %v3025 = vunpack.c.h.b16 %v532
    %v3026 = vunpack.c.l.b16 %v533
    %v3027 = vunpack.c.h.b16 %v533
    %v3028 = vunpack.c.l.b16 %v534
    %v3029 = vunpack.c.h.b16 %v534
    %v3030 = vunpack.c.l.b16 %v535
    %v3031 = vunpack.c.h.b16 %v535
    %v3032 = vunpack.c.l.b16 %v536
    %v3033 = vunpack.c.h.b16 %v536
    %v3034 = vunpack.c.l.b16 %v537
    %v3035 = vunpack.c.h.b16 %v537
    %v3036 = vunpack.c.l.b16 %v538
    %v3037 = vunpack.c.h.b16 %v538
    %v3038 = vunpack.c.l.b16 %v539
    %v3039 = vunpack.c.h.b16 %v539
    %v3040 = vunpack.c.l.b16 %v540
    %v3041 = vunpack.c.h.b16 %v540
    %v3042 = vunpack.c.l.b16 %v541
    %v3043 = vunpack.c.h.b16 %v541
    %v3044 = vunpack.c.l.b16 %v542
    %v3045 = vunpack.c.h.b16 %v542
    %v3046 = vunpack.c.l.b16 %v543
    %v3047 = vunpack.c.h.b16 %v543
    %v3048 = vunpack.c.l.b16 %v544
    %v3049 = vunpack.c.h.b16 %v544
    %v3050 = vunpack.c.l.b16 %v545
    %v3051 = vunpack.c.h.b16 %v545
    %v3052 = vunpack.c.l.b16 %v546
    %v3053 = vunpack.c.h.b16 %v546
    %v3054 = vunpack.c.l.b16 %v547
    %v3055 = vunpack.c.h.b16 %v547
    %v3056 = vunpack.c.l.b16 %v548
    %v3057 = vunpack.c.h.b16 %v548
    %v3058 = vunpack.c.l.b16 %v549
    %v3059 = vunpack.c.h.b16 %v549
    %v3060 = vunpack.c.l.b16 %v550
    %v3061 = vunpack.c.h.b16 %v550
    %v3062 = vunpack.c.l.b16 %v551
    %v3063 = vunpack.c.h.b16 %v551
    %v3064 = vunpack.c.l.b16 %v552
    %v3065 = vunpack.c.h.b16 %v552
    %v3066 = vunpack.c.l.b16 %v553
    %v3067 = vunpack.c.h.b16 %v553
    %v3068 = vunpack.c.l.b16 %v554
    %v3069 = vunpack.c.h.b16 %v554
    %v3070 = vunpack.c.l.b16 %v555
    %v3071 = vunpack.c.h.b16 %v555
    %v3072 = vunpack.c.l.b16 %v556
    %v3073 = vunpack.c.h.b16 %v556
    %v3074 = vunpack.c.l.b16 %v557
    %v3075 = vunpack.c.h.b16 %v557
    %v3076 = vunpack.c.l.b16 %v558
    %v3077 = vunpack.c.h.b16 %v558
    %v3078 = vunpack.c.l.b16 %v559
    %v3079 = vunpack.c.h.b16 %v559
    %v3080 = vunpack.c.l.b16 %v560
    %v3081 = vunpack.c.h.b16 %v560
    %v3082 = vunpack.c.l.b16 %v561
    %v3083 = vunpack.c.h.b16 %v561
    %v3084 = vunpack.c.l.b16 %v562
    %v3085 = vunpack.c.h.b16 %v562
    %v3086 = vunpack.c.l.b16 %v563
    %v3087 = vunpack.c.h.b16 %v563
    %v3088 = vunpack.c.l.b16 %v564
    %v3089 = vunpack.c.h.b16 %v564
    %v3090 = vunpack.c.l.b16 %v565
    %v3091 = vunpack.c.h.b16 %v565
    %v3092 = vunpack.c.l.b16 %v566
    %v3093 = vunpack.c.h.b16 %v566
    %v3094 = vunpack.c.l.b16 %v567
    %v3095 = vunpack.c.h.b16 %v567
    %v3096 = vunpack.c.l.b16 %v568
    %v3097 = vunpack.c.h.b16 %v568
    %v3098 = vunpack.c.l.b16 %v569
    %v3099 = vunpack.c.h.b16 %v569
    %v3100 = vunpack.c.l.b16 %v570
    %v3101 = vunpack.c.h.b16 %v570
    %v3102 = vunpack.c.l.b16 %v571
    %v3103 = vunpack.c.h.b16 %v571
    %v3104 = vunpack.c.l.b16 %v572
    %v3105 = vunpack.c.h.b16 %v572
    %v3106 = vunpack.c.l.b16 %v573
    %v3107 = vunpack.c.h.b16 %v573
    %v3108 = vunpack.c.l.b16 %v574
    %v3109 = vunpack.c.h.b16 %v574
    %v3110 = vunpack.c.l.b16 %v575
    %v3111 = vunpack.c.h.b16 %v575
    %v3112 = vunpack.c.l.b16 %v576
    %v3113 = vunpack.c.h.b16 %v576
    %v3114 = vunpack.c.l.b16 %v577
    %v3115 = vunpack.c.h.b16 %v577
    %v3116 = vunpack.c.l.b16 %v578
    %v3117 = vunpack.c.h.b16 %v578
    %v3118 = vunpack.c.l.b16 %v579
    %v3119 = vunpack.c.h.b16 %v579
    %v3120 = vunpack.c.l.b16 %v580
    %v3121 = vunpack.c.h.b16 %v580
    %v3122 = vunpack.c.l.b16 %v581
    %v3123 = vunpack.c.h.b16 %v581
    %v3124 = vunpack.c.l.b16 %v582
    %v3125 = vunpack.c.h.b16 %v582
    %v3126 = vunpack.c.l.b16 %v583
    %v3127 = vunpack.c.h.b16 %v583
    %v3128 = vunpack.c.l.b16 %v584
    %v3129 = vunpack.c.h.b16 %v584
    %v3130 = vunpack.c.l.b16 %v585
    %v3131 = vunpack.c.h.b16 %v585
    %v3132 = vunpack.c.l.b16 %v586
    %v3133 = vunpack.c.h.b16 %v586
    %v3134 = vunpack.c.l.b16 %v587
    %v3135 = vunpack.c.h.b16 %v587
    %v3136 = vunpack.c.l.b16 %v588
    %v3137 = vunpack.c.h.b16 %v588
    %v3138 = vunpack.c.l.b16 %v589
    %v3139 = vunpack.c.h.b16 %v589
    %v3140 = vunpack.c.l.b16 %v590
    %v3141 = vunpack.c.h.b16 %v590
    %v3142 = vunpack.c.l.b16 %v591
    %v3143 = vunpack.c.h.b16 %v591
    %v3144 = vunpack.c.l.b16 %v592
    %v3145 = vunpack.c.h.b16 %v592
    %v3146 = vunpack.c.l.b16 %v593
    %v3147 = vunpack.c.h.b16 %v593
    %v3148 = vunpack.c.l.b16 %v594
    %v3149 = vunpack.c.h.b16 %v594
    %v3150 = vunpack.c.l.b16 %v595
    %v3151 = vunpack.c.h.b16 %v595
    %v3152 = vunpack.c.l.b16 %v596
    %v3153 = vunpack.c.h.b16 %v596
    %v3154 = vunpack.c.l.b16 %v597
    %v3155 = vunpack.c.h.b16 %v597
    %v3156 = vunpack.c.l.b16 %v598
    %v3157 = vunpack.c.h.b16 %v598
    %v3158 = vunpack.c.l.b16 %v599
    %v3159 = vunpack.c.h.b16 %v599
    %v3160 = vunpack.c.l.b16 %v600
    %v3161 = vunpack.c.h.b16 %v600
    %v3162 = vunpack.c.l.b16 %v601
    %v3163 = vunpack.c.h.b16 %v601
    %v3164 = vunpack.c.l.b16 %v602
    %v3165 = vunpack.c.h.b16 %v602
    %v3166 = vunpack.c.l.b16 %v603
    %v3167 = vunpack.c.h.b16 %v603
    %v3168 = vunpack.c.l.b16 %v604
    %v3169 = vunpack.c.h.b16 %v604
    %v3170 = vunpack.c.l.b16 %v605
    %v3171 = vunpack.c.h.b16 %v605
    %v3172 = vunpack.c.l.b16 %v606
    %v3173 = vunpack.c.h.b16 %v606
    %v3174 = vunpack.c.l.b16 %v607
    %v3175 = vunpack.c.h.b16 %v607
    %v3176 = vunpack.c.l.b16 %v608
    %v3177 = vunpack.c.h.b16 %v608
    %v3178 = vunpack.c.l.b16 %v609
    %v3179 = vunpack.c.h.b16 %v609
    %v3180 = vunpack.c.l.b16 %v610
    %v3181 = vunpack.c.h.b16 %v610
    %v3182 = vunpack.c.l.b16 %v611
    %v3183 = vunpack.c.h.b16 %v611
    %v3184 = vunpack.c.l.b16 %v612
    %v3185 = vunpack.c.h.b16 %v612
    %v3186 = vunpack.c.l.b16 %v613
    %v3187 = vunpack.c.h.b16 %v613
    %v3188 = vunpack.c.l.b16 %v614
    %v3189 = vunpack.c.h.b16 %v614
    %v3190 = vunpack.c.l.b16 %v615
    %v3191 = vunpack.c.h.b16 %v615
    %v3192 = vunpack.c.l.b16 %v616
    %v3193 = vunpack.c.h.b16 %v616
    %v3194 = vunpack.c.l.b16 %v617
    %v3195 = vunpack.c.h.b16 %v617
    %v3196 = vunpack.c.l.b16 %v618
    %v3197 = vunpack.c.h.b16 %v618
    %v3198 = vunpack.c.l.b16 %v619
    %v3199 = vunpack.c.h.b16 %v619
    %v3200 = vunpack.c.l.b16 %v620
    %v3201 = vunpack.c.h.b16 %v620
    %v3202 = vunpack.c.l.b16 %v621
    %v3203 = vunpack.c.h.b16 %v621
    %v3204 = vunpack.c.l.b16 %v622
    %v3205 = vunpack.c.h.b16 %v622
    %v3206 = vunpack.c.l.b16 %v623
    %v3207 = vunpack.c.h.b16 %v623
    %v3208 = vunpack.c.l.b16 %v624
    %v3209 = vunpack.c.h.b16 %v624
    %v3210 = vunpack.c.l.b16 %v625
    %v3211 = vunpack.c.h.b16 %v625
    %v3212 = vunpack.c.l.b16 %v626
    %v3213 = vunpack.c.h.b16 %v626
    %v3214 = vunpack.c.l.b16 %v627
    %v3215 = vunpack.c.h.b16 %v627
    %v3216 = vunpack.c.l.b16 %v628
    %v3217 = vunpack.c.h.b16 %v628
    %v3218 = vunpack.c.l.b16 %v629
    %v3219 = vunpack.c.h.b16 %v629
    %v3220 = vunpack.c.l.b16 %v630
    %v3221 = vunpack.c.h.b16 %v630
    %v3222 = vunpack.c.l.b16 %v631
    %v3223 = vunpack.c.h.b16 %v631
    %v3224 = vunpack.c.l.b16 %v632
    %v3225 = vunpack.c.h.b16 %v632
    %v3226 = vunpack.c.l.b16 %v633
    %v3227 = vunpack.c.h.b16 %v633
    %v3228 = vunpack.c.l.b16 %v634
    %v3229 = vunpack.c.h.b16 %v634
    %v3230 = vunpack.c.l.b16 %v635
    %v3231 = vunpack.c.h.b16 %v635
    %v3232 = vunpack.c.l.b16 %v636
    %v3233 = vunpack.c.h.b16 %v636
    %v3234 = vunpack.c.l.b16 %v637
    %v3235 = vunpack.c.h.b16 %v637
    %v3236 = vunpack.c.l.b16 %v638
    %v3237 = vunpack.c.h.b16 %v638
    %v3238 = vunpack.c.l.b16 %v639
    %v3239 = vunpack.c.h.b16 %v639
    %v3240 = vunpack.c.l.b16 %v640
    %v3241 = vunpack.c.h.b16 %v640
    %v3242 = vunpack.c.l.b16 %v641
    %v3243 = vunpack.c.h.b16 %v641
    %v3244 = vunpack.c.l.b16 %v642
    %v3245 = vunpack.c.h.b16 %v642
    %v3246 = vunpack.c.l.b16 %v643
    %v3247 = vunpack.c.h.b16 %v643
    %v3248 = vunpack.c.l.b16 %v644
    %v3249 = vunpack.c.h.b16 %v644
    %v3250 = vunpack.c.l.b16 %v645
    %v3251 = vunpack.c.h.b16 %v645
    %v3252 = vunpack.c.l.b16 %v646
    %v3253 = vunpack.c.h.b16 %v646
    %v3254 = vunpack.c.l.b16 %v647
    %v3255 = vunpack.c.h.b16 %v647
    %v3256 = vunpack.c.l.b16 %v648
    %v3257 = vunpack.c.h.b16 %v648
    %v3258 = vunpack.c.l.b16 %v649
    %v3259 = vunpack.c.h.b16 %v649
    %v3260 = vunpack.c.l.b16 %v650
    %v3261 = vunpack.c.h.b16 %v650
    %v3262 = vunpack.c.l.b16 %v651
    %v3263 = vunpack.c.h.b16 %v651
    %v3264 = vunpack.c.l.b16 %v652
    %v3265 = vunpack.c.h.b16 %v652
    %v3266 = vunpack.c.l.b16 %v653
    %v3267 = vunpack.c.h.b16 %v653
    %v3268 = vunpack.c.l.b16 %v654
    %v3269 = vunpack.c.h.b16 %v654
    %v3270 = vunpack.c.l.b16 %v655
    %v3271 = vunpack.c.h.b16 %v655
    %v3272 = vunpack.c.l.b16 %v656
    %v3273 = vunpack.c.h.b16 %v656
    %v3274 = vunpack.c.l.b16 %v657
    %v3275 = vunpack.c.h.b16 %v657
    %v3276 = vunpack.c.l.b16 %v658
    %v3277 = vunpack.c.h.b16 %v658
    %v3278 = vunpack.c.l.b16 %v659
    %v3279 = vunpack.c.h.b16 %v659
    %v3280 = vunpack.c.l.b16 %v660
    %v3281 = vunpack.c.h.b16 %v660
    %v3282 = vunpack.c.l.b16 %v661
    %v3283 = vunpack.c.h.b16 %v661
    %v3284 = vunpack.c.l.b16 %v662
    %v3285 = vunpack.c.h.b16 %v662
    %v3286 = vunpack.c.l.b16 %v663
    %v3287 = vunpack.c.h.b16 %v663
    %v3288 = vunpack.c.l.b16 %v664
    %v3289 = vunpack.c.h.b16 %v664
    %v3290 = vunpack.c.l.b16 %v665
    %v3291 = vunpack.c.h.b16 %v665
    %v3292 = vunpack.c.l.b16 %v666
    %v3293 = vunpack.c.h.b16 %v666
    %v3294 = vunpack.c.l.b16 %v667
    %v3295 = vunpack.c.h.b16 %v667
    %v3296 = vunpack.c.l.b16 %v668
    %v3297 = vunpack.c.h.b16 %v668
    %v3298 = vunpack.c.l.b16 %v669
    %v3299 = vunpack.c.h.b16 %v669
    %v3300 = vunpack.c.l.b16 %v670
    %v3301 = vunpack.c.h.b16 %v670
    %v3302 = vunpack.c.l.b16 %v671
    %v3303 = vunpack.c.h.b16 %v671
    %v3304 = vunpack.c.l.b16 %v672
    %v3305 = vunpack.c.h.b16 %v672
    %v3306 = vunpack.c.l.b16 %v673
    %v3307 = vunpack.c.h.b16 %v673
    %v3308 = vunpack.c.l.b16 %v674
    %v3309 = vunpack.c.h.b16 %v674
    %v3310 = vunpack.c.l.b16 %v675
    %v3311 = vunpack.c.h.b16 %v675
    %v3312 = vunpack.c.l.b16 %v676
    %v3313 = vunpack.c.h.b16 %v676
    %v3314 = vunpack.c.l.b16 %v677
    %v3315 = vunpack.c.h.b16 %v677
    %v3316 = vunpack.c.l.b16 %v678
    %v3317 = vunpack.c.h.b16 %v678
    %v3318 = vunpack.c.l.b16 %v679
    %v3319 = vunpack.c.h.b16 %v679
    %v3320 = vunpack.c.l.b16 %v680
    %v3321 = vunpack.c.h.b16 %v680
    %v3322 = vunpack.c.l.b16 %v681
    %v3323 = vunpack.c.h.b16 %v681
    %v3324 = vunpack.c.l.b16 %v682
    %v3325 = vunpack.c.h.b16 %v682
    %v3326 = vunpack.c.l.b16 %v683
    %v3327 = vunpack.c.h.b16 %v683
    %v3328 = vunpack.c.l.b16 %v684
    %v3329 = vunpack.c.h.b16 %v684
    %v3330 = vunpack.c.l.b16 %v685
    %v3331 = vunpack.c.h.b16 %v685
    %v3332 = vunpack.c.l.b16 %v686
    %v3333 = vunpack.c.h.b16 %v686
    %v3334 = vunpack.c.l.b16 %v687
    %v3335 = vunpack.c.h.b16 %v687
    %v3336 = vunpack.c.l.b16 %v688
    %v3337 = vunpack.c.h.b16 %v688
    %v3338 = vunpack.c.l.b16 %v689
    %v3339 = vunpack.c.h.b16 %v689
    %v3340 = vunpack.c.l.b16 %v690
    %v3341 = vunpack.c.h.b16 %v690
    %v3342 = vunpack.c.l.b16 %v691
    %v3343 = vunpack.c.h.b16 %v691
    %v3344 = vunpack.c.l.b16 %v692
    %v3345 = vunpack.c.h.b16 %v692
    %v3346 = vunpack.c.l.b16 %v693
    %v3347 = vunpack.c.h.b16 %v693
    %v3348 = vunpack.c.l.b16 %v694
    %v3349 = vunpack.c.h.b16 %v694
    %v3350 = vunpack.c.l.b16 %v695
    %v3351 = vunpack.c.h.b16 %v695
    %v3352 = vunpack.c.l.b16 %v696
    %v3353 = vunpack.c.h.b16 %v696
    %v3354 = vunpack.c.l.b16 %v697
    %v3355 = vunpack.c.h.b16 %v697
    %v3356 = vunpack.c.l.b16 %v698
    %v3357 = vunpack.c.h.b16 %v698
    %v3358 = vunpack.c.l.b16 %v699
    %v3359 = vunpack.c.h.b16 %v699
    %v3360 = vunpack.c.l.b16 %v700
    %v3361 = vunpack.c.h.b16 %v700
    %v3362 = vunpack.c.l.b16 %v701
    %v3363 = vunpack.c.h.b16 %v701
    %v3364 = vunpack.c.l.b16 %v702
    %v3365 = vunpack.c.h.b16 %v702
    %v3366 = vunpack.c.l.b16 %v703
    %v3367 = vunpack.c.h.b16 %v703
    %v3368 = vunpack.c.l.b16 %v704
    %v3369 = vunpack.c.h.b16 %v704
    %v3370 = vunpack.c.l.b16 %v705
    %v3371 = vunpack.c.h.b16 %v705
    %v3372 = vunpack.c.l.b16 %v706
    %v3373 = vunpack.c.h.b16 %v706
    %v3374 = vunpack.c.l.b16 %v707
    %v3375 = vunpack.c.h.b16 %v707
    %v3376 = vunpack.c.l.b16 %v708
    %v3377 = vunpack.c.h.b16 %v708
    %v3378 = vunpack.c.l.b16 %v709
    %v3379 = vunpack.c.h.b16 %v709
    %v3380 = vunpack.c.l.b16 %v710
    %v3381 = vunpack.c.h.b16 %v710
    %v3382 = vunpack.c.l.b16 %v711
    %v3383 = vunpack.c.h.b16 %v711
    %v3384 = vunpack.c.l.b16 %v712
    %v3385 = vunpack.c.h.b16 %v712
    %v3386 = vunpack.c.l.b16 %v713
    %v3387 = vunpack.c.h.b16 %v713
    %v3388 = vunpack.c.l.b16 %v714
    %v3389 = vunpack.c.h.b16 %v714
    %v3390 = vunpack.c.l.b16 %v715
    %v3391 = vunpack.c.h.b16 %v715
    %v3392 = vunpack.c.l.b16 %v716
    %v3393 = vunpack.c.h.b16 %v716
    %v3394 = vunpack.c.l.b16 %v717
    %v3395 = vunpack.c.h.b16 %v717
    %v3396 = vunpack.c.l.b16 %v718
    %v3397 = vunpack.c.h.b16 %v718
    %v3398 = vunpack.c.l.b16 %v719
    %v3399 = vunpack.c.h.b16 %v719
    %v3400 = vunpack.c.l.b16 %v720
    %v3401 = vunpack.c.h.b16 %v720
    %v3402 = vunpack.c.l.b16 %v721
    %v3403 = vunpack.c.h.b16 %v721
    %v3404 = vunpack.c.l.b16 %v722
    %v3405 = vunpack.c.h.b16 %v722
    %v3406 = vunpack.c.l.b16 %v723
    %v3407 = vunpack.c.h.b16 %v723
    %v3408 = vunpack.c.l.b16 %v724
    %v3409 = vunpack.c.h.b16 %v724
    %v3410 = vunpack.c.l.b16 %v725
    %v3411 = vunpack.c.h.b16 %v725
    %v3412 = vunpack.c.l.b16 %v726
    %v3413 = vunpack.c.h.b16 %v726
    %v3414 = vunpack.c.l.b16 %v727
    %v3415 = vunpack.c.h.b16 %v727
    %v3416 = vunpack.c.l.b16 %v728
    %v3417 = vunpack.c.h.b16 %v728
    %v3418 = vunpack.c.l.b16 %v729
    %v3419 = vunpack.c.h.b16 %v729
    %v3420 = vunpack.c.l.b16 %v730
    %v3421 = vunpack.c.h.b16 %v730
    %v3422 = vunpack.c.l.b16 %v731
    %v3423 = vunpack.c.h.b16 %v731
    %v3424 = vunpack.c.l.b16 %v732
    %v3425 = vunpack.c.h.b16 %v732
    %v3426 = vunpack.c.l.b16 %v733
    %v3427 = vunpack.c.h.b16 %v733
    %v3428 = vunpack.c.l.b16 %v734
    %v3429 = vunpack.c.h.b16 %v734
    %v3430 = vunpack.c.l.b16 %v735
    %v3431 = vunpack.c.h.b16 %v735
    %v3432 = vunpack.c.l.b16 %v736
    %v3433 = vunpack.c.h.b16 %v736
    %v3434 = vunpack.c.l.b16 %v737
    %v3435 = vunpack.c.h.b16 %v737
    %v3436 = vunpack.c.l.b16 %v738
    %v3437 = vunpack.c.h.b16 %v738
    %v3438 = vunpack.c.l.b16 %v739
    %v3439 = vunpack.c.h.b16 %v739
    %v3440 = vunpack.c.l.b16 %v740
    %v3441 = vunpack.c.h.b16 %v740
    %v3442 = vunpack.c.l.b16 %v741
    %v3443 = vunpack.c.h.b16 %v741
    %v3444 = vunpack.c.l.b16 %v742
    %v3445 = vunpack.c.h.b16 %v742
    %v3446 = vunpack.c.l.b16 %v743
    %v3447 = vunpack.c.h.b16 %v743
    %v3448 = vunpack.c.l.b16 %v744
    %v3449 = vunpack.c.h.b16 %v744
    %v3450 = vunpack.c.l.b16 %v745
    %v3451 = vunpack.c.h.b16 %v745
    %v3452 = vunpack.c.l.b16 %v746
    %v3453 = vunpack.c.h.b16 %v746
    %v3454 = vunpack.c.l.b16 %v747
    %v3455 = vunpack.c.h.b16 %v747
    %v3456 = vunpack.c.l.b16 %v748
    %v3457 = vunpack.c.h.b16 %v748
    %v3458 = vunpack.c.l.b16 %v749
    %v3459 = vunpack.c.h.b16 %v749
    %v3460 = vunpack.c.l.b16 %v750
    %v3461 = vunpack.c.h.b16 %v750
    %v3462 = vunpack.c.l.b16 %v751
    %v3463 = vunpack.c.h.b16 %v751
    %v3464 = vunpack.c.l.b16 %v752
    %v3465 = vunpack.c.h.b16 %v752
    %v3466 = vunpack.c.l.b16 %v753
    %v3467 = vunpack.c.h.b16 %v753
    %v3468 = vunpack.c.l.b16 %v754
    %v3469 = vunpack.c.h.b16 %v754
    %v3470 = vunpack.c.l.b16 %v755
    %v3471 = vunpack.c.h.b16 %v755
    %v3472 = vunpack.c.l.b16 %v756
    %v3473 = vunpack.c.h.b16 %v756
    %v3474 = vunpack.c.l.b16 %v757
    %v3475 = vunpack.c.h.b16 %v757
    %v3476 = vunpack.c.l.b16 %v758
    %v3477 = vunpack.c.h.b16 %v758
    %v3478 = vunpack.c.l.b16 %v759
    %v3479 = vunpack.c.h.b16 %v759
    %v3480 = vunpack.c.l.b16 %v760
    %v3481 = vunpack.c.h.b16 %v760
    %v3482 = vunpack.c.l.b16 %v761
    %v3483 = vunpack.c.h.b16 %v761
    %v3484 = vunpack.c.l.b16 %v762
    %v3485 = vunpack.c.h.b16 %v762
    %v3486 = vunpack.c.l.b16 %v763
    %v3487 = vunpack.c.h.b16 %v763
    %v3488 = vunpack.c.l.b16 %v764
    %v3489 = vunpack.c.h.b16 %v764
    %v3490 = vunpack.c.l.b16 %v765
    %v3491 = vunpack.c.h.b16 %v765
    %v3492 = vunpack.c.l.b16 %v766
    %v3493 = vunpack.c.h.b16 %v766
    %v3494 = vunpack.c.l.b16 %v767
    %v3495 = vunpack.c.h.b16 %v767
    %v3496 = vunpack.c.l.b16 %v768
    %v3497 = vunpack.c.h.b16 %v768
    %v3498 = vunpack.c.l.b16 %v769
    %v3499 = vunpack.c.h.b16 %v769
    %v3500 = vunpack.c.l.b16 %v770
    %v3501 = vunpack.c.h.b16 %v770
    %v3502 = vunpack.c.l.b16 %v771
    %v3503 = vunpack.c.h.b16 %v771
    %v3504 = vunpack.c.l.b16 %v772
    %v3505 = vunpack.c.h.b16 %v772
    %v3506 = vunpack.c.l.b16 %v773
    %v3507 = vunpack.c.h.b16 %v773
    %v3508 = vunpack.c.l.b16 %v774
    %v3509 = vunpack.c.h.b16 %v774
    %v3510 = vunpack.c.l.b16 %v775
    %v3511 = vunpack.c.h.b16 %v775
    %v3512 = vunpack.c.l.b16 %v776
    %v3513 = vunpack.c.h.b16 %v776
    %v3514 = vunpack.c.l.b16 %v777
    %v3515 = vunpack.c.h.b16 %v777
    %v3516 = vunpack.c.l.b16 %v778
    %v3517 = vunpack.c.h.b16 %v778
    %v3518 = vunpack.c.l.b16 %v779
    %v3519 = vunpack.c.h.b16 %v779
    %v3520 = vunpack.c.l.b16 %v780
    %v3521 = vunpack.c.h.b16 %v780
    %v3522 = vunpack.c.l.b16 %v781
    %v3523 = vunpack.c.h.b16 %v781
    %v3524 = vunpack.c.l.b16 %v782
    %v3525 = vunpack.c.h.b16 %v782
    %v3526 = vunpack.c.l.b16 %v783
    %v3527 = vunpack.c.h.b16 %v783
    %v3528 = vunpack.c.l.b16 %v784
    %v3529 = vunpack.c.h.b16 %v784
    %v3530 = vunpack.c.l.b16 %v785
    %v3531 = vunpack.c.h.b16 %v785
    %v3532 = vunpack.c.l.b16 %v786
    %v3533 = vunpack.c.h.b16 %v786
    %v3534 = vunpack.c.l.b16 %v787
    %v3535 = vunpack.c.h.b16 %v787
    %v3536 = vunpack.c.l.b16 %v788
    %v3537 = vunpack.c.h.b16 %v788
    %v3538 = vunpack.c.l.b16 %v789
    %v3539 = vunpack.c.h.b16 %v789
    %v3540 = vunpack.c.l.b16 %v790
    %v3541 = vunpack.c.h.b16 %v790
    %v3542 = vunpack.c.l.b16 %v791
    %v3543 = vunpack.c.h.b16 %v791
    %v3544 = vunpack.c.l.b16 %v792
    %v3545 = vunpack.c.h.b16 %v792
    %v3546 = vunpack.c.l.b16 %v793
    %v3547 = vunpack.c.h.b16 %v793
    %v3548 = vunpack.c.l.b16 %v794
    %v3549 = vunpack.c.h.b16 %v794
    %v3550 = vunpack.c.l.b16 %v795
    %v3551 = vunpack.c.h.b16 %v795
    %v3552 = vunpack.c.l.b16 %v796
    %v3553 = vunpack.c.h.b16 %v796
    %v3554 = vunpack.c.l.b16 %v797
    %v3555 = vunpack.c.h.b16 %v797
    %v3556 = vunpack.c.l.b16 %v798
    %v3557 = vunpack.c.h.b16 %v798
    %v3558 = vunpack.c.l.b16 %v799
    %v3559 = vunpack.c.h.b16 %v799
    %v3560 = vunpack.c.l.b16 %v800
    %v3561 = vunpack.c.h.b16 %v800
    %v3562 = vunpack.c.l.b16 %v801
    %v3563 = vunpack.c.h.b16 %v801
    %v3564 = vunpack.c.l.b16 %v802
    %v3565 = vunpack.c.h.b16 %v802
    %v3566 = vunpack.c.l.b16 %v803
    %v3567 = vunpack.c.h.b16 %v803
    %v3568 = vunpack.c.l.b16 %v804
    %v3569 = vunpack.c.h.b16 %v804
    %v3570 = vunpack.c.l.b16 %v805
    %v3571 = vunpack.c.h.b16 %v805
    %v3572 = vunpack.c.l.b16 %v806
    %v3573 = vunpack.c.h.b16 %v806
    %v3574 = vunpack.c.l.b16 %v807
    %v3575 = vunpack.c.h.b16 %v807
    %v3576 = vunpack.c.l.b16 %v808
    %v3577 = vunpack.c.h.b16 %v808
    %v3578 = vunpack.c.l.b16 %v809
    %v3579 = vunpack.c.h.b16 %v809
    %v3580 = vunpack.c.l.b16 %v810
    %v3581 = vunpack.c.h.b16 %v810
    %v3582 = vunpack.c.l.b16 %v811
    %v3583 = vunpack.c.h.b16 %v811
    %v3584 = vunpack.c.l.b16 %v812
    %v3585 = vunpack.c.h.b16 %v812
    %v3586 = vunpack.c.l.b16 %v813
    %v3587 = vunpack.c.h.b16 %v813
    %v3588 = vunpack.c.l.b16 %v814
    %v3589 = vunpack.c.h.b16 %v814
    %v3590 = vunpack.c.l.b16 %v815
    %v3591 = vunpack.c.h.b16 %v815
    %v3592 = vunpack.c.l.b16 %v816
    %v3593 = vunpack.c.h.b16 %v816
    %v3594 = vunpack.c.l.b16 %v817
    %v3595 = vunpack.c.h.b16 %v817
    %v3596 = vunpack.c.l.b16 %v818
    %v3597 = vunpack.c.h.b16 %v818
    %v3598 = vunpack.c.l.b16 %v819
    %v3599 = vunpack.c.h.b16 %v819
    %v3600 = vunpack.c.l.b16 %v820
    %v3601 = vunpack.c.h.b16 %v820
    %v3602 = vunpack.c.l.b16 %v821
    %v3603 = vunpack.c.h.b16 %v821
    %v3604 = vunpack.c.l.b16 %v822
    %v3605 = vunpack.c.h.b16 %v822
    %v3606 = vunpack.c.l.b16 %v823
    %v3607 = vunpack.c.h.b16 %v823
    %v3608 = vunpack.c.l.b16 %v824
    %v3609 = vunpack.c.h.b16 %v824
    %v3610 = vunpack.c.l.b16 %v825
    %v3611 = vunpack.c.h.b16 %v825
    %v3612 = vunpack.c.l.b16 %v826
    %v3613 = vunpack.c.h.b16 %v826
    %v3614 = vunpack.c.l.b16 %v827
    %v3615 = vunpack.c.h.b16 %v827
    %v3616 = vunpack.c.l.b16 %v828
    %v3617 = vunpack.c.h.b16 %v828
    %v3618 = vunpack.c.l.b16 %v829
    %v3619 = vunpack.c.h.b16 %v829
    %v3620 = vunpack.c.l.b16 %v830
    %v3621 = vunpack.c.h.b16 %v830
    %v3622 = vunpack.c.l.b16 %v831
    %v3623 = vunpack.c.h.b16 %v831
    %v3624 = vunpack.c.l.b16 %v832
    %v3625 = vunpack.c.h.b16 %v832
    %v3626 = vunpack.c.l.b16 %v833
    %v3627 = vunpack.c.h.b16 %v833
    %v3628 = vunpack.c.l.b16 %v834
    %v3629 = vunpack.c.h.b16 %v834
    %v3630 = vunpack.c.l.b16 %v835
    %v3631 = vunpack.c.h.b16 %v835
    %v3632 = vunpack.c.l.b16 %v836
    %v3633 = vunpack.c.h.b16 %v836
    %v3634 = vunpack.c.l.b16 %v837
    %v3635 = vunpack.c.h.b16 %v837
    %v3636 = vunpack.c.l.b16 %v838
    %v3637 = vunpack.c.h.b16 %v838
    %v3638 = vunpack.c.l.b16 %v839
    %v3639 = vunpack.c.h.b16 %v839
    %v3640 = vunpack.c.l.b16 %v840
    %v3641 = vunpack.c.h.b16 %v840
    %v3642 = vunpack.c.l.b16 %v841
    %v3643 = vunpack.c.h.b16 %v841
    %v3644 = vunpack.c.l.b16 %v842
    %v3645 = vunpack.c.h.b16 %v842
    %v3646 = vunpack.c.l.b16 %v843
    %v3647 = vunpack.c.h.b16 %v843
    %v3648 = vunpack.c.l.b16 %v844
    %v3649 = vunpack.c.h.b16 %v844
    %v3650 = vunpack.c.l.b16 %v845
    %v3651 = vunpack.c.h.b16 %v845
    %v3652 = vunpack.c.l.b16 %v846
    %v3653 = vunpack.c.h.b16 %v846
    %v3654 = vunpack.c.l.b16 %v847
    %v3655 = vunpack.c.h.b16 %v847
    %v3656 = vunpack.c.l.b16 %v848
    %v3657 = vunpack.c.h.b16 %v848
    %v3658 = vunpack.c.l.b16 %v849
    %v3659 = vunpack.c.h.b16 %v849
    %v3660 = vunpack.c.l.b16 %v850
    %v3661 = vunpack.c.h.b16 %v850
    %v3662 = vunpack.c.l.b16 %v851
    %v3663 = vunpack.c.h.b16 %v851
    %v3664 = vunpack.c.l.b16 %v852
    %v3665 = vunpack.c.h.b16 %v852
    %v3666 = vunpack.c.l.b16 %v853
    %v3667 = vunpack.c.h.b16 %v853
    %v3668 = vunpack.c.l.b16 %v854
    %v3669 = vunpack.c.h.b16 %v854
    %v3670 = vunpack.c.l.b16 %v855
    %v3671 = vunpack.c.h.b16 %v855
    %v3672 = vunpack.c.l.b16 %v856
    %v3673 = vunpack.c.h.b16 %v856
    %v3674 = vunpack.c.l.b16 %v857
    %v3675 = vunpack.c.h.b16 %v857
    %v3676 = vunpack.c.l.b16 %v858
    %v3677 = vunpack.c.h.b16 %v858
    %v3678 = vunpack.c.l.b16 %v859
    %v3679 = vunpack.c.h.b16 %v859
    %v3680 = vunpack.c.l.b16 %v860
    %v3681 = vunpack.c.h.b16 %v860
    %v3682 = vunpack.c.l.b16 %v861
    %v3683 = vunpack.c.h.b16 %v861
    %v3684 = vunpack.c.l.b16 %v862
    %v3685 = vunpack.c.h.b16 %v862
    %v3686 = vunpack.c.l.b16 %v863
    %v3687 = vunpack.c.h.b16 %v863
    %v3688 = vunpack.c.l.b16 %v864
    %v3689 = vunpack.c.h.b16 %v864
    %v3690 = vunpack.c.l.b16 %v865
    %v3691 = vunpack.c.h.b16 %v865
    %v3692 = vunpack.c.l.b16 %v866
    %v3693 = vunpack.c.h.b16 %v866
    %v3694 = vunpack.c.l.b16 %v867
    %v3695 = vunpack.c.h.b16 %v867
    %v3696 = vunpack.c.l.b16 %v868
    %v3697 = vunpack.c.h.b16 %v868
    %v3698 = vunpack.c.l.b16 %v869
    %v3699 = vunpack.c.h.b16 %v869
    %v3700 = vunpack.c.l.b16 %v870
    %v3701 = vunpack.c.h.b16 %v870
    %v3702 = vunpack.c.l.b16 %v871
    %v3703 = vunpack.c.h.b16 %v871
    %v3704 = vunpack.c.l.b16 %v872
    %v3705 = vunpack.c.h.b16 %v872
    %v3706 = vunpack.c.l.b16 %v873
    %v3707 = vunpack.c.h.b16 %v873
    %v3708 = vunpack.c.l.b16 %v874
    %v3709 = vunpack.c.h.b16 %v874
    %v3710 = vunpack.c.l.b16 %v875
    %v3711 = vunpack.c.h.b16 %v875
    %v3712 = vunpack.c.l.b16 %v876
    %v3713 = vunpack.c.h.b16 %v876
    %v3714 = vunpack.c.l.b16 %v877
    %v3715 = vunpack.c.h.b16 %v877
    %v3716 = vunpack.c.l.b16 %v878
    %v3717 = vunpack.c.h.b16 %v878
    %v3718 = vunpack.c.l.b16 %v879
    %v3719 = vunpack.c.h.b16 %v879
    %v3720 = vunpack.c.l.b16 %v880
    %v3721 = vunpack.c.h.b16 %v880
    %v3722 = vunpack.c.l.b16 %v881
    %v3723 = vunpack.c.h.b16 %v881
    %v3724 = vunpack.c.l.b16 %v882
    %v3725 = vunpack.c.h.b16 %v882
    %v3726 = vunpack.c.l.b16 %v883
    %v3727 = vunpack.c.h.b16 %v883
    %v3728 = vunpack.c.l.b16 %v884
    %v3729 = vunpack.c.h.b16 %v884
    %v3730 = vunpack.c.l.b16 %v885
    %v3731 = vunpack.c.h.b16 %v885
    %v3732 = vunpack.c.l.b16 %v886
    %v3733 = vunpack.c.h.b16 %v886
    %v3734 = vunpack.c.l.b16 %v887
    %v3735 = vunpack.c.h.b16 %v887
    %v3736 = vunpack.c.l.b16 %v888
    %v3737 = vunpack.c.h.b16 %v888
    %v3738 = vunpack.c.l.b16 %v889
    %v3739 = vunpack.c.h.b16 %v889
    %v3740 = vunpack.c.l.b16 %v890
    %v3741 = vunpack.c.h.b16 %v890
    %v3742 = vunpack.c.l.b16 %v891
    %v3743 = vunpack.c.h.b16 %v891
    %v3744 = vunpack.c.l.b16 %v892
    %v3745 = vunpack.c.h.b16 %v892
    %v3746 = vunpack.c.l.b16 %v893
    %v3747 = vunpack.c.h.b16 %v893
    %v3748 = vunpack.c.l.b16 %v894
    %v3749 = vunpack.c.h.b16 %v894
    %v3750 = vunpack.c.l.b16 %v895
    %v3751 = vunpack.c.h.b16 %v895
    %v3752 = vunpack.c.l.b16 %v896
    %v3753 = vunpack.c.h.b16 %v896
    %v3754 = vunpack.c.l.b16 %v897
    %v3755 = vunpack.c.h.b16 %v897
    %v3756 = vunpack.c.l.b16 %v898
    %v3757 = vunpack.c.h.b16 %v898
    %v3758 = vunpack.c.l.b16 %v899
    %v3759 = vunpack.c.h.b16 %v899
    %v3760 = vunpack.c.l.b16 %v900
    %v3761 = vunpack.c.h.b16 %v900
    %v3762 = vunpack.c.l.b16 %v901
    %v3763 = vunpack.c.h.b16 %v901
    %v3764 = vunpack.c.l.b16 %v902
    %v3765 = vunpack.c.h.b16 %v902
    %v3766 = vunpack.c.l.b16 %v903
    %v3767 = vunpack.c.h.b16 %v903
    %v3768 = vunpack.c.l.b16 %v904
    %v3769 = vunpack.c.h.b16 %v904
    %v3770 = vunpack.c.l.b16 %v905
    %v3771 = vunpack.c.h.b16 %v905
    %v3772 = vunpack.c.l.b16 %v906
    %v3773 = vunpack.c.h.b16 %v906
    %v3774 = vunpack.c.l.b16 %v907
    %v3775 = vunpack.c.h.b16 %v907
    %v3776 = vunpack.c.l.b16 %v908
    %v3777 = vunpack.c.h.b16 %v908
    %v3778 = vunpack.c.l.b16 %v909
    %v3779 = vunpack.c.h.b16 %v909
    %v3780 = vunpack.c.l.b16 %v910
    %v3781 = vunpack.c.h.b16 %v910
    %v3782 = vunpack.c.l.b16 %v911
    %v3783 = vunpack.c.h.b16 %v911
    %v3784 = vunpack.c.l.b16 %v912
    %v3785 = vunpack.c.h.b16 %v912
    %v3786 = vunpack.c.l.b16 %v913
    %v3787 = vunpack.c.h.b16 %v913
    %v3788 = vunpack.c.l.b16 %v914
    %v3789 = vunpack.c.h.b16 %v914
    %v3790 = vunpack.c.l.b16 %v915
    %v3791 = vunpack.c.h.b16 %v915
    %v3792 = vunpack.c.l.b16 %v916
    %v3793 = vunpack.c.h.b16 %v916
    %v3794 = vunpack.c.l.b16 %v917
    %v3795 = vunpack.c.h.b16 %v917
    %v3796 = vunpack.c.l.b16 %v918
    %v3797 = vunpack.c.h.b16 %v918
    %v3798 = vunpack.c.l.b16 %v919
    %v3799 = vunpack.c.h.b16 %v919
    %v3800 = vunpack.c.l.b16 %v920
    %v3801 = vunpack.c.h.b16 %v920
    %v3802 = vunpack.c.l.b16 %v921
    %v3803 = vunpack.c.h.b16 %v921
    %v3804 = vunpack.c.l.b16 %v922
    %v3805 = vunpack.c.h.b16 %v922
    %v3806 = vunpack.c.l.b16 %v923
    %v3807 = vunpack.c.h.b16 %v923
    %v3808 = vunpack.c.l.b16 %v924
    %v3809 = vunpack.c.h.b16 %v924
    %v3810 = vunpack.c.l.b16 %v925
    %v3811 = vunpack.c.h.b16 %v925
    %v3812 = vunpack.c.l.b16 %v926
    %v3813 = vunpack.c.h.b16 %v926
    %v3814 = vunpack.c.l.b16 %v927
    %v3815 = vunpack.c.h.b16 %v927
    %v3816 = vunpack.c.l.b16 %v928
    %v3817 = vunpack.c.h.b16 %v928
    %v3818 = vunpack.c.l.b16 %v929
    %v3819 = vunpack.c.h.b16 %v929
    %v3820 = vunpack.c.l.b16 %v930
    %v3821 = vunpack.c.h.b16 %v930
    %v3822 = vunpack.c.l.b16 %v931
    %v3823 = vunpack.c.h.b16 %v931
    %v3824 = vunpack.c.l.b16 %v932
    %v3825 = vunpack.c.h.b16 %v932
    %v3826 = vunpack.c.l.b16 %v933
    %v3827 = vunpack.c.h.b16 %v933
    %v3828 = vunpack.c.l.b16 %v934
    %v3829 = vunpack.c.h.b16 %v934
    %v3830 = vunpack.c.l.b16 %v935
    %v3831 = vunpack.c.h.b16 %v935
    %v3832 = vunpack.c.l.b16 %v936
    %v3833 = vunpack.c.h.b16 %v936
    %v3834 = vunpack.c.l.b16 %v937
    %v3835 = vunpack.c.h.b16 %v937
    %v3836 = vunpack.c.l.b16 %v938
    %v3837 = vunpack.c.h.b16 %v938
    %v3838 = vunpack.c.l.b16 %v939
    %v3839 = vunpack.c.h.b16 %v939
    %v3840 = vunpack.c.l.b16 %v940
    %v3841 = vunpack.c.h.b16 %v940
    %v3842 = vunpack.c.l.b16 %v941
    %v3843 = vunpack.c.h.b16 %v941
    %v3844 = vunpack.c.l.b16 %v942
    %v3845 = vunpack.c.h.b16 %v942
    %v3846 = vunpack.c.l.b16 %v943
    %v3847 = vunpack.c.h.b16 %v943
    %v3848 = vunpack.c.l.b16 %v944
    %v3849 = vunpack.c.h.b16 %v944
    %v3850 = vunpack.c.l.b16 %v945
    %v3851 = vunpack.c.h.b16 %v945
    %v3852 = vunpack.c.l.b16 %v946
    %v3853 = vunpack.c.h.b16 %v946
    %v3854 = vunpack.c.l.b16 %v947
    %v3855 = vunpack.c.h.b16 %v947
    %v3856 = vunpack.c.l.b16 %v948
    %v3857 = vunpack.c.h.b16 %v948
    %v3858 = vunpack.c.l.b16 %v949
    %v3859 = vunpack.c.h.b16 %v949
    %v3860 = vunpack.c.l.b16 %v950
    %v3861 = vunpack.c.h.b16 %v950
    %v3862 = vunpack.c.l.b16 %v951
    %v3863 = vunpack.c.h.b16 %v951
    %v3864 = vunpack.c.l.b16 %v952
    %v3865 = vunpack.c.h.b16 %v952
    %v3866 = vunpack.c.l.b16 %v953
    %v3867 = vunpack.c.h.b16 %v953
    %v3868 = vunpack.c.l.b16 %v954
    %v3869 = vunpack.c.h.b16 %v954
    %v3870 = vunpack.c.l.b16 %v955
    %v3871 = vunpack.c.h.b16 %v955
    %v3872 = vunpack.c.l.b16 %v956
    %v3873 = vunpack.c.h.b16 %v956
    %v3874 = vunpack.c.l.b16 %v957
    %v3875 = vunpack.c.h.b16 %v957
    %v3876 = vunpack.c.l.b16 %v958
    %v3877 = vunpack.c.h.b16 %v958
    %v3878 = vunpack.c.l.b16 %v959
    %v3879 = vunpack.c.h.b16 %v959
    %v3880 = vunpack.c.l.b16 %v960
    %v3881 = vunpack.c.h.b16 %v960
    %v3882 = vunpack.c.l.b16 %v961
    %v3883 = vunpack.c.h.b16 %v961
    %v3884 = vunpack.c.l.b16 %v962
    %v3885 = vunpack.c.h.b16 %v962
    %v3886 = vunpack.c.l.b16 %v963
    %v3887 = vunpack.c.h.b16 %v963
    %v3888 = vunpack.c.l.b16 %v964
    %v3889 = vunpack.c.h.b16 %v964
    %v3890 = vunpack.c.l.b16 %v965
    %v3891 = vunpack.c.h.b16 %v965
    %v3892 = vunpack.c.l.b16 %v966
    %v3893 = vunpack.c.h.b16 %v966
    %v3894 = vunpack.c.l.b16 %v967
    %v3895 = vunpack.c.h.b16 %v967
    %v3896 = vunpack.c.l.b16 %v968
    %v3897 = vunpack.c.h.b16 %v968
    %v3898 = vunpack.c.l.b16 %v969
    %v3899 = vunpack.c.h.b16 %v969
    %v3900 = vunpack.c.l.b16 %v970
    %v3901 = vunpack.c.h.b16 %v970
    %v3902 = vunpack.c.l.b16 %v971
    %v3903 = vunpack.c.h.b16 %v971
    %v3904 = vunpack.c.l.b16 %v972
    %v3905 = vunpack.c.h.b16 %v972
    %v3906 = vunpack.c.l.b16 %v973
    %v3907 = vunpack.c.h.b16 %v973
    %v3908 = vunpack.c.l.b16 %v974
    %v3909 = vunpack.c.h.b16 %v974
    %v3910 = vunpack.c.l.b16 %v975
    %v3911 = vunpack.c.h.b16 %v975
    %v3912 = vunpack.c.l.b16 %v976
    %v3913 = vunpack.c.h.b16 %v976
    %v3914 = vunpack.c.l.b16 %v977
    %v3915 = vunpack.c.h.b16 %v977
    %v3916 = vunpack.c.l.b16 %v978
    %v3917 = vunpack.c.h.b16 %v978
    %v3918 = vunpack.c.l.b16 %v979
    %v3919 = vunpack.c.h.b16 %v979
    %v3920 = vunpack.c.l.b16 %v980
    %v3921 = vunpack.c.h.b16 %v980
    %v3922 = vunpack.c.l.b16 %v981
    %v3923 = vunpack.c.h.b16 %v981
    %v3924 = vunpack.c.l.b16 %v982
    %v3925 = vunpack.c.h.b16 %v982
    %v3926 = vunpack.c.l.b16 %v983
    %v3927 = vunpack.c.h.b16 %v983
    %v3928 = vunpack.c.l.b16 %v984
    %v3929 = vunpack.c.h.b16 %v984
    %v3930 = vunpack.c.l.b16 %v985
    %v3931 = vunpack.c.h.b16 %v985
    %v3932 = vunpack.c.l.b16 %v986
    %v3933 = vunpack.c.h.b16 %v986
    %v3934 = vunpack.c.l.b16 %v987
    %v3935 = vunpack.c.h.b16 %v987
    %v3936 = vunpack.c.l.b16 %v988
    %v3937 = vunpack.c.h.b16 %v988
    %v3938 = vunpack.c.l.b16 %v989
    %v3939 = vunpack.c.h.b16 %v989
    %v3940 = vunpack.c.l.b16 %v990
    %v3941 = vunpack.c.h.b16 %v990
    %v3942 = vunpack.c.l.b16 %v991
    %v3943 = vunpack.c.h.b16 %v991
    %v3944 = vunpack.c.l.b16 %v992
    %v3945 = vunpack.c.h.b16 %v992
    %v3946 = vunpack.c.l.b16 %v993
    %v3947 = vunpack.c.h.b16 %v993
    %v3948 = vunpack.c.l.b16 %v994
    %v3949 = vunpack.c.h.b16 %v994
    %v3950 = vunpack.c.l.b16 %v995
    %v3951 = vunpack.c.h.b16 %v995
    %v3952 = vunpack.c.l.b16 %v996
    %v3953 = vunpack.c.h.b16 %v996
    %v3954 = vunpack.c.l.b16 %v997
    %v3955 = vunpack.c.h.b16 %v997
    %v3956 = vunpack.c.l.b16 %v998
    %v3957 = vunpack.c.h.b16 %v998
    %v3958 = vunpack.c.l.b16 %v999
    %v3959 = vunpack.c.h.b16 %v999
    %v3960 = vunpack.c.l.b16 %v1000
    %v3961 = vunpack.c.h.b16 %v1000
    %v3962 = vunpack.c.l.b16 %v1001
    %v3963 = vunpack.c.h.b16 %v1001
    %v3964 = vunpack.c.l.b16 %v1002
    %v3965 = vunpack.c.h.b16 %v1002
    %v3966 = vunpack.c.l.b16 %v1003
    %v3967 = vunpack.c.h.b16 %v1003
    %v3968 = vunpack.c.l.b16 %v1004
    %v3969 = vunpack.c.h.b16 %v1004
    %v3970 = vunpack.c.l.b16 %v1005
    %v3971 = vunpack.c.h.b16 %v1005
    %v3972 = vunpack.c.l.b16 %v1006
    %v3973 = vunpack.c.h.b16 %v1006
    %v3974 = vunpack.c.l.b16 %v1007
    %v3975 = vunpack.c.h.b16 %v1007
    %v3976 = vunpack.c.l.b16 %v1008
    %v3977 = vunpack.c.h.b16 %v1008
    %v3978 = vunpack.c.l.b16 %v1009
    %v3979 = vunpack.c.h.b16 %v1009
    %v3980 = vunpack.c.l.b16 %v1010
    %v3981 = vunpack.c.h.b16 %v1010
    %v3982 = vunpack.c.l.b16 %v1011
    %v3983 = vunpack.c.h.b16 %v1011
    %v3984 = vunpack.c.l.b16 %v1012
    %v3985 = vunpack.c.h.b16 %v1012
    %v3986 = vunpack.c.l.b16 %v1013
    %v3987 = vunpack.c.h.b16 %v1013
    %v3988 = vunpack.c.l.b16 %v1014
    %v3989 = vunpack.c.h.b16 %v1014
    %v3990 = vunpack.c.l.b16 %v1015
    %v3991 = vunpack.c.h.b16 %v1015
    %v3992 = vunpack.c.l.b16 %v1016
    %v3993 = vunpack.c.h.b16 %v1016
    %v3994 = vunpack.c.l.b16 %v1017
    %v3995 = vunpack.c.h.b16 %v1017
    %v3996 = vunpack.c.l.b16 %v1018
    %v3997 = vunpack.c.h.b16 %v1018
    %v3998 = vunpack.c.l.b16 %v1019
    %v3999 = vunpack.c.h.b16 %v1019
    %v4000 = vunpack.c.l.b16 %v1020
    %v4001 = vunpack.c.h.b16 %v1020
    %v4002 = vunpack.c.l.b16 %v1021
    %v4003 = vunpack.c.h.b16 %v1021
    %v4004 = vunpack.c.l.b16 %v1022
    %v4005 = vunpack.c.h.b16 %v1022
    %v4006 = vunpack.c.l.b16 %v1023
    %v4007 = vunpack.c.h.b16 %v1023
    %v4008 = vunpack.c.l.b16 %v1024
    %v4009 = vunpack.c.h.b16 %v1024
    %v4010 = vunpack.c.l.b16 %v1025
    %v4011 = vunpack.c.h.b16 %v1025
    %v4012 = vunpack.c.l.b16 %v1026
    %v4013 = vunpack.c.h.b16 %v1026
    %v4014 = vunpack.c.l.b16 %v1027
    %v4015 = vunpack.c.h.b16 %v1027
    %v4016 = vunpack.c.l.b16 %v1028
    %v4017 = vunpack.c.h.b16 %v1028
    %v4018 = vunpack.c.l.b16 %v1029
    %v4019 = vunpack.c.h.b16 %v1029
    %v4020 = vunpack.c.l.b16 %v1030
    %v4021 = vunpack.c.h.b16 %v1030
    %v4022 = vunpack.c.l.b16 %v1031
    %v4023 = vunpack.c.h.b16 %v1031
    %v4024 = vunpack.c.l.b16 %v1032
    %v4025 = vunpack.c.h.b16 %v1032
    %v4026 = vunpack.c.l.b16 %v1033
    %v4027 = vunpack.c.h.b16 %v1033
    %v4028 = vunpack.c.l.b16 %v1034
    %v4029 = vunpack.c.h.b16 %v1034
    %v4030 = vunpack.c.l.b16 %v1035
    %v4031 = vunpack.c.h.b16 %v1035
    %v4032 = vunpack.c.l.b16 %v1036
    %v4033 = vunpack.c.h.b16 %v1036
    %v4034 = vunpack.c.l.b16 %v1037
    %v4035 = vunpack.c.h.b16 %v1037
    %v4036 = vunpack.c.l.b16 %v1038
    %v4037 = vunpack.c.h.b16 %v1038
    %v4038 = vunpack.c.l.b16 %v1039
    %v4039 = vunpack.c.h.b16 %v1039
    %v4040 = vunpack.c.l.b16 %v1040
    %v4041 = vunpack.c.h.b16 %v1040
    %v4042 = vunpack.c.l.b16 %v1041
    %v4043 = vunpack.c.h.b16 %v1041
    %v4044 = vunpack.c.l.b16 %v1042
    %v4045 = vunpack.c.h.b16 %v1042
    %v4046 = vunpack.c.l.b16 %v1043
    %v4047 = vunpack.c.h.b16 %v1043
    %v4048 = vunpack.c.l.b16 %v1044
    %v4049 = vunpack.c.h.b16 %v1044
    %v4050 = vunpack.c.l.b16 %v1045
    %v4051 = vunpack.c.h.b16 %v1045
    %v4052 = vunpack.c.l.b16 %v1046
    %v4053 = vunpack.c.h.b16 %v1046
    %v4054 = vunpack.c.l.b16 %v1047
    %v4055 = vunpack.c.h.b16 %v1047
    %v4056 = vunpack.c.l.b16 %v1048
    %v4057 = vunpack.c.h.b16 %v1048
    %v4058 = vunpack.c.l.b16 %v1049
    %v4059 = vunpack.c.h.b16 %v1049
    %v4060 = vunpack.c.l.b16 %v1050
    %v4061 = vunpack.c.h.b16 %v1050
    %v4062 = vunpack.c.l.b16 %v1051
    %v4063 = vunpack.c.h.b16 %v1051
    %v4064 = vunpack.c.l.b16 %v1052
    %v4065 = vunpack.c.h.b16 %v1052
    %v4066 = vunpack.c.l.b16 %v1053
    %v4067 = vunpack.c.h.b16 %v1053
    %v4068 = vunpack.c.l.b16 %v1054
    %v4069 = vunpack.c.h.b16 %v1054
    %v4070 = vunpack.c.l.b16 %v1055
    %v4071 = vunpack.c.h.b16 %v1055
    %v4072 = vunpack.c.l.b16 %v1056
    %v4073 = vunpack.c.h.b16 %v1056
    %v4074 = vunpack.c.l.b16 %v1057
    %v4075 = vunpack.c.h.b16 %v1057
    %v4076 = vunpack.c.l.b16 %v1058
    %v4077 = vunpack.c.h.b16 %v1058
    %v4078 = vunpack.c.l.b16 %v1059
    %v4079 = vunpack.c.h.b16 %v1059
    %v4080 = vunpack.c.l.b16 %v1060
    %v4081 = vunpack.c.h.b16 %v1060
    %v4082 = vunpack.c.l.b16 %v1061
    %v4083 = vunpack.c.h.b16 %v1061
    %v4084 = vunpack.c.l.b16 %v1062
    %v4085 = vunpack.c.h.b16 %v1062
    %v4086 = vunpack.c.l.b16 %v1063
    %v4087 = vunpack.c.h.b16 %v1063
    %v4088 = vunpack.c.l.b16 %v1064
    %v4089 = vunpack.c.h.b16 %v1064
    %v4090 = vunpack.c.l.b16 %v1065
    %v4091 = vunpack.c.h.b16 %v1065
    %v4092 = vunpack.c.l.b16 %v1066
    %v4093 = vunpack.c.h.b16 %v1066
    %v4094 = vunpack.c.l.b16 %v1067
    %v4095 = vunpack.c.h.b16 %v1067
    %v4096 = vunpack.c.l.b16 %v1068
    %v4097 = vunpack.c.h.b16 %v1068
    %v4098 = vunpack.c.l.b16 %v1069
    %v4099 = vunpack.c.h.b16 %v1069
    %v4100 = vunpack.c.l.b16 %v1070
    %v4101 = vunpack.c.h.b16 %v1070
    %v4102 = vunpack.c.l.b16 %v1071
    %v4103 = vunpack.c.h.b16 %v1071
    %v4104 = vunpack.c.l.b16 %v1072
    %v4105 = vunpack.c.h.b16 %v1072
    %v4106 = vunpack.c.l.b16 %v1073
    %v4107 = vunpack.c.h.b16 %v1073
    %v4108 = vunpack.c.l.b16 %v1074
    %v4109 = vunpack.c.h.b16 %v1074
    %v4110 = vunpack.c.l.b16 %v1075
    %v4111 = vunpack.c.h.b16 %v1075
    %v4112 = vunpack.c.l.b16 %v1076
    %v4113 = vunpack.c.h.b16 %v1076
    %v4114 = vunpack.c.l.b16 %v1077
    %v4115 = vunpack.c.h.b16 %v1077
    %v4116 = vunpack.c.l.b16 %v1078
    %v4117 = vunpack.c.h.b16 %v1078
    %v4118 = vunpack.c.l.b16 %v1079
    %v4119 = vunpack.c.h.b16 %v1079
    %v4120 = vunpack.c.l.b16 %v1080
    %v4121 = vunpack.c.h.b16 %v1080
    %v4122 = vunpack.c.l.b16 %v1081
    %v4123 = vunpack.c.h.b16 %v1081
    %v4124 = vunpack.c.l.b16 %v1082
    %v4125 = vunpack.c.h.b16 %v1082
    %v4126 = vunpack.c.l.b16 %v1083
    %v4127 = vunpack.c.h.b16 %v1083
    %v4128 = vunpack.c.l.b16 %v1084
    %v4129 = vunpack.c.h.b16 %v1084
    %v4130 = vunpack.c.l.b16 %v1085
    %v4131 = vunpack.c.h.b16 %v1085
    %v4132 = vunpack.c.l.b16 %v1086
    %v4133 = vunpack.c.h.b16 %v1086
    %v4134 = vunpack.c.l.b16 %v1087
    %v4135 = vunpack.c.h.b16 %v1087
    %v4136 = vunpack.c.l.b16 %v1088
    %v4137 = vunpack.c.h.b16 %v1088
    %v4138 = vunpack.c.l.b16 %v1089
    %v4139 = vunpack.c.h.b16 %v1089
    %v4140 = vunpack.c.l.b16 %v1090
    %v4141 = vunpack.c.h.b16 %v1090
    %v4142 = vunpack.c.l.b16 %v1091
    %v4143 = vunpack.c.h.b16 %v1091
    %v4144 = vunpack.c.l.b16 %v1092
    %v4145 = vunpack.c.h.b16 %v1092
    %v4146 = vunpack.c.l.b16 %v1093
    %v4147 = vunpack.c.h.b16 %v1093
    %v4148 = vunpack.c.l.b16 %v1094
    %v4149 = vunpack.c.h.b16 %v1094
    %v4150 = vunpack.c.l.b16 %v1095
    %v4151 = vunpack.c.h.b16 %v1095
    %v4152 = vunpack.c.l.b16 %v1096
    %v4153 = vunpack.c.h.b16 %v1096
    %v4154 = vunpack.c.l.b16 %v1097
    %v4155 = vunpack.c.h.b16 %v1097
    %v4156 = vunpack.c.l.b16 %v1098
    %v4157 = vunpack.c.h.b16 %v1098
    %v4158 = vunpack.c.l.b16 %v1099
    %v4159 = vunpack.c.h.b16 %v1099
    %v4160 = vunpack.c.l.b16 %v1100
    %v4161 = vunpack.c.h.b16 %v1100
    %v4162 = vunpack.c.l.b16 %v1101
    %v4163 = vunpack.c.h.b16 %v1101
    %v4164 = vunpack.c.l.b16 %v1102
    %v4165 = vunpack.c.h.b16 %v1102
    %v4166 = vunpack.c.l.b16 %v1103
    %v4167 = vunpack.c.h.b16 %v1103
    %v4168 = vunpack.c.l.b16 %v1104
    %v4169 = vunpack.c.h.b16 %v1104
    %v4170 = vunpack.c.l.b16 %v1105
    %v4171 = vunpack.c.h.b16 %v1105
    %v4172 = vunpack.c.l.b16 %v1106
    %v4173 = vunpack.c.h.b16 %v1106
    %v4174 = vunpack.c.l.b16 %v1107
    %v4175 = vunpack.c.h.b16 %v1107
    %v4176 = vunpack.c.l.b16 %v1108
    %v4177 = vunpack.c.h.b16 %v1108
    %v4178 = vunpack.c.l.b16 %v1109
    %v4179 = vunpack.c.h.b16 %v1109
    %v4180 = vunpack.c.l.b16 %v1110
    %v4181 = vunpack.c.h.b16 %v1110
    %v4182 = vunpack.c.l.b16 %v1111
    %v4183 = vunpack.c.h.b16 %v1111
    %v4184 = vunpack.c.l.b16 %v1112
    %v4185 = vunpack.c.h.b16 %v1112
    %v4186 = vunpack.c.l.b16 %v1113
    %v4187 = vunpack.c.h.b16 %v1113
    %v4188 = vunpack.c.l.b16 %v1114
    %v4189 = vunpack.c.h.b16 %v1114
    %v4190 = vunpack.c.l.b16 %v1115
    %v4191 = vunpack.c.h.b16 %v1115
    %v4192 = vunpack.c.l.b16 %v1116
    %v4193 = vunpack.c.h.b16 %v1116
    %v4194 = vunpack.c.l.b16 %v1117
    %v4195 = vunpack.c.h.b16 %v1117
    %v4196 = vunpack.c.l.b16 %v1118
    %v4197 = vunpack.c.h.b16 %v1118
    %v4198 = vunpack.c.l.b16 %v1119
    %v4199 = vunpack.c.h.b16 %v1119
    %v4200 = vunpack.c.l.b16 %v1120
    %v4201 = vunpack.c.h.b16 %v1120
    %v4202 = vunpack.c.l.b16 %v1121
    %v4203 = vunpack.c.h.b16 %v1121
    %v4204 = vunpack.c.l.b16 %v1122
    %v4205 = vunpack.c.h.b16 %v1122
    %v4206 = vunpack.c.l.b16 %v1123
    %v4207 = vunpack.c.h.b16 %v1123
    %v4208 = vunpack.c.l.b16 %v1124
    %v4209 = vunpack.c.h.b16 %v1124
    %v4210 = vunpack.c.l.b16 %v1125
    %v4211 = vunpack.c.h.b16 %v1125
    %v4212 = vunpack.c.l.b16 %v1126
    %v4213 = vunpack.c.h.b16 %v1126
    %v4214 = vunpack.c.l.b16 %v1127
    %v4215 = vunpack.c.h.b16 %v1127
    %v4216 = vunpack.c.l.b16 %v1128
    %v4217 = vunpack.c.h.b16 %v1128
    %v4218 = vunpack.c.l.b16 %v1129
    %v4219 = vunpack.c.h.b16 %v1129
    %v4220 = vunpack.c.l.b16 %v1130
    %v4221 = vunpack.c.h.b16 %v1130
    %v4222 = vunpack.c.l.b16 %v1131
    %v4223 = vunpack.c.h.b16 %v1131
    %v4224 = vunpack.c.l.b16 %v1132
    %v4225 = vunpack.c.h.b16 %v1132
    %v4226 = vunpack.c.l.b16 %v1133
    %v4227 = vunpack.c.h.b16 %v1133
    %v4228 = vunpack.c.l.b16 %v1134
    %v4229 = vunpack.c.h.b16 %v1134
    %v4230 = vunpack.c.l.b16 %v1135
    %v4231 = vunpack.c.h.b16 %v1135
    %v4232 = vunpack.c.l.b16 %v1136
    %v4233 = vunpack.c.h.b16 %v1136
    %v4234 = vunpack.c.l.b16 %v1137
    %v4235 = vunpack.c.h.b16 %v1137
    %v4236 = vunpack.c.l.b16 %v1138
    %v4237 = vunpack.c.h.b16 %v1138
    %v4238 = vunpack.c.l.b16 %v1139
    %v4239 = vunpack.c.h.b16 %v1139
    %v4240 = vunpack.c.l.b16 %v1140
    %v4241 = vunpack.c.h.b16 %v1140
    %v4242 = vunpack.c.l.b16 %v1141
    %v4243 = vunpack.c.h.b16 %v1141
    %v4244 = vunpack.c.l.b16 %v1142
    %v4245 = vunpack.c.h.b16 %v1142
    %v4246 = vunpack.c.l.b16 %v1143
    %v4247 = vunpack.c.h.b16 %v1143
    %v4248 = vunpack.c.l.b16 %v1144
    %v4249 = vunpack.c.h.b16 %v1144
    %v4250 = vunpack.c.l.b16 %v1145
    %v4251 = vunpack.c.h.b16 %v1145
    %v4252 = vunpack.c.l.b16 %v1146
    %v4253 = vunpack.c.h.b16 %v1146
    %v4254 = vunpack.c.l.b16 %v1147
    %v4255 = vunpack.c.h.b16 %v1147
    %v4256 = vpack.c.b16 %v2224, %v2208
    %v4257 = vpack.c.b16 %v2225, %v2209
    %v4258 = vpack.c.b16 %v2226, %v2210
    %v4259 = vpack.c.b16 %v2227, %v2211
    %v4260 = vpack.c.b16 %v2228, %v2212
    %v4261 = vpack.c.b16 %v2229, %v2213
    %v4262 = vpack.c.b16 %v2230, %v2214
    %v4263 = vpack.c.b16 %v2231, %v2215
    %v4264 = vpack.c.b16 %v2232, %v2216
    %v4265 = vpack.c.b16 %v2233, %v2217
    %v4266 = vpack.c.b16 %v2234, %v2218
    %v4267 = vpack.c.b16 %v2235, %v2219
    %v4268 = vpack.c.b16 %v2236, %v2220
    %v4269 = vpack.c.b16 %v2237, %v2221
    %v4270 = vpack.c.b16 %v2238, %v2222
    %v4271 = vpack.c.b16 %v2239, %v2223
    %v4272 = vpack.c.b16 %v2256, %v2240
    %v4273 = vpack.c.b16 %v2257, %v2241
    %v4274 = vpack.c.b16 %v2258, %v2242
    %v4275 = vpack.c.b16 %v2259, %v2243
    %v4276 = vpack.c.b16 %v2260, %v2244
    %v4277 = vpack.c.b16 %v2261, %v2245
    %v4278 = vpack.c.b16 %v2262, %v2246
    %v4279 = vpack.c.b16 %v2263, %v2247
    %v4280 = vpack.c.b16 %v2264, %v2248
    %v4281 = vpack.c.b16 %v2265, %v2249
    %v4282 = vpack.c.b16 %v2266, %v2250
    %v4283 = vpack.c.b16 %v2267, %v2251
    %v4284 = vpack.c.b16 %v2268, %v2252
    %v4285 = vpack.c.b16 %v2269, %v2253
    %v4286 = vpack.c.b16 %v2270, %v2254
    %v4287 = vpack.c.b16 %v2271, %v2255
    %v4288 = vpack.c.b16 %v2288, %v2272
    %v4289 = vpack.c.b16 %v2289, %v2273
    %v4290 = vpack.c.b16 %v2290, %v2274
    %v4291 = vpack.c.b16 %v2291, %v2275
    %v4292 = vpack.c.b16 %v2292, %v2276
    %v4293 = vpack.c.b16 %v2293, %v2277
    %v4294 = vpack.c.b16 %v2294, %v2278
    %v4295 = vpack.c.b16 %v2295, %v2279
    %v4296 = vpack.c.b16 %v2296, %v2280
    %v4297 = vpack.c.b16 %v2297, %v2281
    %v4298 = vpack.c.b16 %v2298, %v2282
    %v4299 = vpack.c.b16 %v2299, %v2283
    %v4300 = vpack.c.b16 %v2300, %v2284
    %v4301 = vpack.c.b16 %v2301, %v2285
    %v4302 = vpack.c.b16 %v2302, %v2286
    %v4303 = vpack.c.b16 %v2303, %v2287
    %v4304 = vpack.c.b16 %v2320, %v2304
    %v4305 = vpack.c.b16 %v2321, %v2305
    %v4306 = vpack.c.b16 %v2322, %v2306
    %v4307 = vpack.c.b16 %v2323, %v2307
    %v4308 = vpack.c.b16 %v2324, %v2308
    %v4309 = vpack.c.b16 %v2325, %v2309
    %v4310 = vpack.c.b16 %v2326, %v2310
    %v4311 = vpack.c.b16 %v2327, %v2311
    %v4312 = vpack.c.b16 %v2328, %v2312
    %v4313 = vpack.c.b16 %v2329, %v2313
    %v4314 = vpack.c.b16 %v2330, %v2314
    %v4315 = vpack.c.b16 %v2331, %v2315
    %v4316 = vpack.c.b16 %v2332, %v2316
    %v4317 = vpack.c.b16 %v2333, %v2317
    %v4318 = vpack.c.b16 %v2334, %v2318
    %v4319 = vpack.c.b16 %v2335, %v2319
    %v4320 = vpack.c.b16 %v2352, %v2336
    %v4321 = vpack.c.b16 %v2353, %v2337
    %v4322 = vpack.c.b16 %v2354, %v2338
    %v4323 = vpack.c.b16 %v2355, %v2339
    %v4324 = vpack.c.b16 %v2356, %v2340
    %v4325 = vpack.c.b16 %v2357, %v2341
    %v4326 = vpack.c.b16 %v2358, %v2342
    %v4327 = vpack.c.b16 %v2359, %v2343
    %v4328 = vpack.c.b16 %v2360, %v2344
    %v4329 = vpack.c.b16 %v2361, %v2345
    %v4330 = vpack.c.b16 %v2362, %v2346
    %v4331 = vpack.c.b16 %v2363, %v2347
    %v4332 = vpack.c.b16 %v2364, %v2348
    %v4333 = vpack.c.b16 %v2365, %v2349
    %v4334 = vpack.c.b16 %v2366, %v2350
    %v4335 = vpack.c.b16 %v2367, %v2351
    %v4336 = vpack.c.b16 %v2384, %v2368
    %v4337 = vpack.c.b16 %v2385, %v2369
    %v4338 = vpack.c.b16 %v2386, %v2370
    %v4339 = vpack.c.b16 %v2387, %v2371
    %v4340 = vpack.c.b16 %v2388, %v2372
    %v4341 = vpack.c.b16 %v2389, %v2373
    %v4342 = vpack.c.b16 %v2390, %v2374
    %v4343 = vpack.c.b16 %v2391, %v2375
    %v4344 = vpack.c.b16 %v2392, %v2376
    %v4345 = vpack.c.b16 %v2393, %v2377
    %v4346 = vpack.c.b16 %v2394, %v2378
    %v4347 = vpack.c.b16 %v2395, %v2379
    %v4348 = vpack.c.b16 %v2396, %v2380
    %v4349 = vpack.c.b16 %v2397, %v2381
    %v4350 = vpack.c.b16 %v2398, %v2382
    %v4351 = vpack.c.b16 %v2399, %v2383
    %v4352 = vpack.c.b16 %v2416, %v2400
    %v4353 = vpack.c.b16 %v2417, %v2401
    %v4354 = vpack.c.b16 %v2418, %v2402
    %v4355 = vpack.c.b16 %v2419, %v2403
    %v4356 = vpack.c.b16 %v2420, %v2404
    %v4357 = vpack.c.b16 %v2421, %v2405
    %v4358 = vpack.c.b16 %v2422, %v2406
    %v4359 = vpack.c.b16 %v2423, %v2407
    %v4360 = vpack.c.b16 %v2424, %v2408
    %v4361 = vpack.c.b16 %v2425, %v2409
    %v4362 = vpack.c.b16 %v2426, %v2410
    %v4363 = vpack.c.b16 %v2427, %v2411
    %v4364 = vpack.c.b16 %v2428, %v2412
    %v4365 = vpack.c.b16 %v2429, %v2413
    %v4366 = vpack.c.b16 %v2430, %v2414
    %v4367 = vpack.c.b16 %v2431, %v2415
    %v4368 = vpack.c.b16 %v2448, %v2432
    %v4369 = vpack.c.b16 %v2449, %v2433
    %v4370 = vpack.c.b16 %v2450, %v2434
    %v4371 = vpack.c.b16 %v2451, %v2435
    %v4372 = vpack.c.b16 %v2452, %v2436
    %v4373 = vpack.c.b16 %v2453, %v2437
    %v4374 = vpack.c.b16 %v2454, %v2438
    %v4375 = vpack.c.b16 %v2455, %v2439
    %v4376 = vpack.c.b16 %v2456, %v2440
    %v4377 = vpack.c.b16 %v2457, %v2441
    %v4378 = vpack.c.b16 %v2458, %v2442
    %v4379 = vpack.c.b16 %v2459, %v2443
    %v4380 = vpack.c.b16 %v2460, %v2444
    %v4381 = vpack.c.b16 %v2461, %v2445
    %v4382 = vpack.c.b16 %v2462, %v2446
    %v4383 = vpack.c.b16 %v2463, %v2447
    %v4384 = vpack.c.b16 %v2480, %v2464
    %v4385 = vpack.c.b16 %v2481, %v2465
    %v4386 = vpack.c.b16 %v2482, %v2466
    %v4387 = vpack.c.b16 %v2483, %v2467
    %v4388 = vpack.c.b16 %v2484, %v2468
    %v4389 = vpack.c.b16 %v2485, %v2469
    %v4390 = vpack.c.b16 %v2486, %v2470
    %v4391 = vpack.c.b16 %v2487, %v2471
    %v4392 = vpack.c.b16 %v2488, %v2472
    %v4393 = vpack.c.b16 %v2489, %v2473
    %v4394 = vpack.c.b16 %v2490, %v2474
    %v4395 = vpack.c.b16 %v2491, %v2475
    %v4396 = vpack.c.b16 %v2492, %v2476
    %v4397 = vpack.c.b16 %v2493, %v2477
    %v4398 = vpack.c.b16 %v2494, %v2478
    %v4399 = vpack.c.b16 %v2495, %v2479
    %v4400 = vpack.c.b16 %v2512, %v2496
    %v4401 = vpack.c.b16 %v2513, %v2497
    %v4402 = vpack.c.b16 %v2514, %v2498
    %v4403 = vpack.c.b16 %v2515, %v2499
    %v4404 = vpack.c.b16 %v2516, %v2500
    %v4405 = vpack.c.b16 %v2517, %v2501
    %v4406 = vpack.c.b16 %v2518, %v2502
    %v4407 = vpack.c.b16 %v2519, %v2503
    %v4408 = vpack.c.b16 %v2520, %v2504
    %v4409 = vpack.c.b16 %v2521, %v2505
    %v4410 = vpack.c.b16 %v2522, %v2506
    %v4411 = vpack.c.b16 %v2523, %v2507
    %v4412 = vpack.c.b16 %v2524, %v2508
    %v4413 = vpack.c.b16 %v2525, %v2509
    %v4414 = vpack.c.b16 %v2526, %v2510
    %v4415 = vpack.c.b16 %v2527, %v2511
    %v4416 = vpack.c.b16 %v2544, %v2528
    %v4417 = vpack.c.b16 %v2545, %v2529
    %v4418 = vpack.c.b16 %v2546, %v2530
    %v4419 = vpack.c.b16 %v2547, %v2531
    %v4420 = vpack.c.b16 %v2548, %v2532
    %v4421 = vpack.c.b16 %v2549, %v2533
    %v4422 = vpack.c.b16 %v2550, %v2534
    %v4423 = vpack.c.b16 %v2551, %v2535
    %v4424 = vpack.c.b16 %v2552, %v2536
    %v4425 = vpack.c.b16 %v2553, %v2537
    %v4426 = vpack.c.b16 %v2554, %v2538
    %v4427 = vpack.c.b16 %v2555, %v2539
    %v4428 = vpack.c.b16 %v2556, %v2540
    %v4429 = vpack.c.b16 %v2557, %v2541
    %v4430 = vpack.c.b16 %v2558, %v2542
    %v4431 = vpack.c.b16 %v2559, %v2543
    %v4432 = vpack.c.b16 %v2576, %v2560
    %v4433 = vpack.c.b16 %v2577, %v2561
    %v4434 = vpack.c.b16 %v2578, %v2562
    %v4435 = vpack.c.b16 %v2579, %v2563
    %v4436 = vpack.c.b16 %v2580, %v2564
    %v4437 = vpack.c.b16 %v2581, %v2565
    %v4438 = vpack.c.b16 %v2582, %v2566
    %v4439 = vpack.c.b16 %v2583, %v2567
    %v4440 = vpack.c.b16 %v2584, %v2568
    %v4441 = vpack.c.b16 %v2585, %v2569
    %v4442 = vpack.c.b16 %v2586, %v2570
    %v4443 = vpack.c.b16 %v2587, %v2571
    %v4444 = vpack.c.b16 %v2588, %v2572
    %v4445 = vpack.c.b16 %v2589, %v2573
    %v4446 = vpack.c.b16 %v2590, %v2574
    %v4447 = vpack.c.b16 %v2591, %v2575
    %v4448 = vpack.c.b16 %v2608, %v2592
    %v4449 = vpack.c.b16 %v2609, %v2593
    %v4450 = vpack.c.b16 %v2610, %v2594
    %v4451 = vpack.c.b16 %v2611, %v2595
    %v4452 = vpack.c.b16 %v2612, %v2596
    %v4453 = vpack.c.b16 %v2613, %v2597
    %v4454 = vpack.c.b16 %v2614, %v2598
    %v4455 = vpack.c.b16 %v2615, %v2599
    %v4456 = vpack.c.b16 %v2616, %v2600
    %v4457 = vpack.c.b16 %v2617, %v2601
    %v4458 = vpack.c.b16 %v2618, %v2602
    %v4459 = vpack.c.b16 %v2619, %v2603
    %v4460 = vpack.c.b16 %v2620, %v2604
    %v4461 = vpack.c.b16 %v2621, %v2605
    %v4462 = vpack.c.b16 %v2622, %v2606
    %v4463 = vpack.c.b16 %v2623, %v2607
    %v4464 = vpack.c.b16 %v2640, %v2624
    %v4465 = vpack.c.b16 %v2641, %v2625
    %v4466 = vpack.c.b16 %v2642, %v2626
    %v4467 = vpack.c.b16 %v2643, %v2627
    %v4468 = vpack.c.b16 %v2644, %v2628
    %v4469 = vpack.c.b16 %v2645, %v2629
    %v4470 = vpack.c.b16 %v2646, %v2630
    %v4471 = vpack.c.b16 %v2647, %v2631
    %v4472 = vpack.c.b16 %v2648, %v2632
    %v4473 = vpack.c.b16 %v2649, %v2633
    %v4474 = vpack.c.b16 %v2650, %v2634
    %v4475 = vpack.c.b16 %v2651, %v2635
    %v4476 = vpack.c.b16 %v2652, %v2636
    %v4477 = vpack.c.b16 %v2653, %v2637
    %v4478 = vpack.c.b16 %v2654, %v2638
    %v4479 = vpack.c.b16 %v2655, %v2639
    %v4480 = vpack.c.b16 %v2672, %v2656
    %v4481 = vpack.c.b16 %v2673, %v2657
    %v4482 = vpack.c.b16 %v2674, %v2658
    %v4483 = vpack.c.b16 %v2675, %v2659
    %v4484 = vpack.c.b16 %v2676, %v2660
    %v4485 = vpack.c.b16 %v2677, %v2661
    %v4486 = vpack.c.b16 %v2678, %v2662
    %v4487 = vpack.c.b16 %v2679, %v2663
    %v4488 = vpack.c.b16 %v2680, %v2664
    %v4489 = vpack.c.b16 %v2681, %v2665
    %v4490 = vpack.c.b16 %v2682, %v2666
    %v4491 = vpack.c.b16 %v2683, %v2667
    %v4492 = vpack.c.b16 %v2684, %v2668
    %v4493 = vpack.c.b16 %v2685, %v2669
    %v4494 = vpack.c.b16 %v2686, %v2670
    %v4495 = vpack.c.b16 %v2687, %v2671
    %v4496 = vpack.c.b16 %v2704, %v2688
    %v4497 = vpack.c.b16 %v2705, %v2689
    %v4498 = vpack.c.b16 %v2706, %v2690
    %v4499 = vpack.c.b16 %v2707, %v2691
    %v4500 = vpack.c.b16 %v2708, %v2692
    %v4501 = vpack.c.b16 %v2709, %v2693
    %v4502 = vpack.c.b16 %v2710, %v2694
    %v4503 = vpack.c.b16 %v2711, %v2695
    %v4504 = vpack.c.b16 %v2712, %v2696
    %v4505 = vpack.c.b16 %v2713, %v2697
    %v4506 = vpack.c.b16 %v2714, %v2698
    %v4507 = vpack.c.b16 %v2715, %v2699
    %v4508 = vpack.c.b16 %v2716, %v2700
    %v4509 = vpack.c.b16 %v2717, %v2701
    %v4510 = vpack.c.b16 %v2718, %v2702
    %v4511 = vpack.c.b16 %v2719, %v2703
    %v4512 = vpack.c.b16 %v2736, %v2720
    %v4513 = vpack.c.b16 %v2737, %v2721
    %v4514 = vpack.c.b16 %v2738, %v2722
    %v4515 = vpack.c.b16 %v2739, %v2723
    %v4516 = vpack.c.b16 %v2740, %v2724
    %v4517 = vpack.c.b16 %v2741, %v2725
    %v4518 = vpack.c.b16 %v2742, %v2726
    %v4519 = vpack.c.b16 %v2743, %v2727
    %v4520 = vpack.c.b16 %v2744, %v2728
    %v4521 = vpack.c.b16 %v2745, %v2729
    %v4522 = vpack.c.b16 %v2746, %v2730
    %v4523 = vpack.c.b16 %v2747, %v2731
    %v4524 = vpack.c.b16 %v2748, %v2732
    %v4525 = vpack.c.b16 %v2749, %v2733
    %v4526 = vpack.c.b16 %v2750, %v2734
    %v4527 = vpack.c.b16 %v2751, %v2735
    %v4528 = vpack.c.b16 %v2768, %v2752
    %v4529 = vpack.c.b16 %v2769, %v2753
    %v4530 = vpack.c.b16 %v2770, %v2754
    %v4531 = vpack.c.b16 %v2771, %v2755
    %v4532 = vpack.c.b16 %v2772, %v2756
    %v4533 = vpack.c.b16 %v2773, %v2757
    %v4534 = vpack.c.b16 %v2774, %v2758
    %v4535 = vpack.c.b16 %v2775, %v2759
    %v4536 = vpack.c.b16 %v2776, %v2760
    %v4537 = vpack.c.b16 %v2777, %v2761
    %v4538 = vpack.c.b16 %v2778, %v2762
    %v4539 = vpack.c.b16 %v2779, %v2763
    %v4540 = vpack.c.b16 %v2780, %v2764
    %v4541 = vpack.c.b16 %v2781, %v2765
    %v4542 = vpack.c.b16 %v2782, %v2766
    %v4543 = vpack.c.b16 %v2783, %v2767
    %v4544 = vpack.c.b16 %v2800, %v2784
    %v4545 = vpack.c.b16 %v2801, %v2785
    %v4546 = vpack.c.b16 %v2802, %v2786
    %v4547 = vpack.c.b16 %v2803, %v2787
    %v4548 = vpack.c.b16 %v2804, %v2788
    %v4549 = vpack.c.b16 %v2805, %v2789
    %v4550 = vpack.c.b16 %v2806, %v2790
    %v4551 = vpack.c.b16 %v2807, %v2791
    %v4552 = vpack.c.b16 %v2808, %v2792
    %v4553 = vpack.c.b16 %v2809, %v2793
    %v4554 = vpack.c.b16 %v2810, %v2794
    %v4555 = vpack.c.b16 %v2811, %v2795
    %v4556 = vpack.c.b16 %v2812, %v2796
    %v4557 = vpack.c.b16 %v2813, %v2797
    %v4558 = vpack.c.b16 %v2814, %v2798
    %v4559 = vpack.c.b16 %v2815, %v2799
    %v4560 = vpack.c.b16 %v2832, %v2816
    %v4561 = vpack.c.b16 %v2833, %v2817
    %v4562 = vpack.c.b16 %v2834, %v2818
    %v4563 = vpack.c.b16 %v2835, %v2819
    %v4564 = vpack.c.b16 %v2836, %v2820
    %v4565 = vpack.c.b16 %v2837, %v2821
    %v4566 = vpack.c.b16 %v2838, %v2822
    %v4567 = vpack.c.b16 %v2839, %v2823
    %v4568 = vpack.c.b16 %v2840, %v2824
    %v4569 = vpack.c.b16 %v2841, %v2825
    %v4570 = vpack.c.b16 %v2842, %v2826
    %v4571 = vpack.c.b16 %v2843, %v2827
    %v4572 = vpack.c.b16 %v2844, %v2828
    %v4573 = vpack.c.b16 %v2845, %v2829
    %v4574 = vpack.c.b16 %v2846, %v2830
    %v4575 = vpack.c.b16 %v2847, %v2831
    %v4576 = vpack.c.b16 %v2864, %v2848
    %v4577 = vpack.c.b16 %v2865, %v2849
    %v4578 = vpack.c.b16 %v2866, %v2850
    %v4579 = vpack.c.b16 %v2867, %v2851
    %v4580 = vpack.c.b16 %v2868, %v2852
    %v4581 = vpack.c.b16 %v2869, %v2853
    %v4582 = vpack.c.b16 %v2870, %v2854
    %v4583 = vpack.c.b16 %v2871, %v2855
    %v4584 = vpack.c.b16 %v2872, %v2856
    %v4585 = vpack.c.b16 %v2873, %v2857
    %v4586 = vpack.c.b16 %v2874, %v2858
    %v4587 = vpack.c.b16 %v2875, %v2859
    %v4588 = vpack.c.b16 %v2876, %v2860
    %v4589 = vpack.c.b16 %v2877, %v2861
    %v4590 = vpack.c.b16 %v2878, %v2862
    %v4591 = vpack.c.b16 %v2879, %v2863
    %v4592 = vpack.c.b16 %v2896, %v2880
    %v4593 = vpack.c.b16 %v2897, %v2881
    %v4594 = vpack.c.b16 %v2898, %v2882
    %v4595 = vpack.c.b16 %v2899, %v2883
    %v4596 = vpack.c.b16 %v2900, %v2884
    %v4597 = vpack.c.b16 %v2901, %v2885
    %v4598 = vpack.c.b16 %v2902, %v2886
    %v4599 = vpack.c.b16 %v2903, %v2887
    %v4600 = vpack.c.b16 %v2904, %v2888
    %v4601 = vpack.c.b16 %v2905, %v2889
    %v4602 = vpack.c.b16 %v2906, %v2890
    %v4603 = vpack.c.b16 %v2907, %v2891
    %v4604 = vpack.c.b16 %v2908, %v2892
    %v4605 = vpack.c.b16 %v2909, %v2893
    %v4606 = vpack.c.b16 %v2910, %v2894
    %v4607 = vpack.c.b16 %v2911, %v2895
    %v4608 = vpack.c.b16 %v2928, %v2912
    %v4609 = vpack.c.b16 %v2929, %v2913
    %v4610 = vpack.c.b16 %v2930, %v2914
    %v4611 = vpack.c.b16 %v2931, %v2915
    %v4612 = vpack.c.b16 %v2932, %v2916
    %v4613 = vpack.c.b16 %v2933, %v2917
    %v4614 = vpack.c.b16 %v2934, %v2918
    %v4615 = vpack.c.b16 %v2935, %v2919
    %v4616 = vpack.c.b16 %v2936, %v2920
    %v4617 = vpack.c.b16 %v2937, %v2921
    %v4618 = vpack.c.b16 %v2938, %v2922
    %v4619 = vpack.c.b16 %v2939, %v2923
    %v4620 = vpack.c.b16 %v2940, %v2924
    %v4621 = vpack.c.b16 %v2941, %v2925
    %v4622 = vpack.c.b16 %v2942, %v2926
    %v4623 = vpack.c.b16 %v2943, %v2927
    %v4624 = vpack.c.b16 %v2960, %v2944
    %v4625 = vpack.c.b16 %v2961, %v2945
    %v4626 = vpack.c.b16 %v2962, %v2946
    %v4627 = vpack.c.b16 %v2963, %v2947
    %v4628 = vpack.c.b16 %v2964, %v2948
    %v4629 = vpack.c.b16 %v2965, %v2949
    %v4630 = vpack.c.b16 %v2966, %v2950
    %v4631 = vpack.c.b16 %v2967, %v2951
    %v4632 = vpack.c.b16 %v2968, %v2952
    %v4633 = vpack.c.b16 %v2969, %v2953
    %v4634 = vpack.c.b16 %v2970, %v2954
    %v4635 = vpack.c.b16 %v2971, %v2955
    %v4636 = vpack.c.b16 %v2972, %v2956
    %v4637 = vpack.c.b16 %v2973, %v2957
    %v4638 = vpack.c.b16 %v2974, %v2958
    %v4639 = vpack.c.b16 %v2975, %v2959
    %v4640 = vpack.c.b16 %v2992, %v2976
    %v4641 = vpack.c.b16 %v2993, %v2977
    %v4642 = vpack.c.b16 %v2994, %v2978
    %v4643 = vpack.c.b16 %v2995, %v2979
    %v4644 = vpack.c.b16 %v2996, %v2980
    %v4645 = vpack.c.b16 %v2997, %v2981
    %v4646 = vpack.c.b16 %v2998, %v2982
    %v4647 = vpack.c.b16 %v2999, %v2983
    %v4648 = vpack.c.b16 %v3000, %v2984
    %v4649 = vpack.c.b16 %v3001, %v2985
    %v4650 = vpack.c.b16 %v3002, %v2986
    %v4651 = vpack.c.b16 %v3003, %v2987
    %v4652 = vpack.c.b16 %v3004, %v2988
    %v4653 = vpack.c.b16 %v3005, %v2989
    %v4654 = vpack.c.b16 %v3006, %v2990
    %v4655 = vpack.c.b16 %v3007, %v2991
    %v4656 = vpack.c.b16 %v3024, %v3008
    %v4657 = vpack.c.b16 %v3025, %v3009
    %v4658 = vpack.c.b16 %v3026, %v3010
    %v4659 = vpack.c.b16 %v3027, %v3011
    %v4660 = vpack.c.b16 %v3028, %v3012
    %v4661 = vpack.c.b16 %v3029, %v3013
    %v4662 = vpack.c.b16 %v3030, %v3014
    %v4663 = vpack.c.b16 %v3031, %v3015
    %v4664 = vpack.c.b16 %v3032, %v3016
    %v4665 = vpack.c.b16 %v3033, %v3017
    %v4666 = vpack.c.b16 %v3034, %v3018
    %v4667 = vpack.c.b16 %v3035, %v3019
    %v4668 = vpack.c.b16 %v3036, %v3020
    %v4669 = vpack.c.b16 %v3037, %v3021
    %v4670 = vpack.c.b16 %v3038, %v3022
    %v4671 = vpack.c.b16 %v3039, %v3023
    %v4672 = vpack.c.b16 %v3056, %v3040
    %v4673 = vpack.c.b16 %v3057, %v3041
    %v4674 = vpack.c.b16 %v3058, %v3042
    %v4675 = vpack.c.b16 %v3059, %v3043
    %v4676 = vpack.c.b16 %v3060, %v3044
    %v4677 = vpack.c.b16 %v3061, %v3045
    %v4678 = vpack.c.b16 %v3062, %v3046
    %v4679 = vpack.c.b16 %v3063, %v3047
    %v4680 = vpack.c.b16 %v3064, %v3048
    %v4681 = vpack.c.b16 %v3065, %v3049
    %v4682 = vpack.c.b16 %v3066, %v3050
    %v4683 = vpack.c.b16 %v3067, %v3051
    %v4684 = vpack.c.b16 %v3068, %v3052
    %v4685 = vpack.c.b16 %v3069, %v3053
    %v4686 = vpack.c.b16 %v3070, %v3054
    %v4687 = vpack.c.b16 %v3071, %v3055
    %v4688 = vpack.c.b16 %v3088, %v3072
    %v4689 = vpack.c.b16 %v3089, %v3073
    %v4690 = vpack.c.b16 %v3090, %v3074
    %v4691 = vpack.c.b16 %v3091, %v3075
    %v4692 = vpack.c.b16 %v3092, %v3076
    %v4693 = vpack.c.b16 %v3093, %v3077
    %v4694 = vpack.c.b16 %v3094, %v3078
    %v4695 = vpack.c.b16 %v3095, %v3079
    %v4696 = vpack.c.b16 %v3096, %v3080
    %v4697 = vpack.c.b16 %v3097, %v3081
    %v4698 = vpack.c.b16 %v3098, %v3082
    %v4699 = vpack.c.b16 %v3099, %v3083
    %v4700 = vpack.c.b16 %v3100, %v3084
    %v4701 = vpack.c.b16 %v3101, %v3085
    %v4702 = vpack.c.b16 %v3102, %v3086
    %v4703 = vpack.c.b16 %v3103, %v3087
    %v4704 = vpack.c.b16 %v3120, %v3104
    %v4705 = vpack.c.b16 %v3121, %v3105
    %v4706 = vpack.c.b16 %v3122, %v3106
    %v4707 = vpack.c.b16 %v3123, %v3107
    %v4708 = vpack.c.b16 %v3124, %v3108
    %v4709 = vpack.c.b16 %v3125, %v3109
    %v4710 = vpack.c.b16 %v3126, %v3110
    %v4711 = vpack.c.b16 %v3127, %v3111
    %v4712 = vpack.c.b16 %v3128, %v3112
    %v4713 = vpack.c.b16 %v3129, %v3113
    %v4714 = vpack.c.b16 %v3130, %v3114
    %v4715 = vpack.c.b16 %v3131, %v3115
    %v4716 = vpack.c.b16 %v3132, %v3116
    %v4717 = vpack.c.b16 %v3133, %v3117
    %v4718 = vpack.c.b16 %v3134, %v3118
    %v4719 = vpack.c.b16 %v3135, %v3119
    %v4720 = vpack.c.b16 %v3152, %v3136
    %v4721 = vpack.c.b16 %v3153, %v3137
    %v4722 = vpack.c.b16 %v3154, %v3138
    %v4723 = vpack.c.b16 %v3155, %v3139
    %v4724 = vpack.c.b16 %v3156, %v3140
    %v4725 = vpack.c.b16 %v3157, %v3141
    %v4726 = vpack.c.b16 %v3158, %v3142
    %v4727 = vpack.c.b16 %v3159, %v3143
    %v4728 = vpack.c.b16 %v3160, %v3144
    %v4729 = vpack.c.b16 %v3161, %v3145
    %v4730 = vpack.c.b16 %v3162, %v3146
    %v4731 = vpack.c.b16 %v3163, %v3147
    %v4732 = vpack.c.b16 %v3164, %v3148
    %v4733 = vpack.c.b16 %v3165, %v3149
    %v4734 = vpack.c.b16 %v3166, %v3150
    %v4735 = vpack.c.b16 %v3167, %v3151
    %v4736 = vpack.c.b16 %v3184, %v3168
    %v4737 = vpack.c.b16 %v3185, %v3169
    %v4738 = vpack.c.b16 %v3186, %v3170
    %v4739 = vpack.c.b16 %v3187, %v3171
    %v4740 = vpack.c.b16 %v3188, %v3172
    %v4741 = vpack.c.b16 %v3189, %v3173
    %v4742 = vpack.c.b16 %v3190, %v3174
    %v4743 = vpack.c.b16 %v3191, %v3175
    %v4744 = vpack.c.b16 %v3192, %v3176
    %v4745 = vpack.c.b16 %v3193, %v3177
    %v4746 = vpack.c.b16 %v3194, %v3178
    %v4747 = vpack.c.b16 %v3195, %v3179
    %v4748 = vpack.c.b16 %v3196, %v3180
    %v4749 = vpack.c.b16 %v3197, %v3181
    %v4750 = vpack.c.b16 %v3198, %v3182
    %v4751 = vpack.c.b16 %v3199, %v3183
    %v4752 = vpack.c.b16 %v3216, %v3200
    %v4753 = vpack.c.b16 %v3217, %v3201
    %v4754 = vpack.c.b16 %v3218, %v3202
    %v4755 = vpack.c.b16 %v3219, %v3203
    %v4756 = vpack.c.b16 %v3220, %v3204
    %v4757 = vpack.c.b16 %v3221, %v3205
    %v4758 = vpack.c.b16 %v3222, %v3206
    %v4759 = vpack.c.b16 %v3223, %v3207
    %v4760 = vpack.c.b16 %v3224, %v3208
    %v4761 = vpack.c.b16 %v3225, %v3209
    %v4762 = vpack.c.b16 %v3226, %v3210
    %v4763 = vpack.c.b16 %v3227, %v3211
    %v4764 = vpack.c.b16 %v3228, %v3212
    %v4765 = vpack.c.b16 %v3229, %v3213
    %v4766 = vpack.c.b16 %v3230, %v3214
    %v4767 = vpack.c.b16 %v3231, %v3215
    %v4768 = vpack.c.b16 %v3248, %v3232
    %v4769 = vpack.c.b16 %v3249, %v3233
    %v4770 = vpack.c.b16 %v3250, %v3234
    %v4771 = vpack.c.b16 %v3251, %v3235
    %v4772 = vpack.c.b16 %v3252, %v3236
    %v4773 = vpack.c.b16 %v3253, %v3237
    %v4774 = vpack.c.b16 %v3254, %v3238
    %v4775 = vpack.c.b16 %v3255, %v3239
    %v4776 = vpack.c.b16 %v3256, %v3240
    %v4777 = vpack.c.b16 %v3257, %v3241
    %v4778 = vpack.c.b16 %v3258, %v3242
    %v4779 = vpack.c.b16 %v3259, %v3243
    %v4780 = vpack.c.b16 %v3260, %v3244
    %v4781 = vpack.c.b16 %v3261, %v3245
    %v4782 = vpack.c.b16 %v3262, %v3246
    %v4783 = vpack.c.b16 %v3263, %v3247
    %v4784 = vpack.c.b16 %v3280, %v3264
    %v4785 = vpack.c.b16 %v3281, %v3265
    %v4786 = vpack.c.b16 %v3282, %v3266
    %v4787 = vpack.c.b16 %v3283, %v3267
    %v4788 = vpack.c.b16 %v3284, %v3268
    %v4789 = vpack.c.b16 %v3285, %v3269
    %v4790 = vpack.c.b16 %v3286, %v3270
    %v4791 = vpack.c.b16 %v3287, %v3271
    %v4792 = vpack.c.b16 %v3288, %v3272
    %v4793 = vpack.c.b16 %v3289, %v3273
    %v4794 = vpack.c.b16 %v3290, %v3274
    %v4795 = vpack.c.b16 %v3291, %v3275
    %v4796 = vpack.c.b16 %v3292, %v3276
    %v4797 = vpack.c.b16 %v3293, %v3277
    %v4798 = vpack.c.b16 %v3294, %v3278
    %v4799 = vpack.c.b16 %v3295, %v3279
    %v4800 = vpack.c.b16 %v3312, %v3296
    %v4801 = vpack.c.b16 %v3313, %v3297
    %v4802 = vpack.c.b16 %v3314, %v3298
    %v4803 = vpack.c.b16 %v3315, %v3299
    %v4804 = vpack.c.b16 %v3316, %v3300
    %v4805 = vpack.c.b16 %v3317, %v3301
    %v4806 = vpack.c.b16 %v3318, %v3302
    %v4807 = vpack.c.b16 %v3319, %v3303
    %v4808 = vpack.c.b16 %v3320, %v3304
    %v4809 = vpack.c.b16 %v3321, %v3305
    %v4810 = vpack.c.b16 %v3322, %v3306
    %v4811 = vpack.c.b16 %v3323, %v3307
    %v4812 = vpack.c.b16 %v3324, %v3308
    %v4813 = vpack.c.b16 %v3325, %v3309
    %v4814 = vpack.c.b16 %v3326, %v3310
    %v4815 = vpack.c.b16 %v3327, %v3311
    %v4816 = vpack.c.b16 %v3344, %v3328
    %v4817 = vpack.c.b16 %v3345, %v3329
    %v4818 = vpack.c.b16 %v3346, %v3330
    %v4819 = vpack.c.b16 %v3347, %v3331
    %v4820 = vpack.c.b16 %v3348, %v3332
    %v4821 = vpack.c.b16 %v3349, %v3333
    %v4822 = vpack.c.b16 %v3350, %v3334
    %v4823 = vpack.c.b16 %v3351, %v3335
    %v4824 = vpack.c.b16 %v3352, %v3336
    %v4825 = vpack.c.b16 %v3353, %v3337
    %v4826 = vpack.c.b16 %v3354, %v3338
    %v4827 = vpack.c.b16 %v3355, %v3339
    %v4828 = vpack.c.b16 %v3356, %v3340
    %v4829 = vpack.c.b16 %v3357, %v3341
    %v4830 = vpack.c.b16 %v3358, %v3342
    %v4831 = vpack.c.b16 %v3359, %v3343
    %v4832 = vpack.c.b16 %v3376, %v3360
    %v4833 = vpack.c.b16 %v3377, %v3361
    %v4834 = vpack.c.b16 %v3378, %v3362
    %v4835 = vpack.c.b16 %v3379, %v3363
    %v4836 = vpack.c.b16 %v3380, %v3364
    %v4837 = vpack.c.b16 %v3381, %v3365
    %v4838 = vpack.c.b16 %v3382, %v3366
    %v4839 = vpack.c.b16 %v3383, %v3367
    %v4840 = vpack.c.b16 %v3384, %v3368
    %v4841 = vpack.c.b16 %v3385, %v3369
    %v4842 = vpack.c.b16 %v3386, %v3370
    %v4843 = vpack.c.b16 %v3387, %v3371
    %v4844 = vpack.c.b16 %v3388, %v3372
    %v4845 = vpack.c.b16 %v3389, %v3373
    %v4846 = vpack.c.b16 %v3390, %v3374
    %v4847 = vpack.c.b16 %v3391, %v3375
    %v4848 = vpack.c.b16 %v3408, %v3392
    %v4849 = vpack.c.b16 %v3409, %v3393
    %v4850 = vpack.c.b16 %v3410, %v3394
    %v4851 = vpack.c.b16 %v3411, %v3395
    %v4852 = vpack.c.b16 %v3412, %v3396
    %v4853 = vpack.c.b16 %v3413, %v3397
    %v4854 = vpack.c.b16 %v3414, %v3398
    %v4855 = vpack.c.b16 %v3415, %v3399
    %v4856 = vpack.c.b16 %v3416, %v3400
    %v4857 = vpack.c.b16 %v3417, %v3401
    %v4858 = vpack.c.b16 %v3418, %v3402
    %v4859 = vpack.c.b16 %v3419, %v3403
    %v4860 = vpack.c.b16 %v3420, %v3404
    %v4861 = vpack.c.b16 %v3421, %v3405
    %v4862 = vpack.c.b16 %v3422, %v3406
    %v4863 = vpack.c.b16 %v3423, %v3407
    %v4864 = vpack.c.b16 %v3440, %v3424
    %v4865 = vpack.c.b16 %v3441, %v3425
    %v4866 = vpack.c.b16 %v3442, %v3426
    %v4867 = vpack.c.b16 %v3443, %v3427
    %v4868 = vpack.c.b16 %v3444, %v3428
    %v4869 = vpack.c.b16 %v3445, %v3429
    %v4870 = vpack.c.b16 %v3446, %v3430
    %v4871 = vpack.c.b16 %v3447, %v3431
    %v4872 = vpack.c.b16 %v3448, %v3432
    %v4873 = vpack.c.b16 %v3449, %v3433
    %v4874 = vpack.c.b16 %v3450, %v3434
    %v4875 = vpack.c.b16 %v3451, %v3435
    %v4876 = vpack.c.b16 %v3452, %v3436
    %v4877 = vpack.c.b16 %v3453, %v3437
    %v4878 = vpack.c.b16 %v3454, %v3438
    %v4879 = vpack.c.b16 %v3455, %v3439
    %v4880 = vpack.c.b16 %v3472, %v3456
    %v4881 = vpack.c.b16 %v3473, %v3457
    %v4882 = vpack.c.b16 %v3474, %v3458
    %v4883 = vpack.c.b16 %v3475, %v3459
    %v4884 = vpack.c.b16 %v3476, %v3460
    %v4885 = vpack.c.b16 %v3477, %v3461
    %v4886 = vpack.c.b16 %v3478, %v3462
    %v4887 = vpack.c.b16 %v3479, %v3463
    %v4888 = vpack.c.b16 %v3480, %v3464
    %v4889 = vpack.c.b16 %v3481, %v3465
    %v4890 = vpack.c.b16 %v3482, %v3466
    %v4891 = vpack.c.b16 %v3483, %v3467
    %v4892 = vpack.c.b16 %v3484, %v3468
    %v4893 = vpack.c.b16 %v3485, %v3469
    %v4894 = vpack.c.b16 %v3486, %v3470
    %v4895 = vpack.c.b16 %v3487, %v3471
    %v4896 = vpack.c.b16 %v3504, %v3488
    %v4897 = vpack.c.b16 %v3505, %v3489
    %v4898 = vpack.c.b16 %v3506, %v3490
    %v4899 = vpack.c.b16 %v3507, %v3491
    %v4900 = vpack.c.b16 %v3508, %v3492
    %v4901 = vpack.c.b16 %v3509, %v3493
    %v4902 = vpack.c.b16 %v3510, %v3494
    %v4903 = vpack.c.b16 %v3511, %v3495
    %v4904 = vpack.c.b16 %v3512, %v3496
    %v4905 = vpack.c.b16 %v3513, %v3497
    %v4906 = vpack.c.b16 %v3514, %v3498
    %v4907 = vpack.c.b16 %v3515, %v3499
    %v4908 = vpack.c.b16 %v3516, %v3500
    %v4909 = vpack.c.b16 %v3517, %v3501
    %v4910 = vpack.c.b16 %v3518, %v3502
    %v4911 = vpack.c.b16 %v3519, %v3503
    %v4912 = vpack.c.b16 %v3536, %v3520
    %v4913 = vpack.c.b16 %v3537, %v3521
    %v4914 = vpack.c.b16 %v3538, %v3522
    %v4915 = vpack.c.b16 %v3539, %v3523
    %v4916 = vpack.c.b16 %v3540, %v3524
    %v4917 = vpack.c.b16 %v3541, %v3525
    %v4918 = vpack.c.b16 %v3542, %v3526
    %v4919 = vpack.c.b16 %v3543, %v3527
    %v4920 = vpack.c.b16 %v3544, %v3528
    %v4921 = vpack.c.b16 %v3545, %v3529
    %v4922 = vpack.c.b16 %v3546, %v3530
    %v4923 = vpack.c.b16 %v3547, %v3531
    %v4924 = vpack.c.b16 %v3548, %v3532
    %v4925 = vpack.c.b16 %v3549, %v3533
    %v4926 = vpack.c.b16 %v3550, %v3534
    %v4927 = vpack.c.b16 %v3551, %v3535
    %v4928 = vpack.c.b16 %v3568, %v3552
    %v4929 = vpack.c.b16 %v3569, %v3553
    %v4930 = vpack.c.b16 %v3570, %v3554
    %v4931 = vpack.c.b16 %v3571, %v3555
    %v4932 = vpack.c.b16 %v3572, %v3556
    %v4933 = vpack.c.b16 %v3573, %v3557
    %v4934 = vpack.c.b16 %v3574, %v3558
    %v4935 = vpack.c.b16 %v3575, %v3559
    %v4936 = vpack.c.b16 %v3576, %v3560
    %v4937 = vpack.c.b16 %v3577, %v3561
    %v4938 = vpack.c.b16 %v3578, %v3562
    %v4939 = vpack.c.b16 %v3579, %v3563
    %v4940 = vpack.c.b16 %v3580, %v3564
    %v4941 = vpack.c.b16 %v3581, %v3565
    %v4942 = vpack.c.b16 %v3582, %v3566
    %v4943 = vpack.c.b16 %v3583, %v3567
    %v4944 = vpack.c.b16 %v3600, %v3584
    %v4945 = vpack.c.b16 %v3601, %v3585
    %v4946 = vpack.c.b16 %v3602, %v3586
    %v4947 = vpack.c.b16 %v3603, %v3587
    %v4948 = vpack.c.b16 %v3604, %v3588
    %v4949 = vpack.c.b16 %v3605, %v3589
    %v4950 = vpack.c.b16 %v3606, %v3590
    %v4951 = vpack.c.b16 %v3607, %v3591
    %v4952 = vpack.c.b16 %v3608, %v3592
    %v4953 = vpack.c.b16 %v3609, %v3593
    %v4954 = vpack.c.b16 %v3610, %v3594
    %v4955 = vpack.c.b16 %v3611, %v3595
    %v4956 = vpack.c.b16 %v3612, %v3596
    %v4957 = vpack.c.b16 %v3613, %v3597
    %v4958 = vpack.c.b16 %v3614, %v3598
    %v4959 = vpack.c.b16 %v3615, %v3599
    %v4960 = vpack.c.b16 %v3632, %v3616
    %v4961 = vpack.c.b16 %v3633, %v3617
    %v4962 = vpack.c.b16 %v3634, %v3618
    %v4963 = vpack.c.b16 %v3635, %v3619
    %v4964 = vpack.c.b16 %v3636, %v3620
    %v4965 = vpack.c.b16 %v3637, %v3621
    %v4966 = vpack.c.b16 %v3638, %v3622
    %v4967 = vpack.c.b16 %v3639, %v3623
    %v4968 = vpack.c.b16 %v3640, %v3624
    %v4969 = vpack.c.b16 %v3641, %v3625
    %v4970 = vpack.c.b16 %v3642, %v3626
    %v4971 = vpack.c.b16 %v3643, %v3627
    %v4972 = vpack.c.b16 %v3644, %v3628
    %v4973 = vpack.c.b16 %v3645, %v3629
    %v4974 = vpack.c.b16 %v3646, %v3630
    %v4975 = vpack.c.b16 %v3647, %v3631
    %v4976 = vpack.c.b16 %v3664, %v3648
    %v4977 = vpack.c.b16 %v3665, %v3649
    %v4978 = vpack.c.b16 %v3666, %v3650
    %v4979 = vpack.c.b16 %v3667, %v3651
    %v4980 = vpack.c.b16 %v3668, %v3652
    %v4981 = vpack.c.b16 %v3669, %v3653
    %v4982 = vpack.c.b16 %v3670, %v3654
    %v4983 = vpack.c.b16 %v3671, %v3655
    %v4984 = vpack.c.b16 %v3672, %v3656
    %v4985 = vpack.c.b16 %v3673, %v3657
    %v4986 = vpack.c.b16 %v3674, %v3658
    %v4987 = vpack.c.b16 %v3675, %v3659
    %v4988 = vpack.c.b16 %v3676, %v3660
    %v4989 = vpack.c.b16 %v3677, %v3661
    %v4990 = vpack.c.b16 %v3678, %v3662
    %v4991 = vpack.c.b16 %v3679, %v3663
    %v4992 = vpack.c.b16 %v3696, %v3680
    %v4993 = vpack.c.b16 %v3697, %v3681
    %v4994 = vpack.c.b16 %v3698, %v3682
    %v4995 = vpack.c.b16 %v3699, %v3683
    %v4996 = vpack.c.b16 %v3700, %v3684
    %v4997 = vpack.c.b16 %v3701, %v3685
    %v4998 = vpack.c.b16 %v3702, %v3686
    %v4999 = vpack.c.b16 %v3703, %v3687
    %v5000 = vpack.c.b16 %v3704, %v3688
    %v5001 = vpack.c.b16 %v3705, %v3689
    %v5002 = vpack.c.b16 %v3706, %v3690
    %v5003 = vpack.c.b16 %v3707, %v3691
    %v5004 = vpack.c.b16 %v3708, %v3692
    %v5005 = vpack.c.b16 %v3709, %v3693
    %v5006 = vpack.c.b16 %v3710, %v3694
    %v5007 = vpack.c.b16 %v3711, %v3695
    %v5008 = vpack.c.b16 %v3728, %v3712
    %v5009 = vpack.c.b16 %v3729, %v3713
    %v5010 = vpack.c.b16 %v3730, %v3714
    %v5011 = vpack.c.b16 %v3731, %v3715
    %v5012 = vpack.c.b16 %v3732, %v3716
    %v5013 = vpack.c.b16 %v3733, %v3717
    %v5014 = vpack.c.b16 %v3734, %v3718
    %v5015 = vpack.c.b16 %v3735, %v3719
    %v5016 = vpack.c.b16 %v3736, %v3720
    %v5017 = vpack.c.b16 %v3737, %v3721
    %v5018 = vpack.c.b16 %v3738, %v3722
    %v5019 = vpack.c.b16 %v3739, %v3723
    %v5020 = vpack.c.b16 %v3740, %v3724
    %v5021 = vpack.c.b16 %v3741, %v3725
    %v5022 = vpack.c.b16 %v3742, %v3726
    %v5023 = vpack.c.b16 %v3743, %v3727
    %v5024 = vpack.c.b16 %v3760, %v3744
    %v5025 = vpack.c.b16 %v3761, %v3745
    %v5026 = vpack.c.b16 %v3762, %v3746
    %v5027 = vpack.c.b16 %v3763, %v3747
    %v5028 = vpack.c.b16 %v3764, %v3748
    %v5029 = vpack.c.b16 %v3765, %v3749
    %v5030 = vpack.c.b16 %v3766, %v3750
    %v5031 = vpack.c.b16 %v3767, %v3751
    %v5032 = vpack.c.b16 %v3768, %v3752
    %v5033 = vpack.c.b16 %v3769, %v3753
    %v5034 = vpack.c.b16 %v3770, %v3754
    %v5035 = vpack.c.b16 %v3771, %v3755
    %v5036 = vpack.c.b16 %v3772, %v3756
    %v5037 = vpack.c.b16 %v3773, %v3757
    %v5038 = vpack.c.b16 %v3774, %v3758
    %v5039 = vpack.c.b16 %v3775, %v3759
    %v5040 = vpack.c.b16 %v3792, %v3776
    %v5041 = vpack.c.b16 %v3793, %v3777
    %v5042 = vpack.c.b16 %v3794, %v3778
    %v5043 = vpack.c.b16 %v3795, %v3779
    %v5044 = vpack.c.b16 %v3796, %v3780
    %v5045 = vpack.c.b16 %v3797, %v3781
    %v5046 = vpack.c.b16 %v3798, %v3782
    %v5047 = vpack.c.b16 %v3799, %v3783
    %v5048 = vpack.c.b16 %v3800, %v3784
    %v5049 = vpack.c.b16 %v3801, %v3785
    %v5050 = vpack.c.b16 %v3802, %v3786
    %v5051 = vpack.c.b16 %v3803, %v3787
    %v5052 = vpack.c.b16 %v3804, %v3788
    %v5053 = vpack.c.b16 %v3805, %v3789
    %v5054 = vpack.c.b16 %v3806, %v3790
    %v5055 = vpack.c.b16 %v3807, %v3791
    %v5056 = vpack.c.b16 %v3824, %v3808
    %v5057 = vpack.c.b16 %v3825, %v3809
    %v5058 = vpack.c.b16 %v3826, %v3810
    %v5059 = vpack.c.b16 %v3827, %v3811
    %v5060 = vpack.c.b16 %v3828, %v3812
    %v5061 = vpack.c.b16 %v3829, %v3813
    %v5062 = vpack.c.b16 %v3830, %v3814
    %v5063 = vpack.c.b16 %v3831, %v3815
    %v5064 = vpack.c.b16 %v3832, %v3816
    %v5065 = vpack.c.b16 %v3833, %v3817
    %v5066 = vpack.c.b16 %v3834, %v3818
    %v5067 = vpack.c.b16 %v3835, %v3819
    %v5068 = vpack.c.b16 %v3836, %v3820
    %v5069 = vpack.c.b16 %v3837, %v3821
    %v5070 = vpack.c.b16 %v3838, %v3822
    %v5071 = vpack.c.b16 %v3839, %v3823
    %v5072 = vpack.c.b16 %v3856, %v3840
    %v5073 = vpack.c.b16 %v3857, %v3841
    %v5074 = vpack.c.b16 %v3858, %v3842
    %v5075 = vpack.c.b16 %v3859, %v3843
    %v5076 = vpack.c.b16 %v3860, %v3844
    %v5077 = vpack.c.b16 %v3861, %v3845
    %v5078 = vpack.c.b16 %v3862, %v3846
    %v5079 = vpack.c.b16 %v3863, %v3847
    %v5080 = vpack.c.b16 %v3864, %v3848
    %v5081 = vpack.c.b16 %v3865, %v3849
    %v5082 = vpack.c.b16 %v3866, %v3850
    %v5083 = vpack.c.b16 %v3867, %v3851
    %v5084 = vpack.c.b16 %v3868, %v3852
    %v5085 = vpack.c.b16 %v3869, %v3853
    %v5086 = vpack.c.b16 %v3870, %v3854
    %v5087 = vpack.c.b16 %v3871, %v3855
    %v5088 = vpack.c.b16 %v3888, %v3872
    %v5089 = vpack.c.b16 %v3889, %v3873
    %v5090 = vpack.c.b16 %v3890, %v3874
    %v5091 = vpack.c.b16 %v3891, %v3875
    %v5092 = vpack.c.b16 %v3892, %v3876
    %v5093 = vpack.c.b16 %v3893, %v3877
    %v5094 = vpack.c.b16 %v3894, %v3878
    %v5095 = vpack.c.b16 %v3895, %v3879
    %v5096 = vpack.c.b16 %v3896, %v3880
    %v5097 = vpack.c.b16 %v3897, %v3881
    %v5098 = vpack.c.b16 %v3898, %v3882
    %v5099 = vpack.c.b16 %v3899, %v3883
    %v5100 = vpack.c.b16 %v3900, %v3884
    %v5101 = vpack.c.b16 %v3901, %v3885
    %v5102 = vpack.c.b16 %v3902, %v3886
    %v5103 = vpack.c.b16 %v3903, %v3887
    %v5104 = vpack.c.b16 %v3920, %v3904
    %v5105 = vpack.c.b16 %v3921, %v3905
    %v5106 = vpack.c.b16 %v3922, %v3906
    %v5107 = vpack.c.b16 %v3923, %v3907
    %v5108 = vpack.c.b16 %v3924, %v3908
    %v5109 = vpack.c.b16 %v3925, %v3909
    %v5110 = vpack.c.b16 %v3926, %v3910
    %v5111 = vpack.c.b16 %v3927, %v3911
    %v5112 = vpack.c.b16 %v3928, %v3912
    %v5113 = vpack.c.b16 %v3929, %v3913
    %v5114 = vpack.c.b16 %v3930, %v3914
    %v5115 = vpack.c.b16 %v3931, %v3915
    %v5116 = vpack.c.b16 %v3932, %v3916
    %v5117 = vpack.c.b16 %v3933, %v3917
    %v5118 = vpack.c.b16 %v3934, %v3918
    %v5119 = vpack.c.b16 %v3935, %v3919
    %v5120 = vpack.c.b16 %v3952, %v3936
    %v5121 = vpack.c.b16 %v3953, %v3937
    %v5122 = vpack.c.b16 %v3954, %v3938
    %v5123 = vpack.c.b16 %v3955, %v3939
    %v5124 = vpack.c.b16 %v3956, %v3940
    %v5125 = vpack.c.b16 %v3957, %v3941
    %v5126 = vpack.c.b16 %v3958, %v3942
    %v5127 = vpack.c.b16 %v3959, %v3943
    %v5128 = vpack.c.b16 %v3960, %v3944
    %v5129 = vpack.c.b16 %v3961, %v3945
    %v5130 = vpack.c.b16 %v3962, %v3946
    %v5131 = vpack.c.b16 %v3963, %v3947
    %v5132 = vpack.c.b16 %v3964, %v3948
    %v5133 = vpack.c.b16 %v3965, %v3949
    %v5134 = vpack.c.b16 %v3966, %v3950
    %v5135 = vpack.c.b16 %v3967, %v3951
    %v5136 = vpack.c.b16 %v3984, %v3968
    %v5137 = vpack.c.b16 %v3985, %v3969
    %v5138 = vpack.c.b16 %v3986, %v3970
    %v5139 = vpack.c.b16 %v3987, %v3971
    %v5140 = vpack.c.b16 %v3988, %v3972
    %v5141 = vpack.c.b16 %v3989, %v3973
    %v5142 = vpack.c.b16 %v3990, %v3974
    %v5143 = vpack.c.b16 %v3991, %v3975
    %v5144 = vpack.c.b16 %v3992, %v3976
    %v5145 = vpack.c.b16 %v3993, %v3977
    %v5146 = vpack.c.b16 %v3994, %v3978
    %v5147 = vpack.c.b16 %v3995, %v3979
    %v5148 = vpack.c.b16 %v3996, %v3980
    %v5149 = vpack.c.b16 %v3997, %v3981
    %v5150 = vpack.c.b16 %v3998, %v3982
    %v5151 = vpack.c.b16 %v3999, %v3983
    %v5152 = vpack.c.b16 %v4016, %v4000
    %v5153 = vpack.c.b16 %v4017, %v4001
    %v5154 = vpack.c.b16 %v4018, %v4002
    %v5155 = vpack.c.b16 %v4019, %v4003
    %v5156 = vpack.c.b16 %v4020, %v4004
    %v5157 = vpack.c.b16 %v4021, %v4005
    %v5158 = vpack.c.b16 %v4022, %v4006
    %v5159 = vpack.c.b16 %v4023, %v4007
    %v5160 = vpack.c.b16 %v4024, %v4008
    %v5161 = vpack.c.b16 %v4025, %v4009
    %v5162 = vpack.c.b16 %v4026, %v4010
    %v5163 = vpack.c.b16 %v4027, %v4011
    %v5164 = vpack.c.b16 %v4028, %v4012
    %v5165 = vpack.c.b16 %v4029, %v4013
    %v5166 = vpack.c.b16 %v4030, %v4014
    %v5167 = vpack.c.b16 %v4031, %v4015
    %v5168 = vpack.c.b16 %v4048, %v4032
    %v5169 = vpack.c.b16 %v4049, %v4033
    %v5170 = vpack.c.b16 %v4050, %v4034
    %v5171 = vpack.c.b16 %v4051, %v4035
    %v5172 = vpack.c.b16 %v4052, %v4036
    %v5173 = vpack.c.b16 %v4053, %v4037
    %v5174 = vpack.c.b16 %v4054, %v4038
    %v5175 = vpack.c.b16 %v4055, %v4039
    %v5176 = vpack.c.b16 %v4056, %v4040
    %v5177 = vpack.c.b16 %v4057, %v4041
    %v5178 = vpack.c.b16 %v4058, %v4042
    %v5179 = vpack.c.b16 %v4059, %v4043
    %v5180 = vpack.c.b16 %v4060, %v4044
    %v5181 = vpack.c.b16 %v4061, %v4045
    %v5182 = vpack.c.b16 %v4062, %v4046
    %v5183 = vpack.c.b16 %v4063, %v4047
    %v5184 = vpack.c.b16 %v4080, %v4064
    %v5185 = vpack.c.b16 %v4081, %v4065
    %v5186 = vpack.c.b16 %v4082, %v4066
    %v5187 = vpack.c.b16 %v4083, %v4067
    %v5188 = vpack.c.b16 %v4084, %v4068
    %v5189 = vpack.c.b16 %v4085, %v4069
    %v5190 = vpack.c.b16 %v4086, %v4070
    %v5191 = vpack.c.b16 %v4087, %v4071
    %v5192 = vpack.c.b16 %v4088, %v4072
    %v5193 = vpack.c.b16 %v4089, %v4073
    %v5194 = vpack.c.b16 %v4090, %v4074
    %v5195 = vpack.c.b16 %v4091, %v4075
    %v5196 = vpack.c.b16 %v4092, %v4076
    %v5197 = vpack.c.b16 %v4093, %v4077
    %v5198 = vpack.c.b16 %v4094, %v4078
    %v5199 = vpack.c.b16 %v4095, %v4079
    %v5200 = vpack.c.b16 %v4112, %v4096
    %v5201 = vpack.c.b16 %v4113, %v4097
    %v5202 = vpack.c.b16 %v4114, %v4098
    %v5203 = vpack.c.b16 %v4115, %v4099
    %v5204 = vpack.c.b16 %v4116, %v4100
    %v5205 = vpack.c.b16 %v4117, %v4101
    %v5206 = vpack.c.b16 %v4118, %v4102
    %v5207 = vpack.c.b16 %v4119, %v4103
    %v5208 = vpack.c.b16 %v4120, %v4104
    %v5209 = vpack.c.b16 %v4121, %v4105
    %v5210 = vpack.c.b16 %v4122, %v4106
    %v5211 = vpack.c.b16 %v4123, %v4107
    %v5212 = vpack.c.b16 %v4124, %v4108
    %v5213 = vpack.c.b16 %v4125, %v4109
    %v5214 = vpack.c.b16 %v4126, %v4110
    %v5215 = vpack.c.b16 %v4127, %v4111
    %v5216 = vpack.c.b16 %v4144, %v4128
    %v5217 = vpack.c.b16 %v4145, %v4129
    %v5218 = vpack.c.b16 %v4146, %v4130
    %v5219 = vpack.c.b16 %v4147, %v4131
    %v5220 = vpack.c.b16 %v4148, %v4132
    %v5221 = vpack.c.b16 %v4149, %v4133
    %v5222 = vpack.c.b16 %v4150, %v4134
    %v5223 = vpack.c.b16 %v4151, %v4135
    %v5224 = vpack.c.b16 %v4152, %v4136
    %v5225 = vpack.c.b16 %v4153, %v4137
    %v5226 = vpack.c.b16 %v4154, %v4138
    %v5227 = vpack.c.b16 %v4155, %v4139
    %v5228 = vpack.c.b16 %v4156, %v4140
    %v5229 = vpack.c.b16 %v4157, %v4141
    %v5230 = vpack.c.b16 %v4158, %v4142
    %v5231 = vpack.c.b16 %v4159, %v4143
    %v5232 = vpack.c.b16 %v4176, %v4160
    %v5233 = vpack.c.b16 %v4177, %v4161
    %v5234 = vpack.c.b16 %v4178, %v4162
    %v5235 = vpack.c.b16 %v4179, %v4163
    %v5236 = vpack.c.b16 %v4180, %v4164
    %v5237 = vpack.c.b16 %v4181, %v4165
    %v5238 = vpack.c.b16 %v4182, %v4166
    %v5239 = vpack.c.b16 %v4183, %v4167
    %v5240 = vpack.c.b16 %v4184, %v4168
    %v5241 = vpack.c.b16 %v4185, %v4169
    %v5242 = vpack.c.b16 %v4186, %v4170
    %v5243 = vpack.c.b16 %v4187, %v4171
    %v5244 = vpack.c.b16 %v4188, %v4172
    %v5245 = vpack.c.b16 %v4189, %v4173
    %v5246 = vpack.c.b16 %v4190, %v4174
    %v5247 = vpack.c.b16 %v4191, %v4175
    %v5248 = vpack.c.b16 %v4208, %v4192
    %v5249 = vpack.c.b16 %v4209, %v4193
    %v5250 = vpack.c.b16 %v4210, %v4194
    %v5251 = vpack.c.b16 %v4211, %v4195
    %v5252 = vpack.c.b16 %v4212, %v4196
    %v5253 = vpack.c.b16 %v4213, %v4197
    %v5254 = vpack.c.b16 %v4214, %v4198
    %v5255 = vpack.c.b16 %v4215, %v4199
    %v5256 = vpack.c.b16 %v4216, %v4200
    %v5257 = vpack.c.b16 %v4217, %v4201
    %v5258 = vpack.c.b16 %v4218, %v4202
    %v5259 = vpack.c.b16 %v4219, %v4203
    %v5260 = vpack.c.b16 %v4220, %v4204
    %v5261 = vpack.c.b16 %v4221, %v4205
    %v5262 = vpack.c.b16 %v4222, %v4206
    %v5263 = vpack.c.b16 %v4223, %v4207
    %v5264 = vpack.c.b16 %v4240, %v4224
    %v5265 = vpack.c.b16 %v4241, %v4225
    %v5266 = vpack.c.b16 %v4242, %v4226
    %v5267 = vpack.c.b16 %v4243, %v4227
    %v5268 = vpack.c.b16 %v4244, %v4228
    %v5269 = vpack.c.b16 %v4245, %v4229
    %v5270 = vpack.c.b16 %v4246, %v4230
    %v5271 = vpack.c.b16 %v4247, %v4231
    %v5272 = vpack.c.b16 %v4248, %v4232
    %v5273 = vpack.c.b16 %v4249, %v4233
    %v5274 = vpack.c.b16 %v4250, %v4234
    %v5275 = vpack.c.b16 %v4251, %v4235
    %v5276 = vpack.c.b16 %v4252, %v4236
    %v5277 = vpack.c.b16 %v4253, %v4237
    %v5278 = vpack.c.b16 %v4254, %v4238
    %v5279 = vpack.c.b16 %v4255, %v4239
    %6304 = vmatpush.bf16.msra.mxu0 %v4368
    %6305 = vmatpush.bf16.msra.mxu0 %v4352
    %6306 = vmatpush.bf16.msra.mxu0 %v4336
    %6307 = vmatpush.bf16.msra.mxu0 %v4320
    %6308 = vmatpush.bf16.msra.mxu0 %v4304
    %6309 = vmatpush.bf16.msra.mxu0 %v4288
    %6310 = vmatpush.bf16.msra.mxu0 %v4272
    %6311 = vmatpush.bf16.msra.mxu0 %v4256
    %6312 = vmatmul.bf16.gmra.mxu0 %v116
    %v6313 = vpop.f32.mrf.mxu0
    %v6314 = vadd.f32 %v1152, %v6313
    %v6315 = vpop.f32.mrf.mxu0
    %6316 = vdwg.mxu0
    %6317 = vmatpush.bf16.msra.mxu0 %v4496
    %6318 = vmatpush.bf16.msra.mxu0 %v4480
    %6319 = vmatpush.bf16.msra.mxu0 %v4464
    %6320 = vmatpush.bf16.msra.mxu0 %v4448
    %6321 = vmatpush.bf16.msra.mxu0 %v4432
    %6322 = vmatpush.bf16.msra.mxu0 %v4416
    %6323 = vmatpush.bf16.msra.mxu0 %v4400
    %6324 = vmatpush.bf16.msra.mxu0 %v4384
    %6325 = vmatmul.bf16.gmra.mxu0 %v117
    %v6326 = vpop.f32.mrf.mxu0
    %v6327 = vadd.f32 %v6314, %v6326
    %v6328 = vpop.f32.mrf.mxu0
    %6329 = vdwg.mxu0
    %6330 = vmatpush.bf16.msra.mxu0 %v4624
    %6331 = vmatpush.bf16.msra.mxu0 %v4608
    %6332 = vmatpush.bf16.msra.mxu0 %v4592
    %6333 = vmatpush.bf16.msra.mxu0 %v4576
    %6334 = vmatpush.bf16.msra.mxu0 %v4560
    %6335 = vmatpush.bf16.msra.mxu0 %v4544
    %6336 = vmatpush.bf16.msra.mxu0 %v4528
    %6337 = vmatpush.bf16.msra.mxu0 %v4512
    %6338 = vmatmul.bf16.gmra.mxu0 %v118
    %v6339 = vpop.f32.mrf.mxu0
    %v6340 = vadd.f32 %v6327, %v6339
    %v6341 = vpop.f32.mrf.mxu0
    %6342 = vdwg.mxu0
    %6343 = vmatpush.bf16.msra.mxu0 %v4752
    %6344 = vmatpush.bf16.msra.mxu0 %v4736
    %6345 = vmatpush.bf16.msra.mxu0 %v4720
    %6346 = vmatpush.bf16.msra.mxu0 %v4704
    %6347 = vmatpush.bf16.msra.mxu0 %v4688
    %6348 = vmatpush.bf16.msra.mxu0 %v4672
    %6349 = vmatpush.bf16.msra.mxu0 %v4656
    %6350 = vmatpush.bf16.msra.mxu0 %v4640
    %6351 = vmatmul.bf16.gmra.mxu0 %v119
    %v6352 = vpop.f32.mrf.mxu0
    %v6353 = vadd.f32 %v6340, %v6352
    %v6354 = vpop.f32.mrf.mxu0
    %6355 = vdwg.mxu0
    %6356 = vmatpush.bf16.msra.mxu0 %v4880
    %6357 = vmatpush.bf16.msra.mxu0 %v4864
    %6358 = vmatpush.bf16.msra.mxu0 %v4848
    %6359 = vmatpush.bf16.msra.mxu0 %v4832
    %6360 = vmatpush.bf16.msra.mxu0 %v4816
    %6361 = vmatpush.bf16.msra.mxu0 %v4800
    %6362 = vmatpush.bf16.msra.mxu0 %v4784
    %6363 = vmatpush.bf16.msra.mxu0 %v4768
    %6364 = vmatmul.bf16.gmra.mxu0 %v120
    %v6365 = vpop.f32.mrf.mxu0
    %v6366 = vadd.f32 %v6353, %v6365
    %v6367 = vpop.f32.mrf.mxu0
    %6368 = vdwg.mxu0
    %6369 = vmatpush.bf16.msra.mxu0 %v5008
    %6370 = vmatpush.bf16.msra.mxu0 %v4992
    %6371 = vmatpush.bf16.msra.mxu0 %v4976
    %6372 = vmatpush.bf16.msra.mxu0 %v4960
    %6373 = vmatpush.bf16.msra.mxu0 %v4944
    %6374 = vmatpush.bf16.msra.mxu0 %v4928
    %6375 = vmatpush.bf16.msra.mxu0 %v4912
    %6376 = vmatpush.bf16.msra.mxu0 %v4896
    %6377 = vmatmul.bf16.gmra.mxu0 %v121
    %v6378 = vpop.f32.mrf.mxu0
    %v6379 = vadd.f32 %v6366, %v6378
    %v6380 = vpop.f32.mrf.mxu0
    %6381 = vdwg.mxu0
    %6382 = vmatpush.bf16.msra.mxu0 %v5136
    %6383 = vmatpush.bf16.msra.mxu0 %v5120
    %6384 = vmatpush.bf16.msra.mxu0 %v5104
    %6385 = vmatpush.bf16.msra.mxu0 %v5088
    %6386 = vmatpush.bf16.msra.mxu0 %v5072
    %6387 = vmatpush.bf16.msra.mxu0 %v5056
    %6388 = vmatpush.bf16.msra.mxu0 %v5040
    %6389 = vmatpush.bf16.msra.mxu0 %v5024
    %6390 = vmatmul.bf16.gmra.mxu0 %v122
    %v6391 = vpop.f32.mrf.mxu0
    %v6392 = vadd.f32 %v6379, %v6391
    %v6393 = vpop.f32.mrf.mxu0
    %6394 = vdwg.mxu0
    %6395 = vmatpush.bf16.msra.mxu0 %v5264
    %6396 = vmatpush.bf16.msra.mxu0 %v5248
    %6397 = vmatpush.bf16.msra.mxu0 %v5232
    %6398 = vmatpush.bf16.msra.mxu0 %v5216
    %6399 = vmatpush.bf16.msra.mxu0 %v5200
    %6400 = vmatpush.bf16.msra.mxu0 %v5184
    %6401 = vmatpush.bf16.msra.mxu0 %v5168
    %6402 = vmatpush.bf16.msra.mxu0 %v5152
    %6403 = vmatmul.bf16.gmra.mxu0 %v123
    %v6404 = vpop.f32.mrf.mxu0
    %v6405 = vadd.f32 %v6392, %v6404
    %v6406 = vpop.f32.mrf.mxu0
    %6407 = vdwg.mxu0
    %6408 = vmatpush.bf16.msra.mxu0 %v4369
    %6409 = vmatpush.bf16.msra.mxu0 %v4353
    %6410 = vmatpush.bf16.msra.mxu0 %v4337
    %6411 = vmatpush.bf16.msra.mxu0 %v4321
    %6412 = vmatpush.bf16.msra.mxu0 %v4305
    %6413 = vmatpush.bf16.msra.mxu0 %v4289
    %6414 = vmatpush.bf16.msra.mxu0 %v4273
    %6415 = vmatpush.bf16.msra.mxu0 %v4257
    %6416 = vmatmul.bf16.gmra.mxu0 %v116
    %v6417 = vpop.f32.mrf.mxu0
    %v6418 = vadd.f32 %v1153, %v6417
    %v6419 = vpop.f32.mrf.mxu0
    %6420 = vdwg.mxu0
    %6421 = vmatpush.bf16.msra.mxu0 %v4497
    %6422 = vmatpush.bf16.msra.mxu0 %v4481
    %6423 = vmatpush.bf16.msra.mxu0 %v4465
    %6424 = vmatpush.bf16.msra.mxu0 %v4449
    %6425 = vmatpush.bf16.msra.mxu0 %v4433
    %6426 = vmatpush.bf16.msra.mxu0 %v4417
    %6427 = vmatpush.bf16.msra.mxu0 %v4401
    %6428 = vmatpush.bf16.msra.mxu0 %v4385
    %6429 = vmatmul.bf16.gmra.mxu0 %v117
    %v6430 = vpop.f32.mrf.mxu0
    %v6431 = vadd.f32 %v6418, %v6430
    %v6432 = vpop.f32.mrf.mxu0
    %6433 = vdwg.mxu0
    %6434 = vmatpush.bf16.msra.mxu0 %v4625
    %6435 = vmatpush.bf16.msra.mxu0 %v4609
    %6436 = vmatpush.bf16.msra.mxu0 %v4593
    %6437 = vmatpush.bf16.msra.mxu0 %v4577
    %6438 = vmatpush.bf16.msra.mxu0 %v4561
    %6439 = vmatpush.bf16.msra.mxu0 %v4545
    %6440 = vmatpush.bf16.msra.mxu0 %v4529
    %6441 = vmatpush.bf16.msra.mxu0 %v4513
    %6442 = vmatmul.bf16.gmra.mxu0 %v118
    %v6443 = vpop.f32.mrf.mxu0
    %v6444 = vadd.f32 %v6431, %v6443
    %v6445 = vpop.f32.mrf.mxu0
    %6446 = vdwg.mxu0
    %6447 = vmatpush.bf16.msra.mxu0 %v4753
    %6448 = vmatpush.bf16.msra.mxu0 %v4737
    %6449 = vmatpush.bf16.msra.mxu0 %v4721
    %6450 = vmatpush.bf16.msra.mxu0 %v4705
    %6451 = vmatpush.bf16.msra.mxu0 %v4689
    %6452 = vmatpush.bf16.msra.mxu0 %v4673
    %6453 = vmatpush.bf16.msra.mxu0 %v4657
    %6454 = vmatpush.bf16.msra.mxu0 %v4641
    %6455 = vmatmul.bf16.gmra.mxu0 %v119
    %v6456 = vpop.f32.mrf.mxu0
    %v6457 = vadd.f32 %v6444, %v6456
    %v6458 = vpop.f32.mrf.mxu0
    %6459 = vdwg.mxu0
    %6460 = vmatpush.bf16.msra.mxu0 %v4881
    %6461 = vmatpush.bf16.msra.mxu0 %v4865
    %6462 = vmatpush.bf16.msra.mxu0 %v4849
    %6463 = vmatpush.bf16.msra.mxu0 %v4833
    %6464 = vmatpush.bf16.msra.mxu0 %v4817
    %6465 = vmatpush.bf16.msra.mxu0 %v4801
    %6466 = vmatpush.bf16.msra.mxu0 %v4785
    %6467 = vmatpush.bf16.msra.mxu0 %v4769
    %6468 = vmatmul.bf16.gmra.mxu0 %v120
    %v6469 = vpop.f32.mrf.mxu0
    %v6470 = vadd.f32 %v6457, %v6469
    %v6471 = vpop.f32.mrf.mxu0
    %6472 = vdwg.mxu0
    %6473 = vmatpush.bf16.msra.mxu0 %v5009
    %6474 = vmatpush.bf16.msra.mxu0 %v4993
    %6475 = vmatpush.bf16.msra.mxu0 %v4977
    %6476 = vmatpush.bf16.msra.mxu0 %v4961
    %6477 = vmatpush.bf16.msra.mxu0 %v4945
    %6478 = vmatpush.bf16.msra.mxu0 %v4929
    %6479 = vmatpush.bf16.msra.mxu0 %v4913
    %6480 = vmatpush.bf16.msra.mxu0 %v4897
    %6481 = vmatmul.bf16.gmra.mxu0 %v121
    %v6482 = vpop.f32.mrf.mxu0
    %v6483 = vadd.f32 %v6470, %v6482
    %v6484 = vpop.f32.mrf.mxu0
    %6485 = vdwg.mxu0
    %6486 = vmatpush.bf16.msra.mxu0 %v5137
    %6487 = vmatpush.bf16.msra.mxu0 %v5121
    %6488 = vmatpush.bf16.msra.mxu0 %v5105
    %6489 = vmatpush.bf16.msra.mxu0 %v5089
    %6490 = vmatpush.bf16.msra.mxu0 %v5073
    %6491 = vmatpush.bf16.msra.mxu0 %v5057
    %6492 = vmatpush.bf16.msra.mxu0 %v5041
    %6493 = vmatpush.bf16.msra.mxu0 %v5025
    %6494 = vmatmul.bf16.gmra.mxu0 %v122
    %v6495 = vpop.f32.mrf.mxu0
    %v6496 = vadd.f32 %v6483, %v6495
    %v6497 = vpop.f32.mrf.mxu0
    %6498 = vdwg.mxu0
    %6499 = vmatpush.bf16.msra.mxu0 %v5265
    %6500 = vmatpush.bf16.msra.mxu0 %v5249
    %6501 = vmatpush.bf16.msra.mxu0 %v5233
    %6502 = vmatpush.bf16.msra.mxu0 %v5217
    %6503 = vmatpush.bf16.msra.mxu0 %v5201
    %6504 = vmatpush.bf16.msra.mxu0 %v5185
    %6505 = vmatpush.bf16.msra.mxu0 %v5169
    %6506 = vmatpush.bf16.msra.mxu0 %v5153
    %6507 = vmatmul.bf16.gmra.mxu0 %v123
    %v6508 = vpop.f32.mrf.mxu0
    %v6509 = vadd.f32 %v6496, %v6508
    %v6510 = vpop.f32.mrf.mxu0
    %6511 = vdwg.mxu0
    %6512 = vmatpush.bf16.msra.mxu0 %v4370
    %6513 = vmatpush.bf16.msra.mxu0 %v4354
    %6514 = vmatpush.bf16.msra.mxu0 %v4338
    %6515 = vmatpush.bf16.msra.mxu0 %v4322
    %6516 = vmatpush.bf16.msra.mxu0 %v4306
    %6517 = vmatpush.bf16.msra.mxu0 %v4290
    %6518 = vmatpush.bf16.msra.mxu0 %v4274
    %6519 = vmatpush.bf16.msra.mxu0 %v4258
    %6520 = vmatmul.bf16.gmra.mxu0 %v116
    %v6521 = vpop.f32.mrf.mxu0
    %v6522 = vadd.f32 %v1154, %v6521
    %v6523 = vpop.f32.mrf.mxu0
    %6524 = vdwg.mxu0
    %6525 = vmatpush.bf16.msra.mxu0 %v4498
    %6526 = vmatpush.bf16.msra.mxu0 %v4482
    %6527 = vmatpush.bf16.msra.mxu0 %v4466
    %6528 = vmatpush.bf16.msra.mxu0 %v4450
    %6529 = vmatpush.bf16.msra.mxu0 %v4434
    %6530 = vmatpush.bf16.msra.mxu0 %v4418
    %6531 = vmatpush.bf16.msra.mxu0 %v4402
    %6532 = vmatpush.bf16.msra.mxu0 %v4386
    %6533 = vmatmul.bf16.gmra.mxu0 %v117
    %v6534 = vpop.f32.mrf.mxu0
    %v6535 = vadd.f32 %v6522, %v6534
    %v6536 = vpop.f32.mrf.mxu0
    %6537 = vdwg.mxu0
    %6538 = vmatpush.bf16.msra.mxu0 %v4626
    %6539 = vmatpush.bf16.msra.mxu0 %v4610
    %6540 = vmatpush.bf16.msra.mxu0 %v4594
    %6541 = vmatpush.bf16.msra.mxu0 %v4578
    %6542 = vmatpush.bf16.msra.mxu0 %v4562
    %6543 = vmatpush.bf16.msra.mxu0 %v4546
    %6544 = vmatpush.bf16.msra.mxu0 %v4530
    %6545 = vmatpush.bf16.msra.mxu0 %v4514
    %6546 = vmatmul.bf16.gmra.mxu0 %v118
    %v6547 = vpop.f32.mrf.mxu0
    %v6548 = vadd.f32 %v6535, %v6547
    %v6549 = vpop.f32.mrf.mxu0
    %6550 = vdwg.mxu0
    %6551 = vmatpush.bf16.msra.mxu0 %v4754
    %6552 = vmatpush.bf16.msra.mxu0 %v4738
    %6553 = vmatpush.bf16.msra.mxu0 %v4722
    %6554 = vmatpush.bf16.msra.mxu0 %v4706
    %6555 = vmatpush.bf16.msra.mxu0 %v4690
    %6556 = vmatpush.bf16.msra.mxu0 %v4674
    %6557 = vmatpush.bf16.msra.mxu0 %v4658
    %6558 = vmatpush.bf16.msra.mxu0 %v4642
    %6559 = vmatmul.bf16.gmra.mxu0 %v119
    %v6560 = vpop.f32.mrf.mxu0
    %v6561 = vadd.f32 %v6548, %v6560
    %v6562 = vpop.f32.mrf.mxu0
    %6563 = vdwg.mxu0
    %6564 = vmatpush.bf16.msra.mxu0 %v4882
    %6565 = vmatpush.bf16.msra.mxu0 %v4866
    %6566 = vmatpush.bf16.msra.mxu0 %v4850
    %6567 = vmatpush.bf16.msra.mxu0 %v4834
    %6568 = vmatpush.bf16.msra.mxu0 %v4818
    %6569 = vmatpush.bf16.msra.mxu0 %v4802
    %6570 = vmatpush.bf16.msra.mxu0 %v4786
    %6571 = vmatpush.bf16.msra.mxu0 %v4770
    %6572 = vmatmul.bf16.gmra.mxu0 %v120
    %v6573 = vpop.f32.mrf.mxu0
    %v6574 = vadd.f32 %v6561, %v6573
    %v6575 = vpop.f32.mrf.mxu0
    %6576 = vdwg.mxu0
    %6577 = vmatpush.bf16.msra.mxu0 %v5010
    %6578 = vmatpush.bf16.msra.mxu0 %v4994
    %6579 = vmatpush.bf16.msra.mxu0 %v4978
    %6580 = vmatpush.bf16.msra.mxu0 %v4962
    %6581 = vmatpush.bf16.msra.mxu0 %v4946
    %6582 = vmatpush.bf16.msra.mxu0 %v4930
    %6583 = vmatpush.bf16.msra.mxu0 %v4914
    %6584 = vmatpush.bf16.msra.mxu0 %v4898
    %6585 = vmatmul.bf16.gmra.mxu0 %v121
    %v6586 = vpop.f32.mrf.mxu0
    %v6587 = vadd.f32 %v6574, %v6586
    %v6588 = vpop.f32.mrf.mxu0
    %6589 = vdwg.mxu0
    %6590 = vmatpush.bf16.msra.mxu0 %v5138
    %6591 = vmatpush.bf16.msra.mxu0 %v5122
    %6592 = vmatpush.bf16.msra.mxu0 %v5106
    %6593 = vmatpush.bf16.msra.mxu0 %v5090
    %6594 = vmatpush.bf16.msra.mxu0 %v5074
    %6595 = vmatpush.bf16.msra.mxu0 %v5058
    %6596 = vmatpush.bf16.msra.mxu0 %v5042
    %6597 = vmatpush.bf16.msra.mxu0 %v5026
    %6598 = vmatmul.bf16.gmra.mxu0 %v122
    %v6599 = vpop.f32.mrf.mxu0
    %v6600 = vadd.f32 %v6587, %v6599
    %v6601 = vpop.f32.mrf.mxu0
    %6602 = vdwg.mxu0
    %6603 = vmatpush.bf16.msra.mxu0 %v5266
    %6604 = vmatpush.bf16.msra.mxu0 %v5250
    %6605 = vmatpush.bf16.msra.mxu0 %v5234
    %6606 = vmatpush.bf16.msra.mxu0 %v5218
    %6607 = vmatpush.bf16.msra.mxu0 %v5202
    %6608 = vmatpush.bf16.msra.mxu0 %v5186
    %6609 = vmatpush.bf16.msra.mxu0 %v5170
    %6610 = vmatpush.bf16.msra.mxu0 %v5154
    %6611 = vmatmul.bf16.gmra.mxu0 %v123
    %v6612 = vpop.f32.mrf.mxu0
    %v6613 = vadd.f32 %v6600, %v6612
    %v6614 = vpop.f32.mrf.mxu0
    %6615 = vdwg.mxu0
    %6616 = vmatpush.bf16.msra.mxu0 %v4371
    %6617 = vmatpush.bf16.msra.mxu0 %v4355
    %6618 = vmatpush.bf16.msra.mxu0 %v4339
    %6619 = vmatpush.bf16.msra.mxu0 %v4323
    %6620 = vmatpush.bf16.msra.mxu0 %v4307
    %6621 = vmatpush.bf16.msra.mxu0 %v4291
    %6622 = vmatpush.bf16.msra.mxu0 %v4275
    %6623 = vmatpush.bf16.msra.mxu0 %v4259
    %6624 = vmatmul.bf16.gmra.mxu0 %v116
    %v6625 = vpop.f32.mrf.mxu0
    %v6626 = vadd.f32 %v1155, %v6625
    %v6627 = vpop.f32.mrf.mxu0
    %6628 = vdwg.mxu0
    %6629 = vmatpush.bf16.msra.mxu0 %v4499
    %6630 = vmatpush.bf16.msra.mxu0 %v4483
    %6631 = vmatpush.bf16.msra.mxu0 %v4467
    %6632 = vmatpush.bf16.msra.mxu0 %v4451
    %6633 = vmatpush.bf16.msra.mxu0 %v4435
    %6634 = vmatpush.bf16.msra.mxu0 %v4419
    %6635 = vmatpush.bf16.msra.mxu0 %v4403
    %6636 = vmatpush.bf16.msra.mxu0 %v4387
    %6637 = vmatmul.bf16.gmra.mxu0 %v117
    %v6638 = vpop.f32.mrf.mxu0
    %v6639 = vadd.f32 %v6626, %v6638
    %v6640 = vpop.f32.mrf.mxu0
    %6641 = vdwg.mxu0
    %6642 = vmatpush.bf16.msra.mxu0 %v4627
    %6643 = vmatpush.bf16.msra.mxu0 %v4611
    %6644 = vmatpush.bf16.msra.mxu0 %v4595
    %6645 = vmatpush.bf16.msra.mxu0 %v4579
    %6646 = vmatpush.bf16.msra.mxu0 %v4563
    %6647 = vmatpush.bf16.msra.mxu0 %v4547
    %6648 = vmatpush.bf16.msra.mxu0 %v4531
    %6649 = vmatpush.bf16.msra.mxu0 %v4515
    %6650 = vmatmul.bf16.gmra.mxu0 %v118
    %v6651 = vpop.f32.mrf.mxu0
    %v6652 = vadd.f32 %v6639, %v6651
    %v6653 = vpop.f32.mrf.mxu0
    %6654 = vdwg.mxu0
    %6655 = vmatpush.bf16.msra.mxu0 %v4755
    %6656 = vmatpush.bf16.msra.mxu0 %v4739
    %6657 = vmatpush.bf16.msra.mxu0 %v4723
    %6658 = vmatpush.bf16.msra.mxu0 %v4707
    %6659 = vmatpush.bf16.msra.mxu0 %v4691
    %6660 = vmatpush.bf16.msra.mxu0 %v4675
    %6661 = vmatpush.bf16.msra.mxu0 %v4659
    %6662 = vmatpush.bf16.msra.mxu0 %v4643
    %6663 = vmatmul.bf16.gmra.mxu0 %v119
    %v6664 = vpop.f32.mrf.mxu0
    %v6665 = vadd.f32 %v6652, %v6664
    %v6666 = vpop.f32.mrf.mxu0
    %6667 = vdwg.mxu0
    %6668 = vmatpush.bf16.msra.mxu0 %v4883
    %6669 = vmatpush.bf16.msra.mxu0 %v4867
    %6670 = vmatpush.bf16.msra.mxu0 %v4851
    %6671 = vmatpush.bf16.msra.mxu0 %v4835
    %6672 = vmatpush.bf16.msra.mxu0 %v4819
    %6673 = vmatpush.bf16.msra.mxu0 %v4803
    %6674 = vmatpush.bf16.msra.mxu0 %v4787
    %6675 = vmatpush.bf16.msra.mxu0 %v4771
    %6676 = vmatmul.bf16.gmra.mxu0 %v120
    %v6677 = vpop.f32.mrf.mxu0
    %v6678 = vadd.f32 %v6665, %v6677
    %v6679 = vpop.f32.mrf.mxu0
    %6680 = vdwg.mxu0
    %6681 = vmatpush.bf16.msra.mxu0 %v5011
    %6682 = vmatpush.bf16.msra.mxu0 %v4995
    %6683 = vmatpush.bf16.msra.mxu0 %v4979
    %6684 = vmatpush.bf16.msra.mxu0 %v4963
    %6685 = vmatpush.bf16.msra.mxu0 %v4947
    %6686 = vmatpush.bf16.msra.mxu0 %v4931
    %6687 = vmatpush.bf16.msra.mxu0 %v4915
    %6688 = vmatpush.bf16.msra.mxu0 %v4899
    %6689 = vmatmul.bf16.gmra.mxu0 %v121
    %v6690 = vpop.f32.mrf.mxu0
    %v6691 = vadd.f32 %v6678, %v6690
    %v6692 = vpop.f32.mrf.mxu0
    %6693 = vdwg.mxu0
    %6694 = vmatpush.bf16.msra.mxu0 %v5139
    %6695 = vmatpush.bf16.msra.mxu0 %v5123
    %6696 = vmatpush.bf16.msra.mxu0 %v5107
    %6697 = vmatpush.bf16.msra.mxu0 %v5091
    %6698 = vmatpush.bf16.msra.mxu0 %v5075
    %6699 = vmatpush.bf16.msra.mxu0 %v5059
    %6700 = vmatpush.bf16.msra.mxu0 %v5043
    %6701 = vmatpush.bf16.msra.mxu0 %v5027
    %6702 = vmatmul.bf16.gmra.mxu0 %v122
    %v6703 = vpop.f32.mrf.mxu0
    %v6704 = vadd.f32 %v6691, %v6703
    %v6705 = vpop.f32.mrf.mxu0
    %6706 = vdwg.mxu0
    %6707 = vmatpush.bf16.msra.mxu0 %v5267
    %6708 = vmatpush.bf16.msra.mxu0 %v5251
    %6709 = vmatpush.bf16.msra.mxu0 %v5235
    %6710 = vmatpush.bf16.msra.mxu0 %v5219
    %6711 = vmatpush.bf16.msra.mxu0 %v5203
    %6712 = vmatpush.bf16.msra.mxu0 %v5187
    %6713 = vmatpush.bf16.msra.mxu0 %v5171
    %6714 = vmatpush.bf16.msra.mxu0 %v5155
    %6715 = vmatmul.bf16.gmra.mxu0 %v123
    %v6716 = vpop.f32.mrf.mxu0
    %v6717 = vadd.f32 %v6704, %v6716
    %v6718 = vpop.f32.mrf.mxu0
    %6719 = vdwg.mxu0
    %6720 = vmatpush.bf16.msra.mxu0 %v4372
    %6721 = vmatpush.bf16.msra.mxu0 %v4356
    %6722 = vmatpush.bf16.msra.mxu0 %v4340
    %6723 = vmatpush.bf16.msra.mxu0 %v4324
    %6724 = vmatpush.bf16.msra.mxu0 %v4308
    %6725 = vmatpush.bf16.msra.mxu0 %v4292
    %6726 = vmatpush.bf16.msra.mxu0 %v4276
    %6727 = vmatpush.bf16.msra.mxu0 %v4260
    %6728 = vmatmul.bf16.gmra.mxu0 %v116
    %v6729 = vpop.f32.mrf.mxu0
    %v6730 = vadd.f32 %v1156, %v6729
    %v6731 = vpop.f32.mrf.mxu0
    %6732 = vdwg.mxu0
    %6733 = vmatpush.bf16.msra.mxu0 %v4500
    %6734 = vmatpush.bf16.msra.mxu0 %v4484
    %6735 = vmatpush.bf16.msra.mxu0 %v4468
    %6736 = vmatpush.bf16.msra.mxu0 %v4452
    %6737 = vmatpush.bf16.msra.mxu0 %v4436
    %6738 = vmatpush.bf16.msra.mxu0 %v4420
    %6739 = vmatpush.bf16.msra.mxu0 %v4404
    %6740 = vmatpush.bf16.msra.mxu0 %v4388
    %6741 = vmatmul.bf16.gmra.mxu0 %v117
    %v6742 = vpop.f32.mrf.mxu0
    %v6743 = vadd.f32 %v6730, %v6742
    %v6744 = vpop.f32.mrf.mxu0
    %6745 = vdwg.mxu0
    %6746 = vmatpush.bf16.msra.mxu0 %v4628
    %6747 = vmatpush.bf16.msra.mxu0 %v4612
    %6748 = vmatpush.bf16.msra.mxu0 %v4596
    %6749 = vmatpush.bf16.msra.mxu0 %v4580
    %6750 = vmatpush.bf16.msra.mxu0 %v4564
    %6751 = vmatpush.bf16.msra.mxu0 %v4548
    %6752 = vmatpush.bf16.msra.mxu0 %v4532
    %6753 = vmatpush.bf16.msra.mxu0 %v4516
    %6754 = vmatmul.bf16.gmra.mxu0 %v118
    %v6755 = vpop.f32.mrf.mxu0
    %v6756 = vadd.f32 %v6743, %v6755
    %v6757 = vpop.f32.mrf.mxu0
    %6758 = vdwg.mxu0
    %6759 = vmatpush.bf16.msra.mxu0 %v4756
    %6760 = vmatpush.bf16.msra.mxu0 %v4740
    %6761 = vmatpush.bf16.msra.mxu0 %v4724
    %6762 = vmatpush.bf16.msra.mxu0 %v4708
    %6763 = vmatpush.bf16.msra.mxu0 %v4692
    %6764 = vmatpush.bf16.msra.mxu0 %v4676
    %6765 = vmatpush.bf16.msra.mxu0 %v4660
    %6766 = vmatpush.bf16.msra.mxu0 %v4644
    %6767 = vmatmul.bf16.gmra.mxu0 %v119
    %v6768 = vpop.f32.mrf.mxu0
    %v6769 = vadd.f32 %v6756, %v6768
    %v6770 = vpop.f32.mrf.mxu0
    %6771 = vdwg.mxu0
    %6772 = vmatpush.bf16.msra.mxu0 %v4884
    %6773 = vmatpush.bf16.msra.mxu0 %v4868
    %6774 = vmatpush.bf16.msra.mxu0 %v4852
    %6775 = vmatpush.bf16.msra.mxu0 %v4836
    %6776 = vmatpush.bf16.msra.mxu0 %v4820
    %6777 = vmatpush.bf16.msra.mxu0 %v4804
    %6778 = vmatpush.bf16.msra.mxu0 %v4788
    %6779 = vmatpush.bf16.msra.mxu0 %v4772
    %6780 = vmatmul.bf16.gmra.mxu0 %v120
    %v6781 = vpop.f32.mrf.mxu0
    %v6782 = vadd.f32 %v6769, %v6781
    %v6783 = vpop.f32.mrf.mxu0
    %6784 = vdwg.mxu0
    %6785 = vmatpush.bf16.msra.mxu0 %v5012
    %6786 = vmatpush.bf16.msra.mxu0 %v4996
    %6787 = vmatpush.bf16.msra.mxu0 %v4980
    %6788 = vmatpush.bf16.msra.mxu0 %v4964
    %6789 = vmatpush.bf16.msra.mxu0 %v4948
    %6790 = vmatpush.bf16.msra.mxu0 %v4932
    %6791 = vmatpush.bf16.msra.mxu0 %v4916
    %6792 = vmatpush.bf16.msra.mxu0 %v4900
    %6793 = vmatmul.bf16.gmra.mxu0 %v121
    %v6794 = vpop.f32.mrf.mxu0
    %v6795 = vadd.f32 %v6782, %v6794
    %v6796 = vpop.f32.mrf.mxu0
    %6797 = vdwg.mxu0
    %6798 = vmatpush.bf16.msra.mxu0 %v5140
    %6799 = vmatpush.bf16.msra.mxu0 %v5124
    %6800 = vmatpush.bf16.msra.mxu0 %v5108
    %6801 = vmatpush.bf16.msra.mxu0 %v5092
    %6802 = vmatpush.bf16.msra.mxu0 %v5076
    %6803 = vmatpush.bf16.msra.mxu0 %v5060
    %6804 = vmatpush.bf16.msra.mxu0 %v5044
    %6805 = vmatpush.bf16.msra.mxu0 %v5028
    %6806 = vmatmul.bf16.gmra.mxu0 %v122
    %v6807 = vpop.f32.mrf.mxu0
    %v6808 = vadd.f32 %v6795, %v6807
    %v6809 = vpop.f32.mrf.mxu0
    %6810 = vdwg.mxu0
    %6811 = vmatpush.bf16.msra.mxu0 %v5268
    %6812 = vmatpush.bf16.msra.mxu0 %v5252
    %6813 = vmatpush.bf16.msra.mxu0 %v5236
    %6814 = vmatpush.bf16.msra.mxu0 %v5220
    %6815 = vmatpush.bf16.msra.mxu0 %v5204
    %6816 = vmatpush.bf16.msra.mxu0 %v5188
    %6817 = vmatpush.bf16.msra.mxu0 %v5172
    %6818 = vmatpush.bf16.msra.mxu0 %v5156
    %6819 = vmatmul.bf16.gmra.mxu0 %v123
    %v6820 = vpop.f32.mrf.mxu0
    %v6821 = vadd.f32 %v6808, %v6820
    %v6822 = vpop.f32.mrf.mxu0
    %6823 = vdwg.mxu0
    %6824 = vmatpush.bf16.msra.mxu0 %v4373
    %6825 = vmatpush.bf16.msra.mxu0 %v4357
    %6826 = vmatpush.bf16.msra.mxu0 %v4341
    %6827 = vmatpush.bf16.msra.mxu0 %v4325
    %6828 = vmatpush.bf16.msra.mxu0 %v4309
    %6829 = vmatpush.bf16.msra.mxu0 %v4293
    %6830 = vmatpush.bf16.msra.mxu0 %v4277
    %6831 = vmatpush.bf16.msra.mxu0 %v4261
    %6832 = vmatmul.bf16.gmra.mxu0 %v116
    %v6833 = vpop.f32.mrf.mxu0
    %v6834 = vadd.f32 %v1157, %v6833
    %v6835 = vpop.f32.mrf.mxu0
    %6836 = vdwg.mxu0
    %6837 = vmatpush.bf16.msra.mxu0 %v4501
    %6838 = vmatpush.bf16.msra.mxu0 %v4485
    %6839 = vmatpush.bf16.msra.mxu0 %v4469
    %6840 = vmatpush.bf16.msra.mxu0 %v4453
    %6841 = vmatpush.bf16.msra.mxu0 %v4437
    %6842 = vmatpush.bf16.msra.mxu0 %v4421
    %6843 = vmatpush.bf16.msra.mxu0 %v4405
    %6844 = vmatpush.bf16.msra.mxu0 %v4389
    %6845 = vmatmul.bf16.gmra.mxu0 %v117
    %v6846 = vpop.f32.mrf.mxu0
    %v6847 = vadd.f32 %v6834, %v6846
    %v6848 = vpop.f32.mrf.mxu0
    %6849 = vdwg.mxu0
    %6850 = vmatpush.bf16.msra.mxu0 %v4629
    %6851 = vmatpush.bf16.msra.mxu0 %v4613
    %6852 = vmatpush.bf16.msra.mxu0 %v4597
    %6853 = vmatpush.bf16.msra.mxu0 %v4581
    %6854 = vmatpush.bf16.msra.mxu0 %v4565
    %6855 = vmatpush.bf16.msra.mxu0 %v4549
    %6856 = vmatpush.bf16.msra.mxu0 %v4533
    %6857 = vmatpush.bf16.msra.mxu0 %v4517
    %6858 = vmatmul.bf16.gmra.mxu0 %v118
    %v6859 = vpop.f32.mrf.mxu0
    %v6860 = vadd.f32 %v6847, %v6859
    %v6861 = vpop.f32.mrf.mxu0
    %6862 = vdwg.mxu0
    %6863 = vmatpush.bf16.msra.mxu0 %v4757
    %6864 = vmatpush.bf16.msra.mxu0 %v4741
    %6865 = vmatpush.bf16.msra.mxu0 %v4725
    %6866 = vmatpush.bf16.msra.mxu0 %v4709
    %6867 = vmatpush.bf16.msra.mxu0 %v4693
    %6868 = vmatpush.bf16.msra.mxu0 %v4677
    %6869 = vmatpush.bf16.msra.mxu0 %v4661
    %6870 = vmatpush.bf16.msra.mxu0 %v4645
    %6871 = vmatmul.bf16.gmra.mxu0 %v119
    %v6872 = vpop.f32.mrf.mxu0
    %v6873 = vadd.f32 %v6860, %v6872
    %v6874 = vpop.f32.mrf.mxu0
    %6875 = vdwg.mxu0
    %6876 = vmatpush.bf16.msra.mxu0 %v4885
    %6877 = vmatpush.bf16.msra.mxu0 %v4869
    %6878 = vmatpush.bf16.msra.mxu0 %v4853
    %6879 = vmatpush.bf16.msra.mxu0 %v4837
    %6880 = vmatpush.bf16.msra.mxu0 %v4821
    %6881 = vmatpush.bf16.msra.mxu0 %v4805
    %6882 = vmatpush.bf16.msra.mxu0 %v4789
    %6883 = vmatpush.bf16.msra.mxu0 %v4773
    %6884 = vmatmul.bf16.gmra.mxu0 %v120
    %v6885 = vpop.f32.mrf.mxu0
    %v6886 = vadd.f32 %v6873, %v6885
    %v6887 = vpop.f32.mrf.mxu0
    %6888 = vdwg.mxu0
    %6889 = vmatpush.bf16.msra.mxu0 %v5013
    %6890 = vmatpush.bf16.msra.mxu0 %v4997
    %6891 = vmatpush.bf16.msra.mxu0 %v4981
    %6892 = vmatpush.bf16.msra.mxu0 %v4965
    %6893 = vmatpush.bf16.msra.mxu0 %v4949
    %6894 = vmatpush.bf16.msra.mxu0 %v4933
    %6895 = vmatpush.bf16.msra.mxu0 %v4917
    %6896 = vmatpush.bf16.msra.mxu0 %v4901
    %6897 = vmatmul.bf16.gmra.mxu0 %v121
    %v6898 = vpop.f32.mrf.mxu0
    %v6899 = vadd.f32 %v6886, %v6898
    %v6900 = vpop.f32.mrf.mxu0
    %6901 = vdwg.mxu0
    %6902 = vmatpush.bf16.msra.mxu0 %v5141
    %6903 = vmatpush.bf16.msra.mxu0 %v5125
    %6904 = vmatpush.bf16.msra.mxu0 %v5109
    %6905 = vmatpush.bf16.msra.mxu0 %v5093
    %6906 = vmatpush.bf16.msra.mxu0 %v5077
    %6907 = vmatpush.bf16.msra.mxu0 %v5061
    %6908 = vmatpush.bf16.msra.mxu0 %v5045
    %6909 = vmatpush.bf16.msra.mxu0 %v5029
    %6910 = vmatmul.bf16.gmra.mxu0 %v122
    %v6911 = vpop.f32.mrf.mxu0
    %v6912 = vadd.f32 %v6899, %v6911
    %v6913 = vpop.f32.mrf.mxu0
    %6914 = vdwg.mxu0
    %6915 = vmatpush.bf16.msra.mxu0 %v5269
    %6916 = vmatpush.bf16.msra.mxu0 %v5253
    %6917 = vmatpush.bf16.msra.mxu0 %v5237
    %6918 = vmatpush.bf16.msra.mxu0 %v5221
    %6919 = vmatpush.bf16.msra.mxu0 %v5205
    %6920 = vmatpush.bf16.msra.mxu0 %v5189
    %6921 = vmatpush.bf16.msra.mxu0 %v5173
    %6922 = vmatpush.bf16.msra.mxu0 %v5157
    %6923 = vmatmul.bf16.gmra.mxu0 %v123
    %v6924 = vpop.f32.mrf.mxu0
    %v6925 = vadd.f32 %v6912, %v6924
    %v6926 = vpop.f32.mrf.mxu0
    %6927 = vdwg.mxu0
    %6928 = vmatpush.bf16.msra.mxu0 %v4374
    %6929 = vmatpush.bf16.msra.mxu0 %v4358
    %6930 = vmatpush.bf16.msra.mxu0 %v4342
    %6931 = vmatpush.bf16.msra.mxu0 %v4326
    %6932 = vmatpush.bf16.msra.mxu0 %v4310
    %6933 = vmatpush.bf16.msra.mxu0 %v4294
    %6934 = vmatpush.bf16.msra.mxu0 %v4278
    %6935 = vmatpush.bf16.msra.mxu0 %v4262
    %6936 = vmatmul.bf16.gmra.mxu0 %v116
    %v6937 = vpop.f32.mrf.mxu0
    %v6938 = vadd.f32 %v1158, %v6937
    %v6939 = vpop.f32.mrf.mxu0
    %6940 = vdwg.mxu0
    %6941 = vmatpush.bf16.msra.mxu0 %v4502
    %6942 = vmatpush.bf16.msra.mxu0 %v4486
    %6943 = vmatpush.bf16.msra.mxu0 %v4470
    %6944 = vmatpush.bf16.msra.mxu0 %v4454
    %6945 = vmatpush.bf16.msra.mxu0 %v4438
    %6946 = vmatpush.bf16.msra.mxu0 %v4422
    %6947 = vmatpush.bf16.msra.mxu0 %v4406
    %6948 = vmatpush.bf16.msra.mxu0 %v4390
    %6949 = vmatmul.bf16.gmra.mxu0 %v117
    %v6950 = vpop.f32.mrf.mxu0
    %v6951 = vadd.f32 %v6938, %v6950
    %v6952 = vpop.f32.mrf.mxu0
    %6953 = vdwg.mxu0
    %6954 = vmatpush.bf16.msra.mxu0 %v4630
    %6955 = vmatpush.bf16.msra.mxu0 %v4614
    %6956 = vmatpush.bf16.msra.mxu0 %v4598
    %6957 = vmatpush.bf16.msra.mxu0 %v4582
    %6958 = vmatpush.bf16.msra.mxu0 %v4566
    %6959 = vmatpush.bf16.msra.mxu0 %v4550
    %6960 = vmatpush.bf16.msra.mxu0 %v4534
    %6961 = vmatpush.bf16.msra.mxu0 %v4518
    %6962 = vmatmul.bf16.gmra.mxu0 %v118
    %v6963 = vpop.f32.mrf.mxu0
    %v6964 = vadd.f32 %v6951, %v6963
    %v6965 = vpop.f32.mrf.mxu0
    %6966 = vdwg.mxu0
    %6967 = vmatpush.bf16.msra.mxu0 %v4758
    %6968 = vmatpush.bf16.msra.mxu0 %v4742
    %6969 = vmatpush.bf16.msra.mxu0 %v4726
    %6970 = vmatpush.bf16.msra.mxu0 %v4710
    %6971 = vmatpush.bf16.msra.mxu0 %v4694
    %6972 = vmatpush.bf16.msra.mxu0 %v4678
    %6973 = vmatpush.bf16.msra.mxu0 %v4662
    %6974 = vmatpush.bf16.msra.mxu0 %v4646
    %6975 = vmatmul.bf16.gmra.mxu0 %v119
    %v6976 = vpop.f32.mrf.mxu0
    %v6977 = vadd.f32 %v6964, %v6976
    %v6978 = vpop.f32.mrf.mxu0
    %6979 = vdwg.mxu0
    %6980 = vmatpush.bf16.msra.mxu0 %v4886
    %6981 = vmatpush.bf16.msra.mxu0 %v4870
    %6982 = vmatpush.bf16.msra.mxu0 %v4854
    %6983 = vmatpush.bf16.msra.mxu0 %v4838
    %6984 = vmatpush.bf16.msra.mxu0 %v4822
    %6985 = vmatpush.bf16.msra.mxu0 %v4806
    %6986 = vmatpush.bf16.msra.mxu0 %v4790
    %6987 = vmatpush.bf16.msra.mxu0 %v4774
    %6988 = vmatmul.bf16.gmra.mxu0 %v120
    %v6989 = vpop.f32.mrf.mxu0
    %v6990 = vadd.f32 %v6977, %v6989
    %v6991 = vpop.f32.mrf.mxu0
    %6992 = vdwg.mxu0
    %6993 = vmatpush.bf16.msra.mxu0 %v5014
    %6994 = vmatpush.bf16.msra.mxu0 %v4998
    %6995 = vmatpush.bf16.msra.mxu0 %v4982
    %6996 = vmatpush.bf16.msra.mxu0 %v4966
    %6997 = vmatpush.bf16.msra.mxu0 %v4950
    %6998 = vmatpush.bf16.msra.mxu0 %v4934
    %6999 = vmatpush.bf16.msra.mxu0 %v4918
    %7000 = vmatpush.bf16.msra.mxu0 %v4902
    %7001 = vmatmul.bf16.gmra.mxu0 %v121
    %v7002 = vpop.f32.mrf.mxu0
    %v7003 = vadd.f32 %v6990, %v7002
    %v7004 = vpop.f32.mrf.mxu0
    %7005 = vdwg.mxu0
    %7006 = vmatpush.bf16.msra.mxu0 %v5142
    %7007 = vmatpush.bf16.msra.mxu0 %v5126
    %7008 = vmatpush.bf16.msra.mxu0 %v5110
    %7009 = vmatpush.bf16.msra.mxu0 %v5094
    %7010 = vmatpush.bf16.msra.mxu0 %v5078
    %7011 = vmatpush.bf16.msra.mxu0 %v5062
    %7012 = vmatpush.bf16.msra.mxu0 %v5046
    %7013 = vmatpush.bf16.msra.mxu0 %v5030
    %7014 = vmatmul.bf16.gmra.mxu0 %v122
    %v7015 = vpop.f32.mrf.mxu0
    %v7016 = vadd.f32 %v7003, %v7015
    %v7017 = vpop.f32.mrf.mxu0
    %7018 = vdwg.mxu0
    %7019 = vmatpush.bf16.msra.mxu0 %v5270
    %7020 = vmatpush.bf16.msra.mxu0 %v5254
    %7021 = vmatpush.bf16.msra.mxu0 %v5238
    %7022 = vmatpush.bf16.msra.mxu0 %v5222
    %7023 = vmatpush.bf16.msra.mxu0 %v5206
    %7024 = vmatpush.bf16.msra.mxu0 %v5190
    %7025 = vmatpush.bf16.msra.mxu0 %v5174
    %7026 = vmatpush.bf16.msra.mxu0 %v5158
    %7027 = vmatmul.bf16.gmra.mxu0 %v123
    %v7028 = vpop.f32.mrf.mxu0
    %v7029 = vadd.f32 %v7016, %v7028
    %v7030 = vpop.f32.mrf.mxu0
    %7031 = vdwg.mxu0
    %7032 = vmatpush.bf16.msra.mxu0 %v4375
    %7033 = vmatpush.bf16.msra.mxu0 %v4359
    %7034 = vmatpush.bf16.msra.mxu0 %v4343
    %7035 = vmatpush.bf16.msra.mxu0 %v4327
    %7036 = vmatpush.bf16.msra.mxu0 %v4311
    %7037 = vmatpush.bf16.msra.mxu0 %v4295
    %7038 = vmatpush.bf16.msra.mxu0 %v4279
    %7039 = vmatpush.bf16.msra.mxu0 %v4263
    %7040 = vmatmul.bf16.gmra.mxu0 %v116
    %v7041 = vpop.f32.mrf.mxu0
    %v7042 = vadd.f32 %v1159, %v7041
    %v7043 = vpop.f32.mrf.mxu0
    %7044 = vdwg.mxu0
    %7045 = vmatpush.bf16.msra.mxu0 %v4503
    %7046 = vmatpush.bf16.msra.mxu0 %v4487
    %7047 = vmatpush.bf16.msra.mxu0 %v4471
    %7048 = vmatpush.bf16.msra.mxu0 %v4455
    %7049 = vmatpush.bf16.msra.mxu0 %v4439
    %7050 = vmatpush.bf16.msra.mxu0 %v4423
    %7051 = vmatpush.bf16.msra.mxu0 %v4407
    %7052 = vmatpush.bf16.msra.mxu0 %v4391
    %7053 = vmatmul.bf16.gmra.mxu0 %v117
    %v7054 = vpop.f32.mrf.mxu0
    %v7055 = vadd.f32 %v7042, %v7054
    %v7056 = vpop.f32.mrf.mxu0
    %7057 = vdwg.mxu0
    %7058 = vmatpush.bf16.msra.mxu0 %v4631
    %7059 = vmatpush.bf16.msra.mxu0 %v4615
    %7060 = vmatpush.bf16.msra.mxu0 %v4599
    %7061 = vmatpush.bf16.msra.mxu0 %v4583
    %7062 = vmatpush.bf16.msra.mxu0 %v4567
    %7063 = vmatpush.bf16.msra.mxu0 %v4551
    %7064 = vmatpush.bf16.msra.mxu0 %v4535
    %7065 = vmatpush.bf16.msra.mxu0 %v4519
    %7066 = vmatmul.bf16.gmra.mxu0 %v118
    %v7067 = vpop.f32.mrf.mxu0
    %v7068 = vadd.f32 %v7055, %v7067
    %v7069 = vpop.f32.mrf.mxu0
    %7070 = vdwg.mxu0
    %7071 = vmatpush.bf16.msra.mxu0 %v4759
    %7072 = vmatpush.bf16.msra.mxu0 %v4743
    %7073 = vmatpush.bf16.msra.mxu0 %v4727
    %7074 = vmatpush.bf16.msra.mxu0 %v4711
    %7075 = vmatpush.bf16.msra.mxu0 %v4695
    %7076 = vmatpush.bf16.msra.mxu0 %v4679
    %7077 = vmatpush.bf16.msra.mxu0 %v4663
    %7078 = vmatpush.bf16.msra.mxu0 %v4647
    %7079 = vmatmul.bf16.gmra.mxu0 %v119
    %v7080 = vpop.f32.mrf.mxu0
    %v7081 = vadd.f32 %v7068, %v7080
    %v7082 = vpop.f32.mrf.mxu0
    %7083 = vdwg.mxu0
    %7084 = vmatpush.bf16.msra.mxu0 %v4887
    %7085 = vmatpush.bf16.msra.mxu0 %v4871
    %7086 = vmatpush.bf16.msra.mxu0 %v4855
    %7087 = vmatpush.bf16.msra.mxu0 %v4839
    %7088 = vmatpush.bf16.msra.mxu0 %v4823
    %7089 = vmatpush.bf16.msra.mxu0 %v4807
    %7090 = vmatpush.bf16.msra.mxu0 %v4791
    %7091 = vmatpush.bf16.msra.mxu0 %v4775
    %7092 = vmatmul.bf16.gmra.mxu0 %v120
    %v7093 = vpop.f32.mrf.mxu0
    %v7094 = vadd.f32 %v7081, %v7093
    %v7095 = vpop.f32.mrf.mxu0
    %7096 = vdwg.mxu0
    %7097 = vmatpush.bf16.msra.mxu0 %v5015
    %7098 = vmatpush.bf16.msra.mxu0 %v4999
    %7099 = vmatpush.bf16.msra.mxu0 %v4983
    %7100 = vmatpush.bf16.msra.mxu0 %v4967
    %7101 = vmatpush.bf16.msra.mxu0 %v4951
    %7102 = vmatpush.bf16.msra.mxu0 %v4935
    %7103 = vmatpush.bf16.msra.mxu0 %v4919
    %7104 = vmatpush.bf16.msra.mxu0 %v4903
    %7105 = vmatmul.bf16.gmra.mxu0 %v121
    %v7106 = vpop.f32.mrf.mxu0
    %v7107 = vadd.f32 %v7094, %v7106
    %v7108 = vpop.f32.mrf.mxu0
    %7109 = vdwg.mxu0
    %7110 = vmatpush.bf16.msra.mxu0 %v5143
    %7111 = vmatpush.bf16.msra.mxu0 %v5127
    %7112 = vmatpush.bf16.msra.mxu0 %v5111
    %7113 = vmatpush.bf16.msra.mxu0 %v5095
    %7114 = vmatpush.bf16.msra.mxu0 %v5079
    %7115 = vmatpush.bf16.msra.mxu0 %v5063
    %7116 = vmatpush.bf16.msra.mxu0 %v5047
    %7117 = vmatpush.bf16.msra.mxu0 %v5031
    %7118 = vmatmul.bf16.gmra.mxu0 %v122
    %v7119 = vpop.f32.mrf.mxu0
    %v7120 = vadd.f32 %v7107, %v7119
    %v7121 = vpop.f32.mrf.mxu0
    %7122 = vdwg.mxu0
    %7123 = vmatpush.bf16.msra.mxu0 %v5271
    %7124 = vmatpush.bf16.msra.mxu0 %v5255
    %7125 = vmatpush.bf16.msra.mxu0 %v5239
    %7126 = vmatpush.bf16.msra.mxu0 %v5223
    %7127 = vmatpush.bf16.msra.mxu0 %v5207
    %7128 = vmatpush.bf16.msra.mxu0 %v5191
    %7129 = vmatpush.bf16.msra.mxu0 %v5175
    %7130 = vmatpush.bf16.msra.mxu0 %v5159
    %7131 = vmatmul.bf16.gmra.mxu0 %v123
    %v7132 = vpop.f32.mrf.mxu0
    %v7133 = vadd.f32 %v7120, %v7132
    %v7134 = vpop.f32.mrf.mxu0
    %7135 = vdwg.mxu0
    %7136 = vmatpush.bf16.msra.mxu0 %v4376
    %7137 = vmatpush.bf16.msra.mxu0 %v4360
    %7138 = vmatpush.bf16.msra.mxu0 %v4344
    %7139 = vmatpush.bf16.msra.mxu0 %v4328
    %7140 = vmatpush.bf16.msra.mxu0 %v4312
    %7141 = vmatpush.bf16.msra.mxu0 %v4296
    %7142 = vmatpush.bf16.msra.mxu0 %v4280
    %7143 = vmatpush.bf16.msra.mxu0 %v4264
    %7144 = vmatmul.bf16.gmra.mxu0 %v116
    %v7145 = vpop.f32.mrf.mxu0
    %v7146 = vadd.f32 %v1160, %v7145
    %v7147 = vpop.f32.mrf.mxu0
    %7148 = vdwg.mxu0
    %7149 = vmatpush.bf16.msra.mxu0 %v4504
    %7150 = vmatpush.bf16.msra.mxu0 %v4488
    %7151 = vmatpush.bf16.msra.mxu0 %v4472
    %7152 = vmatpush.bf16.msra.mxu0 %v4456
    %7153 = vmatpush.bf16.msra.mxu0 %v4440
    %7154 = vmatpush.bf16.msra.mxu0 %v4424
    %7155 = vmatpush.bf16.msra.mxu0 %v4408
    %7156 = vmatpush.bf16.msra.mxu0 %v4392
    %7157 = vmatmul.bf16.gmra.mxu0 %v117
    %v7158 = vpop.f32.mrf.mxu0
    %v7159 = vadd.f32 %v7146, %v7158
    %v7160 = vpop.f32.mrf.mxu0
    %7161 = vdwg.mxu0
    %7162 = vmatpush.bf16.msra.mxu0 %v4632
    %7163 = vmatpush.bf16.msra.mxu0 %v4616
    %7164 = vmatpush.bf16.msra.mxu0 %v4600
    %7165 = vmatpush.bf16.msra.mxu0 %v4584
    %7166 = vmatpush.bf16.msra.mxu0 %v4568
    %7167 = vmatpush.bf16.msra.mxu0 %v4552
    %7168 = vmatpush.bf16.msra.mxu0 %v4536
    %7169 = vmatpush.bf16.msra.mxu0 %v4520
    %7170 = vmatmul.bf16.gmra.mxu0 %v118
    %v7171 = vpop.f32.mrf.mxu0
    %v7172 = vadd.f32 %v7159, %v7171
    %v7173 = vpop.f32.mrf.mxu0
    %7174 = vdwg.mxu0
    %7175 = vmatpush.bf16.msra.mxu0 %v4760
    %7176 = vmatpush.bf16.msra.mxu0 %v4744
    %7177 = vmatpush.bf16.msra.mxu0 %v4728
    %7178 = vmatpush.bf16.msra.mxu0 %v4712
    %7179 = vmatpush.bf16.msra.mxu0 %v4696
    %7180 = vmatpush.bf16.msra.mxu0 %v4680
    %7181 = vmatpush.bf16.msra.mxu0 %v4664
    %7182 = vmatpush.bf16.msra.mxu0 %v4648
    %7183 = vmatmul.bf16.gmra.mxu0 %v119
    %v7184 = vpop.f32.mrf.mxu0
    %v7185 = vadd.f32 %v7172, %v7184
    %v7186 = vpop.f32.mrf.mxu0
    %7187 = vdwg.mxu0
    %7188 = vmatpush.bf16.msra.mxu0 %v4888
    %7189 = vmatpush.bf16.msra.mxu0 %v4872
    %7190 = vmatpush.bf16.msra.mxu0 %v4856
    %7191 = vmatpush.bf16.msra.mxu0 %v4840
    %7192 = vmatpush.bf16.msra.mxu0 %v4824
    %7193 = vmatpush.bf16.msra.mxu0 %v4808
    %7194 = vmatpush.bf16.msra.mxu0 %v4792
    %7195 = vmatpush.bf16.msra.mxu0 %v4776
    %7196 = vmatmul.bf16.gmra.mxu0 %v120
    %v7197 = vpop.f32.mrf.mxu0
    %v7198 = vadd.f32 %v7185, %v7197
    %v7199 = vpop.f32.mrf.mxu0
    %7200 = vdwg.mxu0
    %7201 = vmatpush.bf16.msra.mxu0 %v5016
    %7202 = vmatpush.bf16.msra.mxu0 %v5000
    %7203 = vmatpush.bf16.msra.mxu0 %v4984
    %7204 = vmatpush.bf16.msra.mxu0 %v4968
    %7205 = vmatpush.bf16.msra.mxu0 %v4952
    %7206 = vmatpush.bf16.msra.mxu0 %v4936
    %7207 = vmatpush.bf16.msra.mxu0 %v4920
    %7208 = vmatpush.bf16.msra.mxu0 %v4904
    %7209 = vmatmul.bf16.gmra.mxu0 %v121
    %v7210 = vpop.f32.mrf.mxu0
    %v7211 = vadd.f32 %v7198, %v7210
    %v7212 = vpop.f32.mrf.mxu0
    %7213 = vdwg.mxu0
    %7214 = vmatpush.bf16.msra.mxu0 %v5144
    %7215 = vmatpush.bf16.msra.mxu0 %v5128
    %7216 = vmatpush.bf16.msra.mxu0 %v5112
    %7217 = vmatpush.bf16.msra.mxu0 %v5096
    %7218 = vmatpush.bf16.msra.mxu0 %v5080
    %7219 = vmatpush.bf16.msra.mxu0 %v5064
    %7220 = vmatpush.bf16.msra.mxu0 %v5048
    %7221 = vmatpush.bf16.msra.mxu0 %v5032
    %7222 = vmatmul.bf16.gmra.mxu0 %v122
    %v7223 = vpop.f32.mrf.mxu0
    %v7224 = vadd.f32 %v7211, %v7223
    %v7225 = vpop.f32.mrf.mxu0
    %7226 = vdwg.mxu0
    %7227 = vmatpush.bf16.msra.mxu0 %v5272
    %7228 = vmatpush.bf16.msra.mxu0 %v5256
    %7229 = vmatpush.bf16.msra.mxu0 %v5240
    %7230 = vmatpush.bf16.msra.mxu0 %v5224
    %7231 = vmatpush.bf16.msra.mxu0 %v5208
    %7232 = vmatpush.bf16.msra.mxu0 %v5192
    %7233 = vmatpush.bf16.msra.mxu0 %v5176
    %7234 = vmatpush.bf16.msra.mxu0 %v5160
    %7235 = vmatmul.bf16.gmra.mxu0 %v123
    %v7236 = vpop.f32.mrf.mxu0
    %v7237 = vadd.f32 %v7224, %v7236
    %v7238 = vpop.f32.mrf.mxu0
    %7239 = vdwg.mxu0
    %7240 = vmatpush.bf16.msra.mxu0 %v4377
    %7241 = vmatpush.bf16.msra.mxu0 %v4361
    %7242 = vmatpush.bf16.msra.mxu0 %v4345
    %7243 = vmatpush.bf16.msra.mxu0 %v4329
    %7244 = vmatpush.bf16.msra.mxu0 %v4313
    %7245 = vmatpush.bf16.msra.mxu0 %v4297
    %7246 = vmatpush.bf16.msra.mxu0 %v4281
    %7247 = vmatpush.bf16.msra.mxu0 %v4265
    %7248 = vmatmul.bf16.gmra.mxu0 %v116
    %v7249 = vpop.f32.mrf.mxu0
    %v7250 = vadd.f32 %v1161, %v7249
    %v7251 = vpop.f32.mrf.mxu0
    %7252 = vdwg.mxu0
    %7253 = vmatpush.bf16.msra.mxu0 %v4505
    %7254 = vmatpush.bf16.msra.mxu0 %v4489
    %7255 = vmatpush.bf16.msra.mxu0 %v4473
    %7256 = vmatpush.bf16.msra.mxu0 %v4457
    %7257 = vmatpush.bf16.msra.mxu0 %v4441
    %7258 = vmatpush.bf16.msra.mxu0 %v4425
    %7259 = vmatpush.bf16.msra.mxu0 %v4409
    %7260 = vmatpush.bf16.msra.mxu0 %v4393
    %7261 = vmatmul.bf16.gmra.mxu0 %v117
    %v7262 = vpop.f32.mrf.mxu0
    %v7263 = vadd.f32 %v7250, %v7262
    %v7264 = vpop.f32.mrf.mxu0
    %7265 = vdwg.mxu0
    %7266 = vmatpush.bf16.msra.mxu0 %v4633
    %7267 = vmatpush.bf16.msra.mxu0 %v4617
    %7268 = vmatpush.bf16.msra.mxu0 %v4601
    %7269 = vmatpush.bf16.msra.mxu0 %v4585
    %7270 = vmatpush.bf16.msra.mxu0 %v4569
    %7271 = vmatpush.bf16.msra.mxu0 %v4553
    %7272 = vmatpush.bf16.msra.mxu0 %v4537
    %7273 = vmatpush.bf16.msra.mxu0 %v4521
    %7274 = vmatmul.bf16.gmra.mxu0 %v118
    %v7275 = vpop.f32.mrf.mxu0
    %v7276 = vadd.f32 %v7263, %v7275
    %v7277 = vpop.f32.mrf.mxu0
    %7278 = vdwg.mxu0
    %7279 = vmatpush.bf16.msra.mxu0 %v4761
    %7280 = vmatpush.bf16.msra.mxu0 %v4745
    %7281 = vmatpush.bf16.msra.mxu0 %v4729
    %7282 = vmatpush.bf16.msra.mxu0 %v4713
    %7283 = vmatpush.bf16.msra.mxu0 %v4697
    %7284 = vmatpush.bf16.msra.mxu0 %v4681
    %7285 = vmatpush.bf16.msra.mxu0 %v4665
    %7286 = vmatpush.bf16.msra.mxu0 %v4649
    %7287 = vmatmul.bf16.gmra.mxu0 %v119
    %v7288 = vpop.f32.mrf.mxu0
    %v7289 = vadd.f32 %v7276, %v7288
    %v7290 = vpop.f32.mrf.mxu0
    %7291 = vdwg.mxu0
    %7292 = vmatpush.bf16.msra.mxu0 %v4889
    %7293 = vmatpush.bf16.msra.mxu0 %v4873
    %7294 = vmatpush.bf16.msra.mxu0 %v4857
    %7295 = vmatpush.bf16.msra.mxu0 %v4841
    %7296 = vmatpush.bf16.msra.mxu0 %v4825
    %7297 = vmatpush.bf16.msra.mxu0 %v4809
    %7298 = vmatpush.bf16.msra.mxu0 %v4793
    %7299 = vmatpush.bf16.msra.mxu0 %v4777
    %7300 = vmatmul.bf16.gmra.mxu0 %v120
    %v7301 = vpop.f32.mrf.mxu0
    %v7302 = vadd.f32 %v7289, %v7301
    %v7303 = vpop.f32.mrf.mxu0
    %7304 = vdwg.mxu0
    %7305 = vmatpush.bf16.msra.mxu0 %v5017
    %7306 = vmatpush.bf16.msra.mxu0 %v5001
    %7307 = vmatpush.bf16.msra.mxu0 %v4985
    %7308 = vmatpush.bf16.msra.mxu0 %v4969
    %7309 = vmatpush.bf16.msra.mxu0 %v4953
    %7310 = vmatpush.bf16.msra.mxu0 %v4937
    %7311 = vmatpush.bf16.msra.mxu0 %v4921
    %7312 = vmatpush.bf16.msra.mxu0 %v4905
    %7313 = vmatmul.bf16.gmra.mxu0 %v121
    %v7314 = vpop.f32.mrf.mxu0
    %v7315 = vadd.f32 %v7302, %v7314
    %v7316 = vpop.f32.mrf.mxu0
    %7317 = vdwg.mxu0
    %7318 = vmatpush.bf16.msra.mxu0 %v5145
    %7319 = vmatpush.bf16.msra.mxu0 %v5129
    %7320 = vmatpush.bf16.msra.mxu0 %v5113
    %7321 = vmatpush.bf16.msra.mxu0 %v5097
    %7322 = vmatpush.bf16.msra.mxu0 %v5081
    %7323 = vmatpush.bf16.msra.mxu0 %v5065
    %7324 = vmatpush.bf16.msra.mxu0 %v5049
    %7325 = vmatpush.bf16.msra.mxu0 %v5033
    %7326 = vmatmul.bf16.gmra.mxu0 %v122
    %v7327 = vpop.f32.mrf.mxu0
    %v7328 = vadd.f32 %v7315, %v7327
    %v7329 = vpop.f32.mrf.mxu0
    %7330 = vdwg.mxu0
    %7331 = vmatpush.bf16.msra.mxu0 %v5273
    %7332 = vmatpush.bf16.msra.mxu0 %v5257
    %7333 = vmatpush.bf16.msra.mxu0 %v5241
    %7334 = vmatpush.bf16.msra.mxu0 %v5225
    %7335 = vmatpush.bf16.msra.mxu0 %v5209
    %7336 = vmatpush.bf16.msra.mxu0 %v5193
    %7337 = vmatpush.bf16.msra.mxu0 %v5177
    %7338 = vmatpush.bf16.msra.mxu0 %v5161
    %7339 = vmatmul.bf16.gmra.mxu0 %v123
    %v7340 = vpop.f32.mrf.mxu0
    %v7341 = vadd.f32 %v7328, %v7340
    %v7342 = vpop.f32.mrf.mxu0
    %7343 = vdwg.mxu0
    %7344 = vmatpush.bf16.msra.mxu0 %v4378
    %7345 = vmatpush.bf16.msra.mxu0 %v4362
    %7346 = vmatpush.bf16.msra.mxu0 %v4346
    %7347 = vmatpush.bf16.msra.mxu0 %v4330
    %7348 = vmatpush.bf16.msra.mxu0 %v4314
    %7349 = vmatpush.bf16.msra.mxu0 %v4298
    %7350 = vmatpush.bf16.msra.mxu0 %v4282
    %7351 = vmatpush.bf16.msra.mxu0 %v4266
    %7352 = vmatmul.bf16.gmra.mxu0 %v116
    %v7353 = vpop.f32.mrf.mxu0
    %v7354 = vadd.f32 %v1162, %v7353
    %v7355 = vpop.f32.mrf.mxu0
    %7356 = vdwg.mxu0
    %7357 = vmatpush.bf16.msra.mxu0 %v4506
    %7358 = vmatpush.bf16.msra.mxu0 %v4490
    %7359 = vmatpush.bf16.msra.mxu0 %v4474
    %7360 = vmatpush.bf16.msra.mxu0 %v4458
    %7361 = vmatpush.bf16.msra.mxu0 %v4442
    %7362 = vmatpush.bf16.msra.mxu0 %v4426
    %7363 = vmatpush.bf16.msra.mxu0 %v4410
    %7364 = vmatpush.bf16.msra.mxu0 %v4394
    %7365 = vmatmul.bf16.gmra.mxu0 %v117
    %v7366 = vpop.f32.mrf.mxu0
    %v7367 = vadd.f32 %v7354, %v7366
    %v7368 = vpop.f32.mrf.mxu0
    %7369 = vdwg.mxu0
    %7370 = vmatpush.bf16.msra.mxu0 %v4634
    %7371 = vmatpush.bf16.msra.mxu0 %v4618
    %7372 = vmatpush.bf16.msra.mxu0 %v4602
    %7373 = vmatpush.bf16.msra.mxu0 %v4586
    %7374 = vmatpush.bf16.msra.mxu0 %v4570
    %7375 = vmatpush.bf16.msra.mxu0 %v4554
    %7376 = vmatpush.bf16.msra.mxu0 %v4538
    %7377 = vmatpush.bf16.msra.mxu0 %v4522
    %7378 = vmatmul.bf16.gmra.mxu0 %v118
    %v7379 = vpop.f32.mrf.mxu0
    %v7380 = vadd.f32 %v7367, %v7379
    %v7381 = vpop.f32.mrf.mxu0
    %7382 = vdwg.mxu0
    %7383 = vmatpush.bf16.msra.mxu0 %v4762
    %7384 = vmatpush.bf16.msra.mxu0 %v4746
    %7385 = vmatpush.bf16.msra.mxu0 %v4730
    %7386 = vmatpush.bf16.msra.mxu0 %v4714
    %7387 = vmatpush.bf16.msra.mxu0 %v4698
    %7388 = vmatpush.bf16.msra.mxu0 %v4682
    %7389 = vmatpush.bf16.msra.mxu0 %v4666
    %7390 = vmatpush.bf16.msra.mxu0 %v4650
    %7391 = vmatmul.bf16.gmra.mxu0 %v119
    %v7392 = vpop.f32.mrf.mxu0
    %v7393 = vadd.f32 %v7380, %v7392
    %v7394 = vpop.f32.mrf.mxu0
    %7395 = vdwg.mxu0
    %7396 = vmatpush.bf16.msra.mxu0 %v4890
    %7397 = vmatpush.bf16.msra.mxu0 %v4874
    %7398 = vmatpush.bf16.msra.mxu0 %v4858
    %7399 = vmatpush.bf16.msra.mxu0 %v4842
    %7400 = vmatpush.bf16.msra.mxu0 %v4826
    %7401 = vmatpush.bf16.msra.mxu0 %v4810
    %7402 = vmatpush.bf16.msra.mxu0 %v4794
    %7403 = vmatpush.bf16.msra.mxu0 %v4778
    %7404 = vmatmul.bf16.gmra.mxu0 %v120
    %v7405 = vpop.f32.mrf.mxu0
    %v7406 = vadd.f32 %v7393, %v7405
    %v7407 = vpop.f32.mrf.mxu0
    %7408 = vdwg.mxu0
    %7409 = vmatpush.bf16.msra.mxu0 %v5018
    %7410 = vmatpush.bf16.msra.mxu0 %v5002
    %7411 = vmatpush.bf16.msra.mxu0 %v4986
    %7412 = vmatpush.bf16.msra.mxu0 %v4970
    %7413 = vmatpush.bf16.msra.mxu0 %v4954
    %7414 = vmatpush.bf16.msra.mxu0 %v4938
    %7415 = vmatpush.bf16.msra.mxu0 %v4922
    %7416 = vmatpush.bf16.msra.mxu0 %v4906
    %7417 = vmatmul.bf16.gmra.mxu0 %v121
    %v7418 = vpop.f32.mrf.mxu0
    %v7419 = vadd.f32 %v7406, %v7418
    %v7420 = vpop.f32.mrf.mxu0
    %7421 = vdwg.mxu0
    %7422 = vmatpush.bf16.msra.mxu0 %v5146
    %7423 = vmatpush.bf16.msra.mxu0 %v5130
    %7424 = vmatpush.bf16.msra.mxu0 %v5114
    %7425 = vmatpush.bf16.msra.mxu0 %v5098
    %7426 = vmatpush.bf16.msra.mxu0 %v5082
    %7427 = vmatpush.bf16.msra.mxu0 %v5066
    %7428 = vmatpush.bf16.msra.mxu0 %v5050
    %7429 = vmatpush.bf16.msra.mxu0 %v5034
    %7430 = vmatmul.bf16.gmra.mxu0 %v122
    %v7431 = vpop.f32.mrf.mxu0
    %v7432 = vadd.f32 %v7419, %v7431
    %v7433 = vpop.f32.mrf.mxu0
    %7434 = vdwg.mxu0
    %7435 = vmatpush.bf16.msra.mxu0 %v5274
    %7436 = vmatpush.bf16.msra.mxu0 %v5258
    %7437 = vmatpush.bf16.msra.mxu0 %v5242
    %7438 = vmatpush.bf16.msra.mxu0 %v5226
    %7439 = vmatpush.bf16.msra.mxu0 %v5210
    %7440 = vmatpush.bf16.msra.mxu0 %v5194
    %7441 = vmatpush.bf16.msra.mxu0 %v5178
    %7442 = vmatpush.bf16.msra.mxu0 %v5162
    %7443 = vmatmul.bf16.gmra.mxu0 %v123
    %v7444 = vpop.f32.mrf.mxu0
    %v7445 = vadd.f32 %v7432, %v7444
    %v7446 = vpop.f32.mrf.mxu0
    %7447 = vdwg.mxu0
    %7448 = vmatpush.bf16.msra.mxu0 %v4379
    %7449 = vmatpush.bf16.msra.mxu0 %v4363
    %7450 = vmatpush.bf16.msra.mxu0 %v4347
    %7451 = vmatpush.bf16.msra.mxu0 %v4331
    %7452 = vmatpush.bf16.msra.mxu0 %v4315
    %7453 = vmatpush.bf16.msra.mxu0 %v4299
    %7454 = vmatpush.bf16.msra.mxu0 %v4283
    %7455 = vmatpush.bf16.msra.mxu0 %v4267
    %7456 = vmatmul.bf16.gmra.mxu0 %v116
    %v7457 = vpop.f32.mrf.mxu0
    %v7458 = vadd.f32 %v1163, %v7457
    %v7459 = vpop.f32.mrf.mxu0
    %7460 = vdwg.mxu0
    %7461 = vmatpush.bf16.msra.mxu0 %v4507
    %7462 = vmatpush.bf16.msra.mxu0 %v4491
    %7463 = vmatpush.bf16.msra.mxu0 %v4475
    %7464 = vmatpush.bf16.msra.mxu0 %v4459
    %7465 = vmatpush.bf16.msra.mxu0 %v4443
    %7466 = vmatpush.bf16.msra.mxu0 %v4427
    %7467 = vmatpush.bf16.msra.mxu0 %v4411
    %7468 = vmatpush.bf16.msra.mxu0 %v4395
    %7469 = vmatmul.bf16.gmra.mxu0 %v117
    %v7470 = vpop.f32.mrf.mxu0
    %v7471 = vadd.f32 %v7458, %v7470
    %v7472 = vpop.f32.mrf.mxu0
    %7473 = vdwg.mxu0
    %7474 = vmatpush.bf16.msra.mxu0 %v4635
    %7475 = vmatpush.bf16.msra.mxu0 %v4619
    %7476 = vmatpush.bf16.msra.mxu0 %v4603
    %7477 = vmatpush.bf16.msra.mxu0 %v4587
    %7478 = vmatpush.bf16.msra.mxu0 %v4571
    %7479 = vmatpush.bf16.msra.mxu0 %v4555
    %7480 = vmatpush.bf16.msra.mxu0 %v4539
    %7481 = vmatpush.bf16.msra.mxu0 %v4523
    %7482 = vmatmul.bf16.gmra.mxu0 %v118
    %v7483 = vpop.f32.mrf.mxu0
    %v7484 = vadd.f32 %v7471, %v7483
    %v7485 = vpop.f32.mrf.mxu0
    %7486 = vdwg.mxu0
    %7487 = vmatpush.bf16.msra.mxu0 %v4763
    %7488 = vmatpush.bf16.msra.mxu0 %v4747
    %7489 = vmatpush.bf16.msra.mxu0 %v4731
    %7490 = vmatpush.bf16.msra.mxu0 %v4715
    %7491 = vmatpush.bf16.msra.mxu0 %v4699
    %7492 = vmatpush.bf16.msra.mxu0 %v4683
    %7493 = vmatpush.bf16.msra.mxu0 %v4667
    %7494 = vmatpush.bf16.msra.mxu0 %v4651
    %7495 = vmatmul.bf16.gmra.mxu0 %v119
    %v7496 = vpop.f32.mrf.mxu0
    %v7497 = vadd.f32 %v7484, %v7496
    %v7498 = vpop.f32.mrf.mxu0
    %7499 = vdwg.mxu0
    %7500 = vmatpush.bf16.msra.mxu0 %v4891
    %7501 = vmatpush.bf16.msra.mxu0 %v4875
    %7502 = vmatpush.bf16.msra.mxu0 %v4859
    %7503 = vmatpush.bf16.msra.mxu0 %v4843
    %7504 = vmatpush.bf16.msra.mxu0 %v4827
    %7505 = vmatpush.bf16.msra.mxu0 %v4811
    %7506 = vmatpush.bf16.msra.mxu0 %v4795
    %7507 = vmatpush.bf16.msra.mxu0 %v4779
    %7508 = vmatmul.bf16.gmra.mxu0 %v120
    %v7509 = vpop.f32.mrf.mxu0
    %v7510 = vadd.f32 %v7497, %v7509
    %v7511 = vpop.f32.mrf.mxu0
    %7512 = vdwg.mxu0
    %7513 = vmatpush.bf16.msra.mxu0 %v5019
    %7514 = vmatpush.bf16.msra.mxu0 %v5003
    %7515 = vmatpush.bf16.msra.mxu0 %v4987
    %7516 = vmatpush.bf16.msra.mxu0 %v4971
    %7517 = vmatpush.bf16.msra.mxu0 %v4955
    %7518 = vmatpush.bf16.msra.mxu0 %v4939
    %7519 = vmatpush.bf16.msra.mxu0 %v4923
    %7520 = vmatpush.bf16.msra.mxu0 %v4907
    %7521 = vmatmul.bf16.gmra.mxu0 %v121
    %v7522 = vpop.f32.mrf.mxu0
    %v7523 = vadd.f32 %v7510, %v7522
    %v7524 = vpop.f32.mrf.mxu0
    %7525 = vdwg.mxu0
    %7526 = vmatpush.bf16.msra.mxu0 %v5147
    %7527 = vmatpush.bf16.msra.mxu0 %v5131
    %7528 = vmatpush.bf16.msra.mxu0 %v5115
    %7529 = vmatpush.bf16.msra.mxu0 %v5099
    %7530 = vmatpush.bf16.msra.mxu0 %v5083
    %7531 = vmatpush.bf16.msra.mxu0 %v5067
    %7532 = vmatpush.bf16.msra.mxu0 %v5051
    %7533 = vmatpush.bf16.msra.mxu0 %v5035
    %7534 = vmatmul.bf16.gmra.mxu0 %v122
    %v7535 = vpop.f32.mrf.mxu0
    %v7536 = vadd.f32 %v7523, %v7535
    %v7537 = vpop.f32.mrf.mxu0
    %7538 = vdwg.mxu0
    %7539 = vmatpush.bf16.msra.mxu0 %v5275
    %7540 = vmatpush.bf16.msra.mxu0 %v5259
    %7541 = vmatpush.bf16.msra.mxu0 %v5243
    %7542 = vmatpush.bf16.msra.mxu0 %v5227
    %7543 = vmatpush.bf16.msra.mxu0 %v5211
    %7544 = vmatpush.bf16.msra.mxu0 %v5195
    %7545 = vmatpush.bf16.msra.mxu0 %v5179
    %7546 = vmatpush.bf16.msra.mxu0 %v5163
    %7547 = vmatmul.bf16.gmra.mxu0 %v123
    %v7548 = vpop.f32.mrf.mxu0
    %v7549 = vadd.f32 %v7536, %v7548
    %v7550 = vpop.f32.mrf.mxu0
    %7551 = vdwg.mxu0
    %7552 = vmatpush.bf16.msra.mxu0 %v4380
    %7553 = vmatpush.bf16.msra.mxu0 %v4364
    %7554 = vmatpush.bf16.msra.mxu0 %v4348
    %7555 = vmatpush.bf16.msra.mxu0 %v4332
    %7556 = vmatpush.bf16.msra.mxu0 %v4316
    %7557 = vmatpush.bf16.msra.mxu0 %v4300
    %7558 = vmatpush.bf16.msra.mxu0 %v4284
    %7559 = vmatpush.bf16.msra.mxu0 %v4268
    %7560 = vmatmul.bf16.gmra.mxu0 %v116
    %v7561 = vpop.f32.mrf.mxu0
    %v7562 = vadd.f32 %v1164, %v7561
    %v7563 = vpop.f32.mrf.mxu0
    %7564 = vdwg.mxu0
    %7565 = vmatpush.bf16.msra.mxu0 %v4508
    %7566 = vmatpush.bf16.msra.mxu0 %v4492
    %7567 = vmatpush.bf16.msra.mxu0 %v4476
    %7568 = vmatpush.bf16.msra.mxu0 %v4460
    %7569 = vmatpush.bf16.msra.mxu0 %v4444
    %7570 = vmatpush.bf16.msra.mxu0 %v4428
    %7571 = vmatpush.bf16.msra.mxu0 %v4412
    %7572 = vmatpush.bf16.msra.mxu0 %v4396
    %7573 = vmatmul.bf16.gmra.mxu0 %v117
    %v7574 = vpop.f32.mrf.mxu0
    %v7575 = vadd.f32 %v7562, %v7574
    %v7576 = vpop.f32.mrf.mxu0
    %7577 = vdwg.mxu0
    %7578 = vmatpush.bf16.msra.mxu0 %v4636
    %7579 = vmatpush.bf16.msra.mxu0 %v4620
    %7580 = vmatpush.bf16.msra.mxu0 %v4604
    %7581 = vmatpush.bf16.msra.mxu0 %v4588
    %7582 = vmatpush.bf16.msra.mxu0 %v4572
    %7583 = vmatpush.bf16.msra.mxu0 %v4556
    %7584 = vmatpush.bf16.msra.mxu0 %v4540
    %7585 = vmatpush.bf16.msra.mxu0 %v4524
    %7586 = vmatmul.bf16.gmra.mxu0 %v118
    %v7587 = vpop.f32.mrf.mxu0
    %v7588 = vadd.f32 %v7575, %v7587
    %v7589 = vpop.f32.mrf.mxu0
    %7590 = vdwg.mxu0
    %7591 = vmatpush.bf16.msra.mxu0 %v4764
    %7592 = vmatpush.bf16.msra.mxu0 %v4748
    %7593 = vmatpush.bf16.msra.mxu0 %v4732
    %7594 = vmatpush.bf16.msra.mxu0 %v4716
    %7595 = vmatpush.bf16.msra.mxu0 %v4700
    %7596 = vmatpush.bf16.msra.mxu0 %v4684
    %7597 = vmatpush.bf16.msra.mxu0 %v4668
    %7598 = vmatpush.bf16.msra.mxu0 %v4652
    %7599 = vmatmul.bf16.gmra.mxu0 %v119
    %v7600 = vpop.f32.mrf.mxu0
    %v7601 = vadd.f32 %v7588, %v7600
    %v7602 = vpop.f32.mrf.mxu0
    %7603 = vdwg.mxu0
    %7604 = vmatpush.bf16.msra.mxu0 %v4892
    %7605 = vmatpush.bf16.msra.mxu0 %v4876
    %7606 = vmatpush.bf16.msra.mxu0 %v4860
    %7607 = vmatpush.bf16.msra.mxu0 %v4844
    %7608 = vmatpush.bf16.msra.mxu0 %v4828
    %7609 = vmatpush.bf16.msra.mxu0 %v4812
    %7610 = vmatpush.bf16.msra.mxu0 %v4796
    %7611 = vmatpush.bf16.msra.mxu0 %v4780
    %7612 = vmatmul.bf16.gmra.mxu0 %v120
    %v7613 = vpop.f32.mrf.mxu0
    %v7614 = vadd.f32 %v7601, %v7613
    %v7615 = vpop.f32.mrf.mxu0
    %7616 = vdwg.mxu0
    %7617 = vmatpush.bf16.msra.mxu0 %v5020
    %7618 = vmatpush.bf16.msra.mxu0 %v5004
    %7619 = vmatpush.bf16.msra.mxu0 %v4988
    %7620 = vmatpush.bf16.msra.mxu0 %v4972
    %7621 = vmatpush.bf16.msra.mxu0 %v4956
    %7622 = vmatpush.bf16.msra.mxu0 %v4940
    %7623 = vmatpush.bf16.msra.mxu0 %v4924
    %7624 = vmatpush.bf16.msra.mxu0 %v4908
    %7625 = vmatmul.bf16.gmra.mxu0 %v121
    %v7626 = vpop.f32.mrf.mxu0
    %v7627 = vadd.f32 %v7614, %v7626
    %v7628 = vpop.f32.mrf.mxu0
    %7629 = vdwg.mxu0
    %7630 = vmatpush.bf16.msra.mxu0 %v5148
    %7631 = vmatpush.bf16.msra.mxu0 %v5132
    %7632 = vmatpush.bf16.msra.mxu0 %v5116
    %7633 = vmatpush.bf16.msra.mxu0 %v5100
    %7634 = vmatpush.bf16.msra.mxu0 %v5084
    %7635 = vmatpush.bf16.msra.mxu0 %v5068
    %7636 = vmatpush.bf16.msra.mxu0 %v5052
    %7637 = vmatpush.bf16.msra.mxu0 %v5036
    %7638 = vmatmul.bf16.gmra.mxu0 %v122
    %v7639 = vpop.f32.mrf.mxu0
    %v7640 = vadd.f32 %v7627, %v7639
    %v7641 = vpop.f32.mrf.mxu0
    %7642 = vdwg.mxu0
    %7643 = vmatpush.bf16.msra.mxu0 %v5276
    %7644 = vmatpush.bf16.msra.mxu0 %v5260
    %7645 = vmatpush.bf16.msra.mxu0 %v5244
    %7646 = vmatpush.bf16.msra.mxu0 %v5228
    %7647 = vmatpush.bf16.msra.mxu0 %v5212
    %7648 = vmatpush.bf16.msra.mxu0 %v5196
    %7649 = vmatpush.bf16.msra.mxu0 %v5180
    %7650 = vmatpush.bf16.msra.mxu0 %v5164
    %7651 = vmatmul.bf16.gmra.mxu0 %v123
    %v7652 = vpop.f32.mrf.mxu0
    %v7653 = vadd.f32 %v7640, %v7652
    %v7654 = vpop.f32.mrf.mxu0
    %7655 = vdwg.mxu0
    %7656 = vmatpush.bf16.msra.mxu0 %v4381
    %7657 = vmatpush.bf16.msra.mxu0 %v4365
    %7658 = vmatpush.bf16.msra.mxu0 %v4349
    %7659 = vmatpush.bf16.msra.mxu0 %v4333
    %7660 = vmatpush.bf16.msra.mxu0 %v4317
    %7661 = vmatpush.bf16.msra.mxu0 %v4301
    %7662 = vmatpush.bf16.msra.mxu0 %v4285
    %7663 = vmatpush.bf16.msra.mxu0 %v4269
    %7664 = vmatmul.bf16.gmra.mxu0 %v116
    %v7665 = vpop.f32.mrf.mxu0
    %v7666 = vadd.f32 %v1165, %v7665
    %v7667 = vpop.f32.mrf.mxu0
    %7668 = vdwg.mxu0
    %7669 = vmatpush.bf16.msra.mxu0 %v4509
    %7670 = vmatpush.bf16.msra.mxu0 %v4493
    %7671 = vmatpush.bf16.msra.mxu0 %v4477
    %7672 = vmatpush.bf16.msra.mxu0 %v4461
    %7673 = vmatpush.bf16.msra.mxu0 %v4445
    %7674 = vmatpush.bf16.msra.mxu0 %v4429
    %7675 = vmatpush.bf16.msra.mxu0 %v4413
    %7676 = vmatpush.bf16.msra.mxu0 %v4397
    %7677 = vmatmul.bf16.gmra.mxu0 %v117
    %v7678 = vpop.f32.mrf.mxu0
    %v7679 = vadd.f32 %v7666, %v7678
    %v7680 = vpop.f32.mrf.mxu0
    %7681 = vdwg.mxu0
    %7682 = vmatpush.bf16.msra.mxu0 %v4637
    %7683 = vmatpush.bf16.msra.mxu0 %v4621
    %7684 = vmatpush.bf16.msra.mxu0 %v4605
    %7685 = vmatpush.bf16.msra.mxu0 %v4589
    %7686 = vmatpush.bf16.msra.mxu0 %v4573
    %7687 = vmatpush.bf16.msra.mxu0 %v4557
    %7688 = vmatpush.bf16.msra.mxu0 %v4541
    %7689 = vmatpush.bf16.msra.mxu0 %v4525
    %7690 = vmatmul.bf16.gmra.mxu0 %v118
    %v7691 = vpop.f32.mrf.mxu0
    %v7692 = vadd.f32 %v7679, %v7691
    %v7693 = vpop.f32.mrf.mxu0
    %7694 = vdwg.mxu0
    %7695 = vmatpush.bf16.msra.mxu0 %v4765
    %7696 = vmatpush.bf16.msra.mxu0 %v4749
    %7697 = vmatpush.bf16.msra.mxu0 %v4733
    %7698 = vmatpush.bf16.msra.mxu0 %v4717
    %7699 = vmatpush.bf16.msra.mxu0 %v4701
    %7700 = vmatpush.bf16.msra.mxu0 %v4685
    %7701 = vmatpush.bf16.msra.mxu0 %v4669
    %7702 = vmatpush.bf16.msra.mxu0 %v4653
    %7703 = vmatmul.bf16.gmra.mxu0 %v119
    %v7704 = vpop.f32.mrf.mxu0
    %v7705 = vadd.f32 %v7692, %v7704
    %v7706 = vpop.f32.mrf.mxu0
    %7707 = vdwg.mxu0
    %7708 = vmatpush.bf16.msra.mxu0 %v4893
    %7709 = vmatpush.bf16.msra.mxu0 %v4877
    %7710 = vmatpush.bf16.msra.mxu0 %v4861
    %7711 = vmatpush.bf16.msra.mxu0 %v4845
    %7712 = vmatpush.bf16.msra.mxu0 %v4829
    %7713 = vmatpush.bf16.msra.mxu0 %v4813
    %7714 = vmatpush.bf16.msra.mxu0 %v4797
    %7715 = vmatpush.bf16.msra.mxu0 %v4781
    %7716 = vmatmul.bf16.gmra.mxu0 %v120
    %v7717 = vpop.f32.mrf.mxu0
    %v7718 = vadd.f32 %v7705, %v7717
    %v7719 = vpop.f32.mrf.mxu0
    %7720 = vdwg.mxu0
    %7721 = vmatpush.bf16.msra.mxu0 %v5021
    %7722 = vmatpush.bf16.msra.mxu0 %v5005
    %7723 = vmatpush.bf16.msra.mxu0 %v4989
    %7724 = vmatpush.bf16.msra.mxu0 %v4973
    %7725 = vmatpush.bf16.msra.mxu0 %v4957
    %7726 = vmatpush.bf16.msra.mxu0 %v4941
    %7727 = vmatpush.bf16.msra.mxu0 %v4925
    %7728 = vmatpush.bf16.msra.mxu0 %v4909
    %7729 = vmatmul.bf16.gmra.mxu0 %v121
    %v7730 = vpop.f32.mrf.mxu0
    %v7731 = vadd.f32 %v7718, %v7730
    %v7732 = vpop.f32.mrf.mxu0
    %7733 = vdwg.mxu0
    %7734 = vmatpush.bf16.msra.mxu0 %v5149
    %7735 = vmatpush.bf16.msra.mxu0 %v5133
    %7736 = vmatpush.bf16.msra.mxu0 %v5117
    %7737 = vmatpush.bf16.msra.mxu0 %v5101
    %7738 = vmatpush.bf16.msra.mxu0 %v5085
    %7739 = vmatpush.bf16.msra.mxu0 %v5069
    %7740 = vmatpush.bf16.msra.mxu0 %v5053
    %7741 = vmatpush.bf16.msra.mxu0 %v5037
    %7742 = vmatmul.bf16.gmra.mxu0 %v122
    %v7743 = vpop.f32.mrf.mxu0
    %v7744 = vadd.f32 %v7731, %v7743
    %v7745 = vpop.f32.mrf.mxu0
    %7746 = vdwg.mxu0
    %7747 = vmatpush.bf16.msra.mxu0 %v5277
    %7748 = vmatpush.bf16.msra.mxu0 %v5261
    %7749 = vmatpush.bf16.msra.mxu0 %v5245
    %7750 = vmatpush.bf16.msra.mxu0 %v5229
    %7751 = vmatpush.bf16.msra.mxu0 %v5213
    %7752 = vmatpush.bf16.msra.mxu0 %v5197
    %7753 = vmatpush.bf16.msra.mxu0 %v5181
    %7754 = vmatpush.bf16.msra.mxu0 %v5165
    %7755 = vmatmul.bf16.gmra.mxu0 %v123
    %v7756 = vpop.f32.mrf.mxu0
    %v7757 = vadd.f32 %v7744, %v7756
    %v7758 = vpop.f32.mrf.mxu0
    %7759 = vdwg.mxu0
    %7760 = vmatpush.bf16.msra.mxu0 %v4382
    %7761 = vmatpush.bf16.msra.mxu0 %v4366
    %7762 = vmatpush.bf16.msra.mxu0 %v4350
    %7763 = vmatpush.bf16.msra.mxu0 %v4334
    %7764 = vmatpush.bf16.msra.mxu0 %v4318
    %7765 = vmatpush.bf16.msra.mxu0 %v4302
    %7766 = vmatpush.bf16.msra.mxu0 %v4286
    %7767 = vmatpush.bf16.msra.mxu0 %v4270
    %7768 = vmatmul.bf16.gmra.mxu0 %v116
    %v7769 = vpop.f32.mrf.mxu0
    %v7770 = vadd.f32 %v1166, %v7769
    %v7771 = vpop.f32.mrf.mxu0
    %7772 = vdwg.mxu0
    %7773 = vmatpush.bf16.msra.mxu0 %v4510
    %7774 = vmatpush.bf16.msra.mxu0 %v4494
    %7775 = vmatpush.bf16.msra.mxu0 %v4478
    %7776 = vmatpush.bf16.msra.mxu0 %v4462
    %7777 = vmatpush.bf16.msra.mxu0 %v4446
    %7778 = vmatpush.bf16.msra.mxu0 %v4430
    %7779 = vmatpush.bf16.msra.mxu0 %v4414
    %7780 = vmatpush.bf16.msra.mxu0 %v4398
    %7781 = vmatmul.bf16.gmra.mxu0 %v117
    %v7782 = vpop.f32.mrf.mxu0
    %v7783 = vadd.f32 %v7770, %v7782
    %v7784 = vpop.f32.mrf.mxu0
    %7785 = vdwg.mxu0
    %7786 = vmatpush.bf16.msra.mxu0 %v4638
    %7787 = vmatpush.bf16.msra.mxu0 %v4622
    %7788 = vmatpush.bf16.msra.mxu0 %v4606
    %7789 = vmatpush.bf16.msra.mxu0 %v4590
    %7790 = vmatpush.bf16.msra.mxu0 %v4574
    %7791 = vmatpush.bf16.msra.mxu0 %v4558
    %7792 = vmatpush.bf16.msra.mxu0 %v4542
    %7793 = vmatpush.bf16.msra.mxu0 %v4526
    %7794 = vmatmul.bf16.gmra.mxu0 %v118
    %v7795 = vpop.f32.mrf.mxu0
    %v7796 = vadd.f32 %v7783, %v7795
    %v7797 = vpop.f32.mrf.mxu0
    %7798 = vdwg.mxu0
    %7799 = vmatpush.bf16.msra.mxu0 %v4766
    %7800 = vmatpush.bf16.msra.mxu0 %v4750
    %7801 = vmatpush.bf16.msra.mxu0 %v4734
    %7802 = vmatpush.bf16.msra.mxu0 %v4718
    %7803 = vmatpush.bf16.msra.mxu0 %v4702
    %7804 = vmatpush.bf16.msra.mxu0 %v4686
    %7805 = vmatpush.bf16.msra.mxu0 %v4670
    %7806 = vmatpush.bf16.msra.mxu0 %v4654
    %7807 = vmatmul.bf16.gmra.mxu0 %v119
    %v7808 = vpop.f32.mrf.mxu0
    %v7809 = vadd.f32 %v7796, %v7808
    %v7810 = vpop.f32.mrf.mxu0
    %7811 = vdwg.mxu0
    %7812 = vmatpush.bf16.msra.mxu0 %v4894
    %7813 = vmatpush.bf16.msra.mxu0 %v4878
    %7814 = vmatpush.bf16.msra.mxu0 %v4862
    %7815 = vmatpush.bf16.msra.mxu0 %v4846
    %7816 = vmatpush.bf16.msra.mxu0 %v4830
    %7817 = vmatpush.bf16.msra.mxu0 %v4814
    %7818 = vmatpush.bf16.msra.mxu0 %v4798
    %7819 = vmatpush.bf16.msra.mxu0 %v4782
    %7820 = vmatmul.bf16.gmra.mxu0 %v120
    %v7821 = vpop.f32.mrf.mxu0
    %v7822 = vadd.f32 %v7809, %v7821
    %v7823 = vpop.f32.mrf.mxu0
    %7824 = vdwg.mxu0
    %7825 = vmatpush.bf16.msra.mxu0 %v5022
    %7826 = vmatpush.bf16.msra.mxu0 %v5006
    %7827 = vmatpush.bf16.msra.mxu0 %v4990
    %7828 = vmatpush.bf16.msra.mxu0 %v4974
    %7829 = vmatpush.bf16.msra.mxu0 %v4958
    %7830 = vmatpush.bf16.msra.mxu0 %v4942
    %7831 = vmatpush.bf16.msra.mxu0 %v4926
    %7832 = vmatpush.bf16.msra.mxu0 %v4910
    %7833 = vmatmul.bf16.gmra.mxu0 %v121
    %v7834 = vpop.f32.mrf.mxu0
    %v7835 = vadd.f32 %v7822, %v7834
    %v7836 = vpop.f32.mrf.mxu0
    %7837 = vdwg.mxu0
    %7838 = vmatpush.bf16.msra.mxu0 %v5150
    %7839 = vmatpush.bf16.msra.mxu0 %v5134
    %7840 = vmatpush.bf16.msra.mxu0 %v5118
    %7841 = vmatpush.bf16.msra.mxu0 %v5102
    %7842 = vmatpush.bf16.msra.mxu0 %v5086
    %7843 = vmatpush.bf16.msra.mxu0 %v5070
    %7844 = vmatpush.bf16.msra.mxu0 %v5054
    %7845 = vmatpush.bf16.msra.mxu0 %v5038
    %7846 = vmatmul.bf16.gmra.mxu0 %v122
    %v7847 = vpop.f32.mrf.mxu0
    %v7848 = vadd.f32 %v7835, %v7847
    %v7849 = vpop.f32.mrf.mxu0
    %7850 = vdwg.mxu0
    %7851 = vmatpush.bf16.msra.mxu0 %v5278
    %7852 = vmatpush.bf16.msra.mxu0 %v5262
    %7853 = vmatpush.bf16.msra.mxu0 %v5246
    %7854 = vmatpush.bf16.msra.mxu0 %v5230
    %7855 = vmatpush.bf16.msra.mxu0 %v5214
    %7856 = vmatpush.bf16.msra.mxu0 %v5198
    %7857 = vmatpush.bf16.msra.mxu0 %v5182
    %7858 = vmatpush.bf16.msra.mxu0 %v5166
    %7859 = vmatmul.bf16.gmra.mxu0 %v123
    %v7860 = vpop.f32.mrf.mxu0
    %v7861 = vadd.f32 %v7848, %v7860
    %v7862 = vpop.f32.mrf.mxu0
    %7863 = vdwg.mxu0
    %7864 = vmatpush.bf16.msra.mxu0 %v4383
    %7865 = vmatpush.bf16.msra.mxu0 %v4367
    %7866 = vmatpush.bf16.msra.mxu0 %v4351
    %7867 = vmatpush.bf16.msra.mxu0 %v4335
    %7868 = vmatpush.bf16.msra.mxu0 %v4319
    %7869 = vmatpush.bf16.msra.mxu0 %v4303
    %7870 = vmatpush.bf16.msra.mxu0 %v4287
    %7871 = vmatpush.bf16.msra.mxu0 %v4271
    %7872 = vmatmul.bf16.gmra.mxu0 %v116
    %v7873 = vpop.f32.mrf.mxu0
    %v7874 = vadd.f32 %v1167, %v7873
    %v7875 = vpop.f32.mrf.mxu0
    %7876 = vdwg.mxu0
    %7877 = vmatpush.bf16.msra.mxu0 %v4511
    %7878 = vmatpush.bf16.msra.mxu0 %v4495
    %7879 = vmatpush.bf16.msra.mxu0 %v4479
    %7880 = vmatpush.bf16.msra.mxu0 %v4463
    %7881 = vmatpush.bf16.msra.mxu0 %v4447
    %7882 = vmatpush.bf16.msra.mxu0 %v4431
    %7883 = vmatpush.bf16.msra.mxu0 %v4415
    %7884 = vmatpush.bf16.msra.mxu0 %v4399
    %7885 = vmatmul.bf16.gmra.mxu0 %v117
    %v7886 = vpop.f32.mrf.mxu0
    %v7887 = vadd.f32 %v7874, %v7886
    %v7888 = vpop.f32.mrf.mxu0
    %7889 = vdwg.mxu0
    %7890 = vmatpush.bf16.msra.mxu0 %v4639
    %7891 = vmatpush.bf16.msra.mxu0 %v4623
    %7892 = vmatpush.bf16.msra.mxu0 %v4607
    %7893 = vmatpush.bf16.msra.mxu0 %v4591
    %7894 = vmatpush.bf16.msra.mxu0 %v4575
    %7895 = vmatpush.bf16.msra.mxu0 %v4559
    %7896 = vmatpush.bf16.msra.mxu0 %v4543
    %7897 = vmatpush.bf16.msra.mxu0 %v4527
    %7898 = vmatmul.bf16.gmra.mxu0 %v118
    %v7899 = vpop.f32.mrf.mxu0
    %v7900 = vadd.f32 %v7887, %v7899
    %v7901 = vpop.f32.mrf.mxu0
    %7902 = vdwg.mxu0
    %7903 = vmatpush.bf16.msra.mxu0 %v4767
    %7904 = vmatpush.bf16.msra.mxu0 %v4751
    %7905 = vmatpush.bf16.msra.mxu0 %v4735
    %7906 = vmatpush.bf16.msra.mxu0 %v4719
    %7907 = vmatpush.bf16.msra.mxu0 %v4703
    %7908 = vmatpush.bf16.msra.mxu0 %v4687
    %7909 = vmatpush.bf16.msra.mxu0 %v4671
    %7910 = vmatpush.bf16.msra.mxu0 %v4655
    %7911 = vmatmul.bf16.gmra.mxu0 %v119
    %v7912 = vpop.f32.mrf.mxu0
    %v7913 = vadd.f32 %v7900, %v7912
    %v7914 = vpop.f32.mrf.mxu0
    %7915 = vdwg.mxu0
    %7916 = vmatpush.bf16.msra.mxu0 %v4895
    %7917 = vmatpush.bf16.msra.mxu0 %v4879
    %7918 = vmatpush.bf16.msra.mxu0 %v4863
    %7919 = vmatpush.bf16.msra.mxu0 %v4847
    %7920 = vmatpush.bf16.msra.mxu0 %v4831
    %7921 = vmatpush.bf16.msra.mxu0 %v4815
    %7922 = vmatpush.bf16.msra.mxu0 %v4799
    %7923 = vmatpush.bf16.msra.mxu0 %v4783
    %7924 = vmatmul.bf16.gmra.mxu0 %v120
    %v7925 = vpop.f32.mrf.mxu0
    %v7926 = vadd.f32 %v7913, %v7925
    %v7927 = vpop.f32.mrf.mxu0
    %7928 = vdwg.mxu0
    %7929 = vmatpush.bf16.msra.mxu0 %v5023
    %7930 = vmatpush.bf16.msra.mxu0 %v5007
    %7931 = vmatpush.bf16.msra.mxu0 %v4991
    %7932 = vmatpush.bf16.msra.mxu0 %v4975
    %7933 = vmatpush.bf16.msra.mxu0 %v4959
    %7934 = vmatpush.bf16.msra.mxu0 %v4943
    %7935 = vmatpush.bf16.msra.mxu0 %v4927
    %7936 = vmatpush.bf16.msra.mxu0 %v4911
    %7937 = vmatmul.bf16.gmra.mxu0 %v121
    %v7938 = vpop.f32.mrf.mxu0
    %v7939 = vadd.f32 %v7926, %v7938
    %v7940 = vpop.f32.mrf.mxu0
    %7941 = vdwg.mxu0
    %7942 = vmatpush.bf16.msra.mxu0 %v5151
    %7943 = vmatpush.bf16.msra.mxu0 %v5135
    %7944 = vmatpush.bf16.msra.mxu0 %v5119
    %7945 = vmatpush.bf16.msra.mxu0 %v5103
    %7946 = vmatpush.bf16.msra.mxu0 %v5087
    %7947 = vmatpush.bf16.msra.mxu0 %v5071
    %7948 = vmatpush.bf16.msra.mxu0 %v5055
    %7949 = vmatpush.bf16.msra.mxu0 %v5039
    %7950 = vmatmul.bf16.gmra.mxu0 %v122
    %v7951 = vpop.f32.mrf.mxu0
    %v7952 = vadd.f32 %v7939, %v7951
    %v7953 = vpop.f32.mrf.mxu0
    %7954 = vdwg.mxu0
    %7955 = vmatpush.bf16.msra.mxu0 %v5279
    %7956 = vmatpush.bf16.msra.mxu0 %v5263
    %7957 = vmatpush.bf16.msra.mxu0 %v5247
    %7958 = vmatpush.bf16.msra.mxu0 %v5231
    %7959 = vmatpush.bf16.msra.mxu0 %v5215
    %7960 = vmatpush.bf16.msra.mxu0 %v5199
    %7961 = vmatpush.bf16.msra.mxu0 %v5183
    %7962 = vmatpush.bf16.msra.mxu0 %v5167
    %7963 = vmatmul.bf16.gmra.mxu0 %v123
    %v7964 = vpop.f32.mrf.mxu0
    %v7965 = vadd.f32 %v7952, %v7964
    %v7966 = vpop.f32.mrf.mxu0
    %7967 = vdwg.mxu0
    %v7968 = vmax.f32 %v6405, 0.0
    %v7969 = vmax.f32 %v6509, 0.0
    %v7970 = vmax.f32 %v6613, 0.0
    %v7971 = vmax.f32 %v6717, 0.0
    %v7972 = vmax.f32 %v6821, 0.0
    %v7973 = vmax.f32 %v6925, 0.0
    %v7974 = vmax.f32 %v7029, 0.0
    %v7975 = vmax.f32 %v7133, 0.0
    %v7976 = vmax.f32 %v7237, 0.0
    %v7977 = vmax.f32 %v7341, 0.0
    %v7978 = vmax.f32 %v7445, 0.0
    %v7979 = vmax.f32 %v7549, 0.0
    %v7980 = vmax.f32 %v7653, 0.0
    %v7981 = vmax.f32 %v7757, 0.0
    %v7982 = vmax.f32 %v7861, 0.0
    %v7983 = vmax.f32 %v7965, 0.0
    %v7984 = vpack.c.bf16 %v7968, %v7968
    %v7985 = vpack.c.bf16 %v7969, %v7969
    %v7986 = vpack.c.bf16 %v7970, %v7970
    %v7987 = vpack.c.bf16 %v7971, %v7971
    %v7988 = vpack.c.bf16 %v7972, %v7972
    %v7989 = vpack.c.bf16 %v7973, %v7973
    %v7990 = vpack.c.bf16 %v7974, %v7974
    %v7991 = vpack.c.bf16 %v7975, %v7975
    %v7992 = vpack.c.bf16 %v7976, %v7976
    %v7993 = vpack.c.bf16 %v7977, %v7977
    %v7994 = vpack.c.bf16 %v7978, %v7978
    %v7995 = vpack.c.bf16 %v7979, %v7979
    %v7996 = vpack.c.bf16 %v7980, %v7980
    %v7997 = vpack.c.bf16 %v7981, %v7981
    %v7998 = vpack.c.bf16 %v7982, %v7982
    %v7999 = vpack.c.bf16 %v7983, %v7983
    %v8000 = vld [vmem:[#allocation8] sm:$0xf]
    %v8001 = vld [vmem:[#allocation8 + $0x4] sm:$0xf]
    %v8002 = vld [vmem:[#allocation8 + $0x8] sm:$0xf]
    %v8003 = vld [vmem:[#allocation8 + $0xc] sm:$0xf]
    %v8004 = vld [vmem:[#allocation8 + $0x10] sm:$0xf]
    %v8005 = vld [vmem:[#allocation8 + $0x14] sm:$0xf]
    %v8006 = vld [vmem:[#allocation8 + $0x18] sm:$0xf]
    %v8007 = vld [vmem:[#allocation8 + $0x1c] sm:$0xf]
    %v8008 = vld [vmem:[#allocation8 + $0x20] sm:$0xf]
    %v8009 = vld [vmem:[#allocation8 + $0x24] sm:$0xf]
    %v8010 = vld [vmem:[#allocation8 + $0x28] sm:$0xf]
    %v8011 = vld [vmem:[#allocation8 + $0x2c] sm:$0xf]
    %v8012 = vld [vmem:[#allocation8 + $0x30] sm:$0xf]
    %v8013 = vld [vmem:[#allocation8 + $0x34] sm:$0xf]
    %v8014 = vld [vmem:[#allocation8 + $0x38] sm:$0xf]
    %v8015 = vld [vmem:[#allocation8 + $0x3c] sm:$0xf]
    %v8016 = vld [vmem:[#allocation8 + $0x40] sm:$0xf]
    %v8017 = vld [vmem:[#allocation8 + $0x44] sm:$0xf]
    %v8018 = vld [vmem:[#allocation8 + $0x48] sm:$0xf]
    %v8019 = vld [vmem:[#allocation8 + $0x4c] sm:$0xf]
    %v8020 = vld [vmem:[#allocation8 + $0x50] sm:$0xf]
    %v8021 = vld [vmem:[#allocation8 + $0x54] sm:$0xf]
    %v8022 = vld [vmem:[#allocation8 + $0x58] sm:$0xf]
    %v8023 = vld [vmem:[#allocation8 + $0x5c] sm:$0xf]
    %v8024 = vld [vmem:[#allocation8 + $0x60] sm:$0xf]
    %v8025 = vld [vmem:[#allocation8 + $0x64] sm:$0xf]
    %v8026 = vld [vmem:[#allocation8 + $0x68] sm:$0xf]
    %v8027 = vld [vmem:[#allocation8 + $0x6c] sm:$0xf]
    %v8028 = vld [vmem:[#allocation8 + $0x70] sm:$0xf]
    %v8029 = vld [vmem:[#allocation8 + $0x74] sm:$0xf]
    %v8030 = vld [vmem:[#allocation8 + $0x78] sm:$0xf]
    %v8031 = vld [vmem:[#allocation8 + $0x7c] sm:$0xf]
    %v8032 = vld [vmem:[#allocation8 + $0x80] sm:$0xf]
    %v8033 = vld [vmem:[#allocation8 + $0x84] sm:$0xf]
    %v8034 = vld [vmem:[#allocation8 + $0x88] sm:$0xf]
    %v8035 = vld [vmem:[#allocation8 + $0x8c] sm:$0xf]
    %v8036 = vld [vmem:[#allocation8 + $0x90] sm:$0xf]
    %v8037 = vld [vmem:[#allocation8 + $0x94] sm:$0xf]
    %v8038 = vld [vmem:[#allocation8 + $0x98] sm:$0xf]
    %v8039 = vld [vmem:[#allocation8 + $0x9c] sm:$0xf]
    %v8040 = vld [vmem:[#allocation8 + $0xa0] sm:$0xf]
    %v8041 = vld [vmem:[#allocation8 + $0xa4] sm:$0xf]
    %v8042 = vld [vmem:[#allocation8 + $0xa8] sm:$0xf]
    %v8043 = vld [vmem:[#allocation8 + $0xac] sm:$0xf]
    %v8044 = vld [vmem:[#allocation8 + $0xb0] sm:$0xf]
    %v8045 = vld [vmem:[#allocation8 + $0xb4] sm:$0xf]
    %v8046 = vld [vmem:[#allocation8 + $0xb8] sm:$0xf]
    %v8047 = vld [vmem:[#allocation8 + $0xbc] sm:$0xf]
    %v8048 = vld [vmem:[#allocation8 + $0xc0] sm:$0xf]
    %v8049 = vld [vmem:[#allocation8 + $0xc4] sm:$0xf]
    %v8050 = vld [vmem:[#allocation8 + $0xc8] sm:$0xf]
    %v8051 = vld [vmem:[#allocation8 + $0xcc] sm:$0xf]
    %v8052 = vld [vmem:[#allocation8 + $0xd0] sm:$0xf]
    %v8053 = vld [vmem:[#allocation8 + $0xd4] sm:$0xf]
    %v8054 = vld [vmem:[#allocation8 + $0xd8] sm:$0xf]
    %v8055 = vld [vmem:[#allocation8 + $0xdc] sm:$0xf]
    %v8056 = vld [vmem:[#allocation8 + $0xe0] sm:$0xf]
    %v8057 = vld [vmem:[#allocation8 + $0xe4] sm:$0xf]
    %v8058 = vld [vmem:[#allocation8 + $0xe8] sm:$0xf]
    %v8059 = vld [vmem:[#allocation8 + $0xec] sm:$0xf]
    %v8060 = vld [vmem:[#allocation8 + $0xf0] sm:$0xf]
    %v8061 = vld [vmem:[#allocation8 + $0xf4] sm:$0xf]
    %v8062 = vld [vmem:[#allocation8 + $0xf8] sm:$0xf]
    %v8063 = vld [vmem:[#allocation8 + $0xfc] sm:$0xf]
    %v8064 = vld [vmem:[#allocation8 + $0x100] sm:$0xf]
    %v8065 = vld [vmem:[#allocation8 + $0x104] sm:$0xf]
    %v8066 = vld [vmem:[#allocation8 + $0x108] sm:$0xf]
    %v8067 = vld [vmem:[#allocation8 + $0x10c] sm:$0xf]
    %v8068 = vld [vmem:[#allocation8 + $0x110] sm:$0xf]
    %v8069 = vld [vmem:[#allocation8 + $0x114] sm:$0xf]
    %v8070 = vld [vmem:[#allocation8 + $0x118] sm:$0xf]
    %v8071 = vld [vmem:[#allocation8 + $0x11c] sm:$0xf]
    %v8072 = vld [vmem:[#allocation8 + $0x120] sm:$0xf]
    %v8073 = vld [vmem:[#allocation8 + $0x124] sm:$0xf]
    %v8074 = vld [vmem:[#allocation8 + $0x128] sm:$0xf]
    %v8075 = vld [vmem:[#allocation8 + $0x12c] sm:$0xf]
    %v8076 = vld [vmem:[#allocation8 + $0x130] sm:$0xf]
    %v8077 = vld [vmem:[#allocation8 + $0x134] sm:$0xf]
    %v8078 = vld [vmem:[#allocation8 + $0x138] sm:$0xf]
    %v8079 = vld [vmem:[#allocation8 + $0x13c] sm:$0xf]
    %v8080 = vld [vmem:[#allocation8 + $0x140] sm:$0xf]
    %v8081 = vld [vmem:[#allocation8 + $0x144] sm:$0xf]
    %v8082 = vld [vmem:[#allocation8 + $0x148] sm:$0xf]
    %v8083 = vld [vmem:[#allocation8 + $0x14c] sm:$0xf]
    %v8084 = vld [vmem:[#allocation8 + $0x150] sm:$0xf]
    %v8085 = vld [vmem:[#allocation8 + $0x154] sm:$0xf]
    %v8086 = vld [vmem:[#allocation8 + $0x158] sm:$0xf]
    %v8087 = vld [vmem:[#allocation8 + $0x15c] sm:$0xf]
    %v8088 = vld [vmem:[#allocation8 + $0x160] sm:$0xf]
    %v8089 = vld [vmem:[#allocation8 + $0x164] sm:$0xf]
    %v8090 = vld [vmem:[#allocation8 + $0x168] sm:$0xf]
    %v8091 = vld [vmem:[#allocation8 + $0x16c] sm:$0xf]
    %v8092 = vld [vmem:[#allocation8 + $0x170] sm:$0xf]
    %v8093 = vld [vmem:[#allocation8 + $0x174] sm:$0xf]
    %v8094 = vld [vmem:[#allocation8 + $0x178] sm:$0xf]
    %v8095 = vld [vmem:[#allocation8 + $0x17c] sm:$0xf]
    %v8096 = vld [vmem:[#allocation8 + $0x180] sm:$0xf]
    %v8097 = vld [vmem:[#allocation8 + $0x184] sm:$0xf]
    %v8098 = vld [vmem:[#allocation8 + $0x188] sm:$0xf]
    %v8099 = vld [vmem:[#allocation8 + $0x18c] sm:$0xf]
    %v8100 = vld [vmem:[#allocation8 + $0x190] sm:$0xf]
    %v8101 = vld [vmem:[#allocation8 + $0x194] sm:$0xf]
    %v8102 = vld [vmem:[#allocation8 + $0x198] sm:$0xf]
    %v8103 = vld [vmem:[#allocation8 + $0x19c] sm:$0xf]
    %v8104 = vld [vmem:[#allocation8 + $0x1a0] sm:$0xf]
    %v8105 = vld [vmem:[#allocation8 + $0x1a4] sm:$0xf]
    %v8106 = vld [vmem:[#allocation8 + $0x1a8] sm:$0xf]
    %v8107 = vld [vmem:[#allocation8 + $0x1ac] sm:$0xf]
    %v8108 = vld [vmem:[#allocation8 + $0x1b0] sm:$0xf]
    %v8109 = vld [vmem:[#allocation8 + $0x1b4] sm:$0xf]
    %v8110 = vld [vmem:[#allocation8 + $0x1b8] sm:$0xf]
    %v8111 = vld [vmem:[#allocation8 + $0x1bc] sm:$0xf]
    %v8112 = vld [vmem:[#allocation8 + $0x1c0] sm:$0xf]
    %v8113 = vld [vmem:[#allocation8 + $0x1c4] sm:$0xf]
    %v8114 = vld [vmem:[#allocation8 + $0x1c8] sm:$0xf]
    %v8115 = vld [vmem:[#allocation8 + $0x1cc] sm:$0xf]
    %v8116 = vld [vmem:[#allocation8 + $0x1d0] sm:$0xf]
    %v8117 = vld [vmem:[#allocation8 + $0x1d4] sm:$0xf]
    %v8118 = vld [vmem:[#allocation8 + $0x1d8] sm:$0xf]
    %v8119 = vld [vmem:[#allocation8 + $0x1dc] sm:$0xf]
    %v8120 = vld [vmem:[#allocation8 + $0x1e0] sm:$0xf]
    %v8121 = vld [vmem:[#allocation8 + $0x1e4] sm:$0xf]
    %v8122 = vld [vmem:[#allocation8 + $0x1e8] sm:$0xf]
    %v8123 = vld [vmem:[#allocation8 + $0x1ec] sm:$0xf]
    %v8124 = vld [vmem:[#allocation8 + $0x1f0] sm:$0xf]
    %v8125 = vld [vmem:[#allocation8 + $0x1f4] sm:$0xf]
    %v8126 = vld [vmem:[#allocation8 + $0x1f8] sm:$0xf]
    %v8127 = vld [vmem:[#allocation8 + $0x1fc] sm:$0xf]
    %v8128 = vld [vmem:[#allocation8 + $0x200] sm:$0xf]
    %v8129 = vld [vmem:[#allocation8 + $0x204] sm:$0xf]
    %v8130 = vld [vmem:[#allocation8 + $0x208] sm:$0xf]
    %v8131 = vld [vmem:[#allocation8 + $0x20c] sm:$0xf]
    %v8132 = vld [vmem:[#allocation8 + $0x210] sm:$0xf]
    %v8133 = vld [vmem:[#allocation8 + $0x214] sm:$0xf]
    %v8134 = vld [vmem:[#allocation8 + $0x218] sm:$0xf]
    %v8135 = vld [vmem:[#allocation8 + $0x21c] sm:$0xf]
    %v8136 = vld [vmem:[#allocation8 + $0x220] sm:$0xf]
    %v8137 = vld [vmem:[#allocation8 + $0x224] sm:$0xf]
    %v8138 = vld [vmem:[#allocation8 + $0x228] sm:$0xf]
    %v8139 = vld [vmem:[#allocation8 + $0x22c] sm:$0xf]
    %v8140 = vld [vmem:[#allocation8 + $0x230] sm:$0xf]
    %v8141 = vld [vmem:[#allocation8 + $0x234] sm:$0xf]
    %v8142 = vld [vmem:[#allocation8 + $0x238] sm:$0xf]
    %v8143 = vld [vmem:[#allocation8 + $0x23c] sm:$0xf]
    %v8144 = vld [vmem:[#allocation8 + $0x240] sm:$0xf]
    %v8145 = vld [vmem:[#allocation8 + $0x244] sm:$0xf]
    %v8146 = vld [vmem:[#allocation8 + $0x248] sm:$0xf]
    %v8147 = vld [vmem:[#allocation8 + $0x24c] sm:$0xf]
    %v8148 = vld [vmem:[#allocation8 + $0x250] sm:$0xf]
    %v8149 = vld [vmem:[#allocation8 + $0x254] sm:$0xf]
    %v8150 = vld [vmem:[#allocation8 + $0x258] sm:$0xf]
    %v8151 = vld [vmem:[#allocation8 + $0x25c] sm:$0xf]
    %v8152 = vld [vmem:[#allocation8 + $0x260] sm:$0xf]
    %v8153 = vld [vmem:[#allocation8 + $0x264] sm:$0xf]
    %v8154 = vld [vmem:[#allocation8 + $0x268] sm:$0xf]
    %v8155 = vld [vmem:[#allocation8 + $0x26c] sm:$0xf]
    %v8156 = vld [vmem:[#allocation8 + $0x270] sm:$0xf]
    %v8157 = vld [vmem:[#allocation8 + $0x274] sm:$0xf]
    %v8158 = vld [vmem:[#allocation8 + $0x278] sm:$0xf]
    %v8159 = vld [vmem:[#allocation8 + $0x27c] sm:$0xf]
    %v8160 = vld [vmem:[#allocation8 + $0x280] sm:$0xf]
    %v8161 = vld [vmem:[#allocation8 + $0x284] sm:$0xf]
    %v8162 = vld [vmem:[#allocation8 + $0x288] sm:$0xf]
    %v8163 = vld [vmem:[#allocation8 + $0x28c] sm:$0xf]
    %v8164 = vld [vmem:[#allocation8 + $0x290] sm:$0xf]
    %v8165 = vld [vmem:[#allocation8 + $0x294] sm:$0xf]
    %v8166 = vld [vmem:[#allocation8 + $0x298] sm:$0xf]
    %v8167 = vld [vmem:[#allocation8 + $0x29c] sm:$0xf]
    %v8168 = vld [vmem:[#allocation8 + $0x2a0] sm:$0xf]
    %v8169 = vld [vmem:[#allocation8 + $0x2a4] sm:$0xf]
    %v8170 = vld [vmem:[#allocation8 + $0x2a8] sm:$0xf]
    %v8171 = vld [vmem:[#allocation8 + $0x2ac] sm:$0xf]
    %v8172 = vld [vmem:[#allocation8 + $0x2b0] sm:$0xf]
    %v8173 = vld [vmem:[#allocation8 + $0x2b4] sm:$0xf]
    %v8174 = vld [vmem:[#allocation8 + $0x2b8] sm:$0xf]
    %v8175 = vld [vmem:[#allocation8 + $0x2bc] sm:$0xf]
    %v8176 = vld [vmem:[#allocation8 + $0x2c0] sm:$0xf]
    %v8177 = vld [vmem:[#allocation8 + $0x2c4] sm:$0xf]
    %v8178 = vld [vmem:[#allocation8 + $0x2c8] sm:$0xf]
    %v8179 = vld [vmem:[#allocation8 + $0x2cc] sm:$0xf]
    %v8180 = vld [vmem:[#allocation8 + $0x2d0] sm:$0xf]
    %v8181 = vld [vmem:[#allocation8 + $0x2d4] sm:$0xf]
    %v8182 = vld [vmem:[#allocation8 + $0x2d8] sm:$0xf]
    %v8183 = vld [vmem:[#allocation8 + $0x2dc] sm:$0xf]
    %v8184 = vld [vmem:[#allocation8 + $0x2e0] sm:$0xf]
    %v8185 = vld [vmem:[#allocation8 + $0x2e4] sm:$0xf]
    %v8186 = vld [vmem:[#allocation8 + $0x2e8] sm:$0xf]
    %v8187 = vld [vmem:[#allocation8 + $0x2ec] sm:$0xf]
    %v8188 = vld [vmem:[#allocation8 + $0x2f0] sm:$0xf]
    %v8189 = vld [vmem:[#allocation8 + $0x2f4] sm:$0xf]
    %v8190 = vld [vmem:[#allocation8 + $0x2f8] sm:$0xf]
    %v8191 = vld [vmem:[#allocation8 + $0x2fc] sm:$0xf]
    %v8192 = vld [vmem:[#allocation8 + $0x300] sm:$0xf]
    %v8193 = vld [vmem:[#allocation8 + $0x304] sm:$0xf]
    %v8194 = vld [vmem:[#allocation8 + $0x308] sm:$0xf]
    %v8195 = vld [vmem:[#allocation8 + $0x30c] sm:$0xf]
    %v8196 = vld [vmem:[#allocation8 + $0x310] sm:$0xf]
    %v8197 = vld [vmem:[#allocation8 + $0x314] sm:$0xf]
    %v8198 = vld [vmem:[#allocation8 + $0x318] sm:$0xf]
    %v8199 = vld [vmem:[#allocation8 + $0x31c] sm:$0xf]
    %v8200 = vld [vmem:[#allocation8 + $0x320] sm:$0xf]
    %v8201 = vld [vmem:[#allocation8 + $0x324] sm:$0xf]
    %v8202 = vld [vmem:[#allocation8 + $0x328] sm:$0xf]
    %v8203 = vld [vmem:[#allocation8 + $0x32c] sm:$0xf]
    %v8204 = vld [vmem:[#allocation8 + $0x330] sm:$0xf]
    %v8205 = vld [vmem:[#allocation8 + $0x334] sm:$0xf]
    %v8206 = vld [vmem:[#allocation8 + $0x338] sm:$0xf]
    %v8207 = vld [vmem:[#allocation8 + $0x33c] sm:$0xf]
    %v8208 = vld [vmem:[#allocation8 + $0x340] sm:$0xf]
    %v8209 = vld [vmem:[#allocation8 + $0x344] sm:$0xf]
    %v8210 = vld [vmem:[#allocation8 + $0x348] sm:$0xf]
    %v8211 = vld [vmem:[#allocation8 + $0x34c] sm:$0xf]
    %v8212 = vld [vmem:[#allocation8 + $0x350] sm:$0xf]
    %v8213 = vld [vmem:[#allocation8 + $0x354] sm:$0xf]
    %v8214 = vld [vmem:[#allocation8 + $0x358] sm:$0xf]
    %v8215 = vld [vmem:[#allocation8 + $0x35c] sm:$0xf]
    %v8216 = vld [vmem:[#allocation8 + $0x360] sm:$0xf]
    %v8217 = vld [vmem:[#allocation8 + $0x364] sm:$0xf]
    %v8218 = vld [vmem:[#allocation8 + $0x368] sm:$0xf]
    %v8219 = vld [vmem:[#allocation8 + $0x36c] sm:$0xf]
    %v8220 = vld [vmem:[#allocation8 + $0x370] sm:$0xf]
    %v8221 = vld [vmem:[#allocation8 + $0x374] sm:$0xf]
    %v8222 = vld [vmem:[#allocation8 + $0x378] sm:$0xf]
    %v8223 = vld [vmem:[#allocation8 + $0x37c] sm:$0xf]
    %v8224 = vld [vmem:[#allocation8 + $0x380] sm:$0xf]
    %v8225 = vld [vmem:[#allocation8 + $0x384] sm:$0xf]
    %v8226 = vld [vmem:[#allocation8 + $0x388] sm:$0xf]
    %v8227 = vld [vmem:[#allocation8 + $0x38c] sm:$0xf]
    %v8228 = vld [vmem:[#allocation8 + $0x390] sm:$0xf]
    %v8229 = vld [vmem:[#allocation8 + $0x394] sm:$0xf]
    %v8230 = vld [vmem:[#allocation8 + $0x398] sm:$0xf]
    %v8231 = vld [vmem:[#allocation8 + $0x39c] sm:$0xf]
    %v8232 = vld [vmem:[#allocation8 + $0x3a0] sm:$0xf]
    %v8233 = vld [vmem:[#allocation8 + $0x3a4] sm:$0xf]
    %v8234 = vld [vmem:[#allocation8 + $0x3a8] sm:$0xf]
    %v8235 = vld [vmem:[#allocation8 + $0x3ac] sm:$0xf]
    %v8236 = vld [vmem:[#allocation8 + $0x3b0] sm:$0xf]
    %v8237 = vld [vmem:[#allocation8 + $0x3b4] sm:$0xf]
    %v8238 = vld [vmem:[#allocation8 + $0x3b8] sm:$0xf]
    %v8239 = vld [vmem:[#allocation8 + $0x3bc] sm:$0xf]
    %v8240 = vld [vmem:[#allocation8 + $0x3c0] sm:$0xf]
    %v8241 = vld [vmem:[#allocation8 + $0x3c4] sm:$0xf]
    %v8242 = vld [vmem:[#allocation8 + $0x3c8] sm:$0xf]
    %v8243 = vld [vmem:[#allocation8 + $0x3cc] sm:$0xf]
    %v8244 = vld [vmem:[#allocation8 + $0x3d0] sm:$0xf]
    %v8245 = vld [vmem:[#allocation8 + $0x3d4] sm:$0xf]
    %v8246 = vld [vmem:[#allocation8 + $0x3d8] sm:$0xf]
    %v8247 = vld [vmem:[#allocation8 + $0x3dc] sm:$0xf]
    %v8248 = vld [vmem:[#allocation8 + $0x3e0] sm:$0xf]
    %v8249 = vld [vmem:[#allocation8 + $0x3e4] sm:$0xf]
    %v8250 = vld [vmem:[#allocation8 + $0x3e8] sm:$0xf]
    %v8251 = vld [vmem:[#allocation8 + $0x3ec] sm:$0xf]
    %v8252 = vld [vmem:[#allocation8 + $0x3f0] sm:$0xf]
    %v8253 = vld [vmem:[#allocation8 + $0x3f4] sm:$0xf]
    %v8254 = vld [vmem:[#allocation8 + $0x3f8] sm:$0xf]
    %v8255 = vld [vmem:[#allocation8 + $0x3fc] sm:$0xf]
    %v8256 = vld [vmem:[#allocation10] sm:$0x1]
    %v8258 = vperm.slane %v8256, 0
    %v8516 = vunpack.c.l.b16 %v8000
    %v8517 = vunpack.c.l.b16 %v8001
    %v8518 = vunpack.c.l.b16 %v8002
    %v8519 = vunpack.c.l.b16 %v8003
    %v8520 = vunpack.c.l.b16 %v8004
    %v8521 = vunpack.c.l.b16 %v8005
    %v8522 = vunpack.c.l.b16 %v8006
    %v8523 = vunpack.c.l.b16 %v8007
    %v8524 = vunpack.c.l.b16 %v8008
    %v8525 = vunpack.c.l.b16 %v8009
    %v8526 = vunpack.c.l.b16 %v8010
    %v8527 = vunpack.c.l.b16 %v8011
    %v8528 = vunpack.c.l.b16 %v8012
    %v8529 = vunpack.c.l.b16 %v8013
    %v8530 = vunpack.c.l.b16 %v8014
    %v8531 = vunpack.c.l.b16 %v8015
    %v8532 = vunpack.c.l.b16 %v8016
    %v8533 = vunpack.c.l.b16 %v8017
    %v8534 = vunpack.c.l.b16 %v8018
    %v8535 = vunpack.c.l.b16 %v8019
    %v8536 = vunpack.c.l.b16 %v8020
    %v8537 = vunpack.c.l.b16 %v8021
    %v8538 = vunpack.c.l.b16 %v8022
    %v8539 = vunpack.c.l.b16 %v8023
    %v8540 = vunpack.c.l.b16 %v8024
    %v8541 = vunpack.c.l.b16 %v8025
    %v8542 = vunpack.c.l.b16 %v8026
    %v8543 = vunpack.c.l.b16 %v8027
    %v8544 = vunpack.c.l.b16 %v8028
    %v8545 = vunpack.c.l.b16 %v8029
    %v8546 = vunpack.c.l.b16 %v8030
    %v8547 = vunpack.c.l.b16 %v8031
    %v8548 = vunpack.c.l.b16 %v8032
    %v8549 = vunpack.c.l.b16 %v8033
    %v8550 = vunpack.c.l.b16 %v8034
    %v8551 = vunpack.c.l.b16 %v8035
    %v8552 = vunpack.c.l.b16 %v8036
    %v8553 = vunpack.c.l.b16 %v8037
    %v8554 = vunpack.c.l.b16 %v8038
    %v8555 = vunpack.c.l.b16 %v8039
    %v8556 = vunpack.c.l.b16 %v8040
    %v8557 = vunpack.c.l.b16 %v8041
    %v8558 = vunpack.c.l.b16 %v8042
    %v8559 = vunpack.c.l.b16 %v8043
    %v8560 = vunpack.c.l.b16 %v8044
    %v8561 = vunpack.c.l.b16 %v8045
    %v8562 = vunpack.c.l.b16 %v8046
    %v8563 = vunpack.c.l.b16 %v8047
    %v8564 = vunpack.c.l.b16 %v8048
    %v8565 = vunpack.c.l.b16 %v8049
    %v8566 = vunpack.c.l.b16 %v8050
    %v8567 = vunpack.c.l.b16 %v8051
    %v8568 = vunpack.c.l.b16 %v8052
    %v8569 = vunpack.c.l.b16 %v8053
    %v8570 = vunpack.c.l.b16 %v8054
    %v8571 = vunpack.c.l.b16 %v8055
    %v8572 = vunpack.c.l.b16 %v8056
    %v8573 = vunpack.c.l.b16 %v8057
    %v8574 = vunpack.c.l.b16 %v8058
    %v8575 = vunpack.c.l.b16 %v8059
    %v8576 = vunpack.c.l.b16 %v8060
    %v8577 = vunpack.c.l.b16 %v8061
    %v8578 = vunpack.c.l.b16 %v8062
    %v8579 = vunpack.c.l.b16 %v8063
    %v8580 = vunpack.c.l.b16 %v8064
    %v8581 = vunpack.c.l.b16 %v8065
    %v8582 = vunpack.c.l.b16 %v8066
    %v8583 = vunpack.c.l.b16 %v8067
    %v8584 = vunpack.c.l.b16 %v8068
    %v8585 = vunpack.c.l.b16 %v8069
    %v8586 = vunpack.c.l.b16 %v8070
    %v8587 = vunpack.c.l.b16 %v8071
    %v8588 = vunpack.c.l.b16 %v8072
    %v8589 = vunpack.c.l.b16 %v8073
    %v8590 = vunpack.c.l.b16 %v8074
    %v8591 = vunpack.c.l.b16 %v8075
    %v8592 = vunpack.c.l.b16 %v8076
    %v8593 = vunpack.c.l.b16 %v8077
    %v8594 = vunpack.c.l.b16 %v8078
    %v8595 = vunpack.c.l.b16 %v8079
    %v8596 = vunpack.c.l.b16 %v8080
    %v8597 = vunpack.c.l.b16 %v8081
    %v8598 = vunpack.c.l.b16 %v8082
    %v8599 = vunpack.c.l.b16 %v8083
    %v8600 = vunpack.c.l.b16 %v8084
    %v8601 = vunpack.c.l.b16 %v8085
    %v8602 = vunpack.c.l.b16 %v8086
    %v8603 = vunpack.c.l.b16 %v8087
    %v8604 = vunpack.c.l.b16 %v8088
    %v8605 = vunpack.c.l.b16 %v8089
    %v8606 = vunpack.c.l.b16 %v8090
    %v8607 = vunpack.c.l.b16 %v8091
    %v8608 = vunpack.c.l.b16 %v8092
    %v8609 = vunpack.c.l.b16 %v8093
    %v8610 = vunpack.c.l.b16 %v8094
    %v8611 = vunpack.c.l.b16 %v8095
    %v8612 = vunpack.c.l.b16 %v8096
    %v8613 = vunpack.c.l.b16 %v8097
    %v8614 = vunpack.c.l.b16 %v8098
    %v8615 = vunpack.c.l.b16 %v8099
    %v8616 = vunpack.c.l.b16 %v8100
    %v8617 = vunpack.c.l.b16 %v8101
    %v8618 = vunpack.c.l.b16 %v8102
    %v8619 = vunpack.c.l.b16 %v8103
    %v8620 = vunpack.c.l.b16 %v8104
    %v8621 = vunpack.c.l.b16 %v8105
    %v8622 = vunpack.c.l.b16 %v8106
    %v8623 = vunpack.c.l.b16 %v8107
    %v8624 = vunpack.c.l.b16 %v8108
    %v8625 = vunpack.c.l.b16 %v8109
    %v8626 = vunpack.c.l.b16 %v8110
    %v8627 = vunpack.c.l.b16 %v8111
    %v8628 = vunpack.c.l.b16 %v8112
    %v8629 = vunpack.c.l.b16 %v8113
    %v8630 = vunpack.c.l.b16 %v8114
    %v8631 = vunpack.c.l.b16 %v8115
    %v8632 = vunpack.c.l.b16 %v8116
    %v8633 = vunpack.c.l.b16 %v8117
    %v8634 = vunpack.c.l.b16 %v8118
    %v8635 = vunpack.c.l.b16 %v8119
    %v8636 = vunpack.c.l.b16 %v8120
    %v8637 = vunpack.c.l.b16 %v8121
    %v8638 = vunpack.c.l.b16 %v8122
    %v8639 = vunpack.c.l.b16 %v8123
    %v8640 = vunpack.c.l.b16 %v8124
    %v8641 = vunpack.c.l.b16 %v8125
    %v8642 = vunpack.c.l.b16 %v8126
    %v8643 = vunpack.c.l.b16 %v8127
    %v8644 = vunpack.c.l.b16 %v8128
    %v8645 = vunpack.c.l.b16 %v8129
    %v8646 = vunpack.c.l.b16 %v8130
    %v8647 = vunpack.c.l.b16 %v8131
    %v8648 = vunpack.c.l.b16 %v8132
    %v8649 = vunpack.c.l.b16 %v8133
    %v8650 = vunpack.c.l.b16 %v8134
    %v8651 = vunpack.c.l.b16 %v8135
    %v8652 = vunpack.c.l.b16 %v8136
    %v8653 = vunpack.c.l.b16 %v8137
    %v8654 = vunpack.c.l.b16 %v8138
    %v8655 = vunpack.c.l.b16 %v8139
    %v8656 = vunpack.c.l.b16 %v8140
    %v8657 = vunpack.c.l.b16 %v8141
    %v8658 = vunpack.c.l.b16 %v8142
    %v8659 = vunpack.c.l.b16 %v8143
    %v8660 = vunpack.c.l.b16 %v8144
    %v8661 = vunpack.c.l.b16 %v8145
    %v8662 = vunpack.c.l.b16 %v8146
    %v8663 = vunpack.c.l.b16 %v8147
    %v8664 = vunpack.c.l.b16 %v8148
    %v8665 = vunpack.c.l.b16 %v8149
    %v8666 = vunpack.c.l.b16 %v8150
    %v8667 = vunpack.c.l.b16 %v8151
    %v8668 = vunpack.c.l.b16 %v8152
    %v8669 = vunpack.c.l.b16 %v8153
    %v8670 = vunpack.c.l.b16 %v8154
    %v8671 = vunpack.c.l.b16 %v8155
    %v8672 = vunpack.c.l.b16 %v8156
    %v8673 = vunpack.c.l.b16 %v8157
    %v8674 = vunpack.c.l.b16 %v8158
    %v8675 = vunpack.c.l.b16 %v8159
    %v8676 = vunpack.c.l.b16 %v8160
    %v8677 = vunpack.c.l.b16 %v8161
    %v8678 = vunpack.c.l.b16 %v8162
    %v8679 = vunpack.c.l.b16 %v8163
    %v8680 = vunpack.c.l.b16 %v8164
    %v8681 = vunpack.c.l.b16 %v8165
    %v8682 = vunpack.c.l.b16 %v8166
    %v8683 = vunpack.c.l.b16 %v8167
    %v8684 = vunpack.c.l.b16 %v8168
    %v8685 = vunpack.c.l.b16 %v8169
    %v8686 = vunpack.c.l.b16 %v8170
    %v8687 = vunpack.c.l.b16 %v8171
    %v8688 = vunpack.c.l.b16 %v8172
    %v8689 = vunpack.c.l.b16 %v8173
    %v8690 = vunpack.c.l.b16 %v8174
    %v8691 = vunpack.c.l.b16 %v8175
    %v8692 = vunpack.c.l.b16 %v8176
    %v8693 = vunpack.c.l.b16 %v8177
    %v8694 = vunpack.c.l.b16 %v8178
    %v8695 = vunpack.c.l.b16 %v8179
    %v8696 = vunpack.c.l.b16 %v8180
    %v8697 = vunpack.c.l.b16 %v8181
    %v8698 = vunpack.c.l.b16 %v8182
    %v8699 = vunpack.c.l.b16 %v8183
    %v8700 = vunpack.c.l.b16 %v8184
    %v8701 = vunpack.c.l.b16 %v8185
    %v8702 = vunpack.c.l.b16 %v8186
    %v8703 = vunpack.c.l.b16 %v8187
    %v8704 = vunpack.c.l.b16 %v8188
    %v8705 = vunpack.c.l.b16 %v8189
    %v8706 = vunpack.c.l.b16 %v8190
    %v8707 = vunpack.c.l.b16 %v8191
    %v8708 = vunpack.c.l.b16 %v8192
    %v8709 = vunpack.c.l.b16 %v8193
    %v8710 = vunpack.c.l.b16 %v8194
    %v8711 = vunpack.c.l.b16 %v8195
    %v8712 = vunpack.c.l.b16 %v8196
    %v8713 = vunpack.c.l.b16 %v8197
    %v8714 = vunpack.c.l.b16 %v8198
    %v8715 = vunpack.c.l.b16 %v8199
    %v8716 = vunpack.c.l.b16 %v8200
    %v8717 = vunpack.c.l.b16 %v8201
    %v8718 = vunpack.c.l.b16 %v8202
    %v8719 = vunpack.c.l.b16 %v8203
    %v8720 = vunpack.c.l.b16 %v8204
    %v8721 = vunpack.c.l.b16 %v8205
    %v8722 = vunpack.c.l.b16 %v8206
    %v8723 = vunpack.c.l.b16 %v8207
    %v8724 = vunpack.c.l.b16 %v8208
    %v8725 = vunpack.c.l.b16 %v8209
    %v8726 = vunpack.c.l.b16 %v8210
    %v8727 = vunpack.c.l.b16 %v8211
    %v8728 = vunpack.c.l.b16 %v8212
    %v8729 = vunpack.c.l.b16 %v8213
    %v8730 = vunpack.c.l.b16 %v8214
    %v8731 = vunpack.c.l.b16 %v8215
    %v8732 = vunpack.c.l.b16 %v8216
    %v8733 = vunpack.c.l.b16 %v8217
    %v8734 = vunpack.c.l.b16 %v8218
    %v8735 = vunpack.c.l.b16 %v8219
    %v8736 = vunpack.c.l.b16 %v8220
    %v8737 = vunpack.c.l.b16 %v8221
    %v8738 = vunpack.c.l.b16 %v8222
    %v8739 = vunpack.c.l.b16 %v8223
    %v8740 = vunpack.c.l.b16 %v8224
    %v8741 = vunpack.c.l.b16 %v8225
    %v8742 = vunpack.c.l.b16 %v8226
    %v8743 = vunpack.c.l.b16 %v8227
    %v8744 = vunpack.c.l.b16 %v8228
    %v8745 = vunpack.c.l.b16 %v8229
    %v8746 = vunpack.c.l.b16 %v8230
    %v8747 = vunpack.c.l.b16 %v8231
    %v8748 = vunpack.c.l.b16 %v8232
    %v8749 = vunpack.c.l.b16 %v8233
    %v8750 = vunpack.c.l.b16 %v8234
    %v8751 = vunpack.c.l.b16 %v8235
    %v8752 = vunpack.c.l.b16 %v8236
    %v8753 = vunpack.c.l.b16 %v8237
    %v8754 = vunpack.c.l.b16 %v8238
    %v8755 = vunpack.c.l.b16 %v8239
    %v8756 = vunpack.c.l.b16 %v8240
    %v8757 = vunpack.c.l.b16 %v8241
    %v8758 = vunpack.c.l.b16 %v8242
    %v8759 = vunpack.c.l.b16 %v8243
    %v8760 = vunpack.c.l.b16 %v8244
    %v8761 = vunpack.c.l.b16 %v8245
    %v8762 = vunpack.c.l.b16 %v8246
    %v8763 = vunpack.c.l.b16 %v8247
    %v8764 = vunpack.c.l.b16 %v8248
    %v8765 = vunpack.c.l.b16 %v8249
    %v8766 = vunpack.c.l.b16 %v8250
    %v8767 = vunpack.c.l.b16 %v8251
    %v8768 = vunpack.c.l.b16 %v8252
    %v8769 = vunpack.c.l.b16 %v8253
    %v8770 = vunpack.c.l.b16 %v8254
    %v8771 = vunpack.c.l.b16 %v8255
    %v8772 = vpack.c.b16 %v8517, %v8516
    %v8773 = vpack.c.b16 %v8519, %v8518
    %v8774 = vpack.c.b16 %v8521, %v8520
    %v8775 = vpack.c.b16 %v8523, %v8522
    %v8776 = vpack.c.b16 %v8525, %v8524
    %v8777 = vpack.c.b16 %v8527, %v8526
    %v8778 = vpack.c.b16 %v8529, %v8528
    %v8779 = vpack.c.b16 %v8531, %v8530
    %v8780 = vpack.c.b16 %v8533, %v8532
    %v8781 = vpack.c.b16 %v8535, %v8534
    %v8782 = vpack.c.b16 %v8537, %v8536
    %v8783 = vpack.c.b16 %v8539, %v8538
    %v8784 = vpack.c.b16 %v8541, %v8540
    %v8785 = vpack.c.b16 %v8543, %v8542
    %v8786 = vpack.c.b16 %v8545, %v8544
    %v8787 = vpack.c.b16 %v8547, %v8546
    %v8788 = vpack.c.b16 %v8549, %v8548
    %v8789 = vpack.c.b16 %v8551, %v8550
    %v8790 = vpack.c.b16 %v8553, %v8552
    %v8791 = vpack.c.b16 %v8555, %v8554
    %v8792 = vpack.c.b16 %v8557, %v8556
    %v8793 = vpack.c.b16 %v8559, %v8558
    %v8794 = vpack.c.b16 %v8561, %v8560
    %v8795 = vpack.c.b16 %v8563, %v8562
    %v8796 = vpack.c.b16 %v8565, %v8564
    %v8797 = vpack.c.b16 %v8567, %v8566
    %v8798 = vpack.c.b16 %v8569, %v8568
    %v8799 = vpack.c.b16 %v8571, %v8570
    %v8800 = vpack.c.b16 %v8573, %v8572
    %v8801 = vpack.c.b16 %v8575, %v8574
    %v8802 = vpack.c.b16 %v8577, %v8576
    %v8803 = vpack.c.b16 %v8579, %v8578
    %v8804 = vpack.c.b16 %v8581, %v8580
    %v8805 = vpack.c.b16 %v8583, %v8582
    %v8806 = vpack.c.b16 %v8585, %v8584
    %v8807 = vpack.c.b16 %v8587, %v8586
    %v8808 = vpack.c.b16 %v8589, %v8588
    %v8809 = vpack.c.b16 %v8591, %v8590
    %v8810 = vpack.c.b16 %v8593, %v8592
    %v8811 = vpack.c.b16 %v8595, %v8594
    %v8812 = vpack.c.b16 %v8597, %v8596
    %v8813 = vpack.c.b16 %v8599, %v8598
    %v8814 = vpack.c.b16 %v8601, %v8600
    %v8815 = vpack.c.b16 %v8603, %v8602
    %v8816 = vpack.c.b16 %v8605, %v8604
    %v8817 = vpack.c.b16 %v8607, %v8606
    %v8818 = vpack.c.b16 %v8609, %v8608
    %v8819 = vpack.c.b16 %v8611, %v8610
    %v8820 = vpack.c.b16 %v8613, %v8612
    %v8821 = vpack.c.b16 %v8615, %v8614
    %v8822 = vpack.c.b16 %v8617, %v8616
    %v8823 = vpack.c.b16 %v8619, %v8618
    %v8824 = vpack.c.b16 %v8621, %v8620
    %v8825 = vpack.c.b16 %v8623, %v8622
    %v8826 = vpack.c.b16 %v8625, %v8624
    %v8827 = vpack.c.b16 %v8627, %v8626
    %v8828 = vpack.c.b16 %v8629, %v8628
    %v8829 = vpack.c.b16 %v8631, %v8630
    %v8830 = vpack.c.b16 %v8633, %v8632
    %v8831 = vpack.c.b16 %v8635, %v8634
    %v8832 = vpack.c.b16 %v8637, %v8636
    %v8833 = vpack.c.b16 %v8639, %v8638
    %v8834 = vpack.c.b16 %v8641, %v8640
    %v8835 = vpack.c.b16 %v8643, %v8642
    %v8836 = vpack.c.b16 %v8645, %v8644
    %v8837 = vpack.c.b16 %v8647, %v8646
    %v8838 = vpack.c.b16 %v8649, %v8648
    %v8839 = vpack.c.b16 %v8651, %v8650
    %v8840 = vpack.c.b16 %v8653, %v8652
    %v8841 = vpack.c.b16 %v8655, %v8654
    %v8842 = vpack.c.b16 %v8657, %v8656
    %v8843 = vpack.c.b16 %v8659, %v8658
    %v8844 = vpack.c.b16 %v8661, %v8660
    %v8845 = vpack.c.b16 %v8663, %v8662
    %v8846 = vpack.c.b16 %v8665, %v8664
    %v8847 = vpack.c.b16 %v8667, %v8666
    %v8848 = vpack.c.b16 %v8669, %v8668
    %v8849 = vpack.c.b16 %v8671, %v8670
    %v8850 = vpack.c.b16 %v8673, %v8672
    %v8851 = vpack.c.b16 %v8675, %v8674
    %v8852 = vpack.c.b16 %v8677, %v8676
    %v8853 = vpack.c.b16 %v8679, %v8678
    %v8854 = vpack.c.b16 %v8681, %v8680
    %v8855 = vpack.c.b16 %v8683, %v8682
    %v8856 = vpack.c.b16 %v8685, %v8684
    %v8857 = vpack.c.b16 %v8687, %v8686
    %v8858 = vpack.c.b16 %v8689, %v8688
    %v8859 = vpack.c.b16 %v8691, %v8690
    %v8860 = vpack.c.b16 %v8693, %v8692
    %v8861 = vpack.c.b16 %v8695, %v8694
    %v8862 = vpack.c.b16 %v8697, %v8696
    %v8863 = vpack.c.b16 %v8699, %v8698
    %v8864 = vpack.c.b16 %v8701, %v8700
    %v8865 = vpack.c.b16 %v8703, %v8702
    %v8866 = vpack.c.b16 %v8705, %v8704
    %v8867 = vpack.c.b16 %v8707, %v8706
    %v8868 = vpack.c.b16 %v8709, %v8708
    %v8869 = vpack.c.b16 %v8711, %v8710
    %v8870 = vpack.c.b16 %v8713, %v8712
    %v8871 = vpack.c.b16 %v8715, %v8714
    %v8872 = vpack.c.b16 %v8717, %v8716
    %v8873 = vpack.c.b16 %v8719, %v8718
    %v8874 = vpack.c.b16 %v8721, %v8720
    %v8875 = vpack.c.b16 %v8723, %v8722
    %v8876 = vpack.c.b16 %v8725, %v8724
    %v8877 = vpack.c.b16 %v8727, %v8726
    %v8878 = vpack.c.b16 %v8729, %v8728
    %v8879 = vpack.c.b16 %v8731, %v8730
    %v8880 = vpack.c.b16 %v8733, %v8732
    %v8881 = vpack.c.b16 %v8735, %v8734
    %v8882 = vpack.c.b16 %v8737, %v8736
    %v8883 = vpack.c.b16 %v8739, %v8738
    %v8884 = vpack.c.b16 %v8741, %v8740
    %v8885 = vpack.c.b16 %v8743, %v8742
    %v8886 = vpack.c.b16 %v8745, %v8744
    %v8887 = vpack.c.b16 %v8747, %v8746
    %v8888 = vpack.c.b16 %v8749, %v8748
    %v8889 = vpack.c.b16 %v8751, %v8750
    %v8890 = vpack.c.b16 %v8753, %v8752
    %v8891 = vpack.c.b16 %v8755, %v8754
    %v8892 = vpack.c.b16 %v8757, %v8756
    %v8893 = vpack.c.b16 %v8759, %v8758
    %v8894 = vpack.c.b16 %v8761, %v8760
    %v8895 = vpack.c.b16 %v8763, %v8762
    %v8896 = vpack.c.b16 %v8765, %v8764
    %v8897 = vpack.c.b16 %v8767, %v8766
    %v8898 = vpack.c.b16 %v8769, %v8768
    %v8899 = vpack.c.b16 %v8771, %v8770
    %9028 = vmatpush.bf16.msra.mxu0 %v8779
    %9029 = vmatpush.bf16.msra.mxu0 %v8778
    %9030 = vmatpush.bf16.msra.mxu0 %v8777
    %9031 = vmatpush.bf16.msra.mxu0 %v8776
    %9032 = vmatpush.bf16.msra.mxu0 %v8775
    %9033 = vmatpush.bf16.msra.mxu0 %v8774
    %9034 = vmatpush.bf16.msra.mxu0 %v8773
    %9035 = vmatpush.bf16.msra.mxu0 %v8772
    %9036 = vmatmul.bf16.gmra.mxu0 %v7984
    %v9037 = vpop.f32.mrf.mxu0
    %v9038 = vadd.f32 %v8258, %v9037
    %v9039 = vpop.f32.mrf.mxu0
    %9040 = vdwg.mxu0
    %9041 = vmatpush.bf16.msra.mxu0 %v8787
    %9042 = vmatpush.bf16.msra.mxu0 %v8786
    %9043 = vmatpush.bf16.msra.mxu0 %v8785
    %9044 = vmatpush.bf16.msra.mxu0 %v8784
    %9045 = vmatpush.bf16.msra.mxu0 %v8783
    %9046 = vmatpush.bf16.msra.mxu0 %v8782
    %9047 = vmatpush.bf16.msra.mxu0 %v8781
    %9048 = vmatpush.bf16.msra.mxu0 %v8780
    %9049 = vmatmul.bf16.gmra.mxu0 %v7985
    %v9050 = vpop.f32.mrf.mxu0
    %v9051 = vadd.f32 %v9038, %v9050
    %v9052 = vpop.f32.mrf.mxu0
    %9053 = vdwg.mxu0
    %9054 = vmatpush.bf16.msra.mxu0 %v8795
    %9055 = vmatpush.bf16.msra.mxu0 %v8794
    %9056 = vmatpush.bf16.msra.mxu0 %v8793
    %9057 = vmatpush.bf16.msra.mxu0 %v8792
    %9058 = vmatpush.bf16.msra.mxu0 %v8791
    %9059 = vmatpush.bf16.msra.mxu0 %v8790
    %9060 = vmatpush.bf16.msra.mxu0 %v8789
    %9061 = vmatpush.bf16.msra.mxu0 %v8788
    %9062 = vmatmul.bf16.gmra.mxu0 %v7986
    %v9063 = vpop.f32.mrf.mxu0
    %v9064 = vadd.f32 %v9051, %v9063
    %v9065 = vpop.f32.mrf.mxu0
    %9066 = vdwg.mxu0
    %9067 = vmatpush.bf16.msra.mxu0 %v8803
    %9068 = vmatpush.bf16.msra.mxu0 %v8802
    %9069 = vmatpush.bf16.msra.mxu0 %v8801
    %9070 = vmatpush.bf16.msra.mxu0 %v8800
    %9071 = vmatpush.bf16.msra.mxu0 %v8799
    %9072 = vmatpush.bf16.msra.mxu0 %v8798
    %9073 = vmatpush.bf16.msra.mxu0 %v8797
    %9074 = vmatpush.bf16.msra.mxu0 %v8796
    %9075 = vmatmul.bf16.gmra.mxu0 %v7987
    %v9076 = vpop.f32.mrf.mxu0
    %v9077 = vadd.f32 %v9064, %v9076
    %v9078 = vpop.f32.mrf.mxu0
    %9079 = vdwg.mxu0
    %9080 = vmatpush.bf16.msra.mxu0 %v8811
    %9081 = vmatpush.bf16.msra.mxu0 %v8810
    %9082 = vmatpush.bf16.msra.mxu0 %v8809
    %9083 = vmatpush.bf16.msra.mxu0 %v8808
    %9084 = vmatpush.bf16.msra.mxu0 %v8807
    %9085 = vmatpush.bf16.msra.mxu0 %v8806
    %9086 = vmatpush.bf16.msra.mxu0 %v8805
    %9087 = vmatpush.bf16.msra.mxu0 %v8804
    %9088 = vmatmul.bf16.gmra.mxu0 %v7988
    %v9089 = vpop.f32.mrf.mxu0
    %v9090 = vadd.f32 %v9077, %v9089
    %v9091 = vpop.f32.mrf.mxu0
    %9092 = vdwg.mxu0
    %9093 = vmatpush.bf16.msra.mxu0 %v8819
    %9094 = vmatpush.bf16.msra.mxu0 %v8818
    %9095 = vmatpush.bf16.msra.mxu0 %v8817
    %9096 = vmatpush.bf16.msra.mxu0 %v8816
    %9097 = vmatpush.bf16.msra.mxu0 %v8815
    %9098 = vmatpush.bf16.msra.mxu0 %v8814
    %9099 = vmatpush.bf16.msra.mxu0 %v8813
    %9100 = vmatpush.bf16.msra.mxu0 %v8812
    %9101 = vmatmul.bf16.gmra.mxu0 %v7989
    %v9102 = vpop.f32.mrf.mxu0
    %v9103 = vadd.f32 %v9090, %v9102
    %v9104 = vpop.f32.mrf.mxu0
    %9105 = vdwg.mxu0
    %9106 = vmatpush.bf16.msra.mxu0 %v8827
    %9107 = vmatpush.bf16.msra.mxu0 %v8826
    %9108 = vmatpush.bf16.msra.mxu0 %v8825
    %9109 = vmatpush.bf16.msra.mxu0 %v8824
    %9110 = vmatpush.bf16.msra.mxu0 %v8823
    %9111 = vmatpush.bf16.msra.mxu0 %v8822
    %9112 = vmatpush.bf16.msra.mxu0 %v8821
    %9113 = vmatpush.bf16.msra.mxu0 %v8820
    %9114 = vmatmul.bf16.gmra.mxu0 %v7990
    %v9115 = vpop.f32.mrf.mxu0
    %v9116 = vadd.f32 %v9103, %v9115
    %v9117 = vpop.f32.mrf.mxu0
    %9118 = vdwg.mxu0
    %9119 = vmatpush.bf16.msra.mxu0 %v8835
    %9120 = vmatpush.bf16.msra.mxu0 %v8834
    %9121 = vmatpush.bf16.msra.mxu0 %v8833
    %9122 = vmatpush.bf16.msra.mxu0 %v8832
    %9123 = vmatpush.bf16.msra.mxu0 %v8831
    %9124 = vmatpush.bf16.msra.mxu0 %v8830
    %9125 = vmatpush.bf16.msra.mxu0 %v8829
    %9126 = vmatpush.bf16.msra.mxu0 %v8828
    %9127 = vmatmul.bf16.gmra.mxu0 %v7991
    %v9128 = vpop.f32.mrf.mxu0
    %v9129 = vadd.f32 %v9116, %v9128
    %v9130 = vpop.f32.mrf.mxu0
    %9131 = vdwg.mxu0
    %9132 = vmatpush.bf16.msra.mxu0 %v8843
    %9133 = vmatpush.bf16.msra.mxu0 %v8842
    %9134 = vmatpush.bf16.msra.mxu0 %v8841
    %9135 = vmatpush.bf16.msra.mxu0 %v8840
    %9136 = vmatpush.bf16.msra.mxu0 %v8839
    %9137 = vmatpush.bf16.msra.mxu0 %v8838
    %9138 = vmatpush.bf16.msra.mxu0 %v8837
    %9139 = vmatpush.bf16.msra.mxu0 %v8836
    %9140 = vmatmul.bf16.gmra.mxu0 %v7992
    %v9141 = vpop.f32.mrf.mxu0
    %v9142 = vadd.f32 %v9129, %v9141
    %v9143 = vpop.f32.mrf.mxu0
    %9144 = vdwg.mxu0
    %9145 = vmatpush.bf16.msra.mxu0 %v8851
    %9146 = vmatpush.bf16.msra.mxu0 %v8850
    %9147 = vmatpush.bf16.msra.mxu0 %v8849
    %9148 = vmatpush.bf16.msra.mxu0 %v8848
    %9149 = vmatpush.bf16.msra.mxu0 %v8847
    %9150 = vmatpush.bf16.msra.mxu0 %v8846
    %9151 = vmatpush.bf16.msra.mxu0 %v8845
    %9152 = vmatpush.bf16.msra.mxu0 %v8844
    %9153 = vmatmul.bf16.gmra.mxu0 %v7993
    %v9154 = vpop.f32.mrf.mxu0
    %v9155 = vadd.f32 %v9142, %v9154
    %v9156 = vpop.f32.mrf.mxu0
    %9157 = vdwg.mxu0
    %9158 = vmatpush.bf16.msra.mxu0 %v8859
    %9159 = vmatpush.bf16.msra.mxu0 %v8858
    %9160 = vmatpush.bf16.msra.mxu0 %v8857
    %9161 = vmatpush.bf16.msra.mxu0 %v8856
    %9162 = vmatpush.bf16.msra.mxu0 %v8855
    %9163 = vmatpush.bf16.msra.mxu0 %v8854
    %9164 = vmatpush.bf16.msra.mxu0 %v8853
    %9165 = vmatpush.bf16.msra.mxu0 %v8852
    %9166 = vmatmul.bf16.gmra.mxu0 %v7994
    %v9167 = vpop.f32.mrf.mxu0
    %v9168 = vadd.f32 %v9155, %v9167
    %v9169 = vpop.f32.mrf.mxu0
    %9170 = vdwg.mxu0
    %9171 = vmatpush.bf16.msra.mxu0 %v8867
    %9172 = vmatpush.bf16.msra.mxu0 %v8866
    %9173 = vmatpush.bf16.msra.mxu0 %v8865
    %9174 = vmatpush.bf16.msra.mxu0 %v8864
    %9175 = vmatpush.bf16.msra.mxu0 %v8863
    %9176 = vmatpush.bf16.msra.mxu0 %v8862
    %9177 = vmatpush.bf16.msra.mxu0 %v8861
    %9178 = vmatpush.bf16.msra.mxu0 %v8860
    %9179 = vmatmul.bf16.gmra.mxu0 %v7995
    %v9180 = vpop.f32.mrf.mxu0
    %v9181 = vadd.f32 %v9168, %v9180
    %v9182 = vpop.f32.mrf.mxu0
    %9183 = vdwg.mxu0
    %9184 = vmatpush.bf16.msra.mxu0 %v8875
    %9185 = vmatpush.bf16.msra.mxu0 %v8874
    %9186 = vmatpush.bf16.msra.mxu0 %v8873
    %9187 = vmatpush.bf16.msra.mxu0 %v8872
    %9188 = vmatpush.bf16.msra.mxu0 %v8871
    %9189 = vmatpush.bf16.msra.mxu0 %v8870
    %9190 = vmatpush.bf16.msra.mxu0 %v8869
    %9191 = vmatpush.bf16.msra.mxu0 %v8868
    %9192 = vmatmul.bf16.gmra.mxu0 %v7996
    %v9193 = vpop.f32.mrf.mxu0
    %v9194 = vadd.f32 %v9181, %v9193
    %v9195 = vpop.f32.mrf.mxu0
    %9196 = vdwg.mxu0
    %9197 = vmatpush.bf16.msra.mxu0 %v8883
    %9198 = vmatpush.bf16.msra.mxu0 %v8882
    %9199 = vmatpush.bf16.msra.mxu0 %v8881
    %9200 = vmatpush.bf16.msra.mxu0 %v8880
    %9201 = vmatpush.bf16.msra.mxu0 %v8879
    %9202 = vmatpush.bf16.msra.mxu0 %v8878
    %9203 = vmatpush.bf16.msra.mxu0 %v8877
    %9204 = vmatpush.bf16.msra.mxu0 %v8876
    %9205 = vmatmul.bf16.gmra.mxu0 %v7997
    %v9206 = vpop.f32.mrf.mxu0
    %v9207 = vadd.f32 %v9194, %v9206
    %v9208 = vpop.f32.mrf.mxu0
    %9209 = vdwg.mxu0
    %9210 = vmatpush.bf16.msra.mxu0 %v8891
    %9211 = vmatpush.bf16.msra.mxu0 %v8890
    %9212 = vmatpush.bf16.msra.mxu0 %v8889
    %9213 = vmatpush.bf16.msra.mxu0 %v8888
    %9214 = vmatpush.bf16.msra.mxu0 %v8887
    %9215 = vmatpush.bf16.msra.mxu0 %v8886
    %9216 = vmatpush.bf16.msra.mxu0 %v8885
    %9217 = vmatpush.bf16.msra.mxu0 %v8884
    %9218 = vmatmul.bf16.gmra.mxu0 %v7998
    %v9219 = vpop.f32.mrf.mxu0
    %v9220 = vadd.f32 %v9207, %v9219
    %v9221 = vpop.f32.mrf.mxu0
    %9222 = vdwg.mxu0
    %9223 = vmatpush.bf16.msra.mxu0 %v8899
    %9224 = vmatpush.bf16.msra.mxu0 %v8898
    %9225 = vmatpush.bf16.msra.mxu0 %v8897
    %9226 = vmatpush.bf16.msra.mxu0 %v8896
    %9227 = vmatpush.bf16.msra.mxu0 %v8895
    %9228 = vmatpush.bf16.msra.mxu0 %v8894
    %9229 = vmatpush.bf16.msra.mxu0 %v8893
    %9230 = vmatpush.bf16.msra.mxu0 %v8892
    %9231 = vmatmul.bf16.gmra.mxu0 %v7999
    %v9232 = vpop.f32.mrf.mxu0
    %v9233 = vadd.f32 %v9220, %v9232
    %v9234 = vpop.f32.mrf.mxu0
    %9235 = vdwg.mxu0
    %9236 = vst [vmem:[#allocation11] sm:$0x3] %v9233
    // Predicated region
    $region42: #{tpu_custom_call.1} parent=1 // pred_check
      _
    $region43: #{tpu_custom_call.1} parent=1 // pred_check_branch
      %9238 = sbr.rel (0) target = $region45
    $region44: #{tpu_custom_call.1} parent=1 // pred_region
      %9240 = vsyncadd [#allocation4], 0
      %s9242 = sshll.u32 [#allocation11], 4
      %s9243 = int_to_ptr.vmem [resolvable:$true] %s9242
      %s9244 = sshll.u32 %s5, 4
      %s9245 = int_to_ptr.hbm [resolvable:$true] %s9244
      %9247 = dma.vmem_to_hbm [thread:$0]  %s9243, 32, %s9245, [#allocation4]
    $region45: #{tpu_custom_call.1} parent=1 // pred_fallthru
      _
    // Predicated region
    $region46: #{tpu_custom_call.1} parent=1 // pred_check
      _
    $region47: #{tpu_custom_call.1} parent=1 // pred_check_branch
      %9249 = sbr.rel (0) target = $region49
    $region48: #{tpu_custom_call.1} parent=1 // pred_region
      %9251 = dma.done [#allocation4], 32
    $region49: #{tpu_custom_call.1} parent=1 // pred_fallthru
      _
    %9252 = vsyncpa [#allocation3], 1
    %9253 = vsyncpa [#allocation6], 1
    %9254 = vsyncpa [#allocation9], 1
    %9255 = vsyncpa [#allocation4], 1

</llo_original>
